<compile_context>
chip_gen: v5e
topology: v5e:2x2
jax: 0.10.0
libtpu: 0.0.40
codegen_flags: <defaults>
</compile_context>

<pallas_src>
import functools
import math

import jax
import jax.numpy as jnp
from jax.experimental import pallas as pl
from jax.experimental.pallas import tpu as pltpu

LEAKY_SLOPE = 0.1
BN_EPS = 1e-5
LANE = 128


def _round_up(x, m):
    return ((x + m - 1) // m) * m


def _vmem_limit(est_bytes):
    # 2x headroom over the static per-step estimate, clamped so it stays within
    # every generation's physical VMEM (v7x: 64 MiB).
    return int(min(48 << 20, max(8 << 20, 2 * est_bytes)))


def _lrelu(h):
    # LeakyReLU(0.1) as a single VPU max (no compare+select).
    return jnp.maximum(h, LEAKY_SLOPE * h)


def _im2col_3x3(col_ref, h_ref, H, W, base):
    """Scatter the 9 shifted 3x3 SAME-conv taps of h (flattened pixels x C) into
    lane slots [base + t*C, base + (t+1)*C), t = ky*3 + kx, of col_ref.

    The pixel shift (dy*W + dx) is realized with pltpu.roll along the flattened
    sublane axis (XLU) plus a full-tile validity mask, so every tap is ONE
    lane/sublane-aligned full-width store; the conv border zero-fill is folded
    into the mask.  h_ref is an explicit f32 VMEM scratch so the activation is
    streamed per tap rather than held live in vregs across all 9 writes.
    """
    HW, C = h_ref.shape
    ri = jax.lax.broadcasted_iota(jnp.int32, (HW, 1), 0)   # flattened pixel idx
    if W & (W - 1) == 0:
        xx = ri & (W - 1)      # x = pixel % W (W is a power of two: SVHN/CIFAR)
    else:
        xx = ri % W            # TODO(synk): non-pow2 W may want a host-side index
    for ky in range(3):
        dy = ky - 1
        for kx in range(3):
            dx = kx - 1
            c0 = base + (ky * 3 + kx) * C
            s = dy * W + dx
            h = h_ref[...]                      # stream from VMEM per tap
            if s == 0:
                col_ref[:, c0:c0 + C] = h.astype(col_ref.dtype)
                continue
            rolled = pltpu.roll(h, (-s) % HW, 0)   # rolled[p] = h[(p + s) % HW]
            conds = []
            if dy == -1:
                conds.append(ri >= W)               # y + dy >= 0
            elif dy == 1:
                conds.append(ri < (H - 1) * W)      # y + dy <= H - 1
            if dx == -1:
                conds.append(xx >= 1)               # x + dx >= 0
            elif dx == 1:
                conds.append(xx < W - 1)            # x + dx <= W - 1
            valid = conds[0]
            for c in conds[1:]:
                valid = valid & c
            tap = jnp.where(valid, rolled, jnp.zeros_like(rolled))
            col_ref[:, c0:c0 + C] = tap.astype(col_ref.dtype)


# --------------------------- kernels ---------------------------

def _bn_stats_kernel(x_ref, sum_ref, sq_ref):
    """Per-channel sum / sum-of-squares, accumulated across the batch grid."""
    @pl.when(pl.program_id(0) == 0)
    def _():
        sum_ref[...] = jnp.zeros_like(sum_ref)
        sq_ref[...] = jnp.zeros_like(sq_ref)

    xf = x_ref[...]                                   # (HW, C) f32
    sum_ref[...] += jnp.sum(xf, axis=0, keepdims=True)
    sq_ref[...] += jnp.sum(xf * xf, axis=0, keepdims=True)


def _conv1_kernel(x_ref, sc_ref, sh_ref, w_ref,
                  y_ref, sum_ref, sq_ref, h_ref, col_ref, *, H, W):
    """BN1 apply + LeakyReLU + 3x3 conv (one K=9*Cpi matmul) + BN2 statistics."""
    @pl.when(pl.program_id(0) == 0)
    def _():
        sum_ref[...] = jnp.zeros_like(sum_ref)
        sq_ref[...] = jnp.zeros_like(sq_ref)

    h_ref[...] = _lrelu(x_ref[...] * sc_ref[...] + sh_ref[...])   # f32 scratch
    _im2col_3x3(col_ref, h_ref, H, W, 0)
    y = jnp.dot(col_ref[...], w_ref[...], preferred_element_type=jnp.float32)
    y_ref[...] = y
    sum_ref[...] += jnp.sum(y, axis=0, keepdims=True)
    sq_ref[...] += jnp.sum(y * y, axis=0, keepdims=True)


def _conv2_kernel(y1_ref, x_ref, sc_ref, sh_ref, w_ref,
                  o_ref, h_ref, col_ref, *, H, W, cpi, cpo):
    """BN2 apply + LeakyReLU + 3x3 conv with the identity 1x1 conv folded into
    the same matmul: out = [im2col(h2) | x] @ [W2 ; Wid]."""
    h_ref[...] = _lrelu(y1_ref[...] * sc_ref[...] + sh_ref[...])
    _im2col_3x3(col_ref, h_ref, H, W, 0)
    col_ref[:, 9 * cpo:9 * cpo + cpi] = x_ref[...].astype(col_ref.dtype)
    o_ref[...] = jnp.dot(col_ref[...], w_ref[...],
                         preferred_element_type=jnp.float32)


# --------------------------- wrapper ---------------------------

def _fold_bn(s, sq, gamma, beta, count):
    """Training-mode BN (biased var) folded into a per-channel scale/shift."""
    mean = s / count
    var = jnp.maximum(sq / count - mean * mean, 0.0)
    scale = gamma * jax.lax.rsqrt(var + BN_EPS)
    shift = beta - mean * scale
    return scale, shift


@functools.partial(jax.jit, static_argnames=("compute_dtype",))
def residual_forward(x_nchw, params, *, compute_dtype=jnp.float32):
    """WRN residual block forward (training-mode BN), NCHW in / NCHW out.

    Three gridded pallas_calls (grid over the batch axis, one image per step).
    compute_dtype controls the matmul-operand dtype (im2col slab + weights);
    BN statistics / scale/shift / matmul accumulation stay float32.
    """
    x = jnp.transpose(x_nchw, (0, 2, 3, 1)).astype(jnp.float32)   # NCHW -> NHWC
    n, h, w, cin = x.shape
    cout = params["wid"].shape[-1]
    cpi = _round_up(cin, LANE)
    cpo = _round_up(cout, LANE)
    dci, dco = cpi - cin, cpo - cout
    hw = h * w
    count = n * hw
    csz = jnp.dtype(compute_dtype).itemsize

    xp = jnp.pad(x, ((0, 0), (0, 0), (0, 0), (0, dci))).reshape(n, hw, cpi)
    g1 = jnp.pad(params["g1"], ((0, 0), (0, dci)))
    b1 = jnp.pad(params["b1"], ((0, 0), (0, dci)))
    g2 = jnp.pad(params["g2"], ((0, 0), (0, dco)))
    b2 = jnp.pad(params["b2"], ((0, 0), (0, dco)))
    # fused 3x3 weights: (3,3,Ci,Co) -> (9*Ci, Co), matching the im2col lane order
    w1p = jnp.pad(params["w1"], ((0, 0), (0, 0), (0, dci), (0, dco))
                  ).reshape(9 * cpi, cpo).astype(compute_dtype)
    w2p = jnp.pad(params["w2"], ((0, 0), (0, 0), (0, dco), (0, dco))
                  ).reshape(9 * cpo, cpo)
    widp = jnp.pad(params["wid"], ((0, dci), (0, dco)))
    w2id = jnp.concatenate([w2p, widp], axis=0).astype(compute_dtype)

    # ---------------- pass 1: BN1 batch statistics ----------------
    est1 = 2 * hw * cpi * 4 + 4 * cpi * 4
    sum1, sq1 = pl.pallas_call(
        _bn_stats_kernel,
        out_shape=(jax.ShapeDtypeStruct((1, cpi), jnp.float32),
                   jax.ShapeDtypeStruct((1, cpi), jnp.float32)),
        grid=(n,),
        in_specs=[pl.BlockSpec((None, hw, cpi), lambda i: (i, 0, 0))],
        out_specs=(pl.BlockSpec((1, cpi), lambda i: (0, 0)),
                   pl.BlockSpec((1, cpi), lambda i: (0, 0))),
        compiler_params=pltpu.CompilerParams(
            dimension_semantics=("arbitrary",),
            vmem_limit_bytes=_vmem_limit(est1)),
        cost_estimate=pl.CostEstimate(
            flops=3 * count * cpi, transcendentals=0,
            bytes_accessed=4 * (count * cpi + 2 * cpi)),
    )(xp)
    sc1, sh1 = _fold_bn(sum1, sq1, g1, b1, count)

    # ---- pass 2: BN1 apply + LeakyReLU + conv1 (K = 9*Cpi) + BN2 statistics ----
    k1 = 9 * cpi
    est2 = (2 * hw * cpi * 4 + 2 * hw * cpo * 4 + 2 * k1 * cpo * csz
            + hw * k1 * csz + hw * cpi * 4)
    y1, sum2, sq2 = pl.pallas_call(
        functools.partial(_conv1_kernel, H=h, W=w),
        out_shape=(jax.ShapeDtypeStruct((n, hw, cpo), jnp.float32),
                   jax.ShapeDtypeStruct((1, cpo), jnp.float32),
                   jax.ShapeDtypeStruct((1, cpo), jnp.float32)),
        grid=(n,),
        in_specs=[
            pl.BlockSpec((None, hw, cpi), lambda i: (i, 0, 0)),
            pl.BlockSpec((1, cpi), lambda i: (0, 0)),
            pl.BlockSpec((1, cpi), lambda i: (0, 0)),
            pl.BlockSpec((k1, cpo), lambda i: (0, 0)),
        ],
        out_specs=(
            pl.BlockSpec((None, hw, cpo), lambda i: (i, 0, 0)),
            pl.BlockSpec((1, cpo), lambda i: (0, 0)),
            pl.BlockSpec((1, cpo), lambda i: (0, 0)),
        ),
        scratch_shapes=[
            pltpu.VMEM((hw, cpi), jnp.float32),     # h1 (explicit, not spilled)
            pltpu.VMEM((hw, k1), compute_dtype),    # im2col slab for conv1
        ],
        compiler_params=pltpu.CompilerParams(
            dimension_semantics=("arbitrary",),     # BN2 stats accumulate here
            vmem_limit_bytes=_vmem_limit(est2)),
        cost_estimate=pl.CostEstimate(
            flops=2 * count * k1 * cpo, transcendentals=0,
            bytes_accessed=4 * count * (cpi + cpo) + csz * k1 * cpo),
    )(xp, sc1, sh1, w1p)
    sc2, sh2 = _fold_bn(sum2, sq2, g2, b2, count)

    # ---- pass 3: BN2 apply + LeakyReLU + conv2 with identity 1x1 folded in ----
    k2 = 9 * cpo + cpi
    est3 = (4 * hw * cpo * 4 + 2 * hw * cpi * 4 + 2 * k2 * cpo * csz
            + hw * k2 * csz + hw * cpo * 4)
    out = pl.pallas_call(
        functools.partial(_conv2_kernel, H=h, W=w, cpi=cpi, cpo=cpo),
        out_shape=jax.ShapeDtypeStruct((n, hw, cpo), jnp.float32),
        grid=(n,),
        in_specs=[
            pl.BlockSpec((None, hw, cpo), lambda i: (i, 0, 0)),
            pl.BlockSpec((None, hw, cpi), lambda i: (i, 0, 0)),
            pl.BlockSpec((1, cpo), lambda i: (0, 0)),
            pl.BlockSpec((1, cpo), lambda i: (0, 0)),
            pl.BlockSpec((k2, cpo), lambda i: (0, 0)),
        ],
        out_specs=pl.BlockSpec((None, hw, cpo), lambda i: (i, 0, 0)),
        scratch_shapes=[
            pltpu.VMEM((hw, cpo), jnp.float32),     # h2
            pltpu.VMEM((hw, k2), compute_dtype),    # im2col slab + identity cols
        ],
        compiler_params=pltpu.CompilerParams(
            dimension_semantics=("parallel",),      # no cross-step state -> megacore
            vmem_limit_bytes=_vmem_limit(est3)),
        cost_estimate=pl.CostEstimate(
            flops=2 * count * k2 * cpo, transcendentals=0,
            bytes_accessed=4 * count * (cpi + 2 * cpo) + csz * k2 * cpo),
    )(y1, xp, sc2, sh2, w2id)

    out = out.reshape(n, h, w, cpo)[..., :cout]
    return jnp.transpose(out, (0, 3, 1, 2))          # NHWC -> NCHW


# --------------------------- reference & test ---------------------------

def residual_reference(x, params):
    """Pure-JAX reference (matches the PyTorch module in training mode)."""
    def bn(v, g, b):
        mu = jnp.mean(v, axis=(0, 2, 3), keepdims=True)
        var = jnp.mean((v - mu) ** 2, axis=(0, 2, 3), keepdims=True)
        return (v - mu) * jax.lax.rsqrt(var + BN_EPS) \
            * g.reshape(1, -1, 1, 1) + b.reshape(1, -1, 1, 1)

    def lrelu(v):
        return jnp.where(v >= 0, v, LEAKY_SLOPE * v)

    dn = ("NCHW", "HWIO", "NCHW")
    prec = jax.lax.Precision.HIGHEST
    h = lrelu(bn(x, params["g1"], params["b1"]))
    y = jax.lax.conv_general_dilated(h, params["w1"], (1, 1), "SAME",
                                     dimension_numbers=dn, precision=prec)
    y = lrelu(bn(y, params["g2"], params["b2"]))
    y = jax.lax.conv_general_dilated(y, params["w2"], (1, 1), "SAME",
                                     dimension_numbers=dn, precision=prec)
    idw = params["wid"].reshape(1, 1, *params["wid"].shape)
    idy = jax.lax.conv_general_dilated(x, idw, (1, 1), "SAME",
                                       dimension_numbers=dn, precision=prec)
    return idy + y


def init_params(key, cin, cout):
    ks = jax.random.split(key, 7)
    return dict(
        w1=jax.random.normal(ks[0], (3, 3, cin, cout), jnp.float32)
        / math.sqrt(9 * cin),
        w2=jax.random.normal(ks[1], (3, 3, cout, cout), jnp.float32)
        / math.sqrt(9 * cout),
        wid=jax.random.normal(ks[2], (cin, cout), jnp.float32) / math.sqrt(cin),
        g1=1.0 + 0.1 * jax.random.normal(ks[3], (1, cin), jnp.float32),
        b1=0.1 * jax.random.normal(ks[4], (1, cin), jnp.float32),
        g2=1.0 + 0.1 * jax.random.normal(ks[5], (1, cout), jnp.float32),
        b2=0.1 * jax.random.normal(ks[6], (1, cout), jnp.float32),
    )


if __name__ == "__main__":
    key = jax.random.PRNGKey(0)
    kx, kp = jax.random.split(key)

    # small shapes consistent with residual(input_channels=4, output_channels=8)
    N, Cin, H, W, Cout = 2, 4, 16, 16, 8
    x = jax.random.normal(kx, (N, Cin, H, W), jnp.float32)   # NCHW (PyTorch layout)
    params = init_params(kp, Cin, Cout)

    ref = residual_reference(x, params)

    # f32 matmul operands: should match the PyTorch/JAX reference tightly.
    out_f32 = jax.block_until_ready(
        residual_forward(x, params, compute_dtype=jnp.float32))
    assert out_f32.shape == (N, Cout, H, W), out_f32.shape
    err_f32 = float(jnp.max(jnp.abs(out_f32 - ref)))
    assert err_f32 < 1e-4, f"f32 mismatch vs reference: {err_f32}"

    # bf16 matmul operands (im2col slab + weights), f32 accumulation / BN stats:
    # looser sanity tolerance for the reduced-precision path.
    out_bf16 = jax.block_until_ready(
        residual_forward(x, params, compute_dtype=jnp.bfloat16))
    err_bf16 = float(jnp.max(jnp.abs(out_bf16 - ref)))
    assert err_bf16 < 0.25, f"bf16 mismatch vs reference: {err_bf16}"

    print("KERNEL_OK")
</pallas_src>

<mosaic_0001>
module attributes {stable_mosaic.version = 11 : i64} {
  func.func @_bn_stats_kernel(%arg0: i32, %arg1: memref<1x256x128xf32, #tpu.memory_space<vmem>>, %arg2: memref<1x128xf32, #tpu.memory_space<vmem>>, %arg3: memref<1x128xf32, #tpu.memory_space<vmem>>) attributes {dimension_semantics = [#tpu.dimension_semantics<arbitrary>], iteration_bounds = array<i64: 2>, scalar_prefetch = 0 : i64, scratch_operands = 0 : i64, tpu.core_type = #tpu.core_type<tc>, window_params = [{transform_indices = @transform_0, window_bounds = array<i64: 1, 256, 128>}, {pipeline_mode = #tpu.pipeline_mode<synchronous>, transform_indices = @transform_1, window_bounds = array<i64: 1, 128>}, {pipeline_mode = #tpu.pipeline_mode<synchronous>, transform_indices = @transform_2, window_bounds = array<i64: 1, 128>}]} {
    %c0_i32 = arith.constant 0 : i32
    %0 = arith.cmpi eq, %arg0, %c0_i32 : i32
    %1 = arith.extui %0 : i1 to i32
    %c0_i32_0 = arith.constant 0 : i32
    %2 = arith.cmpi ne, %1, %c0_i32_0 : i32
    scf.if %2 {
      %cst_12 = arith.constant 0.000000e+00 : f32
      %16 = vector.broadcast %cst_12 : f32 to vector<1x128xf32>
      %c0_13 = arith.constant 0 : index
      %c0_14 = arith.constant 0 : index
      %17 = vector.load %arg2[%c0_13, %c0_14] : memref<1x128xf32, #tpu.memory_space<vmem>>, vector<1x128xf32>
      tpu.vector_store %arg2[%c0_13, %c0_14], %16 {strides = array<i32>} : memref<1x128xf32, #tpu.memory_space<vmem>>, vector<1x128xf32>,
      %cst_15 = arith.constant 0.000000e+00 : f32
      %18 = vector.broadcast %cst_15 : f32 to vector<1x128xf32>
      %c0_16 = arith.constant 0 : index
      %c0_17 = arith.constant 0 : index
      %19 = vector.load %arg3[%c0_16, %c0_17] : memref<1x128xf32, #tpu.memory_space<vmem>>, vector<1x128xf32>
      tpu.vector_store %arg3[%c0_16, %c0_17], %18 {strides = array<i32>} : memref<1x128xf32, #tpu.memory_space<vmem>>, vector<1x128xf32>,
    } else {
    }
    %c0 = arith.constant 0 : index
    %c0_1 = arith.constant 0 : index
    %c0_2 = arith.constant 0 : index
    %3 = vector.load %arg1[%c0, %c0_1, %c0_2] : memref<1x256x128xf32, #tpu.memory_space<vmem>>, vector<1x256x128xf32>
    %4 = vector.shape_cast %3 : vector<1x256x128xf32> to vector<256x128xf32>
    %c0_3 = arith.constant 0 : index
    %c0_4 = arith.constant 0 : index
    %5 = vector.load %arg2[%c0_3, %c0_4] : memref<1x128xf32, #tpu.memory_space<vmem>>, vector<1x128xf32>
    %cst = arith.constant dense<0.000000e+00> : vector<128xf32>
    %6 = vector.multi_reduction <add>, %4, %cst [0] : vector<256x128xf32> to vector<128xf32>
    %7 = vector.shape_cast %6 : vector<128xf32> to vector<1x128xf32>
    %8 = arith.addf %5, %7 : vector<1x128xf32>
    %c0_5 = arith.constant 0 : index
    %c0_6 = arith.constant 0 : index
    %9 = vector.load %arg2[%c0_5, %c0_6] : memref<1x128xf32, #tpu.memory_space<vmem>>, vector<1x128xf32>
    tpu.vector_store %arg2[%c0_5, %c0_6], %8 {strides = array<i32>} : memref<1x128xf32, #tpu.memory_space<vmem>>, vector<1x128xf32>,
    %c0_7 = arith.constant 0 : index
    %c0_8 = arith.constant 0 : index
    %10 = vector.load %arg3[%c0_7, %c0_8] : memref<1x128xf32, #tpu.memory_space<vmem>>, vector<1x128xf32>
    %11 = arith.mulf %4, %4 : vector<256x128xf32>
    %cst_9 = arith.constant dense<0.000000e+00> : vector<128xf32>
    %12 = vector.multi_reduction <add>, %11, %cst_9 [0] : vector<256x128xf32> to vector<128xf32>
    %13 = vector.shape_cast %12 : vector<128xf32> to vector<1x128xf32>
    %14 = arith.addf %10, %13 : vector<1x128xf32>
    %c0_10 = arith.constant 0 : index
    %c0_11 = arith.constant 0 : index
    %15 = vector.load %arg3[%c0_10, %c0_11] : memref<1x128xf32, #tpu.memory_space<vmem>>, vector<1x128xf32>
    tpu.vector_store %arg3[%c0_10, %c0_11], %14 {strides = array<i32>} : memref<1x128xf32, #tpu.memory_space<vmem>>, vector<1x128xf32>,
    return
  }
  func.func @transform_0(%arg0: i32) -> (i32, i32, i32) {
    %c0_i32 = arith.constant 0 : i32
    %c0_i32_0 = arith.constant 0 : i32
    %c0_i32_1 = arith.constant 0 : i32
    return %arg0, %c0_i32, %c0_i32_0 : i32, i32, i32
  }
  func.func @transform_1(%arg0: i32) -> (i32, i32) {
    %c0_i32 = arith.constant 0 : i32
    %c0_i32_0 = arith.constant 0 : i32
    %c0_i32_1 = arith.constant 0 : i32
    return %c0_i32, %c0_i32_0 : i32, i32
  }
  func.func @transform_2(%arg0: i32) -> (i32, i32) {
    %c0_i32 = arith.constant 0 : i32
    %c0_i32_0 = arith.constant 0 : i32
    %c0_i32_1 = arith.constant 0 : i32
    return %c0_i32, %c0_i32_0 : i32, i32
  }
}

module attributes {stable_mosaic.version = 11 : i64} {
  func.func @_conv1_kernel(%arg0: i32, %arg1: memref<1x256x128xf32, #tpu.memory_space<vmem>>, %arg2: memref<1x128xf32, #tpu.memory_space<vmem>>, %arg3: memref<1x128xf32, #tpu.memory_space<vmem>>, %arg4: memref<1152x128xf32, #tpu.memory_space<vmem>>, %arg5: memref<1x256x128xf32, #tpu.memory_space<vmem>>, %arg6: memref<1x128xf32, #tpu.memory_space<vmem>>, %arg7: memref<1x128xf32, #tpu.memory_space<vmem>>, %arg8: memref<256x128xf32, #tpu.memory_space<vmem>>, %arg9: memref<256x1152xf32, #tpu.memory_space<vmem>>) attributes {dimension_semantics = [#tpu.dimension_semantics<arbitrary>], iteration_bounds = array<i64: 2>, scalar_prefetch = 0 : i64, scratch_operands = 2 : i64, tpu.core_type = #tpu.core_type<tc>, window_params = [{transform_indices = @transform_0, window_bounds = array<i64: 1, 256, 128>}, {pipeline_mode = #tpu.pipeline_mode<synchronous>, transform_indices = @transform_1, window_bounds = array<i64: 1, 128>}, {pipeline_mode = #tpu.pipeline_mode<synchronous>, transform_indices = @transform_2, window_bounds = array<i64: 1, 128>}, {pipeline_mode = #tpu.pipeline_mode<synchronous>, transform_indices = @transform_3, window_bounds = array<i64: 1152, 128>}, {transform_indices = @transform_4, window_bounds = array<i64: 1, 256, 128>}, {pipeline_mode = #tpu.pipeline_mode<synchronous>, transform_indices = @transform_5, window_bounds = array<i64: 1, 128>}, {pipeline_mode = #tpu.pipeline_mode<synchronous>, transform_indices = @transform_6, window_bounds = array<i64: 1, 128>}]} {
    %c0_i32 = arith.constant 0 : i32
    %0 = arith.cmpi eq, %arg0, %c0_i32 : i32
    %1 = arith.extui %0 : i1 to i32
    %c0_i32_0 = arith.constant 0 : i32
    %2 = arith.cmpi ne, %1, %c0_i32_0 : i32
    scf.if %2 {
      %cst_76 = arith.constant 0.000000e+00 : f32
      %121 = vector.broadcast %cst_76 : f32 to vector<1x128xf32>
      %c0_77 = arith.constant 0 : index
      %c0_78 = arith.constant 0 : index
      %122 = vector.load %arg6[%c0_77, %c0_78] : memref<1x128xf32, #tpu.memory_space<vmem>>, vector<1x128xf32>
      tpu.vector_store %arg6[%c0_77, %c0_78], %121 {strides = array<i32>} : memref<1x128xf32, #tpu.memory_space<vmem>>, vector<1x128xf32>,
      %cst_79 = arith.constant 0.000000e+00 : f32
      %123 = vector.broadcast %cst_79 : f32 to vector<1x128xf32>
      %c0_80 = arith.constant 0 : index
      %c0_81 = arith.constant 0 : index
      %124 = vector.load %arg7[%c0_80, %c0_81] : memref<1x128xf32, #tpu.memory_space<vmem>>, vector<1x128xf32>
      tpu.vector_store %arg7[%c0_80, %c0_81], %123 {strides = array<i32>} : memref<1x128xf32, #tpu.memory_space<vmem>>, vector<1x128xf32>,
    } else {
    }
    %c0 = arith.constant 0 : index
    %c0_1 = arith.constant 0 : index
    %c0_2 = arith.constant 0 : index
    %3 = vector.load %arg1[%c0, %c0_1, %c0_2] : memref<1x256x128xf32, #tpu.memory_space<vmem>>, vector<1x256x128xf32>
    %4 = vector.shape_cast %3 : vector<1x256x128xf32> to vector<256x128xf32>
    %c0_3 = arith.constant 0 : index
    %c0_4 = arith.constant 0 : index
    %5 = vector.load %arg2[%c0_3, %c0_4] : memref<1x128xf32, #tpu.memory_space<vmem>>, vector<1x128xf32>
    %6 = vector.broadcast %5 : vector<1x128xf32> to vector<256x128xf32>
    %7 = arith.mulf %4, %6 : vector<256x128xf32>
    %c0_5 = arith.constant 0 : index
    %c0_6 = arith.constant 0 : index
    %8 = vector.load %arg3[%c0_5, %c0_6] : memref<1x128xf32, #tpu.memory_space<vmem>>, vector<1x128xf32>
    %9 = vector.broadcast %8 : vector<1x128xf32> to vector<256x128xf32>
    %10 = arith.addf %7, %9 : vector<256x128xf32>
    %cst = arith.constant 1.000000e-01 : f32
    %11 = vector.broadcast %cst : f32 to vector<256x128xf32>
    %12 = arith.mulf %11, %10 : vector<256x128xf32>
    %13 = arith.maximumf %10, %12 : vector<256x128xf32>
    %c0_7 = arith.constant 0 : index
    %c0_8 = arith.constant 0 : index
    %14 = vector.load %arg8[%c0_7, %c0_8] : memref<256x128xf32, #tpu.memory_space<vmem>>, vector<256x128xf32>
    tpu.vector_store %arg8[%c0_7, %c0_8], %13 {strides = array<i32>} : memref<256x128xf32, #tpu.memory_space<vmem>>, vector<256x128xf32>,
    %15 = tpu.iota {dimensions = array<i32: 0>} : vector<256x1xi32>
    %c15_i32 = arith.constant 15 : i32
    %16 = vector.broadcast %c15_i32 : i32 to vector<256x1xi32>
    %17 = arith.andi %15, %16 : vector<256x1xi32>
    %c0_9 = arith.constant 0 : index
    %c0_10 = arith.constant 0 : index
    %18 = vector.load %arg8[%c0_9, %c0_10] : memref<256x128xf32, #tpu.memory_space<vmem>>, vector<256x128xf32>
    %c17_i32 = arith.constant 17 : i32
    %19 = tpu.dynamic_rotate %18 by %c17_i32 dim 0 : vector<256x128xf32>, i32 -> vector<256x128xf32>
    %c16_i32 = arith.constant 16 : i32
    %20 = vector.broadcast %c16_i32 : i32 to vector<256x1xi32>
    %21 = arith.cmpi sge, %15, %20 : vector<256x1xi32>
    %c1_i32 = arith.constant 1 : i32
    %22 = vector.broadcast %c1_i32 : i32 to vector<256x1xi32>
    %23 = arith.cmpi sge, %17, %22 : vector<256x1xi32>
    %24 = arith.andi %21, %23 : vector<256x1xi1>
    %cst_11 = arith.constant 0.000000e+00 : f32
    %25 = vector.broadcast %cst_11 : f32 to vector<256x128xf32>
    %26 = vector.shape_cast %24 : vector<256x1xi1> to vector<256x1xi1>
    %27 = vector.broadcast %26 : vector<256x1xi1> to vector<256x128xi1>
    %28 = arith.select %27, %19, %25 : vector<256x128xi1>, vector<256x128xf32>
    %c0_12 = arith.constant 0 : index
    %c0_13 = arith.constant 0 : index
    %29 = vector.load %arg9[%c0_12, %c0_13] : memref<256x1152xf32, #tpu.memory_space<vmem>>, vector<256x128xf32>
    tpu.vector_store %arg9[%c0_12, %c0_13], %28 {strides = array<i32>} : memref<256x1152xf32, #tpu.memory_space<vmem>>, vector<256x128xf32>,
    %c0_14 = arith.constant 0 : index
    %c0_15 = arith.constant 0 : index
    %30 = vector.load %arg8[%c0_14, %c0_15] : memref<256x128xf32, #tpu.memory_space<vmem>>, vector<256x128xf32>
    %c16_i32_16 = arith.constant 16 : i32
    %31 = tpu.dynamic_rotate %30 by %c16_i32_16 dim 0 : vector<256x128xf32>, i32 -> vector<256x128xf32>
    %c16_i32_17 = arith.constant 16 : i32
    %32 = vector.broadcast %c16_i32_17 : i32 to vector<256x1xi32>
    %33 = arith.cmpi sge, %15, %32 : vector<256x1xi32>
    %cst_18 = arith.constant 0.000000e+00 : f32
    %34 = vector.broadcast %cst_18 : f32 to vector<256x128xf32>
    %35 = vector.shape_cast %33 : vector<256x1xi1> to vector<256x1xi1>
    %36 = vector.broadcast %35 : vector<256x1xi1> to vector<256x128xi1>
    %37 = arith.select %36, %31, %34 : vector<256x128xi1>, vector<256x128xf32>
    %c0_19 = arith.constant 0 : index
    %c128 = arith.constant 128 : index
    %38 = vector.load %arg9[%c0_19, %c128] : memref<256x1152xf32, #tpu.memory_space<vmem>>, vector<256x128xf32>
    tpu.vector_store %arg9[%c0_19, %c128], %37 {strides = array<i32>} : memref<256x1152xf32, #tpu.memory_space<vmem>>, vector<256x128xf32>,
    %c0_20 = arith.constant 0 : index
    %c0_21 = arith.constant 0 : index
    %39 = vector.load %arg8[%c0_20, %c0_21] : memref<256x128xf32, #tpu.memory_space<vmem>>, vector<256x128xf32>
    %c15_i32_22 = arith.constant 15 : i32
    %40 = tpu.dynamic_rotate %39 by %c15_i32_22 dim 0 : vector<256x128xf32>, i32 -> vector<256x128xf32>
    %c16_i32_23 = arith.constant 16 : i32
    %41 = vector.broadcast %c16_i32_23 : i32 to vector<256x1xi32>
    %42 = arith.cmpi sge, %15, %41 : vector<256x1xi32>
    %c15_i32_24 = arith.constant 15 : i32
    %43 = vector.broadcast %c15_i32_24 : i32 to vector<256x1xi32>
    %44 = arith.cmpi slt, %17, %43 : vector<256x1xi32>
    %45 = arith.andi %42, %44 : vector<256x1xi1>
    %cst_25 = arith.constant 0.000000e+00 : f32
    %46 = vector.broadcast %cst_25 : f32 to vector<256x128xf32>
    %47 = vector.shape_cast %45 : vector<256x1xi1> to vector<256x1xi1>
    %48 = vector.broadcast %47 : vector<256x1xi1> to vector<256x128xi1>
    %49 = arith.select %48, %40, %46 : vector<256x128xi1>, vector<256x128xf32>
    %c0_26 = arith.constant 0 : index
    %c256 = arith.constant 256 : index
    %50 = vector.load %arg9[%c0_26, %c256] : memref<256x1152xf32, #tpu.memory_space<vmem>>, vector<256x128xf32>
    tpu.vector_store %arg9[%c0_26, %c256], %49 {strides = array<i32>} : memref<256x1152xf32, #tpu.memory_space<vmem>>, vector<256x128xf32>,
    %c0_27 = arith.constant 0 : index
    %c0_28 = arith.constant 0 : index
    %51 = vector.load %arg8[%c0_27, %c0_28] : memref<256x128xf32, #tpu.memory_space<vmem>>, vector<256x128xf32>
    %c1_i32_29 = arith.constant 1 : i32
    %52 = tpu.dynamic_rotate %51 by %c1_i32_29 dim 0 : vector<256x128xf32>, i32 -> vector<256x128xf32>
    %c1_i32_30 = arith.constant 1 : i32
    %53 = vector.broadcast %c1_i32_30 : i32 to vector<256x1xi32>
    %54 = arith.cmpi sge, %17, %53 : vector<256x1xi32>
    %cst_31 = arith.constant 0.000000e+00 : f32
    %55 = vector.broadcast %cst_31 : f32 to vector<256x128xf32>
    %56 = vector.shape_cast %54 : vector<256x1xi1> to vector<256x1xi1>
    %57 = vector.broadcast %56 : vector<256x1xi1> to vector<256x128xi1>
    %58 = arith.select %57, %52, %55 : vector<256x128xi1>, vector<256x128xf32>
    %c0_32 = arith.constant 0 : index
    %c384 = arith.constant 384 : index
    %59 = vector.load %arg9[%c0_32, %c384] : memref<256x1152xf32, #tpu.memory_space<vmem>>, vector<256x128xf32>
    tpu.vector_store %arg9[%c0_32, %c384], %58 {strides = array<i32>} : memref<256x1152xf32, #tpu.memory_space<vmem>>, vector<256x128xf32>,
    %c0_33 = arith.constant 0 : index
    %c0_34 = arith.constant 0 : index
    %60 = vector.load %arg8[%c0_33, %c0_34] : memref<256x128xf32, #tpu.memory_space<vmem>>, vector<256x128xf32>
    %c0_35 = arith.constant 0 : index
    %c512 = arith.constant 512 : index
    %61 = vector.load %arg9[%c0_35, %c512] : memref<256x1152xf32, #tpu.memory_space<vmem>>, vector<256x128xf32>
    tpu.vector_store %arg9[%c0_35, %c512], %60 {strides = array<i32>} : memref<256x1152xf32, #tpu.memory_space<vmem>>, vector<256x128xf32>,
    %c0_36 = arith.constant 0 : index
    %c0_37 = arith.constant 0 : index
    %62 = vector.load %arg8[%c0_36, %c0_37] : memref<256x128xf32, #tpu.memory_space<vmem>>, vector<256x128xf32>
    %c255_i32 = arith.constant 255 : i32
    %63 = tpu.dynamic_rotate %62 by %c255_i32 dim 0 : vector<256x128xf32>, i32 -> vector<256x128xf32>
    %c15_i32_38 = arith.constant 15 : i32
    %64 = vector.broadcast %c15_i32_38 : i32 to vector<256x1xi32>
    %65 = arith.cmpi slt, %17, %64 : vector<256x1xi32>
    %cst_39 = arith.constant 0.000000e+00 : f32
    %66 = vector.broadcast %cst_39 : f32 to vector<256x128xf32>
    %67 = vector.shape_cast %65 : vector<256x1xi1> to vector<256x1xi1>
    %68 = vector.broadcast %67 : vector<256x1xi1> to vector<256x128xi1>
    %69 = arith.select %68, %63, %66 : vector<256x128xi1>, vector<256x128xf32>
    %c0_40 = arith.constant 0 : index
    %c640 = arith.constant 640 : index
    %70 = vector.load %arg9[%c0_40, %c640] : memref<256x1152xf32, #tpu.memory_space<vmem>>, vector<256x128xf32>
    tpu.vector_store %arg9[%c0_40, %c640], %69 {strides = array<i32>} : memref<256x1152xf32, #tpu.memory_space<vmem>>, vector<256x128xf32>,
    %c0_41 = arith.constant 0 : index
    %c0_42 = arith.constant 0 : index
    %71 = vector.load %arg8[%c0_41, %c0_42] : memref<256x128xf32, #tpu.memory_space<vmem>>, vector<256x128xf32>
    %c241_i32 = arith.constant 241 : i32
    %72 = tpu.dynamic_rotate %71 by %c241_i32 dim 0 : vector<256x128xf32>, i32 -> vector<256x128xf32>
    %c240_i32 = arith.constant 240 : i32
    %73 = vector.broadcast %c240_i32 : i32 to vector<256x1xi32>
    %74 = arith.cmpi slt, %15, %73 : vector<256x1xi32>
    %c1_i32_43 = arith.constant 1 : i32
    %75 = vector.broadcast %c1_i32_43 : i32 to vector<256x1xi32>
    %76 = arith.cmpi sge, %17, %75 : vector<256x1xi32>
    %77 = arith.andi %74, %76 : vector<256x1xi1>
    %cst_44 = arith.constant 0.000000e+00 : f32
    %78 = vector.broadcast %cst_44 : f32 to vector<256x128xf32>
    %79 = vector.shape_cast %77 : vector<256x1xi1> to vector<256x1xi1>
    %80 = vector.broadcast %79 : vector<256x1xi1> to vector<256x128xi1>
    %81 = arith.select %80, %72, %78 : vector<256x128xi1>, vector<256x128xf32>
    %c0_45 = arith.constant 0 : index
    %c768 = arith.constant 768 : index
    %82 = vector.load %arg9[%c0_45, %c768] : memref<256x1152xf32, #tpu.memory_space<vmem>>, vector<256x128xf32>
    tpu.vector_store %arg9[%c0_45, %c768], %81 {strides = array<i32>} : memref<256x1152xf32, #tpu.memory_space<vmem>>, vector<256x128xf32>,
    %c0_46 = arith.constant 0 : index
    %c0_47 = arith.constant 0 : index
    %83 = vector.load %arg8[%c0_46, %c0_47] : memref<256x128xf32, #tpu.memory_space<vmem>>, vector<256x128xf32>
    %c240_i32_48 = arith.constant 240 : i32
    %84 = tpu.dynamic_rotate %83 by %c240_i32_48 dim 0 : vector<256x128xf32>, i32 -> vector<256x128xf32>
    %c240_i32_49 = arith.constant 240 : i32
    %85 = vector.broadcast %c240_i32_49 : i32 to vector<256x1xi32>
    %86 = arith.cmpi slt, %15, %85 : vector<256x1xi32>
    %cst_50 = arith.constant 0.000000e+00 : f32
    %87 = vector.broadcast %cst_50 : f32 to vector<256x128xf32>
    %88 = vector.shape_cast %86 : vector<256x1xi1> to vector<256x1xi1>
    %89 = vector.broadcast %88 : vector<256x1xi1> to vector<256x128xi1>
    %90 = arith.select %89, %84, %87 : vector<256x128xi1>, vector<256x128xf32>
    %c0_51 = arith.constant 0 : index
    %c896 = arith.constant 896 : index
    %91 = vector.load %arg9[%c0_51, %c896] : memref<256x1152xf32, #tpu.memory_space<vmem>>, vector<256x128xf32>
    tpu.vector_store %arg9[%c0_51, %c896], %90 {strides = array<i32>} : memref<256x1152xf32, #tpu.memory_space<vmem>>, vector<256x128xf32>,
    %c0_52 = arith.constant 0 : index
    %c0_53 = arith.constant 0 : index
    %92 = vector.load %arg8[%c0_52, %c0_53] : memref<256x128xf32, #tpu.memory_space<vmem>>, vector<256x128xf32>
    %c239_i32 = arith.constant 239 : i32
    %93 = tpu.dynamic_rotate %92 by %c239_i32 dim 0 : vector<256x128xf32>, i32 -> vector<256x128xf32>
    %c240_i32_54 = arith.constant 240 : i32
    %94 = vector.broadcast %c240_i32_54 : i32 to vector<256x1xi32>
    %95 = arith.cmpi slt, %15, %94 : vector<256x1xi32>
    %c15_i32_55 = arith.constant 15 : i32
    %96 = vector.broadcast %c15_i32_55 : i32 to vector<256x1xi32>
    %97 = arith.cmpi slt, %17, %96 : vector<256x1xi32>
    %98 = arith.andi %95, %97 : vector<256x1xi1>
    %cst_56 = arith.constant 0.000000e+00 : f32
    %99 = vector.broadcast %cst_56 : f32 to vector<256x128xf32>
    %100 = vector.shape_cast %98 : vector<256x1xi1> to vector<256x1xi1>
    %101 = vector.broadcast %100 : vector<256x1xi1> to vector<256x128xi1>
    %102 = arith.select %101, %93, %99 : vector<256x128xi1>, vector<256x128xf32>
    %c0_57 = arith.constant 0 : index
    %c1024 = arith.constant 1024 : index
    %103 = vector.load %arg9[%c0_57, %c1024] : memref<256x1152xf32, #tpu.memory_space<vmem>>, vector<256x128xf32>
    tpu.vector_store %arg9[%c0_57, %c1024], %102 {strides = array<i32>} : memref<256x1152xf32, #tpu.memory_space<vmem>>, vector<256x128xf32>,
    %c0_58 = arith.constant 0 : index
    %c0_59 = arith.constant 0 : index
    %104 = vector.load %arg9[%c0_58, %c0_59] : memref<256x1152xf32, #tpu.memory_space<vmem>>, vector<256x1152xf32>
    %c0_60 = arith.constant 0 : index
    %c0_61 = arith.constant 0 : index
    %105 = vector.load %arg4[%c0_60, %c0_61] : memref<1152x128xf32, #tpu.memory_space<vmem>>, vector<1152x128xf32>
    %cst_62 = arith.constant dense<0.000000e+00> : vector<256x128xf32>
    %106 = tpu.matmul %104, %105, %cst_62 {dimension_numbers = #tpu.dot_dimension_numbers<[1], [0], [0], [1], [0, 0, 1, 1], [], []>} : vector<256x1152xf32>, vector<1152x128xf32>, vector<256x128xf32> -> vector<256x128xf32>
    %c0_63 = arith.constant 0 : index
    %c0_64 = arith.constant 0 : index
    %c0_65 = arith.constant 0 : index
    %107 = vector.load %arg5[%c0_63, %c0_64, %c0_65] : memref<1x256x128xf32, #tpu.memory_space<vmem>>, vector<1x256x128xf32>
    %108 = vector.shape_cast %107 : vector<1x256x128xf32> to vector<256x128xf32>
    %109 = vector.shape_cast %106 : vector<256x128xf32> to vector<1x256x128xf32>
    tpu.vector_store %arg5[%c0_63, %c0_64, %c0_65], %109 {strides = array<i32>} : memref<1x256x128xf32, #tpu.memory_space<vmem>>, vector<1x256x128xf32>,
    %c0_66 = arith.constant 0 : index
    %c0_67 = arith.constant 0 : index
    %110 = vector.load %arg6[%c0_66, %c0_67] : memref<1x128xf32, #tpu.memory_space<vmem>>, vector<1x128xf32>
    %cst_68 = arith.constant dense<0.000000e+00> : vector<128xf32>
    %111 = vector.multi_reduction <add>, %106, %cst_68 [0] : vector<256x128xf32> to vector<128xf32>
    %112 = vector.shape_cast %111 : vector<128xf32> to vector<1x128xf32>
    %113 = arith.addf %110, %112 : vector<1x128xf32>
    %c0_69 = arith.constant 0 : index
    %c0_70 = arith.constant 0 : index
    %114 = vector.load %arg6[%c0_69, %c0_70] : memref<1x128xf32, #tpu.memory_space<vmem>>, vector<1x128xf32>
    tpu.vector_store %arg6[%c0_69, %c0_70], %113 {strides = array<i32>} : memref<1x128xf32, #tpu.memory_space<vmem>>, vector<1x128xf32>,
    %c0_71 = arith.constant 0 : index
    %c0_72 = arith.constant 0 : index
    %115 = vector.load %arg7[%c0_71, %c0_72] : memref<1x128xf32, #tpu.memory_space<vmem>>, vector<1x128xf32>
    %116 = arith.mulf %106, %106 : vector<256x128xf32>
    %cst_73 = arith.constant dense<0.000000e+00> : vector<128xf32>
    %117 = vector.multi_reduction <add>, %116, %cst_73 [0] : vector<256x128xf32> to vector<128xf32>
    %118 = vector.shape_cast %117 : vector<128xf32> to vector<1x128xf32>
    %119 = arith.addf %115, %118 : vector<1x128xf32>
    %c0_74 = arith.constant 0 : index
    %c0_75 = arith.constant 0 : index
    %120 = vector.load %arg7[%c0_74, %c0_75] : memref<1x128xf32, #tpu.memory_space<vmem>>, vector<1x128xf32>
    tpu.vector_store %arg7[%c0_74, %c0_75], %119 {strides = array<i32>} : memref<1x128xf32, #tpu.memory_space<vmem>>, vector<1x128xf32>,
    return
  }
  func.func @transform_0(%arg0: i32) -> (i32, i32, i32) {
    %c0_i32 = arith.constant 0 : i32
    %c0_i32_0 = arith.constant 0 : i32
    %c0_i32_1 = arith.constant 0 : i32
    return %arg0, %c0_i32, %c0_i32_0 : i32, i32, i32
  }
  func.func @transform_1(%arg0: i32) -> (i32, i32) {
    %c0_i32 = arith.constant 0 : i32
    %c0_i32_0 = arith.constant 0 : i32
    %c0_i32_1 = arith.constant 0 : i32
    return %c0_i32, %c0_i32_0 : i32, i32
  }
  func.func @transform_2(%arg0: i32) -> (i32, i32) {
    %c0_i32 = arith.constant 0 : i32
    %c0_i32_0 = arith.constant 0 : i32
    %c0_i32_1 = arith.constant 0 : i32
    return %c0_i32, %c0_i32_0 : i32, i32
  }
  func.func @transform_3(%arg0: i32) -> (i32, i32) {
    %c0_i32 = arith.constant 0 : i32
    %c0_i32_0 = arith.constant 0 : i32
    %c0_i32_1 = arith.constant 0 : i32
    return %c0_i32, %c0_i32_0 : i32, i32
  }
  func.func @transform_4(%arg0: i32) -> (i32, i32, i32) {
    %c0_i32 = arith.constant 0 : i32
    %c0_i32_0 = arith.constant 0 : i32
    %c0_i32_1 = arith.constant 0 : i32
    return %arg0, %c0_i32, %c0_i32_0 : i32, i32, i32
  }
  func.func @transform_5(%arg0: i32) -> (i32, i32) {
    %c0_i32 = arith.constant 0 : i32
    %c0_i32_0 = arith.constant 0 : i32
    %c0_i32_1 = arith.constant 0 : i32
    return %c0_i32, %c0_i32_0 : i32, i32
  }
  func.func @transform_6(%arg0: i32) -> (i32, i32) {
    %c0_i32 = arith.constant 0 : i32
    %c0_i32_0 = arith.constant 0 : i32
    %c0_i32_1 = arith.constant 0 : i32
    return %c0_i32, %c0_i32_0 : i32, i32
  }
}

module attributes {stable_mosaic.version = 11 : i64} {
  func.func @_conv2_kernel(%arg0: i32, %arg1: memref<1x256x128xf32, #tpu.memory_space<vmem>>, %arg2: memref<1x256x128xf32, #tpu.memory_space<vmem>>, %arg3: memref<1x128xf32, #tpu.memory_space<vmem>>, %arg4: memref<1x128xf32, #tpu.memory_space<vmem>>, %arg5: memref<1280x128xf32, #tpu.memory_space<vmem>>, %arg6: memref<1x256x128xf32, #tpu.memory_space<vmem>>, %arg7: memref<256x128xf32, #tpu.memory_space<vmem>>, %arg8: memref<256x1280xf32, #tpu.memory_space<vmem>>) attributes {dimension_semantics = [#tpu.dimension_semantics<parallel>], iteration_bounds = array<i64: 2>, scalar_prefetch = 0 : i64, scratch_operands = 2 : i64, tpu.core_type = #tpu.core_type<tc>, window_params = [{transform_indices = @transform_0, window_bounds = array<i64: 1, 256, 128>}, {transform_indices = @transform_1, window_bounds = array<i64: 1, 256, 128>}, {pipeline_mode = #tpu.pipeline_mode<synchronous>, transform_indices = @transform_2, window_bounds = array<i64: 1, 128>}, {pipeline_mode = #tpu.pipeline_mode<synchronous>, transform_indices = @transform_3, window_bounds = array<i64: 1, 128>}, {pipeline_mode = #tpu.pipeline_mode<synchronous>, transform_indices = @transform_4, window_bounds = array<i64: 1280, 128>}, {transform_indices = @transform_5, window_bounds = array<i64: 1, 256, 128>}]} {
    %c0 = arith.constant 0 : index
    %c0_0 = arith.constant 0 : index
    %c0_1 = arith.constant 0 : index
    %0 = vector.load %arg1[%c0, %c0_0, %c0_1] : memref<1x256x128xf32, #tpu.memory_space<vmem>>, vector<1x256x128xf32>
    %1 = vector.shape_cast %0 : vector<1x256x128xf32> to vector<256x128xf32>
    %c0_2 = arith.constant 0 : index
    %c0_3 = arith.constant 0 : index
    %2 = vector.load %arg3[%c0_2, %c0_3] : memref<1x128xf32, #tpu.memory_space<vmem>>, vector<1x128xf32>
    %3 = vector.broadcast %2 : vector<1x128xf32> to vector<256x128xf32>
    %4 = arith.mulf %1, %3 : vector<256x128xf32>
    %c0_4 = arith.constant 0 : index
    %c0_5 = arith.constant 0 : index
    %5 = vector.load %arg4[%c0_4, %c0_5] : memref<1x128xf32, #tpu.memory_space<vmem>>, vector<1x128xf32>
    %6 = vector.broadcast %5 : vector<1x128xf32> to vector<256x128xf32>
    %7 = arith.addf %4, %6 : vector<256x128xf32>
    %cst = arith.constant 1.000000e-01 : f32
    %8 = vector.broadcast %cst : f32 to vector<256x128xf32>
    %9 = arith.mulf %8, %7 : vector<256x128xf32>
    %10 = arith.maximumf %7, %9 : vector<256x128xf32>
    %c0_6 = arith.constant 0 : index
    %c0_7 = arith.constant 0 : index
    %11 = vector.load %arg7[%c0_6, %c0_7] : memref<256x128xf32, #tpu.memory_space<vmem>>, vector<256x128xf32>
    tpu.vector_store %arg7[%c0_6, %c0_7], %10 {strides = array<i32>} : memref<256x128xf32, #tpu.memory_space<vmem>>, vector<256x128xf32>,
    %12 = tpu.iota {dimensions = array<i32: 0>} : vector<256x1xi32>
    %c15_i32 = arith.constant 15 : i32
    %13 = vector.broadcast %c15_i32 : i32 to vector<256x1xi32>
    %14 = arith.andi %12, %13 : vector<256x1xi32>
    %c0_8 = arith.constant 0 : index
    %c0_9 = arith.constant 0 : index
    %15 = vector.load %arg7[%c0_8, %c0_9] : memref<256x128xf32, #tpu.memory_space<vmem>>, vector<256x128xf32>
    %c17_i32 = arith.constant 17 : i32
    %16 = tpu.dynamic_rotate %15 by %c17_i32 dim 0 : vector<256x128xf32>, i32 -> vector<256x128xf32>
    %c16_i32 = arith.constant 16 : i32
    %17 = vector.broadcast %c16_i32 : i32 to vector<256x1xi32>
    %18 = arith.cmpi sge, %12, %17 : vector<256x1xi32>
    %c1_i32 = arith.constant 1 : i32
    %19 = vector.broadcast %c1_i32 : i32 to vector<256x1xi32>
    %20 = arith.cmpi sge, %14, %19 : vector<256x1xi32>
    %21 = arith.andi %18, %20 : vector<256x1xi1>
    %cst_10 = arith.constant 0.000000e+00 : f32
    %22 = vector.broadcast %cst_10 : f32 to vector<256x128xf32>
    %23 = vector.shape_cast %21 : vector<256x1xi1> to vector<256x1xi1>
    %24 = vector.broadcast %23 : vector<256x1xi1> to vector<256x128xi1>
    %25 = arith.select %24, %16, %22 : vector<256x128xi1>, vector<256x128xf32>
    %c0_11 = arith.constant 0 : index
    %c0_12 = arith.constant 0 : index
    %26 = vector.load %arg8[%c0_11, %c0_12] : memref<256x1280xf32, #tpu.memory_space<vmem>>, vector<256x128xf32>
    tpu.vector_store %arg8[%c0_11, %c0_12], %25 {strides = array<i32>} : memref<256x1280xf32, #tpu.memory_space<vmem>>, vector<256x128xf32>,
    %c0_13 = arith.constant 0 : index
    %c0_14 = arith.constant 0 : index
    %27 = vector.load %arg7[%c0_13, %c0_14] : memref<256x128xf32, #tpu.memory_space<vmem>>, vector<256x128xf32>
    %c16_i32_15 = arith.constant 16 : i32
    %28 = tpu.dynamic_rotate %27 by %c16_i32_15 dim 0 : vector<256x128xf32>, i32 -> vector<256x128xf32>
    %c16_i32_16 = arith.constant 16 : i32
    %29 = vector.broadcast %c16_i32_16 : i32 to vector<256x1xi32>
    %30 = arith.cmpi sge, %12, %29 : vector<256x1xi32>
    %cst_17 = arith.constant 0.000000e+00 : f32
    %31 = vector.broadcast %cst_17 : f32 to vector<256x128xf32>
    %32 = vector.shape_cast %30 : vector<256x1xi1> to vector<256x1xi1>
    %33 = vector.broadcast %32 : vector<256x1xi1> to vector<256x128xi1>
    %34 = arith.select %33, %28, %31 : vector<256x128xi1>, vector<256x128xf32>
    %c0_18 = arith.constant 0 : index
    %c128 = arith.constant 128 : index
    %35 = vector.load %arg8[%c0_18, %c128] : memref<256x1280xf32, #tpu.memory_space<vmem>>, vector<256x128xf32>
    tpu.vector_store %arg8[%c0_18, %c128], %34 {strides = array<i32>} : memref<256x1280xf32, #tpu.memory_space<vmem>>, vector<256x128xf32>,
    %c0_19 = arith.constant 0 : index
    %c0_20 = arith.constant 0 : index
    %36 = vector.load %arg7[%c0_19, %c0_20] : memref<256x128xf32, #tpu.memory_space<vmem>>, vector<256x128xf32>
    %c15_i32_21 = arith.constant 15 : i32
    %37 = tpu.dynamic_rotate %36 by %c15_i32_21 dim 0 : vector<256x128xf32>, i32 -> vector<256x128xf32>
    %c16_i32_22 = arith.constant 16 : i32
    %38 = vector.broadcast %c16_i32_22 : i32 to vector<256x1xi32>
    %39 = arith.cmpi sge, %12, %38 : vector<256x1xi32>
    %c15_i32_23 = arith.constant 15 : i32
    %40 = vector.broadcast %c15_i32_23 : i32 to vector<256x1xi32>
    %41 = arith.cmpi slt, %14, %40 : vector<256x1xi32>
    %42 = arith.andi %39, %41 : vector<256x1xi1>
    %cst_24 = arith.constant 0.000000e+00 : f32
    %43 = vector.broadcast %cst_24 : f32 to vector<256x128xf32>
    %44 = vector.shape_cast %42 : vector<256x1xi1> to vector<256x1xi1>
    %45 = vector.broadcast %44 : vector<256x1xi1> to vector<256x128xi1>
    %46 = arith.select %45, %37, %43 : vector<256x128xi1>, vector<256x128xf32>
    %c0_25 = arith.constant 0 : index
    %c256 = arith.constant 256 : index
    %47 = vector.load %arg8[%c0_25, %c256] : memref<256x1280xf32, #tpu.memory_space<vmem>>, vector<256x128xf32>
    tpu.vector_store %arg8[%c0_25, %c256], %46 {strides = array<i32>} : memref<256x1280xf32, #tpu.memory_space<vmem>>, vector<256x128xf32>,
    %c0_26 = arith.constant 0 : index
    %c0_27 = arith.constant 0 : index
    %48 = vector.load %arg7[%c0_26, %c0_27] : memref<256x128xf32, #tpu.memory_space<vmem>>, vector<256x128xf32>
    %c1_i32_28 = arith.constant 1 : i32
    %49 = tpu.dynamic_rotate %48 by %c1_i32_28 dim 0 : vector<256x128xf32>, i32 -> vector<256x128xf32>
    %c1_i32_29 = arith.constant 1 : i32
    %50 = vector.broadcast %c1_i32_29 : i32 to vector<256x1xi32>
    %51 = arith.cmpi sge, %14, %50 : vector<256x1xi32>
    %cst_30 = arith.constant 0.000000e+00 : f32
    %52 = vector.broadcast %cst_30 : f32 to vector<256x128xf32>
    %53 = vector.shape_cast %51 : vector<256x1xi1> to vector<256x1xi1>
    %54 = vector.broadcast %53 : vector<256x1xi1> to vector<256x128xi1>
    %55 = arith.select %54, %49, %52 : vector<256x128xi1>, vector<256x128xf32>
    %c0_31 = arith.constant 0 : index
    %c384 = arith.constant 384 : index
    %56 = vector.load %arg8[%c0_31, %c384] : memref<256x1280xf32, #tpu.memory_space<vmem>>, vector<256x128xf32>
    tpu.vector_store %arg8[%c0_31, %c384], %55 {strides = array<i32>} : memref<256x1280xf32, #tpu.memory_space<vmem>>, vector<256x128xf32>,
    %c0_32 = arith.constant 0 : index
    %c0_33 = arith.constant 0 : index
    %57 = vector.load %arg7[%c0_32, %c0_33] : memref<256x128xf32, #tpu.memory_space<vmem>>, vector<256x128xf32>
    %c0_34 = arith.constant 0 : index
    %c512 = arith.constant 512 : index
    %58 = vector.load %arg8[%c0_34, %c512] : memref<256x1280xf32, #tpu.memory_space<vmem>>, vector<256x128xf32>
    tpu.vector_store %arg8[%c0_34, %c512], %57 {strides = array<i32>} : memref<256x1280xf32, #tpu.memory_space<vmem>>, vector<256x128xf32>,
    %c0_35 = arith.constant 0 : index
    %c0_36 = arith.constant 0 : index
    %59 = vector.load %arg7[%c0_35, %c0_36] : memref<256x128xf32, #tpu.memory_space<vmem>>, vector<256x128xf32>
    %c255_i32 = arith.constant 255 : i32
    %60 = tpu.dynamic_rotate %59 by %c255_i32 dim 0 : vector<256x128xf32>, i32 -> vector<256x128xf32>
    %c15_i32_37 = arith.constant 15 : i32
    %61 = vector.broadcast %c15_i32_37 : i32 to vector<256x1xi32>
    %62 = arith.cmpi slt, %14, %61 : vector<256x1xi32>
    %cst_38 = arith.constant 0.000000e+00 : f32
    %63 = vector.broadcast %cst_38 : f32 to vector<256x128xf32>
    %64 = vector.shape_cast %62 : vector<256x1xi1> to vector<256x1xi1>
    %65 = vector.broadcast %64 : vector<256x1xi1> to vector<256x128xi1>
    %66 = arith.select %65, %60, %63 : vector<256x128xi1>, vector<256x128xf32>
    %c0_39 = arith.constant 0 : index
    %c640 = arith.constant 640 : index
    %67 = vector.load %arg8[%c0_39, %c640] : memref<256x1280xf32, #tpu.memory_space<vmem>>, vector<256x128xf32>
    tpu.vector_store %arg8[%c0_39, %c640], %66 {strides = array<i32>} : memref<256x1280xf32, #tpu.memory_space<vmem>>, vector<256x128xf32>,
    %c0_40 = arith.constant 0 : index
    %c0_41 = arith.constant 0 : index
    %68 = vector.load %arg7[%c0_40, %c0_41] : memref<256x128xf32, #tpu.memory_space<vmem>>, vector<256x128xf32>
    %c241_i32 = arith.constant 241 : i32
    %69 = tpu.dynamic_rotate %68 by %c241_i32 dim 0 : vector<256x128xf32>, i32 -> vector<256x128xf32>
    %c240_i32 = arith.constant 240 : i32
    %70 = vector.broadcast %c240_i32 : i32 to vector<256x1xi32>
    %71 = arith.cmpi slt, %12, %70 : vector<256x1xi32>
    %c1_i32_42 = arith.constant 1 : i32
    %72 = vector.broadcast %c1_i32_42 : i32 to vector<256x1xi32>
    %73 = arith.cmpi sge, %14, %72 : vector<256x1xi32>
    %74 = arith.andi %71, %73 : vector<256x1xi1>
    %cst_43 = arith.constant 0.000000e+00 : f32
    %75 = vector.broadcast %cst_43 : f32 to vector<256x128xf32>
    %76 = vector.shape_cast %74 : vector<256x1xi1> to vector<256x1xi1>
    %77 = vector.broadcast %76 : vector<256x1xi1> to vector<256x128xi1>
    %78 = arith.select %77, %69, %75 : vector<256x128xi1>, vector<256x128xf32>
    %c0_44 = arith.constant 0 : index
    %c768 = arith.constant 768 : index
    %79 = vector.load %arg8[%c0_44, %c768] : memref<256x1280xf32, #tpu.memory_space<vmem>>, vector<256x128xf32>
    tpu.vector_store %arg8[%c0_44, %c768], %78 {strides = array<i32>} : memref<256x1280xf32, #tpu.memory_space<vmem>>, vector<256x128xf32>,
    %c0_45 = arith.constant 0 : index
    %c0_46 = arith.constant 0 : index
    %80 = vector.load %arg7[%c0_45, %c0_46] : memref<256x128xf32, #tpu.memory_space<vmem>>, vector<256x128xf32>
    %c240_i32_47 = arith.constant 240 : i32
    %81 = tpu.dynamic_rotate %80 by %c240_i32_47 dim 0 : vector<256x128xf32>, i32 -> vector<256x128xf32>
    %c240_i32_48 = arith.constant 240 : i32
    %82 = vector.broadcast %c240_i32_48 : i32 to vector<256x1xi32>
    %83 = arith.cmpi slt, %12, %82 : vector<256x1xi32>
    %cst_49 = arith.constant 0.000000e+00 : f32
    %84 = vector.broadcast %cst_49 : f32 to vector<256x128xf32>
    %85 = vector.shape_cast %83 : vector<256x1xi1> to vector<256x1xi1>
    %86 = vector.broadcast %85 : vector<256x1xi1> to vector<256x128xi1>
    %87 = arith.select %86, %81, %84 : vector<256x128xi1>, vector<256x128xf32>
    %c0_50 = arith.constant 0 : index
    %c896 = arith.constant 896 : index
    %88 = vector.load %arg8[%c0_50, %c896] : memref<256x1280xf32, #tpu.memory_space<vmem>>, vector<256x128xf32>
    tpu.vector_store %arg8[%c0_50, %c896], %87 {strides = array<i32>} : memref<256x1280xf32, #tpu.memory_space<vmem>>, vector<256x128xf32>,
    %c0_51 = arith.constant 0 : index
    %c0_52 = arith.constant 0 : index
    %89 = vector.load %arg7[%c0_51, %c0_52] : memref<256x128xf32, #tpu.memory_space<vmem>>, vector<256x128xf32>
    %c239_i32 = arith.constant 239 : i32
    %90 = tpu.dynamic_rotate %89 by %c239_i32 dim 0 : vector<256x128xf32>, i32 -> vector<256x128xf32>
    %c240_i32_53 = arith.constant 240 : i32
    %91 = vector.broadcast %c240_i32_53 : i32 to vector<256x1xi32>
    %92 = arith.cmpi slt, %12, %91 : vector<256x1xi32>
    %c15_i32_54 = arith.constant 15 : i32
    %93 = vector.broadcast %c15_i32_54 : i32 to vector<256x1xi32>
    %94 = arith.cmpi slt, %14, %93 : vector<256x1xi32>
    %95 = arith.andi %92, %94 : vector<256x1xi1>
    %cst_55 = arith.constant 0.000000e+00 : f32
    %96 = vector.broadcast %cst_55 : f32 to vector<256x128xf32>
    %97 = vector.shape_cast %95 : vector<256x1xi1> to vector<256x1xi1>
    %98 = vector.broadcast %97 : vector<256x1xi1> to vector<256x128xi1>
    %99 = arith.select %98, %90, %96 : vector<256x128xi1>, vector<256x128xf32>
    %c0_56 = arith.constant 0 : index
    %c1024 = arith.constant 1024 : index
    %100 = vector.load %arg8[%c0_56, %c1024] : memref<256x1280xf32, #tpu.memory_space<vmem>>, vector<256x128xf32>
    tpu.vector_store %arg8[%c0_56, %c1024], %99 {strides = array<i32>} : memref<256x1280xf32, #tpu.memory_space<vmem>>, vector<256x128xf32>,
    %c0_57 = arith.constant 0 : index
    %c0_58 = arith.constant 0 : index
    %c0_59 = arith.constant 0 : index
    %101 = vector.load %arg2[%c0_57, %c0_58, %c0_59] : memref<1x256x128xf32, #tpu.memory_space<vmem>>, vector<1x256x128xf32>
    %102 = vector.shape_cast %101 : vector<1x256x128xf32> to vector<256x128xf32>
    %c0_60 = arith.constant 0 : index
    %c1152 = arith.constant 1152 : index
    %103 = vector.load %arg8[%c0_60, %c1152] : memref<256x1280xf32, #tpu.memory_space<vmem>>, vector<256x128xf32>
    tpu.vector_store %arg8[%c0_60, %c1152], %102 {strides = array<i32>} : memref<256x1280xf32, #tpu.memory_space<vmem>>, vector<256x128xf32>,
    %c0_61 = arith.constant 0 : index
    %c0_62 = arith.constant 0 : index
    %104 = vector.load %arg8[%c0_61, %c0_62] : memref<256x1280xf32, #tpu.memory_space<vmem>>, vector<256x1280xf32>
    %c0_63 = arith.constant 0 : index
    %c0_64 = arith.constant 0 : index
    %105 = vector.load %arg5[%c0_63, %c0_64] : memref<1280x128xf32, #tpu.memory_space<vmem>>, vector<1280x128xf32>
    %cst_65 = arith.constant dense<0.000000e+00> : vector<256x128xf32>
    %106 = tpu.matmul %104, %105, %cst_65 {dimension_numbers = #tpu.dot_dimension_numbers<[1], [0], [0], [1], [0, 0, 1, 1], [], []>} : vector<256x1280xf32>, vector<1280x128xf32>, vector<256x128xf32> -> vector<256x128xf32>
    %c0_66 = arith.constant 0 : index
    %c0_67 = arith.constant 0 : index
    %c0_68 = arith.constant 0 : index
    %107 = vector.load %arg6[%c0_66, %c0_67, %c0_68] : memref<1x256x128xf32, #tpu.memory_space<vmem>>, vector<1x256x128xf32>
    %108 = vector.shape_cast %107 : vector<1x256x128xf32> to vector<256x128xf32>
    %109 = vector.shape_cast %106 : vector<256x128xf32> to vector<1x256x128xf32>
    tpu.vector_store %arg6[%c0_66, %c0_67, %c0_68], %109 {strides = array<i32>} : memref<1x256x128xf32, #tpu.memory_space<vmem>>, vector<1x256x128xf32>,
    return
  }
  func.func @transform_0(%arg0: i32) -> (i32, i32, i32) {
    %c0_i32 = arith.constant 0 : i32
    %c0_i32_0 = arith.constant 0 : i32
    %c0_i32_1 = arith.constant 0 : i32
    return %arg0, %c0_i32, %c0_i32_0 : i32, i32, i32
  }
  func.func @transform_1(%arg0: i32) -> (i32, i32, i32) {
    %c0_i32 = arith.constant 0 : i32
    %c0_i32_0 = arith.constant 0 : i32
    %c0_i32_1 = arith.constant 0 : i32
    return %arg0, %c0_i32, %c0_i32_0 : i32, i32, i32
  }
  func.func @transform_2(%arg0: i32) -> (i32, i32) {
    %c0_i32 = arith.constant 0 : i32
    %c0_i32_0 = arith.constant 0 : i32
    %c0_i32_1 = arith.constant 0 : i32
    return %c0_i32, %c0_i32_0 : i32, i32
  }
  func.func @transform_3(%arg0: i32) -> (i32, i32) {
    %c0_i32 = arith.constant 0 : i32
    %c0_i32_0 = arith.constant 0 : i32
    %c0_i32_1 = arith.constant 0 : i32
    return %c0_i32, %c0_i32_0 : i32, i32
  }
  func.func @transform_4(%arg0: i32) -> (i32, i32) {
    %c0_i32 = arith.constant 0 : i32
    %c0_i32_0 = arith.constant 0 : i32
    %c0_i32_1 = arith.constant 0 : i32
    return %c0_i32, %c0_i32_0 : i32, i32
  }
  func.func @transform_5(%arg0: i32) -> (i32, i32, i32) {
    %c0_i32 = arith.constant 0 : i32
    %c0_i32_0 = arith.constant 0 : i32
    %c0_i32_1 = arith.constant 0 : i32
    return %arg0, %c0_i32, %c0_i32_0 : i32, i32, i32
  }
}

</mosaic_0001>

<llo_original>
// kernel: residual_forward.3
$region0: #{residual_forward.3}
  #allocation0 [shape = 'u32[]', space=smem, size = 0x4, offset = 0x4, fixed_abs, tag = 'smem constant byte address 0x4 - core index']
  #allocation1 [shape = 'u32[72,128]{1,0:T(1,128)}', space=vmem, size = 0x9000, scoped, tag = 'internal scratch']
  %s0 = inlined_call_operand.vmem [shape: f32[2,256,128], index: 0, kind: input, shape index: {}]
  %s1 = inlined_call_operand.vmem [shape: f32[1,128], index: 1, kind: output, shape index: {0}]
  %s2 = inlined_call_operand.vmem [shape: f32[1,128], index: 2, kind: output, shape index: {1}]
  %3 = xla_tuple %s1, %s2
  %s4 = sld [smem:[#allocation0]]
  $region49: #{residual_forward.3} parent=0
    _
  %s6 = ssub.s32 1, %s4
  %s7 = scalar_select 0, %s6, %s4
  loop: start=0, step=1, limit=4
  $region2: #{residual_forward.3} parent=0 // loop_pre_header
    _
  $region3: #{residual_forward.3} parent=0 // loop_header
    %s9 = sphi 0, %s13
    %p10 = scmp.ge.s32.totalorder %s9, 4
    %s19 = sphi 0, %s21
    %s22 = sphi 0, %s19
    %s23 = sphi 0, %s22
    %s39 = sphi 0, %s23
    %s43 = sphi 0, %s43
    %s45 = sphi 0, %s43
    %s46 = sphi 0, %s45
    %s60 = sphi 0, %s46
    %s64 = sphi 0, %s64
    %s66 = sphi 0, %s64
    %s67 = sphi 0, %s66
    %s81 = sphi 0, %s67
  $region4: #{residual_forward.3} parent=0 // loop_header_branch
    %12 = sbr.rel (%p10) target = $region8
  $region5: #{residual_forward.3} parent=0 // loop_body
    %s14 = ssub.s32 %s9, 1
    %s15 = ssub.s32 %s9, 2
    %s16 = sadd.s32 %s9, 1
    %s17 = ssub.s32 %s9, %s16
    %p18 = scmp.eq.s32.totalorder %s17, 0
    %s20 = sadd.s32 %s19, 1
    %s21 = scalar_select %p18, %s19, %s20
    %p24 = pneg %p18
    %p25 = scmp.eq.s32.totalorder %s9, 1
    %p26 = por %p24, %p25
    %p27 = scmp.ne.s32.totalorder %s19, %s22
    %p28 = scmp.eq.s32.totalorder %s9, 0
    %p29 = por %p27, %p28
    %p30 = scmp.ne.s32.totalorder %s19, %s22
    %p31 = scmp.eq.s32.totalorder %s14, 1
    %p32 = por %p30, %p31
    %p33 = scmp.ne.s32.totalorder %s22, %s23
    %p34 = scmp.eq.s32.totalorder %s14, 0
    %p35 = por %p33, %p34
    %p36 = scmp.ne.s32.totalorder %s22, %s23
    %p37 = scmp.eq.s32.totalorder %s15, 1
    %p38 = por %p36, %p37
    %p40 = scmp.ne.s32.totalorder %s23, %s39
    %p41 = scmp.eq.s32.totalorder %s15, 0
    %p42 = por %p40, %p41
    %s44 = sadd.s32 %s43, 1
    %p47 = scmp.eq.s32.totalorder %s9, 1
    %p48 = scmp.ne.s32.totalorder %s43, %s45
    %p49 = scmp.eq.s32.totalorder %s9, 0
    %p50 = por %p48, %p49
    %p51 = scmp.ne.s32.totalorder %s43, %s45
    %p52 = scmp.eq.s32.totalorder %s14, 1
    %p53 = por %p51, %p52
    %p54 = scmp.ne.s32.totalorder %s45, %s46
    %p55 = scmp.eq.s32.totalorder %s14, 0
    %p56 = por %p54, %p55
    %p57 = scmp.ne.s32.totalorder %s45, %s46
    %p58 = scmp.eq.s32.totalorder %s15, 1
    %p59 = por %p57, %p58
    %p61 = scmp.ne.s32.totalorder %s46, %s60
    %p62 = scmp.eq.s32.totalorder %s15, 0
    %p63 = por %p61, %p62
    %s65 = sadd.s32 %s64, 1
    %p68 = scmp.eq.s32.totalorder %s9, 1
    %p69 = scmp.ne.s32.totalorder %s64, %s66
    %p70 = scmp.eq.s32.totalorder %s9, 0
    %p71 = por %p69, %p70
    %p72 = scmp.ne.s32.totalorder %s64, %s66
    %p73 = scmp.eq.s32.totalorder %s14, 1
    %p74 = por %p72, %p73
    %p75 = scmp.ne.s32.totalorder %s66, %s67
    %p76 = scmp.eq.s32.totalorder %s14, 0
    %p77 = por %p75, %p76
    %p78 = scmp.ne.s32.totalorder %s66, %s67
    %p79 = scmp.eq.s32.totalorder %s15, 1
    %p80 = por %p78, %p79
    %p82 = scmp.ne.s32.totalorder %s67, %s81
    %p83 = scmp.eq.s32.totalorder %s15, 0
    %p84 = por %p82, %p83
    %p85 = scmp.le.s32.totalorder 1, %s9
    %p86 = scmp.lt.s32.totalorder %s9, 3
    %p87 = pnand %p85, %p86
    %p88 = pneg %p87
    // Predicated region
    $region9: #{residual_forward.3} parent=5 // pred_check
      _
    $region10: #{residual_forward.3} parent=5 // pred_check_branch
      %90 = sbr.rel (%p87) target = $region12
    $region11: #{residual_forward.3} parent=5 // pred_region
      %s91 = ssub.s32 %s9, 1
    $region12: #{residual_forward.3} parent=5 // pred_fallthru
      _
    %p92 = scmp.lt.s32.totalorder %s9, 2
    // Predicated region
    $region13: #{residual_forward.3} parent=5 // pred_check
      %p93 = pneg %p92
    $region14: #{residual_forward.3} parent=5 // pred_check_branch
      %95 = sbr.rel (%p93) target = $region16
    $region15: #{residual_forward.3} parent=5 // pred_region
      // Predicated region
      $region17: #{residual_forward.3} parent=15 // pred_check
        %p96 = pneg %p29
      $region18: #{residual_forward.3} parent=15 // pred_check_branch
        %98 = sbr.rel (%p96) target = $region20
      $region19: #{residual_forward.3} parent=15 // pred_region
        %p99 = scmp.lt.s32.totalorder %s9, 1
        %s100 = scalar_select %p99, %s9, 1
        %s101 = smul.addr %s100, 32
        %s102 = smul.addr %s101, 8
        %s103 = scalar_lea.vmem %s0, %s102
      $region20: #{residual_forward.3} parent=15 // pred_fallthru
        _
    $region16: #{residual_forward.3} parent=5 // pred_fallthru
      _
    %p104 = scmp.le.s32.totalorder 1, %s9
    %p105 = scmp.lt.s32.totalorder %s9, 3
    %p106 = pnand %p104, %p105
    %p107 = pneg %p106
    // Predicated region
    $region21: #{residual_forward.3} parent=5 // pred_check
      _
    $region22: #{residual_forward.3} parent=5 // pred_check_branch
      %109 = sbr.rel (%p106) target = $region24
    $region23: #{residual_forward.3} parent=5 // pred_region
      %s110 = ssub.s32 %s9, 1
      %p111 = scmp.lt.s32.totalorder %s14, 1
      %s112 = scalar_select %p111, %s14, 1
      %s113 = smul.addr %s112, 32
      %s114 = smul.addr %s113, 8
      %s115 = scalar_lea.vmem %s0, %s114
      %p116 = pneg %p35
      %p117 = pneg %p32
      %p118 = pneg %p56
      %p119 = pneg %p53
      %p120 = pneg %p77
      %p121 = pneg %p74
      %p122 = scmp.lt.s32.totalorder %s14, 1
      %s123 = scalar_select %p122, %s14, 1
      %s124 = smul.addr %s123, 32
      %s125 = smul.addr %s124, 8
      %s126 = scalar_lea.vmem %s0, %s125
      %p127 = scmp.eq.s32.totalorder %s14, 0
      // Predicated region
      $region25: #{residual_forward.3} parent=23 // pred_check
        %p128 = pneg %p127
      $region26: #{residual_forward.3} parent=23 // pred_check_branch
        %130 = sbr.rel (%p128) target = $region28
      $region27: #{residual_forward.3} parent=23 // pred_region
        %131 = vst [vmem:[%s1] sm:$0x1] 0.0
        %132 = vst [vmem:[%s2] sm:$0x1] 0.0
      $region28: #{residual_forward.3} parent=23 // pred_fallthru
        _
      %v133 = vld [vmem:[%s126] sm:$0xff]
      %v134 = vld [vmem:[%s126 + $0x8] sm:$0xff]
      %v135 = vld [vmem:[%s126 + $0x10] sm:$0xff]
      %v136 = vld [vmem:[%s126 + $0x18] sm:$0xff]
      %v137 = vld [vmem:[%s126 + $0x20] sm:$0xff]
      %v138 = vld [vmem:[%s126 + $0x28] sm:$0xff]
      %v139 = vld [vmem:[%s126 + $0x30] sm:$0xff]
      %v140 = vld [vmem:[%s126 + $0x38] sm:$0xff]
      %v141 = vld [vmem:[%s126 + $0x40] sm:$0xff]
      %v142 = vld [vmem:[%s126 + $0x48] sm:$0xff]
      %v143 = vld [vmem:[%s126 + $0x50] sm:$0xff]
      %v144 = vld [vmem:[%s126 + $0x58] sm:$0xff]
      %v145 = vld [vmem:[%s126 + $0x60] sm:$0xff]
      %v146 = vld [vmem:[%s126 + $0x68] sm:$0xff]
      %v147 = vld [vmem:[%s126 + $0x70] sm:$0xff]
      %v148 = vld [vmem:[%s126 + $0x78] sm:$0xff]
      %v149 = vld [vmem:[%s126 + $0x80] sm:$0xff]
      %v150 = vld [vmem:[%s126 + $0x88] sm:$0xff]
      %v151 = vld [vmem:[%s126 + $0x90] sm:$0xff]
      %v152 = vld [vmem:[%s126 + $0x98] sm:$0xff]
      %v153 = vld [vmem:[%s126 + $0xa0] sm:$0xff]
      %v154 = vld [vmem:[%s126 + $0xa8] sm:$0xff]
      %v155 = vld [vmem:[%s126 + $0xb0] sm:$0xff]
      %v156 = vld [vmem:[%s126 + $0xb8] sm:$0xff]
      %v157 = vld [vmem:[%s126 + $0xc0] sm:$0xff]
      %v158 = vld [vmem:[%s126 + $0xc8] sm:$0xff]
      %v159 = vld [vmem:[%s126 + $0xd0] sm:$0xff]
      %v160 = vld [vmem:[%s126 + $0xd8] sm:$0xff]
      %v161 = vld [vmem:[%s126 + $0xe0] sm:$0xff]
      %v162 = vld [vmem:[%s126 + $0xe8] sm:$0xff]
      %v163 = vld [vmem:[%s126 + $0xf0] sm:$0xff]
      %v164 = vld [vmem:[%s126 + $0xf8] sm:$0xff]
      %v165 = vld [vmem:[%s1] sm:$0x1]
      %v166 = vadd.f32 %v133, %v134
      %v167 = vadd.f32 %v166, %v135
      %v168 = vadd.f32 %v167, %v136
      %v169 = vadd.f32 %v168, %v137
      %v170 = vadd.f32 %v169, %v138
      %v171 = vadd.f32 %v170, %v139
      %v172 = vadd.f32 %v171, %v140
      %v173 = vadd.f32 %v172, %v141
      %v174 = vadd.f32 %v173, %v142
      %v175 = vadd.f32 %v174, %v143
      %v176 = vadd.f32 %v175, %v144
      %v177 = vadd.f32 %v176, %v145
      %v178 = vadd.f32 %v177, %v146
      %v179 = vadd.f32 %v178, %v147
      %v180 = vadd.f32 %v179, %v148
      %v181 = vadd.f32 %v180, %v149
      %v182 = vadd.f32 %v181, %v150
      %v183 = vadd.f32 %v182, %v151
      %v184 = vadd.f32 %v183, %v152
      %v185 = vadd.f32 %v184, %v153
      %v186 = vadd.f32 %v185, %v154
      %v187 = vadd.f32 %v186, %v155
      %v188 = vadd.f32 %v187, %v156
      %v189 = vadd.f32 %v188, %v157
      %v190 = vadd.f32 %v189, %v158
      %v191 = vadd.f32 %v190, %v159
      %v192 = vadd.f32 %v191, %v160
      %v193 = vadd.f32 %v192, %v161
      %v194 = vadd.f32 %v193, %v162
      %v195 = vadd.f32 %v194, %v163
      %v196 = vadd.f32 %v195, %v164
      %v197 = vrot.slane %v196, 4
      %v198 = vadd.f32 %v196, %v197
      %v199 = vrot.slane %v198, 2
      %v200 = vadd.f32 %v198, %v199
      %v201 = vrot.slane %v200, 1
      %v202 = vadd.f32 %v200, %v201
      %v203 = vadd.f32 %v165, %v202
      %204 = vst [vmem:[%s1] sm:$0x1] %v203
      %v205 = vld [vmem:[%s2] sm:$0x1]
      %v206 = vmul.f32 %v133, %v133
      %v207 = vmul.f32 %v134, %v134
      %v208 = vmul.f32 %v135, %v135
      %v209 = vmul.f32 %v136, %v136
      %v210 = vmul.f32 %v137, %v137
      %v211 = vmul.f32 %v138, %v138
      %v212 = vmul.f32 %v139, %v139
      %v213 = vmul.f32 %v140, %v140
      %v214 = vmul.f32 %v141, %v141
      %v215 = vmul.f32 %v142, %v142
      %v216 = vmul.f32 %v143, %v143
      %v217 = vmul.f32 %v144, %v144
      %v218 = vmul.f32 %v145, %v145
      %v219 = vmul.f32 %v146, %v146
      %v220 = vmul.f32 %v147, %v147
      %v221 = vmul.f32 %v148, %v148
      %v222 = vmul.f32 %v149, %v149
      %v223 = vmul.f32 %v150, %v150
      %v224 = vmul.f32 %v151, %v151
      %v225 = vmul.f32 %v152, %v152
      %v226 = vmul.f32 %v153, %v153
      %v227 = vmul.f32 %v154, %v154
      %v228 = vmul.f32 %v155, %v155
      %v229 = vmul.f32 %v156, %v156
      %v230 = vmul.f32 %v157, %v157
      %v231 = vmul.f32 %v158, %v158
      %v232 = vmul.f32 %v159, %v159
      %v233 = vmul.f32 %v160, %v160
      %v234 = vmul.f32 %v161, %v161
      %v235 = vmul.f32 %v162, %v162
      %v236 = vmul.f32 %v163, %v163
      %v237 = vmul.f32 %v164, %v164
      %v238 = vadd.f32 %v206, %v207
      %v239 = vadd.f32 %v238, %v208
      %v240 = vadd.f32 %v239, %v209
      %v241 = vadd.f32 %v240, %v210
      %v242 = vadd.f32 %v241, %v211
      %v243 = vadd.f32 %v242, %v212
      %v244 = vadd.f32 %v243, %v213
      %v245 = vadd.f32 %v244, %v214
      %v246 = vadd.f32 %v245, %v215
      %v247 = vadd.f32 %v246, %v216
      %v248 = vadd.f32 %v247, %v217
      %v249 = vadd.f32 %v248, %v218
      %v250 = vadd.f32 %v249, %v219
      %v251 = vadd.f32 %v250, %v220
      %v252 = vadd.f32 %v251, %v221
      %v253 = vadd.f32 %v252, %v222
      %v254 = vadd.f32 %v253, %v223
      %v255 = vadd.f32 %v254, %v224
      %v256 = vadd.f32 %v255, %v225
      %v257 = vadd.f32 %v256, %v226
      %v258 = vadd.f32 %v257, %v227
      %v259 = vadd.f32 %v258, %v228
      %v260 = vadd.f32 %v259, %v229
      %v261 = vadd.f32 %v260, %v230
      %v262 = vadd.f32 %v261, %v231
      %v263 = vadd.f32 %v262, %v232
      %v264 = vadd.f32 %v263, %v233
      %v265 = vadd.f32 %v264, %v234
      %v266 = vadd.f32 %v265, %v235
      %v267 = vadd.f32 %v266, %v236
      %v268 = vadd.f32 %v267, %v237
      %v269 = vrot.slane %v268, 4
      %v270 = vadd.f32 %v268, %v269
      %v271 = vrot.slane %v270, 2
      %v272 = vadd.f32 %v270, %v271
      %v273 = vrot.slane %v272, 1
      %v274 = vadd.f32 %v272, %v273
      %v275 = vadd.f32 %v205, %v274
      %276 = vst [vmem:[%s2] sm:$0x1] %v275
      // Predicated region
      $region29: #{residual_forward.3} parent=23 // pred_check
        %p277 = pneg %p53
      $region30: #{residual_forward.3} parent=23 // pred_check_branch
        %279 = sbr.rel (%p277) target = $region32
      $region31: #{residual_forward.3} parent=23 // pred_region
        _
      $region32: #{residual_forward.3} parent=23 // pred_fallthru
        _
      // Predicated region
      $region33: #{residual_forward.3} parent=23 // pred_check
        %p280 = pneg %p74
      $region34: #{residual_forward.3} parent=23 // pred_check_branch
        %282 = sbr.rel (%p280) target = $region36
      $region35: #{residual_forward.3} parent=23 // pred_region
        _
      $region36: #{residual_forward.3} parent=23 // pred_fallthru
        _
      // Predicated region
      $region37: #{residual_forward.3} parent=23 // pred_check
        %p283 = pneg %p53
      $region38: #{residual_forward.3} parent=23 // pred_check_branch
        %285 = sbr.rel (%p283) target = $region40
      $region39: #{residual_forward.3} parent=23 // pred_region
        _
      $region40: #{residual_forward.3} parent=23 // pred_fallthru
        _
      // Predicated region
      $region41: #{residual_forward.3} parent=23 // pred_check
        %p286 = pneg %p74
      $region42: #{residual_forward.3} parent=23 // pred_check_branch
        %288 = sbr.rel (%p286) target = $region44
      $region43: #{residual_forward.3} parent=23 // pred_region
        _
      $region44: #{residual_forward.3} parent=23 // pred_fallthru
        _
    $region24: #{residual_forward.3} parent=5 // pred_fallthru
      _
    %p289 = scmp.le.s32.totalorder 2, %s9
    // Predicated region
    $region45: #{residual_forward.3} parent=5 // pred_check
      %p290 = pneg %p289
    $region46: #{residual_forward.3} parent=5 // pred_check_branch
      %292 = sbr.rel (%p290) target = $region48
    $region47: #{residual_forward.3} parent=5 // pred_region
      %s293 = ssub.s32 %s9, 2
    $region48: #{residual_forward.3} parent=5 // pred_fallthru
      _
  $region6: #{residual_forward.3} parent=0 // loop_footer
    %s13 = sadd.s32 1, %s9
  $region7: #{residual_forward.3} parent=0 // loop_footer_branch
    %8 = sbr.rel target = $region3
  $region8: #{residual_forward.3} parent=0 // loop_exit
    _

// kernel: residual_forward.4
$region0: #{residual_forward.4}
  #allocation0 [shape = 'u32[]', space=smem, size = 0x4, offset = 0x4, fixed_abs, tag = 'smem constant byte address 0x4 - core index']
  #allocation1 [shape = 'u32[72,128]{1,0:T(1,128)}', space=vmem, size = 0x9000, scoped, tag = 'internal scratch']
  #allocation2 [shape = 'f32[256,128]{1,0:T(8,128)}', space=vmem, size = 0x20000, scoped, tag = 'scratch operand']
  #allocation3 [shape = 'f32[256,1152]{1,0:T(8,128)}', space=vmem, size = 0x120000, scoped, tag = 'scratch operand']
  %s0 = inlined_call_operand.vmem [shape: f32[2,256,128], index: 0, kind: input, shape index: {}]
  %s1 = inlined_call_operand.vmem [shape: f32[1,128], index: 1, kind: input, shape index: {}]
  %s2 = inlined_call_operand.vmem [shape: f32[1,128], index: 2, kind: input, shape index: {}]
  %s3 = inlined_call_operand.vmem [shape: f32[1152,128], index: 3, kind: input, shape index: {}]
  %s4 = inlined_call_operand.vmem [shape: f32[2,256,128], index: 4, kind: output, shape index: {0}]
  %s5 = inlined_call_operand.vmem [shape: f32[1,128], index: 5, kind: output, shape index: {1}]
  %s6 = inlined_call_operand.vmem [shape: f32[1,128], index: 6, kind: output, shape index: {2}]
  %7 = xla_tuple %s4, %s5, %s6
  %s8 = sld [smem:[#allocation0]]
  $region69: #{residual_forward.4} parent=0
    _
  %s10 = ssub.s32 1, %s8
  %s11 = scalar_select 0, %s10, %s8
  loop: start=0, step=1, limit=4
  $region2: #{residual_forward.4} parent=0 // loop_pre_header
    _
  $region3: #{residual_forward.4} parent=0 // loop_header
    %s13 = sphi 0, %s17
    %p14 = scmp.ge.s32.totalorder %s13, 4
    %s23 = sphi 0, %s25
    %s26 = sphi 0, %s23
    %s27 = sphi 0, %s26
    %s43 = sphi 0, %s27
    %s47 = sphi 0, %s47
    %s49 = sphi 0, %s47
    %s50 = sphi 0, %s49
    %s64 = sphi 0, %s50
    %s68 = sphi 0, %s68
    %s70 = sphi 0, %s68
    %s71 = sphi 0, %s70
    %s85 = sphi 0, %s71
    %s89 = sphi 0, %s89
    %s91 = sphi 0, %s89
    %s92 = sphi 0, %s91
    %s106 = sphi 0, %s92
    %s112 = sphi 0, %s114
    %s115 = sphi 0, %s112
    %s116 = sphi 0, %s115
    %s132 = sphi 0, %s116
    %s136 = sphi 0, %s136
    %s138 = sphi 0, %s136
    %s139 = sphi 0, %s138
    %s153 = sphi 0, %s139
    %s157 = sphi 0, %s157
    %s159 = sphi 0, %s157
    %s160 = sphi 0, %s159
    %s174 = sphi 0, %s160
  $region4: #{residual_forward.4} parent=0 // loop_header_branch
    %16 = sbr.rel (%p14) target = $region8
  $region5: #{residual_forward.4} parent=0 // loop_body
    %s18 = ssub.s32 %s13, 1
    %s19 = ssub.s32 %s13, 2
    %s20 = sadd.s32 %s13, 1
    %s21 = ssub.s32 %s13, %s20
    %p22 = scmp.eq.s32.totalorder %s21, 0
    %s24 = sadd.s32 %s23, 1
    %s25 = scalar_select %p22, %s23, %s24
    %p28 = pneg %p22
    %p29 = scmp.eq.s32.totalorder %s13, 1
    %p30 = por %p28, %p29
    %p31 = scmp.ne.s32.totalorder %s23, %s26
    %p32 = scmp.eq.s32.totalorder %s13, 0
    %p33 = por %p31, %p32
    %p34 = scmp.ne.s32.totalorder %s23, %s26
    %p35 = scmp.eq.s32.totalorder %s18, 1
    %p36 = por %p34, %p35
    %p37 = scmp.ne.s32.totalorder %s26, %s27
    %p38 = scmp.eq.s32.totalorder %s18, 0
    %p39 = por %p37, %p38
    %p40 = scmp.ne.s32.totalorder %s26, %s27
    %p41 = scmp.eq.s32.totalorder %s19, 1
    %p42 = por %p40, %p41
    %p44 = scmp.ne.s32.totalorder %s27, %s43
    %p45 = scmp.eq.s32.totalorder %s19, 0
    %p46 = por %p44, %p45
    %s48 = sadd.s32 %s47, 1
    %p51 = scmp.eq.s32.totalorder %s13, 1
    %p52 = scmp.ne.s32.totalorder %s47, %s49
    %p53 = scmp.eq.s32.totalorder %s13, 0
    %p54 = por %p52, %p53
    %p55 = scmp.ne.s32.totalorder %s47, %s49
    %p56 = scmp.eq.s32.totalorder %s18, 1
    %p57 = por %p55, %p56
    %p58 = scmp.ne.s32.totalorder %s49, %s50
    %p59 = scmp.eq.s32.totalorder %s18, 0
    %p60 = por %p58, %p59
    %p61 = scmp.ne.s32.totalorder %s49, %s50
    %p62 = scmp.eq.s32.totalorder %s19, 1
    %p63 = por %p61, %p62
    %p65 = scmp.ne.s32.totalorder %s50, %s64
    %p66 = scmp.eq.s32.totalorder %s19, 0
    %p67 = por %p65, %p66
    %s69 = sadd.s32 %s68, 1
    %p72 = scmp.eq.s32.totalorder %s13, 1
    %p73 = scmp.ne.s32.totalorder %s68, %s70
    %p74 = scmp.eq.s32.totalorder %s13, 0
    %p75 = por %p73, %p74
    %p76 = scmp.ne.s32.totalorder %s68, %s70
    %p77 = scmp.eq.s32.totalorder %s18, 1
    %p78 = por %p76, %p77
    %p79 = scmp.ne.s32.totalorder %s70, %s71
    %p80 = scmp.eq.s32.totalorder %s18, 0
    %p81 = por %p79, %p80
    %p82 = scmp.ne.s32.totalorder %s70, %s71
    %p83 = scmp.eq.s32.totalorder %s19, 1
    %p84 = por %p82, %p83
    %p86 = scmp.ne.s32.totalorder %s71, %s85
    %p87 = scmp.eq.s32.totalorder %s19, 0
    %p88 = por %p86, %p87
    %s90 = sadd.s32 %s89, 1
    %p93 = scmp.eq.s32.totalorder %s13, 1
    %p94 = scmp.ne.s32.totalorder %s89, %s91
    %p95 = scmp.eq.s32.totalorder %s13, 0
    %p96 = por %p94, %p95
    %p97 = scmp.ne.s32.totalorder %s89, %s91
    %p98 = scmp.eq.s32.totalorder %s18, 1
    %p99 = por %p97, %p98
    %p100 = scmp.ne.s32.totalorder %s91, %s92
    %p101 = scmp.eq.s32.totalorder %s18, 0
    %p102 = por %p100, %p101
    %p103 = scmp.ne.s32.totalorder %s91, %s92
    %p104 = scmp.eq.s32.totalorder %s19, 1
    %p105 = por %p103, %p104
    %p107 = scmp.ne.s32.totalorder %s92, %s106
    %p108 = scmp.eq.s32.totalorder %s19, 0
    %p109 = por %p107, %p108
    %s110 = ssub.s32 %s13, %s20
    %p111 = scmp.eq.s32.totalorder %s110, 0
    %s113 = sadd.s32 %s112, 1
    %s114 = scalar_select %p111, %s112, %s113
    %p117 = pneg %p111
    %p118 = scmp.eq.s32.totalorder %s13, 1
    %p119 = por %p117, %p118
    %p120 = scmp.ne.s32.totalorder %s112, %s115
    %p121 = scmp.eq.s32.totalorder %s13, 0
    %p122 = por %p120, %p121
    %p123 = scmp.ne.s32.totalorder %s112, %s115
    %p124 = scmp.eq.s32.totalorder %s18, 1
    %p125 = por %p123, %p124
    %p126 = scmp.ne.s32.totalorder %s115, %s116
    %p127 = scmp.eq.s32.totalorder %s18, 0
    %p128 = por %p126, %p127
    %p129 = scmp.ne.s32.totalorder %s115, %s116
    %p130 = scmp.eq.s32.totalorder %s19, 1
    %p131 = por %p129, %p130
    %p133 = scmp.ne.s32.totalorder %s116, %s132
    %p134 = scmp.eq.s32.totalorder %s19, 0
    %p135 = por %p133, %p134
    %s137 = sadd.s32 %s136, 1
    %p140 = scmp.eq.s32.totalorder %s13, 1
    %p141 = scmp.ne.s32.totalorder %s136, %s138
    %p142 = scmp.eq.s32.totalorder %s13, 0
    %p143 = por %p141, %p142
    %p144 = scmp.ne.s32.totalorder %s136, %s138
    %p145 = scmp.eq.s32.totalorder %s18, 1
    %p146 = por %p144, %p145
    %p147 = scmp.ne.s32.totalorder %s138, %s139
    %p148 = scmp.eq.s32.totalorder %s18, 0
    %p149 = por %p147, %p148
    %p150 = scmp.ne.s32.totalorder %s138, %s139
    %p151 = scmp.eq.s32.totalorder %s19, 1
    %p152 = por %p150, %p151
    %p154 = scmp.ne.s32.totalorder %s139, %s153
    %p155 = scmp.eq.s32.totalorder %s19, 0
    %p156 = por %p154, %p155
    %s158 = sadd.s32 %s157, 1
    %p161 = scmp.eq.s32.totalorder %s13, 1
    %p162 = scmp.ne.s32.totalorder %s157, %s159
    %p163 = scmp.eq.s32.totalorder %s13, 0
    %p164 = por %p162, %p163
    %p165 = scmp.ne.s32.totalorder %s157, %s159
    %p166 = scmp.eq.s32.totalorder %s18, 1
    %p167 = por %p165, %p166
    %p168 = scmp.ne.s32.totalorder %s159, %s160
    %p169 = scmp.eq.s32.totalorder %s18, 0
    %p170 = por %p168, %p169
    %p171 = scmp.ne.s32.totalorder %s159, %s160
    %p172 = scmp.eq.s32.totalorder %s19, 1
    %p173 = por %p171, %p172
    %p175 = scmp.ne.s32.totalorder %s160, %s174
    %p176 = scmp.eq.s32.totalorder %s19, 0
    %p177 = por %p175, %p176
    %p178 = scmp.le.s32.totalorder 1, %s13
    %p179 = scmp.lt.s32.totalorder %s13, 3
    %p180 = pnand %p178, %p179
    %p181 = pneg %p180
    // Predicated region
    $region9: #{residual_forward.4} parent=5 // pred_check
      _
    $region10: #{residual_forward.4} parent=5 // pred_check_branch
      %183 = sbr.rel (%p180) target = $region12
    $region11: #{residual_forward.4} parent=5 // pred_region
      %s184 = ssub.s32 %s13, 1
      // Predicated region
      $region13: #{residual_forward.4} parent=11 // pred_check
        %p185 = pneg %p60
      $region14: #{residual_forward.4} parent=11 // pred_check_branch
        %187 = sbr.rel (%p185) target = $region16
      $region15: #{residual_forward.4} parent=11 // pred_region
        _
      $region16: #{residual_forward.4} parent=11 // pred_fallthru
        _
      // Predicated region
      $region17: #{residual_forward.4} parent=11 // pred_check
        %p188 = pneg %p81
      $region18: #{residual_forward.4} parent=11 // pred_check_branch
        %190 = sbr.rel (%p188) target = $region20
      $region19: #{residual_forward.4} parent=11 // pred_region
        _
      $region20: #{residual_forward.4} parent=11 // pred_fallthru
        _
      // Predicated region
      $region21: #{residual_forward.4} parent=11 // pred_check
        %p191 = pneg %p102
      $region22: #{residual_forward.4} parent=11 // pred_check_branch
        %193 = sbr.rel (%p191) target = $region24
      $region23: #{residual_forward.4} parent=11 // pred_region
        _
      $region24: #{residual_forward.4} parent=11 // pred_fallthru
        _
    $region12: #{residual_forward.4} parent=5 // pred_fallthru
      _
    %p194 = scmp.lt.s32.totalorder %s13, 2
    // Predicated region
    $region25: #{residual_forward.4} parent=5 // pred_check
      %p195 = pneg %p194
    $region26: #{residual_forward.4} parent=5 // pred_check_branch
      %197 = sbr.rel (%p195) target = $region28
    $region27: #{residual_forward.4} parent=5 // pred_region
      // Predicated region
      $region29: #{residual_forward.4} parent=27 // pred_check
        %p198 = pneg %p33
      $region30: #{residual_forward.4} parent=27 // pred_check_branch
        %200 = sbr.rel (%p198) target = $region32
      $region31: #{residual_forward.4} parent=27 // pred_region
        %p201 = scmp.lt.s32.totalorder %s13, 1
        %s202 = scalar_select %p201, %s13, 1
        %s203 = smul.addr %s202, 32
        %s204 = smul.addr %s203, 8
        %s205 = scalar_lea.vmem %s0, %s204
      $region32: #{residual_forward.4} parent=27 // pred_fallthru
        _
    $region28: #{residual_forward.4} parent=5 // pred_fallthru
      _
    %p206 = scmp.le.s32.totalorder 1, %s13
    %p207 = scmp.lt.s32.totalorder %s13, 3
    %p208 = pnand %p206, %p207
    %p209 = pneg %p208
    // Predicated region
    $region33: #{residual_forward.4} parent=5 // pred_check
      _
    $region34: #{residual_forward.4} parent=5 // pred_check_branch
      %211 = sbr.rel (%p208) target = $region36
    $region35: #{residual_forward.4} parent=5 // pred_region
      %s212 = ssub.s32 %s13, 1
      %p213 = scmp.lt.s32.totalorder %s18, 1
      %s214 = scalar_select %p213, %s18, 1
      %s215 = smul.addr %s214, 32
      %s216 = smul.addr %s215, 8
      %s217 = scalar_lea.vmem %s0, %s216
      %p218 = pneg %p39
      %p219 = pneg %p36
      %p220 = pneg %p60
      %p221 = pneg %p57
      %p222 = pneg %p81
      %p223 = pneg %p78
      %p224 = pneg %p102
      %p225 = pneg %p99
      %p226 = pneg %p128
      %p227 = pneg %p125
      %p228 = scmp.lt.s32.totalorder %s18, 1
      %s229 = scalar_select %p228, %s18, 1
      %s230 = smul.addr %s229, 32
      %s231 = smul.addr %s230, 8
      %s232 = scalar_lea.vmem %s4, %s231
      %p233 = pneg %p149
      %p234 = pneg %p146
      %p235 = pneg %p170
      %p236 = pneg %p167
      %p237 = scmp.lt.s32.totalorder %s18, 1
      %s238 = scalar_select %p237, %s18, 1
      %s239 = smul.addr %s238, 32
      %s240 = smul.addr %s239, 8
      %s241 = scalar_lea.vmem %s0, %s240
      %p242 = scmp.lt.s32.totalorder %s18, 1
      %s243 = scalar_select %p242, %s18, 1
      %s244 = smul.addr %s243, 32
      %s245 = smul.addr %s244, 8
      %s246 = scalar_lea.vmem %s4, %s245
      %p247 = scmp.eq.s32.totalorder %s18, 0
      // Predicated region
      $region37: #{residual_forward.4} parent=35 // pred_check
        %p248 = pneg %p247
      $region38: #{residual_forward.4} parent=35 // pred_check_branch
        %250 = sbr.rel (%p248) target = $region40
      $region39: #{residual_forward.4} parent=35 // pred_region
        %251 = vst [vmem:[%s5] sm:$0x1] 0.0
        %252 = vst [vmem:[%s6] sm:$0x1] 0.0
      $region40: #{residual_forward.4} parent=35 // pred_fallthru
        _
      %v253 = vld [vmem:[%s241] sm:$0xff]
      %v254 = vld [vmem:[%s241 + $0x8] sm:$0xff]
      %v255 = vld [vmem:[%s241 + $0x10] sm:$0xff]
      %v256 = vld [vmem:[%s241 + $0x18] sm:$0xff]
      %v257 = vld [vmem:[%s241 + $0x20] sm:$0xff]
      %v258 = vld [vmem:[%s241 + $0x28] sm:$0xff]
      %v259 = vld [vmem:[%s241 + $0x30] sm:$0xff]
      %v260 = vld [vmem:[%s241 + $0x38] sm:$0xff]
      %v261 = vld [vmem:[%s241 + $0x40] sm:$0xff]
      %v262 = vld [vmem:[%s241 + $0x48] sm:$0xff]
      %v263 = vld [vmem:[%s241 + $0x50] sm:$0xff]
      %v264 = vld [vmem:[%s241 + $0x58] sm:$0xff]
      %v265 = vld [vmem:[%s241 + $0x60] sm:$0xff]
      %v266 = vld [vmem:[%s241 + $0x68] sm:$0xff]
      %v267 = vld [vmem:[%s241 + $0x70] sm:$0xff]
      %v268 = vld [vmem:[%s241 + $0x78] sm:$0xff]
      %v269 = vld [vmem:[%s241 + $0x80] sm:$0xff]
      %v270 = vld [vmem:[%s241 + $0x88] sm:$0xff]
      %v271 = vld [vmem:[%s241 + $0x90] sm:$0xff]
      %v272 = vld [vmem:[%s241 + $0x98] sm:$0xff]
      %v273 = vld [vmem:[%s241 + $0xa0] sm:$0xff]
      %v274 = vld [vmem:[%s241 + $0xa8] sm:$0xff]
      %v275 = vld [vmem:[%s241 + $0xb0] sm:$0xff]
      %v276 = vld [vmem:[%s241 + $0xb8] sm:$0xff]
      %v277 = vld [vmem:[%s241 + $0xc0] sm:$0xff]
      %v278 = vld [vmem:[%s241 + $0xc8] sm:$0xff]
      %v279 = vld [vmem:[%s241 + $0xd0] sm:$0xff]
      %v280 = vld [vmem:[%s241 + $0xd8] sm:$0xff]
      %v281 = vld [vmem:[%s241 + $0xe0] sm:$0xff]
      %v282 = vld [vmem:[%s241 + $0xe8] sm:$0xff]
      %v283 = vld [vmem:[%s241 + $0xf0] sm:$0xff]
      %v284 = vld [vmem:[%s241 + $0xf8] sm:$0xff]
      %v285 = vld [vmem:[%s1] sm:$0x1]
      %v287 = vperm.slane %v285, 0
      %v289 = vmul.f32 %v253, %v287
      %v290 = vmul.f32 %v254, %v287
      %v291 = vmul.f32 %v255, %v287
      %v292 = vmul.f32 %v256, %v287
      %v293 = vmul.f32 %v257, %v287
      %v294 = vmul.f32 %v258, %v287
      %v295 = vmul.f32 %v259, %v287
      %v296 = vmul.f32 %v260, %v287
      %v297 = vmul.f32 %v261, %v287
      %v298 = vmul.f32 %v262, %v287
      %v299 = vmul.f32 %v263, %v287
      %v300 = vmul.f32 %v264, %v287
      %v301 = vmul.f32 %v265, %v287
      %v302 = vmul.f32 %v266, %v287
      %v303 = vmul.f32 %v267, %v287
      %v304 = vmul.f32 %v268, %v287
      %v305 = vmul.f32 %v269, %v287
      %v306 = vmul.f32 %v270, %v287
      %v307 = vmul.f32 %v271, %v287
      %v308 = vmul.f32 %v272, %v287
      %v309 = vmul.f32 %v273, %v287
      %v310 = vmul.f32 %v274, %v287
      %v311 = vmul.f32 %v275, %v287
      %v312 = vmul.f32 %v276, %v287
      %v313 = vmul.f32 %v277, %v287
      %v314 = vmul.f32 %v278, %v287
      %v315 = vmul.f32 %v279, %v287
      %v316 = vmul.f32 %v280, %v287
      %v317 = vmul.f32 %v281, %v287
      %v318 = vmul.f32 %v282, %v287
      %v319 = vmul.f32 %v283, %v287
      %v320 = vmul.f32 %v284, %v287
      %v321 = vld [vmem:[%s2] sm:$0x1]
      %v323 = vperm.slane %v321, 0
      %v325 = vadd.f32 %v289, %v323
      %v326 = vadd.f32 %v290, %v323
      %v327 = vadd.f32 %v291, %v323
      %v328 = vadd.f32 %v292, %v323
      %v329 = vadd.f32 %v293, %v323
      %v330 = vadd.f32 %v294, %v323
      %v331 = vadd.f32 %v295, %v323
      %v332 = vadd.f32 %v296, %v323
      %v333 = vadd.f32 %v297, %v323
      %v334 = vadd.f32 %v298, %v323
      %v335 = vadd.f32 %v299, %v323
      %v336 = vadd.f32 %v300, %v323
      %v337 = vadd.f32 %v301, %v323
      %v338 = vadd.f32 %v302, %v323
      %v339 = vadd.f32 %v303, %v323
      %v340 = vadd.f32 %v304, %v323
      %v341 = vadd.f32 %v305, %v323
      %v342 = vadd.f32 %v306, %v323
      %v343 = vadd.f32 %v307, %v323
      %v344 = vadd.f32 %v308, %v323
      %v345 = vadd.f32 %v309, %v323
      %v346 = vadd.f32 %v310, %v323
      %v347 = vadd.f32 %v311, %v323
      %v348 = vadd.f32 %v312, %v323
      %v349 = vadd.f32 %v313, %v323
      %v350 = vadd.f32 %v314, %v323
      %v351 = vadd.f32 %v315, %v323
      %v352 = vadd.f32 %v316, %v323
      %v353 = vadd.f32 %v317, %v323
      %v354 = vadd.f32 %v318, %v323
      %v355 = vadd.f32 %v319, %v323
      %v356 = vadd.f32 %v320, %v323
      %v357 = vmul.f32 %v325, 0.1
      %v358 = vmul.f32 %v326, 0.1
      %v359 = vmul.f32 %v327, 0.1
      %v360 = vmul.f32 %v328, 0.1
      %v361 = vmul.f32 %v329, 0.1
      %v362 = vmul.f32 %v330, 0.1
      %v363 = vmul.f32 %v331, 0.1
      %v364 = vmul.f32 %v332, 0.1
      %v365 = vmul.f32 %v333, 0.1
      %v366 = vmul.f32 %v334, 0.1
      %v367 = vmul.f32 %v335, 0.1
      %v368 = vmul.f32 %v336, 0.1
      %v369 = vmul.f32 %v337, 0.1
      %v370 = vmul.f32 %v338, 0.1
      %v371 = vmul.f32 %v339, 0.1
      %v372 = vmul.f32 %v340, 0.1
      %v373 = vmul.f32 %v341, 0.1
      %v374 = vmul.f32 %v342, 0.1
      %v375 = vmul.f32 %v343, 0.1
      %v376 = vmul.f32 %v344, 0.1
      %v377 = vmul.f32 %v345, 0.1
      %v378 = vmul.f32 %v346, 0.1
      %v379 = vmul.f32 %v347, 0.1
      %v380 = vmul.f32 %v348, 0.1
      %v381 = vmul.f32 %v349, 0.1
      %v382 = vmul.f32 %v350, 0.1
      %v383 = vmul.f32 %v351, 0.1
      %v384 = vmul.f32 %v352, 0.1
      %v385 = vmul.f32 %v353, 0.1
      %v386 = vmul.f32 %v354, 0.1
      %v387 = vmul.f32 %v355, 0.1
      %v388 = vmul.f32 %v356, 0.1
      %v389 = vmax.f32 %v325, %v357
      %v390 = vmax.f32 %v326, %v358
      %v391 = vmax.f32 %v327, %v359
      %v392 = vmax.f32 %v328, %v360
      %v393 = vmax.f32 %v329, %v361
      %v394 = vmax.f32 %v330, %v362
      %v395 = vmax.f32 %v331, %v363
      %v396 = vmax.f32 %v332, %v364
      %v397 = vmax.f32 %v333, %v365
      %v398 = vmax.f32 %v334, %v366
      %v399 = vmax.f32 %v335, %v367
      %v400 = vmax.f32 %v336, %v368
      %v401 = vmax.f32 %v337, %v369
      %v402 = vmax.f32 %v338, %v370
      %v403 = vmax.f32 %v339, %v371
      %v404 = vmax.f32 %v340, %v372
      %v405 = vmax.f32 %v341, %v373
      %v406 = vmax.f32 %v342, %v374
      %v407 = vmax.f32 %v343, %v375
      %v408 = vmax.f32 %v344, %v376
      %v409 = vmax.f32 %v345, %v377
      %v410 = vmax.f32 %v346, %v378
      %v411 = vmax.f32 %v347, %v379
      %v412 = vmax.f32 %v348, %v380
      %v413 = vmax.f32 %v349, %v381
      %v414 = vmax.f32 %v350, %v382
      %v415 = vmax.f32 %v351, %v383
      %v416 = vmax.f32 %v352, %v384
      %v417 = vmax.f32 %v353, %v385
      %v418 = vmax.f32 %v354, %v386
      %v419 = vmax.f32 %v355, %v387
      %v420 = vmax.f32 %v356, %v388
      %421 = vst [vmem:[#allocation2] sm:$0xff] %v389
      %422 = vst [vmem:[#allocation2 + $0x8] sm:$0xff] %v390
      %423 = vst [vmem:[#allocation2 + $0x10] sm:$0xff] %v391
      %424 = vst [vmem:[#allocation2 + $0x18] sm:$0xff] %v392
      %425 = vst [vmem:[#allocation2 + $0x20] sm:$0xff] %v393
      %426 = vst [vmem:[#allocation2 + $0x28] sm:$0xff] %v394
      %427 = vst [vmem:[#allocation2 + $0x30] sm:$0xff] %v395
      %428 = vst [vmem:[#allocation2 + $0x38] sm:$0xff] %v396
      %429 = vst [vmem:[#allocation2 + $0x40] sm:$0xff] %v397
      %430 = vst [vmem:[#allocation2 + $0x48] sm:$0xff] %v398
      %431 = vst [vmem:[#allocation2 + $0x50] sm:$0xff] %v399
      %432 = vst [vmem:[#allocation2 + $0x58] sm:$0xff] %v400
      %433 = vst [vmem:[#allocation2 + $0x60] sm:$0xff] %v401
      %434 = vst [vmem:[#allocation2 + $0x68] sm:$0xff] %v402
      %435 = vst [vmem:[#allocation2 + $0x70] sm:$0xff] %v403
      %436 = vst [vmem:[#allocation2 + $0x78] sm:$0xff] %v404
      %437 = vst [vmem:[#allocation2 + $0x80] sm:$0xff] %v405
      %438 = vst [vmem:[#allocation2 + $0x88] sm:$0xff] %v406
      %439 = vst [vmem:[#allocation2 + $0x90] sm:$0xff] %v407
      %440 = vst [vmem:[#allocation2 + $0x98] sm:$0xff] %v408
      %441 = vst [vmem:[#allocation2 + $0xa0] sm:$0xff] %v409
      %442 = vst [vmem:[#allocation2 + $0xa8] sm:$0xff] %v410
      %443 = vst [vmem:[#allocation2 + $0xb0] sm:$0xff] %v411
      %444 = vst [vmem:[#allocation2 + $0xb8] sm:$0xff] %v412
      %445 = vst [vmem:[#allocation2 + $0xc0] sm:$0xff] %v413
      %446 = vst [vmem:[#allocation2 + $0xc8] sm:$0xff] %v414
      %447 = vst [vmem:[#allocation2 + $0xd0] sm:$0xff] %v415
      %448 = vst [vmem:[#allocation2 + $0xd8] sm:$0xff] %v416
      %449 = vst [vmem:[#allocation2 + $0xe0] sm:$0xff] %v417
      %450 = vst [vmem:[#allocation2 + $0xe8] sm:$0xff] %v418
      %451 = vst [vmem:[#allocation2 + $0xf0] sm:$0xff] %v419
      %452 = vst [vmem:[#allocation2 + $0xf8] sm:$0xff] %v420
      %v453 = vlaneseq
      %v454 = vshrl.u32 %v453, 7
      %v455 = vadd.s32 %v454, 8
      %v456 = vadd.s32 %v454, 16
      %v457 = vadd.s32 %v454, 24
      %v458 = vadd.s32 %v454, 32
      %v459 = vadd.s32 %v454, 40
      %v460 = vadd.s32 %v454, 48
      %v461 = vadd.s32 %v454, 56
      %v462 = vadd.s32 %v454, 64
      %v463 = vadd.s32 %v454, 72
      %v464 = vadd.s32 %v454, 80
      %v465 = vadd.s32 %v454, 88
      %v466 = vadd.s32 %v454, 96
      %v467 = vadd.s32 %v454, 104
      %v468 = vadd.s32 %v454, 112
      %v469 = vadd.s32 %v454, 120
      %v470 = vadd.s32 %v454, 128
      %v471 = vadd.s32 %v454, 136
      %v472 = vadd.s32 %v454, 144
      %v473 = vadd.s32 %v454, 152
      %v474 = vadd.s32 %v454, 160
      %v475 = vadd.s32 %v454, 168
      %v476 = vadd.s32 %v454, 176
      %v477 = vadd.s32 %v454, 184
      %v478 = vadd.s32 %v454, 192
      %v479 = vadd.s32 %v454, 200
      %v480 = vadd.s32 %v454, 208
      %v481 = vadd.s32 %v454, 216
      %v482 = vadd.s32 %v454, 224
      %v483 = vadd.s32 %v454, 232
      %v484 = vadd.s32 %v454, 240
      %v485 = vadd.s32 %v454, 248
      %v486 = vand.u32 %v454, 15
      %v487 = vand.u32 %v455, 15
      %v488 = vand.u32 %v456, 15
      %v489 = vand.u32 %v457, 15
      %v490 = vand.u32 %v458, 15
      %v491 = vand.u32 %v459, 15
      %v492 = vand.u32 %v460, 15
      %v493 = vand.u32 %v461, 15
      %v494 = vand.u32 %v462, 15
      %v495 = vand.u32 %v463, 15
      %v496 = vand.u32 %v464, 15
      %v497 = vand.u32 %v465, 15
      %v498 = vand.u32 %v466, 15
      %v499 = vand.u32 %v467, 15
      %v500 = vand.u32 %v468, 15
      %v501 = vand.u32 %v469, 15
      %v502 = vand.u32 %v470, 15
      %v503 = vand.u32 %v471, 15
      %v504 = vand.u32 %v472, 15
      %v505 = vand.u32 %v473, 15
      %v506 = vand.u32 %v474, 15
      %v507 = vand.u32 %v475, 15
      %v508 = vand.u32 %v476, 15
      %v509 = vand.u32 %v477, 15
      %v510 = vand.u32 %v478, 15
      %v511 = vand.u32 %v479, 15
      %v512 = vand.u32 %v480, 15
      %v513 = vand.u32 %v481, 15
      %v514 = vand.u32 %v482, 15
      %v515 = vand.u32 %v483, 15
      %v516 = vand.u32 %v484, 15
      %v517 = vand.u32 %v485, 15
      %v518 = vld [vmem:[#allocation2] sm:$0xff]
      %v519 = vld [vmem:[#allocation2 + $0x8] sm:$0xff]
      %v520 = vld [vmem:[#allocation2 + $0x10] sm:$0xff]
      %v521 = vld [vmem:[#allocation2 + $0x18] sm:$0xff]
      %v522 = vld [vmem:[#allocation2 + $0x20] sm:$0xff]
      %v523 = vld [vmem:[#allocation2 + $0x28] sm:$0xff]
      %v524 = vld [vmem:[#allocation2 + $0x30] sm:$0xff]
      %v525 = vld [vmem:[#allocation2 + $0x38] sm:$0xff]
      %v526 = vld [vmem:[#allocation2 + $0x40] sm:$0xff]
      %v527 = vld [vmem:[#allocation2 + $0x48] sm:$0xff]
      %v528 = vld [vmem:[#allocation2 + $0x50] sm:$0xff]
      %v529 = vld [vmem:[#allocation2 + $0x58] sm:$0xff]
      %v530 = vld [vmem:[#allocation2 + $0x60] sm:$0xff]
      %v531 = vld [vmem:[#allocation2 + $0x68] sm:$0xff]
      %v532 = vld [vmem:[#allocation2 + $0x70] sm:$0xff]
      %v533 = vld [vmem:[#allocation2 + $0x78] sm:$0xff]
      %v534 = vld [vmem:[#allocation2 + $0x80] sm:$0xff]
      %v535 = vld [vmem:[#allocation2 + $0x88] sm:$0xff]
      %v536 = vld [vmem:[#allocation2 + $0x90] sm:$0xff]
      %v537 = vld [vmem:[#allocation2 + $0x98] sm:$0xff]
      %v538 = vld [vmem:[#allocation2 + $0xa0] sm:$0xff]
      %v539 = vld [vmem:[#allocation2 + $0xa8] sm:$0xff]
      %v540 = vld [vmem:[#allocation2 + $0xb0] sm:$0xff]
      %v541 = vld [vmem:[#allocation2 + $0xb8] sm:$0xff]
      %v542 = vld [vmem:[#allocation2 + $0xc0] sm:$0xff]
      %v543 = vld [vmem:[#allocation2 + $0xc8] sm:$0xff]
      %v544 = vld [vmem:[#allocation2 + $0xd0] sm:$0xff]
      %v545 = vld [vmem:[#allocation2 + $0xd8] sm:$0xff]
      %v546 = vld [vmem:[#allocation2 + $0xe0] sm:$0xff]
      %v547 = vld [vmem:[#allocation2 + $0xe8] sm:$0xff]
      %v548 = vld [vmem:[#allocation2 + $0xf0] sm:$0xff]
      %v549 = vld [vmem:[#allocation2 + $0xf8] sm:$0xff]
      %v550 = vrot.slane %v518, 7
      %v551 = vrot.slane %v519, 7
      %v552 = vrot.slane %v520, 7
      %v553 = vrot.slane %v521, 7
      %v554 = vrot.slane %v522, 7
      %v555 = vrot.slane %v523, 7
      %v556 = vrot.slane %v524, 7
      %v557 = vrot.slane %v525, 7
      %v558 = vrot.slane %v526, 7
      %v559 = vrot.slane %v527, 7
      %v560 = vrot.slane %v528, 7
      %v561 = vrot.slane %v529, 7
      %v562 = vrot.slane %v530, 7
      %v563 = vrot.slane %v531, 7
      %v564 = vrot.slane %v532, 7
      %v565 = vrot.slane %v533, 7
      %v566 = vrot.slane %v534, 7
      %v567 = vrot.slane %v535, 7
      %v568 = vrot.slane %v536, 7
      %v569 = vrot.slane %v537, 7
      %v570 = vrot.slane %v538, 7
      %v571 = vrot.slane %v539, 7
      %v572 = vrot.slane %v540, 7
      %v573 = vrot.slane %v541, 7
      %v574 = vrot.slane %v542, 7
      %v575 = vrot.slane %v543, 7
      %v576 = vrot.slane %v544, 7
      %v577 = vrot.slane %v545, 7
      %v578 = vrot.slane %v546, 7
      %v579 = vrot.slane %v547, 7
      %v580 = vrot.slane %v548, 7
      %v581 = vrot.slane %v549, 7
      %vm582 = vcmp.lt.s32.totalorder %v454, 1
      %v583 = vsel %vm582, %v580, %v581
      %v584 = vsel %vm582, %v579, %v580
      %v585 = vsel %vm582, %v578, %v579
      %v586 = vsel %vm582, %v577, %v578
      %v587 = vsel %vm582, %v576, %v577
      %v588 = vsel %vm582, %v575, %v576
      %v589 = vsel %vm582, %v574, %v575
      %v590 = vsel %vm582, %v573, %v574
      %v591 = vsel %vm582, %v572, %v573
      %v592 = vsel %vm582, %v571, %v572
      %v593 = vsel %vm582, %v570, %v571
      %v594 = vsel %vm582, %v569, %v570
      %v595 = vsel %vm582, %v568, %v569
      %v596 = vsel %vm582, %v567, %v568
      %v597 = vsel %vm582, %v566, %v567
      %v598 = vsel %vm582, %v565, %v566
      %v599 = vsel %vm582, %v564, %v565
      %v600 = vsel %vm582, %v563, %v564
      %v601 = vsel %vm582, %v562, %v563
      %v602 = vsel %vm582, %v561, %v562
      %v603 = vsel %vm582, %v560, %v561
      %v604 = vsel %vm582, %v559, %v560
      %v605 = vsel %vm582, %v558, %v559
      %v606 = vsel %vm582, %v557, %v558
      %v607 = vsel %vm582, %v556, %v557
      %v608 = vsel %vm582, %v555, %v556
      %v609 = vsel %vm582, %v554, %v555
      %v610 = vsel %vm582, %v553, %v554
      %v611 = vsel %vm582, %v552, %v553
      %v612 = vsel %vm582, %v551, %v552
      %v613 = vsel %vm582, %v550, %v551
      %v614 = vsel %vm582, %v581, %v550
      %vm615 = vcmp.ge.s32.totalorder %v454, 16
      %vm616 = vcmp.ge.s32.totalorder %v455, 16
      %vm617 = vcmp.ge.s32.totalorder %v456, 16
      %vm618 = vcmp.ge.s32.totalorder %v457, 16
      %vm619 = vcmp.ge.s32.totalorder %v458, 16
      %vm620 = vcmp.ge.s32.totalorder %v459, 16
      %vm621 = vcmp.ge.s32.totalorder %v460, 16
      %vm622 = vcmp.ge.s32.totalorder %v461, 16
      %vm623 = vcmp.ge.s32.totalorder %v462, 16
      %vm624 = vcmp.ge.s32.totalorder %v463, 16
      %vm625 = vcmp.ge.s32.totalorder %v464, 16
      %vm626 = vcmp.ge.s32.totalorder %v465, 16
      %vm627 = vcmp.ge.s32.totalorder %v466, 16
      %vm628 = vcmp.ge.s32.totalorder %v467, 16
      %vm629 = vcmp.ge.s32.totalorder %v468, 16
      %vm630 = vcmp.ge.s32.totalorder %v469, 16
      %vm631 = vcmp.ge.s32.totalorder %v470, 16
      %vm632 = vcmp.ge.s32.totalorder %v471, 16
      %vm633 = vcmp.ge.s32.totalorder %v472, 16
      %vm634 = vcmp.ge.s32.totalorder %v473, 16
      %vm635 = vcmp.ge.s32.totalorder %v474, 16
      %vm636 = vcmp.ge.s32.totalorder %v475, 16
      %vm637 = vcmp.ge.s32.totalorder %v476, 16
      %vm638 = vcmp.ge.s32.totalorder %v477, 16
      %vm639 = vcmp.ge.s32.totalorder %v478, 16
      %vm640 = vcmp.ge.s32.totalorder %v479, 16
      %vm641 = vcmp.ge.s32.totalorder %v480, 16
      %vm642 = vcmp.ge.s32.totalorder %v481, 16
      %vm643 = vcmp.ge.s32.totalorder %v482, 16
      %vm644 = vcmp.ge.s32.totalorder %v483, 16
      %vm645 = vcmp.ge.s32.totalorder %v484, 16
      %vm646 = vcmp.ge.s32.totalorder %v485, 16
      %vm647 = vcmp.ge.s32.totalorder %v486, 1
      %vm648 = vcmp.ge.s32.totalorder %v487, 1
      %vm649 = vcmp.ge.s32.totalorder %v488, 1
      %vm650 = vcmp.ge.s32.totalorder %v489, 1
      %vm651 = vcmp.ge.s32.totalorder %v490, 1
      %vm652 = vcmp.ge.s32.totalorder %v491, 1
      %vm653 = vcmp.ge.s32.totalorder %v492, 1
      %vm654 = vcmp.ge.s32.totalorder %v493, 1
      %vm655 = vcmp.ge.s32.totalorder %v494, 1
      %vm656 = vcmp.ge.s32.totalorder %v495, 1
      %vm657 = vcmp.ge.s32.totalorder %v496, 1
      %vm658 = vcmp.ge.s32.totalorder %v497, 1
      %vm659 = vcmp.ge.s32.totalorder %v498, 1
      %vm660 = vcmp.ge.s32.totalorder %v499, 1
      %vm661 = vcmp.ge.s32.totalorder %v500, 1
      %vm662 = vcmp.ge.s32.totalorder %v501, 1
      %vm663 = vcmp.ge.s32.totalorder %v502, 1
      %vm664 = vcmp.ge.s32.totalorder %v503, 1
      %vm665 = vcmp.ge.s32.totalorder %v504, 1
      %vm666 = vcmp.ge.s32.totalorder %v505, 1
      %vm667 = vcmp.ge.s32.totalorder %v506, 1
      %vm668 = vcmp.ge.s32.totalorder %v507, 1
      %vm669 = vcmp.ge.s32.totalorder %v508, 1
      %vm670 = vcmp.ge.s32.totalorder %v509, 1
      %vm671 = vcmp.ge.s32.totalorder %v510, 1
      %vm672 = vcmp.ge.s32.totalorder %v511, 1
      %vm673 = vcmp.ge.s32.totalorder %v512, 1
      %vm674 = vcmp.ge.s32.totalorder %v513, 1
      %vm675 = vcmp.ge.s32.totalorder %v514, 1
      %vm676 = vcmp.ge.s32.totalorder %v515, 1
      %vm677 = vcmp.ge.s32.totalorder %v516, 1
      %vm678 = vcmp.ge.s32.totalorder %v517, 1
      %vm679 = vmand %vm615, %vm647
      %vm680 = vmand %vm616, %vm648
      %vm681 = vmand %vm617, %vm649
      %vm682 = vmand %vm618, %vm650
      %vm683 = vmand %vm619, %vm651
      %vm684 = vmand %vm620, %vm652
      %vm685 = vmand %vm621, %vm653
      %vm686 = vmand %vm622, %vm654
      %vm687 = vmand %vm623, %vm655
      %vm688 = vmand %vm624, %vm656
      %vm689 = vmand %vm625, %vm657
      %vm690 = vmand %vm626, %vm658
      %vm691 = vmand %vm627, %vm659
      %vm692 = vmand %vm628, %vm660
      %vm693 = vmand %vm629, %vm661
      %vm694 = vmand %vm630, %vm662
      %vm695 = vmand %vm631, %vm663
      %vm696 = vmand %vm632, %vm664
      %vm697 = vmand %vm633, %vm665
      %vm698 = vmand %vm634, %vm666
      %vm699 = vmand %vm635, %vm667
      %vm700 = vmand %vm636, %vm668
      %vm701 = vmand %vm637, %vm669
      %vm702 = vmand %vm638, %vm670
      %vm703 = vmand %vm639, %vm671
      %vm704 = vmand %vm640, %vm672
      %vm705 = vmand %vm641, %vm673
      %vm706 = vmand %vm642, %vm674
      %vm707 = vmand %vm643, %vm675
      %vm708 = vmand %vm644, %vm676
      %vm709 = vmand %vm645, %vm677
      %vm710 = vmand %vm646, %vm678
      %v711 = vsel %vm679, 1, 0
      %v712 = vsel %vm680, 1, 0
      %v713 = vsel %vm681, 1, 0
      %v714 = vsel %vm682, 1, 0
      %v715 = vsel %vm683, 1, 0
      %v716 = vsel %vm684, 1, 0
      %v717 = vsel %vm685, 1, 0
      %v718 = vsel %vm686, 1, 0
      %v719 = vsel %vm687, 1, 0
      %v720 = vsel %vm688, 1, 0
      %v721 = vsel %vm689, 1, 0
      %v722 = vsel %vm690, 1, 0
      %v723 = vsel %vm691, 1, 0
      %v724 = vsel %vm692, 1, 0
      %v725 = vsel %vm693, 1, 0
      %v726 = vsel %vm694, 1, 0
      %v727 = vsel %vm695, 1, 0
      %v728 = vsel %vm696, 1, 0
      %v729 = vsel %vm697, 1, 0
      %v730 = vsel %vm698, 1, 0
      %v731 = vsel %vm699, 1, 0
      %v732 = vsel %vm700, 1, 0
      %v733 = vsel %vm701, 1, 0
      %v734 = vsel %vm702, 1, 0
      %v735 = vsel %vm703, 1, 0
      %v736 = vsel %vm704, 1, 0
      %v737 = vsel %vm705, 1, 0
      %v738 = vsel %vm706, 1, 0
      %v739 = vsel %vm707, 1, 0
      %v740 = vsel %vm708, 1, 0
      %v741 = vsel %vm709, 1, 0
      %v742 = vsel %vm710, 1, 0
      %vm743 = vcmp.eq.s32.totalorder %v711, 1
      %vm744 = vcmp.eq.s32.totalorder %v712, 1
      %vm745 = vcmp.eq.s32.totalorder %v713, 1
      %vm746 = vcmp.eq.s32.totalorder %v714, 1
      %vm747 = vcmp.eq.s32.totalorder %v715, 1
      %vm748 = vcmp.eq.s32.totalorder %v716, 1
      %vm749 = vcmp.eq.s32.totalorder %v717, 1
      %vm750 = vcmp.eq.s32.totalorder %v718, 1
      %vm751 = vcmp.eq.s32.totalorder %v719, 1
      %vm752 = vcmp.eq.s32.totalorder %v720, 1
      %vm753 = vcmp.eq.s32.totalorder %v721, 1
      %vm754 = vcmp.eq.s32.totalorder %v722, 1
      %vm755 = vcmp.eq.s32.totalorder %v723, 1
      %vm756 = vcmp.eq.s32.totalorder %v724, 1
      %vm757 = vcmp.eq.s32.totalorder %v725, 1
      %vm758 = vcmp.eq.s32.totalorder %v726, 1
      %vm759 = vcmp.eq.s32.totalorder %v727, 1
      %vm760 = vcmp.eq.s32.totalorder %v728, 1
      %vm761 = vcmp.eq.s32.totalorder %v729, 1
      %vm762 = vcmp.eq.s32.totalorder %v730, 1
      %vm763 = vcmp.eq.s32.totalorder %v731, 1
      %vm764 = vcmp.eq.s32.totalorder %v732, 1
      %vm765 = vcmp.eq.s32.totalorder %v733, 1
      %vm766 = vcmp.eq.s32.totalorder %v734, 1
      %vm767 = vcmp.eq.s32.totalorder %v735, 1
      %vm768 = vcmp.eq.s32.totalorder %v736, 1
      %vm769 = vcmp.eq.s32.totalorder %v737, 1
      %vm770 = vcmp.eq.s32.totalorder %v738, 1
      %vm771 = vcmp.eq.s32.totalorder %v739, 1
      %vm772 = vcmp.eq.s32.totalorder %v740, 1
      %vm773 = vcmp.eq.s32.totalorder %v741, 1
      %vm774 = vcmp.eq.s32.totalorder %v742, 1
      %v775 = vsel %vm743, %v584, 0.0
      %v776 = vsel %vm744, %v583, 0.0
      %v777 = vsel %vm745, %v614, 0.0
      %v778 = vsel %vm746, %v613, 0.0
      %v779 = vsel %vm747, %v612, 0.0
      %v780 = vsel %vm748, %v611, 0.0
      %v781 = vsel %vm749, %v610, 0.0
      %v782 = vsel %vm750, %v609, 0.0
      %v783 = vsel %vm751, %v608, 0.0
      %v784 = vsel %vm752, %v607, 0.0
      %v785 = vsel %vm753, %v606, 0.0
      %v786 = vsel %vm754, %v605, 0.0
      %v787 = vsel %vm755, %v604, 0.0
      %v788 = vsel %vm756, %v603, 0.0
      %v789 = vsel %vm757, %v602, 0.0
      %v790 = vsel %vm758, %v601, 0.0
      %v791 = vsel %vm759, %v600, 0.0
      %v792 = vsel %vm760, %v599, 0.0
      %v793 = vsel %vm761, %v598, 0.0
      %v794 = vsel %vm762, %v597, 0.0
      %v795 = vsel %vm763, %v596, 0.0
      %v796 = vsel %vm764, %v595, 0.0
      %v797 = vsel %vm765, %v594, 0.0
      %v798 = vsel %vm766, %v593, 0.0
      %v799 = vsel %vm767, %v592, 0.0
      %v800 = vsel %vm768, %v591, 0.0
      %v801 = vsel %vm769, %v590, 0.0
      %v802 = vsel %vm770, %v589, 0.0
      %v803 = vsel %vm771, %v588, 0.0
      %v804 = vsel %vm772, %v587, 0.0
      %v805 = vsel %vm773, %v586, 0.0
      %v806 = vsel %vm774, %v585, 0.0
      %807 = vst [vmem:[#allocation3] sm:$0xff] %v775
      %808 = vst [vmem:[#allocation3 + $0x48] sm:$0xff] %v776
      %809 = vst [vmem:[#allocation3 + $0x90] sm:$0xff] %v777
      %810 = vst [vmem:[#allocation3 + $0xd8] sm:$0xff] %v778
      %811 = vst [vmem:[#allocation3 + $0x120] sm:$0xff] %v779
      %812 = vst [vmem:[#allocation3 + $0x168] sm:$0xff] %v780
      %813 = vst [vmem:[#allocation3 + $0x1b0] sm:$0xff] %v781
      %814 = vst [vmem:[#allocation3 + $0x1f8] sm:$0xff] %v782
      %815 = vst [vmem:[#allocation3 + $0x240] sm:$0xff] %v783
      %816 = vst [vmem:[#allocation3 + $0x288] sm:$0xff] %v784
      %817 = vst [vmem:[#allocation3 + $0x2d0] sm:$0xff] %v785
      %818 = vst [vmem:[#allocation3 + $0x318] sm:$0xff] %v786
      %819 = vst [vmem:[#allocation3 + $0x360] sm:$0xff] %v787
      %820 = vst [vmem:[#allocation3 + $0x3a8] sm:$0xff] %v788
      %821 = vst [vmem:[#allocation3 + $0x3f0] sm:$0xff] %v789
      %822 = vst [vmem:[#allocation3 + $0x438] sm:$0xff] %v790
      %823 = vst [vmem:[#allocation3 + $0x480] sm:$0xff] %v791
      %824 = vst [vmem:[#allocation3 + $0x4c8] sm:$0xff] %v792
      %825 = vst [vmem:[#allocation3 + $0x510] sm:$0xff] %v793
      %826 = vst [vmem:[#allocation3 + $0x558] sm:$0xff] %v794
      %827 = vst [vmem:[#allocation3 + $0x5a0] sm:$0xff] %v795
      %828 = vst [vmem:[#allocation3 + $0x5e8] sm:$0xff] %v796
      %829 = vst [vmem:[#allocation3 + $0x630] sm:$0xff] %v797
      %830 = vst [vmem:[#allocation3 + $0x678] sm:$0xff] %v798
      %831 = vst [vmem:[#allocation3 + $0x6c0] sm:$0xff] %v799
      %832 = vst [vmem:[#allocation3 + $0x708] sm:$0xff] %v800
      %833 = vst [vmem:[#allocation3 + $0x750] sm:$0xff] %v801
      %834 = vst [vmem:[#allocation3 + $0x798] sm:$0xff] %v802
      %835 = vst [vmem:[#allocation3 + $0x7e0] sm:$0xff] %v803
      %836 = vst [vmem:[#allocation3 + $0x828] sm:$0xff] %v804
      %837 = vst [vmem:[#allocation3 + $0x870] sm:$0xff] %v805
      %838 = vst [vmem:[#allocation3 + $0x8b8] sm:$0xff] %v806
      %v839 = vld [vmem:[#allocation2] sm:$0xff]
      %v840 = vld [vmem:[#allocation2 + $0x8] sm:$0xff]
      %v841 = vld [vmem:[#allocation2 + $0x10] sm:$0xff]
      %v842 = vld [vmem:[#allocation2 + $0x18] sm:$0xff]
      %v843 = vld [vmem:[#allocation2 + $0x20] sm:$0xff]
      %v844 = vld [vmem:[#allocation2 + $0x28] sm:$0xff]
      %v845 = vld [vmem:[#allocation2 + $0x30] sm:$0xff]
      %v846 = vld [vmem:[#allocation2 + $0x38] sm:$0xff]
      %v847 = vld [vmem:[#allocation2 + $0x40] sm:$0xff]
      %v848 = vld [vmem:[#allocation2 + $0x48] sm:$0xff]
      %v849 = vld [vmem:[#allocation2 + $0x50] sm:$0xff]
      %v850 = vld [vmem:[#allocation2 + $0x58] sm:$0xff]
      %v851 = vld [vmem:[#allocation2 + $0x60] sm:$0xff]
      %v852 = vld [vmem:[#allocation2 + $0x68] sm:$0xff]
      %v853 = vld [vmem:[#allocation2 + $0x70] sm:$0xff]
      %v854 = vld [vmem:[#allocation2 + $0x78] sm:$0xff]
      %v855 = vld [vmem:[#allocation2 + $0x80] sm:$0xff]
      %v856 = vld [vmem:[#allocation2 + $0x88] sm:$0xff]
      %v857 = vld [vmem:[#allocation2 + $0x90] sm:$0xff]
      %v858 = vld [vmem:[#allocation2 + $0x98] sm:$0xff]
      %v859 = vld [vmem:[#allocation2 + $0xa0] sm:$0xff]
      %v860 = vld [vmem:[#allocation2 + $0xa8] sm:$0xff]
      %v861 = vld [vmem:[#allocation2 + $0xb0] sm:$0xff]
      %v862 = vld [vmem:[#allocation2 + $0xb8] sm:$0xff]
      %v863 = vld [vmem:[#allocation2 + $0xc0] sm:$0xff]
      %v864 = vld [vmem:[#allocation2 + $0xc8] sm:$0xff]
      %v865 = vld [vmem:[#allocation2 + $0xd0] sm:$0xff]
      %v866 = vld [vmem:[#allocation2 + $0xd8] sm:$0xff]
      %v867 = vld [vmem:[#allocation2 + $0xe0] sm:$0xff]
      %v868 = vld [vmem:[#allocation2 + $0xe8] sm:$0xff]
      %v869 = vld [vmem:[#allocation2 + $0xf0] sm:$0xff]
      %v870 = vld [vmem:[#allocation2 + $0xf8] sm:$0xff]
      %v871 = vsel %vm615, 1, 0
      %v872 = vsel %vm616, 1, 0
      %v873 = vsel %vm617, 1, 0
      %v874 = vsel %vm618, 1, 0
      %v875 = vsel %vm619, 1, 0
      %v876 = vsel %vm620, 1, 0
      %v877 = vsel %vm621, 1, 0
      %v878 = vsel %vm622, 1, 0
      %v879 = vsel %vm623, 1, 0
      %v880 = vsel %vm624, 1, 0
      %v881 = vsel %vm625, 1, 0
      %v882 = vsel %vm626, 1, 0
      %v883 = vsel %vm627, 1, 0
      %v884 = vsel %vm628, 1, 0
      %v885 = vsel %vm629, 1, 0
      %v886 = vsel %vm630, 1, 0
      %v887 = vsel %vm631, 1, 0
      %v888 = vsel %vm632, 1, 0
      %v889 = vsel %vm633, 1, 0
      %v890 = vsel %vm634, 1, 0
      %v891 = vsel %vm635, 1, 0
      %v892 = vsel %vm636, 1, 0
      %v893 = vsel %vm637, 1, 0
      %v894 = vsel %vm638, 1, 0
      %v895 = vsel %vm639, 1, 0
      %v896 = vsel %vm640, 1, 0
      %v897 = vsel %vm641, 1, 0
      %v898 = vsel %vm642, 1, 0
      %v899 = vsel %vm643, 1, 0
      %v900 = vsel %vm644, 1, 0
      %v901 = vsel %vm645, 1, 0
      %v902 = vsel %vm646, 1, 0
      %vm903 = vcmp.eq.s32.totalorder %v871, 1
      %vm904 = vcmp.eq.s32.totalorder %v872, 1
      %vm905 = vcmp.eq.s32.totalorder %v873, 1
      %vm906 = vcmp.eq.s32.totalorder %v874, 1
      %vm907 = vcmp.eq.s32.totalorder %v875, 1
      %vm908 = vcmp.eq.s32.totalorder %v876, 1
      %vm909 = vcmp.eq.s32.totalorder %v877, 1
      %vm910 = vcmp.eq.s32.totalorder %v878, 1
      %vm911 = vcmp.eq.s32.totalorder %v879, 1
      %vm912 = vcmp.eq.s32.totalorder %v880, 1
      %vm913 = vcmp.eq.s32.totalorder %v881, 1
      %vm914 = vcmp.eq.s32.totalorder %v882, 1
      %vm915 = vcmp.eq.s32.totalorder %v883, 1
      %vm916 = vcmp.eq.s32.totalorder %v884, 1
      %vm917 = vcmp.eq.s32.totalorder %v885, 1
      %vm918 = vcmp.eq.s32.totalorder %v886, 1
      %vm919 = vcmp.eq.s32.totalorder %v887, 1
      %vm920 = vcmp.eq.s32.totalorder %v888, 1
      %vm921 = vcmp.eq.s32.totalorder %v889, 1
      %vm922 = vcmp.eq.s32.totalorder %v890, 1
      %vm923 = vcmp.eq.s32.totalorder %v891, 1
      %vm924 = vcmp.eq.s32.totalorder %v892, 1
      %vm925 = vcmp.eq.s32.totalorder %v893, 1
      %vm926 = vcmp.eq.s32.totalorder %v894, 1
      %vm927 = vcmp.eq.s32.totalorder %v895, 1
      %vm928 = vcmp.eq.s32.totalorder %v896, 1
      %vm929 = vcmp.eq.s32.totalorder %v897, 1
      %vm930 = vcmp.eq.s32.totalorder %v898, 1
      %vm931 = vcmp.eq.s32.totalorder %v899, 1
      %vm932 = vcmp.eq.s32.totalorder %v900, 1
      %vm933 = vcmp.eq.s32.totalorder %v901, 1
      %vm934 = vcmp.eq.s32.totalorder %v902, 1
      %v935 = vsel %vm903, %v869, 0.0
      %v936 = vsel %vm904, %v870, 0.0
      %v937 = vsel %vm905, %v839, 0.0
      %v938 = vsel %vm906, %v840, 0.0
      %v939 = vsel %vm907, %v841, 0.0
      %v940 = vsel %vm908, %v842, 0.0
      %v941 = vsel %vm909, %v843, 0.0
      %v942 = vsel %vm910, %v844, 0.0
      %v943 = vsel %vm911, %v845, 0.0
      %v944 = vsel %vm912, %v846, 0.0
      %v945 = vsel %vm913, %v847, 0.0
      %v946 = vsel %vm914, %v848, 0.0
      %v947 = vsel %vm915, %v849, 0.0
      %v948 = vsel %vm916, %v850, 0.0
      %v949 = vsel %vm917, %v851, 0.0
      %v950 = vsel %vm918, %v852, 0.0
      %v951 = vsel %vm919, %v853, 0.0
      %v952 = vsel %vm920, %v854, 0.0
      %v953 = vsel %vm921, %v855, 0.0
      %v954 = vsel %vm922, %v856, 0.0
      %v955 = vsel %vm923, %v857, 0.0
      %v956 = vsel %vm924, %v858, 0.0
      %v957 = vsel %vm925, %v859, 0.0
      %v958 = vsel %vm926, %v860, 0.0
      %v959 = vsel %vm927, %v861, 0.0
      %v960 = vsel %vm928, %v862, 0.0
      %v961 = vsel %vm929, %v863, 0.0
      %v962 = vsel %vm930, %v864, 0.0
      %v963 = vsel %vm931, %v865, 0.0
      %v964 = vsel %vm932, %v866, 0.0
      %v965 = vsel %vm933, %v867, 0.0
      %v966 = vsel %vm934, %v868, 0.0
      %967 = vst [vmem:[#allocation3 + $0x8] sm:$0xff] %v935
      %968 = vst [vmem:[#allocation3 + $0x50] sm:$0xff] %v936
      %969 = vst [vmem:[#allocation3 + $0x98] sm:$0xff] %v937
      %970 = vst [vmem:[#allocation3 + $0xe0] sm:$0xff] %v938
      %971 = vst [vmem:[#allocation3 + $0x128] sm:$0xff] %v939
      %972 = vst [vmem:[#allocation3 + $0x170] sm:$0xff] %v940
      %973 = vst [vmem:[#allocation3 + $0x1b8] sm:$0xff] %v941
      %974 = vst [vmem:[#allocation3 + $0x200] sm:$0xff] %v942
      %975 = vst [vmem:[#allocation3 + $0x248] sm:$0xff] %v943
      %976 = vst [vmem:[#allocation3 + $0x290] sm:$0xff] %v944
      %977 = vst [vmem:[#allocation3 + $0x2d8] sm:$0xff] %v945
      %978 = vst [vmem:[#allocation3 + $0x320] sm:$0xff] %v946
      %979 = vst [vmem:[#allocation3 + $0x368] sm:$0xff] %v947
      %980 = vst [vmem:[#allocation3 + $0x3b0] sm:$0xff] %v948
      %981 = vst [vmem:[#allocation3 + $0x3f8] sm:$0xff] %v949
      %982 = vst [vmem:[#allocation3 + $0x440] sm:$0xff] %v950
      %983 = vst [vmem:[#allocation3 + $0x488] sm:$0xff] %v951
      %984 = vst [vmem:[#allocation3 + $0x4d0] sm:$0xff] %v952
      %985 = vst [vmem:[#allocation3 + $0x518] sm:$0xff] %v953
      %986 = vst [vmem:[#allocation3 + $0x560] sm:$0xff] %v954
      %987 = vst [vmem:[#allocation3 + $0x5a8] sm:$0xff] %v955
      %988 = vst [vmem:[#allocation3 + $0x5f0] sm:$0xff] %v956
      %989 = vst [vmem:[#allocation3 + $0x638] sm:$0xff] %v957
      %990 = vst [vmem:[#allocation3 + $0x680] sm:$0xff] %v958
      %991 = vst [vmem:[#allocation3 + $0x6c8] sm:$0xff] %v959
      %992 = vst [vmem:[#allocation3 + $0x710] sm:$0xff] %v960
      %993 = vst [vmem:[#allocation3 + $0x758] sm:$0xff] %v961
      %994 = vst [vmem:[#allocation3 + $0x7a0] sm:$0xff] %v962
      %995 = vst [vmem:[#allocation3 + $0x7e8] sm:$0xff] %v963
      %996 = vst [vmem:[#allocation3 + $0x830] sm:$0xff] %v964
      %997 = vst [vmem:[#allocation3 + $0x878] sm:$0xff] %v965
      %998 = vst [vmem:[#allocation3 + $0x8c0] sm:$0xff] %v966
      %v999 = vld [vmem:[#allocation2] sm:$0xff]
      %v1000 = vld [vmem:[#allocation2 + $0x8] sm:$0xff]
      %v1001 = vld [vmem:[#allocation2 + $0x10] sm:$0xff]
      %v1002 = vld [vmem:[#allocation2 + $0x18] sm:$0xff]
      %v1003 = vld [vmem:[#allocation2 + $0x20] sm:$0xff]
      %v1004 = vld [vmem:[#allocation2 + $0x28] sm:$0xff]
      %v1005 = vld [vmem:[#allocation2 + $0x30] sm:$0xff]
      %v1006 = vld [vmem:[#allocation2 + $0x38] sm:$0xff]
      %v1007 = vld [vmem:[#allocation2 + $0x40] sm:$0xff]
      %v1008 = vld [vmem:[#allocation2 + $0x48] sm:$0xff]
      %v1009 = vld [vmem:[#allocation2 + $0x50] sm:$0xff]
      %v1010 = vld [vmem:[#allocation2 + $0x58] sm:$0xff]
      %v1011 = vld [vmem:[#allocation2 + $0x60] sm:$0xff]
      %v1012 = vld [vmem:[#allocation2 + $0x68] sm:$0xff]
      %v1013 = vld [vmem:[#allocation2 + $0x70] sm:$0xff]
      %v1014 = vld [vmem:[#allocation2 + $0x78] sm:$0xff]
      %v1015 = vld [vmem:[#allocation2 + $0x80] sm:$0xff]
      %v1016 = vld [vmem:[#allocation2 + $0x88] sm:$0xff]
      %v1017 = vld [vmem:[#allocation2 + $0x90] sm:$0xff]
      %v1018 = vld [vmem:[#allocation2 + $0x98] sm:$0xff]
      %v1019 = vld [vmem:[#allocation2 + $0xa0] sm:$0xff]
      %v1020 = vld [vmem:[#allocation2 + $0xa8] sm:$0xff]
      %v1021 = vld [vmem:[#allocation2 + $0xb0] sm:$0xff]
      %v1022 = vld [vmem:[#allocation2 + $0xb8] sm:$0xff]
      %v1023 = vld [vmem:[#allocation2 + $0xc0] sm:$0xff]
      %v1024 = vld [vmem:[#allocation2 + $0xc8] sm:$0xff]
      %v1025 = vld [vmem:[#allocation2 + $0xd0] sm:$0xff]
      %v1026 = vld [vmem:[#allocation2 + $0xd8] sm:$0xff]
      %v1027 = vld [vmem:[#allocation2 + $0xe0] sm:$0xff]
      %v1028 = vld [vmem:[#allocation2 + $0xe8] sm:$0xff]
      %v1029 = vld [vmem:[#allocation2 + $0xf0] sm:$0xff]
      %v1030 = vld [vmem:[#allocation2 + $0xf8] sm:$0xff]
      %v1031 = vrot.slane %v999, 1
      %v1032 = vrot.slane %v1000, 1
      %v1033 = vrot.slane %v1001, 1
      %v1034 = vrot.slane %v1002, 1
      %v1035 = vrot.slane %v1003, 1
      %v1036 = vrot.slane %v1004, 1
      %v1037 = vrot.slane %v1005, 1
      %v1038 = vrot.slane %v1006, 1
      %v1039 = vrot.slane %v1007, 1
      %v1040 = vrot.slane %v1008, 1
      %v1041 = vrot.slane %v1009, 1
      %v1042 = vrot.slane %v1010, 1
      %v1043 = vrot.slane %v1011, 1
      %v1044 = vrot.slane %v1012, 1
      %v1045 = vrot.slane %v1013, 1
      %v1046 = vrot.slane %v1014, 1
      %v1047 = vrot.slane %v1015, 1
      %v1048 = vrot.slane %v1016, 1
      %v1049 = vrot.slane %v1017, 1
      %v1050 = vrot.slane %v1018, 1
      %v1051 = vrot.slane %v1019, 1
      %v1052 = vrot.slane %v1020, 1
      %v1053 = vrot.slane %v1021, 1
      %v1054 = vrot.slane %v1022, 1
      %v1055 = vrot.slane %v1023, 1
      %v1056 = vrot.slane %v1024, 1
      %v1057 = vrot.slane %v1025, 1
      %v1058 = vrot.slane %v1026, 1
      %v1059 = vrot.slane %v1027, 1
      %v1060 = vrot.slane %v1028, 1
      %v1061 = vrot.slane %v1029, 1
      %v1062 = vrot.slane %v1030, 1
      %vm1063 = vcmp.lt.s32.totalorder %v454, 7
      %v1064 = vsel %vm1063, %v1061, %v1062
      %v1065 = vsel %vm1063, %v1060, %v1061
      %v1066 = vsel %vm1063, %v1059, %v1060
      %v1067 = vsel %vm1063, %v1058, %v1059
      %v1068 = vsel %vm1063, %v1057, %v1058
      %v1069 = vsel %vm1063, %v1056, %v1057
      %v1070 = vsel %vm1063, %v1055, %v1056
      %v1071 = vsel %vm1063, %v1054, %v1055
      %v1072 = vsel %vm1063, %v1053, %v1054
      %v1073 = vsel %vm1063, %v1052, %v1053
      %v1074 = vsel %vm1063, %v1051, %v1052
      %v1075 = vsel %vm1063, %v1050, %v1051
      %v1076 = vsel %vm1063, %v1049, %v1050
      %v1077 = vsel %vm1063, %v1048, %v1049
      %v1078 = vsel %vm1063, %v1047, %v1048
      %v1079 = vsel %vm1063, %v1046, %v1047
      %v1080 = vsel %vm1063, %v1045, %v1046
      %v1081 = vsel %vm1063, %v1044, %v1045
      %v1082 = vsel %vm1063, %v1043, %v1044
      %v1083 = vsel %vm1063, %v1042, %v1043
      %v1084 = vsel %vm1063, %v1041, %v1042
      %v1085 = vsel %vm1063, %v1040, %v1041
      %v1086 = vsel %vm1063, %v1039, %v1040
      %v1087 = vsel %vm1063, %v1038, %v1039
      %v1088 = vsel %vm1063, %v1037, %v1038
      %v1089 = vsel %vm1063, %v1036, %v1037
      %v1090 = vsel %vm1063, %v1035, %v1036
      %v1091 = vsel %vm1063, %v1034, %v1035
      %v1092 = vsel %vm1063, %v1033, %v1034
      %v1093 = vsel %vm1063, %v1032, %v1033
      %v1094 = vsel %vm1063, %v1031, %v1032
      %v1095 = vsel %vm1063, %v1062, %v1031
      %vm1096 = vcmp.lt.s32.totalorder %v486, 15
      %vm1097 = vcmp.lt.s32.totalorder %v487, 15
      %vm1098 = vcmp.lt.s32.totalorder %v488, 15
      %vm1099 = vcmp.lt.s32.totalorder %v489, 15
      %vm1100 = vcmp.lt.s32.totalorder %v490, 15
      %vm1101 = vcmp.lt.s32.totalorder %v491, 15
      %vm1102 = vcmp.lt.s32.totalorder %v492, 15
      %vm1103 = vcmp.lt.s32.totalorder %v493, 15
      %vm1104 = vcmp.lt.s32.totalorder %v494, 15
      %vm1105 = vcmp.lt.s32.totalorder %v495, 15
      %vm1106 = vcmp.lt.s32.totalorder %v496, 15
      %vm1107 = vcmp.lt.s32.totalorder %v497, 15
      %vm1108 = vcmp.lt.s32.totalorder %v498, 15
      %vm1109 = vcmp.lt.s32.totalorder %v499, 15
      %vm1110 = vcmp.lt.s32.totalorder %v500, 15
      %vm1111 = vcmp.lt.s32.totalorder %v501, 15
      %vm1112 = vcmp.lt.s32.totalorder %v502, 15
      %vm1113 = vcmp.lt.s32.totalorder %v503, 15
      %vm1114 = vcmp.lt.s32.totalorder %v504, 15
      %vm1115 = vcmp.lt.s32.totalorder %v505, 15
      %vm1116 = vcmp.lt.s32.totalorder %v506, 15
      %vm1117 = vcmp.lt.s32.totalorder %v507, 15
      %vm1118 = vcmp.lt.s32.totalorder %v508, 15
      %vm1119 = vcmp.lt.s32.totalorder %v509, 15
      %vm1120 = vcmp.lt.s32.totalorder %v510, 15
      %vm1121 = vcmp.lt.s32.totalorder %v511, 15
      %vm1122 = vcmp.lt.s32.totalorder %v512, 15
      %vm1123 = vcmp.lt.s32.totalorder %v513, 15
      %vm1124 = vcmp.lt.s32.totalorder %v514, 15
      %vm1125 = vcmp.lt.s32.totalorder %v515, 15
      %vm1126 = vcmp.lt.s32.totalorder %v516, 15
      %vm1127 = vcmp.lt.s32.totalorder %v517, 15
      %vm1128 = vmand %vm615, %vm1096
      %vm1129 = vmand %vm616, %vm1097
      %vm1130 = vmand %vm617, %vm1098
      %vm1131 = vmand %vm618, %vm1099
      %vm1132 = vmand %vm619, %vm1100
      %vm1133 = vmand %vm620, %vm1101
      %vm1134 = vmand %vm621, %vm1102
      %vm1135 = vmand %vm622, %vm1103
      %vm1136 = vmand %vm623, %vm1104
      %vm1137 = vmand %vm624, %vm1105
      %vm1138 = vmand %vm625, %vm1106
      %vm1139 = vmand %vm626, %vm1107
      %vm1140 = vmand %vm627, %vm1108
      %vm1141 = vmand %vm628, %vm1109
      %vm1142 = vmand %vm629, %vm1110
      %vm1143 = vmand %vm630, %vm1111
      %vm1144 = vmand %vm631, %vm1112
      %vm1145 = vmand %vm632, %vm1113
      %vm1146 = vmand %vm633, %vm1114
      %vm1147 = vmand %vm634, %vm1115
      %vm1148 = vmand %vm635, %vm1116
      %vm1149 = vmand %vm636, %vm1117
      %vm1150 = vmand %vm637, %vm1118
      %vm1151 = vmand %vm638, %vm1119
      %vm1152 = vmand %vm639, %vm1120
      %vm1153 = vmand %vm640, %vm1121
      %vm1154 = vmand %vm641, %vm1122
      %vm1155 = vmand %vm642, %vm1123
      %vm1156 = vmand %vm643, %vm1124
      %vm1157 = vmand %vm644, %vm1125
      %vm1158 = vmand %vm645, %vm1126
      %vm1159 = vmand %vm646, %vm1127
      %v1160 = vsel %vm1128, 1, 0
      %v1161 = vsel %vm1129, 1, 0
      %v1162 = vsel %vm1130, 1, 0
      %v1163 = vsel %vm1131, 1, 0
      %v1164 = vsel %vm1132, 1, 0
      %v1165 = vsel %vm1133, 1, 0
      %v1166 = vsel %vm1134, 1, 0
      %v1167 = vsel %vm1135, 1, 0
      %v1168 = vsel %vm1136, 1, 0
      %v1169 = vsel %vm1137, 1, 0
      %v1170 = vsel %vm1138, 1, 0
      %v1171 = vsel %vm1139, 1, 0
      %v1172 = vsel %vm1140, 1, 0
      %v1173 = vsel %vm1141, 1, 0
      %v1174 = vsel %vm1142, 1, 0
      %v1175 = vsel %vm1143, 1, 0
      %v1176 = vsel %vm1144, 1, 0
      %v1177 = vsel %vm1145, 1, 0
      %v1178 = vsel %vm1146, 1, 0
      %v1179 = vsel %vm1147, 1, 0
      %v1180 = vsel %vm1148, 1, 0
      %v1181 = vsel %vm1149, 1, 0
      %v1182 = vsel %vm1150, 1, 0
      %v1183 = vsel %vm1151, 1, 0
      %v1184 = vsel %vm1152, 1, 0
      %v1185 = vsel %vm1153, 1, 0
      %v1186 = vsel %vm1154, 1, 0
      %v1187 = vsel %vm1155, 1, 0
      %v1188 = vsel %vm1156, 1, 0
      %v1189 = vsel %vm1157, 1, 0
      %v1190 = vsel %vm1158, 1, 0
      %v1191 = vsel %vm1159, 1, 0
      %vm1192 = vcmp.eq.s32.totalorder %v1160, 1
      %vm1193 = vcmp.eq.s32.totalorder %v1161, 1
      %vm1194 = vcmp.eq.s32.totalorder %v1162, 1
      %vm1195 = vcmp.eq.s32.totalorder %v1163, 1
      %vm1196 = vcmp.eq.s32.totalorder %v1164, 1
      %vm1197 = vcmp.eq.s32.totalorder %v1165, 1
      %vm1198 = vcmp.eq.s32.totalorder %v1166, 1
      %vm1199 = vcmp.eq.s32.totalorder %v1167, 1
      %vm1200 = vcmp.eq.s32.totalorder %v1168, 1
      %vm1201 = vcmp.eq.s32.totalorder %v1169, 1
      %vm1202 = vcmp.eq.s32.totalorder %v1170, 1
      %vm1203 = vcmp.eq.s32.totalorder %v1171, 1
      %vm1204 = vcmp.eq.s32.totalorder %v1172, 1
      %vm1205 = vcmp.eq.s32.totalorder %v1173, 1
      %vm1206 = vcmp.eq.s32.totalorder %v1174, 1
      %vm1207 = vcmp.eq.s32.totalorder %v1175, 1
      %vm1208 = vcmp.eq.s32.totalorder %v1176, 1
      %vm1209 = vcmp.eq.s32.totalorder %v1177, 1
      %vm1210 = vcmp.eq.s32.totalorder %v1178, 1
      %vm1211 = vcmp.eq.s32.totalorder %v1179, 1
      %vm1212 = vcmp.eq.s32.totalorder %v1180, 1
      %vm1213 = vcmp.eq.s32.totalorder %v1181, 1
      %vm1214 = vcmp.eq.s32.totalorder %v1182, 1
      %vm1215 = vcmp.eq.s32.totalorder %v1183, 1
      %vm1216 = vcmp.eq.s32.totalorder %v1184, 1
      %vm1217 = vcmp.eq.s32.totalorder %v1185, 1
      %vm1218 = vcmp.eq.s32.totalorder %v1186, 1
      %vm1219 = vcmp.eq.s32.totalorder %v1187, 1
      %vm1220 = vcmp.eq.s32.totalorder %v1188, 1
      %vm1221 = vcmp.eq.s32.totalorder %v1189, 1
      %vm1222 = vcmp.eq.s32.totalorder %v1190, 1
      %vm1223 = vcmp.eq.s32.totalorder %v1191, 1
      %v1224 = vsel %vm1192, %v1064, 0.0
      %v1225 = vsel %vm1193, %v1095, 0.0
      %v1226 = vsel %vm1194, %v1094, 0.0
      %v1227 = vsel %vm1195, %v1093, 0.0
      %v1228 = vsel %vm1196, %v1092, 0.0
      %v1229 = vsel %vm1197, %v1091, 0.0
      %v1230 = vsel %vm1198, %v1090, 0.0
      %v1231 = vsel %vm1199, %v1089, 0.0
      %v1232 = vsel %vm1200, %v1088, 0.0
      %v1233 = vsel %vm1201, %v1087, 0.0
      %v1234 = vsel %vm1202, %v1086, 0.0
      %v1235 = vsel %vm1203, %v1085, 0.0
      %v1236 = vsel %vm1204, %v1084, 0.0
      %v1237 = vsel %vm1205, %v1083, 0.0
      %v1238 = vsel %vm1206, %v1082, 0.0
      %v1239 = vsel %vm1207, %v1081, 0.0
      %v1240 = vsel %vm1208, %v1080, 0.0
      %v1241 = vsel %vm1209, %v1079, 0.0
      %v1242 = vsel %vm1210, %v1078, 0.0
      %v1243 = vsel %vm1211, %v1077, 0.0
      %v1244 = vsel %vm1212, %v1076, 0.0
      %v1245 = vsel %vm1213, %v1075, 0.0
      %v1246 = vsel %vm1214, %v1074, 0.0
      %v1247 = vsel %vm1215, %v1073, 0.0
      %v1248 = vsel %vm1216, %v1072, 0.0
      %v1249 = vsel %vm1217, %v1071, 0.0
      %v1250 = vsel %vm1218, %v1070, 0.0
      %v1251 = vsel %vm1219, %v1069, 0.0
      %v1252 = vsel %vm1220, %v1068, 0.0
      %v1253 = vsel %vm1221, %v1067, 0.0
      %v1254 = vsel %vm1222, %v1066, 0.0
      %v1255 = vsel %vm1223, %v1065, 0.0
      %1256 = vst [vmem:[#allocation3 + $0x10] sm:$0xff] %v1224
      %1257 = vst [vmem:[#allocation3 + $0x58] sm:$0xff] %v1225
      %1258 = vst [vmem:[#allocation3 + $0xa0] sm:$0xff] %v1226
      %1259 = vst [vmem:[#allocation3 + $0xe8] sm:$0xff] %v1227
      %1260 = vst [vmem:[#allocation3 + $0x130] sm:$0xff] %v1228
      %1261 = vst [vmem:[#allocation3 + $0x178] sm:$0xff] %v1229
      %1262 = vst [vmem:[#allocation3 + $0x1c0] sm:$0xff] %v1230
      %1263 = vst [vmem:[#allocation3 + $0x208] sm:$0xff] %v1231
      %1264 = vst [vmem:[#allocation3 + $0x250] sm:$0xff] %v1232
      %1265 = vst [vmem:[#allocation3 + $0x298] sm:$0xff] %v1233
      %1266 = vst [vmem:[#allocation3 + $0x2e0] sm:$0xff] %v1234
      %1267 = vst [vmem:[#allocation3 + $0x328] sm:$0xff] %v1235
      %1268 = vst [vmem:[#allocation3 + $0x370] sm:$0xff] %v1236
      %1269 = vst [vmem:[#allocation3 + $0x3b8] sm:$0xff] %v1237
      %1270 = vst [vmem:[#allocation3 + $0x400] sm:$0xff] %v1238
      %1271 = vst [vmem:[#allocation3 + $0x448] sm:$0xff] %v1239
      %1272 = vst [vmem:[#allocation3 + $0x490] sm:$0xff] %v1240
      %1273 = vst [vmem:[#allocation3 + $0x4d8] sm:$0xff] %v1241
      %1274 = vst [vmem:[#allocation3 + $0x520] sm:$0xff] %v1242
      %1275 = vst [vmem:[#allocation3 + $0x568] sm:$0xff] %v1243
      %1276 = vst [vmem:[#allocation3 + $0x5b0] sm:$0xff] %v1244
      %1277 = vst [vmem:[#allocation3 + $0x5f8] sm:$0xff] %v1245
      %1278 = vst [vmem:[#allocation3 + $0x640] sm:$0xff] %v1246
      %1279 = vst [vmem:[#allocation3 + $0x688] sm:$0xff] %v1247
      %1280 = vst [vmem:[#allocation3 + $0x6d0] sm:$0xff] %v1248
      %1281 = vst [vmem:[#allocation3 + $0x718] sm:$0xff] %v1249
      %1282 = vst [vmem:[#allocation3 + $0x760] sm:$0xff] %v1250
      %1283 = vst [vmem:[#allocation3 + $0x7a8] sm:$0xff] %v1251
      %1284 = vst [vmem:[#allocation3 + $0x7f0] sm:$0xff] %v1252
      %1285 = vst [vmem:[#allocation3 + $0x838] sm:$0xff] %v1253
      %1286 = vst [vmem:[#allocation3 + $0x880] sm:$0xff] %v1254
      %1287 = vst [vmem:[#allocation3 + $0x8c8] sm:$0xff] %v1255
      %v1288 = vld [vmem:[#allocation2] sm:$0xff]
      %v1289 = vld [vmem:[#allocation2 + $0x8] sm:$0xff]
      %v1290 = vld [vmem:[#allocation2 + $0x10] sm:$0xff]
      %v1291 = vld [vmem:[#allocation2 + $0x18] sm:$0xff]
      %v1292 = vld [vmem:[#allocation2 + $0x20] sm:$0xff]
      %v1293 = vld [vmem:[#allocation2 + $0x28] sm:$0xff]
      %v1294 = vld [vmem:[#allocation2 + $0x30] sm:$0xff]
      %v1295 = vld [vmem:[#allocation2 + $0x38] sm:$0xff]
      %v1296 = vld [vmem:[#allocation2 + $0x40] sm:$0xff]
      %v1297 = vld [vmem:[#allocation2 + $0x48] sm:$0xff]
      %v1298 = vld [vmem:[#allocation2 + $0x50] sm:$0xff]
      %v1299 = vld [vmem:[#allocation2 + $0x58] sm:$0xff]
      %v1300 = vld [vmem:[#allocation2 + $0x60] sm:$0xff]
      %v1301 = vld [vmem:[#allocation2 + $0x68] sm:$0xff]
      %v1302 = vld [vmem:[#allocation2 + $0x70] sm:$0xff]
      %v1303 = vld [vmem:[#allocation2 + $0x78] sm:$0xff]
      %v1304 = vld [vmem:[#allocation2 + $0x80] sm:$0xff]
      %v1305 = vld [vmem:[#allocation2 + $0x88] sm:$0xff]
      %v1306 = vld [vmem:[#allocation2 + $0x90] sm:$0xff]
      %v1307 = vld [vmem:[#allocation2 + $0x98] sm:$0xff]
      %v1308 = vld [vmem:[#allocation2 + $0xa0] sm:$0xff]
      %v1309 = vld [vmem:[#allocation2 + $0xa8] sm:$0xff]
      %v1310 = vld [vmem:[#allocation2 + $0xb0] sm:$0xff]
      %v1311 = vld [vmem:[#allocation2 + $0xb8] sm:$0xff]
      %v1312 = vld [vmem:[#allocation2 + $0xc0] sm:$0xff]
      %v1313 = vld [vmem:[#allocation2 + $0xc8] sm:$0xff]
      %v1314 = vld [vmem:[#allocation2 + $0xd0] sm:$0xff]
      %v1315 = vld [vmem:[#allocation2 + $0xd8] sm:$0xff]
      %v1316 = vld [vmem:[#allocation2 + $0xe0] sm:$0xff]
      %v1317 = vld [vmem:[#allocation2 + $0xe8] sm:$0xff]
      %v1318 = vld [vmem:[#allocation2 + $0xf0] sm:$0xff]
      %v1319 = vld [vmem:[#allocation2 + $0xf8] sm:$0xff]
      %v1320 = vrot.slane %v1288, 7
      %v1321 = vrot.slane %v1289, 7
      %v1322 = vrot.slane %v1290, 7
      %v1323 = vrot.slane %v1291, 7
      %v1324 = vrot.slane %v1292, 7
      %v1325 = vrot.slane %v1293, 7
      %v1326 = vrot.slane %v1294, 7
      %v1327 = vrot.slane %v1295, 7
      %v1328 = vrot.slane %v1296, 7
      %v1329 = vrot.slane %v1297, 7
      %v1330 = vrot.slane %v1298, 7
      %v1331 = vrot.slane %v1299, 7
      %v1332 = vrot.slane %v1300, 7
      %v1333 = vrot.slane %v1301, 7
      %v1334 = vrot.slane %v1302, 7
      %v1335 = vrot.slane %v1303, 7
      %v1336 = vrot.slane %v1304, 7
      %v1337 = vrot.slane %v1305, 7
      %v1338 = vrot.slane %v1306, 7
      %v1339 = vrot.slane %v1307, 7
      %v1340 = vrot.slane %v1308, 7
      %v1341 = vrot.slane %v1309, 7
      %v1342 = vrot.slane %v1310, 7
      %v1343 = vrot.slane %v1311, 7
      %v1344 = vrot.slane %v1312, 7
      %v1345 = vrot.slane %v1313, 7
      %v1346 = vrot.slane %v1314, 7
      %v1347 = vrot.slane %v1315, 7
      %v1348 = vrot.slane %v1316, 7
      %v1349 = vrot.slane %v1317, 7
      %v1350 = vrot.slane %v1318, 7
      %v1351 = vrot.slane %v1319, 7
      %v1352 = vsel %vm582, %v1350, %v1351
      %v1353 = vsel %vm582, %v1349, %v1350
      %v1354 = vsel %vm582, %v1348, %v1349
      %v1355 = vsel %vm582, %v1347, %v1348
      %v1356 = vsel %vm582, %v1346, %v1347
      %v1357 = vsel %vm582, %v1345, %v1346
      %v1358 = vsel %vm582, %v1344, %v1345
      %v1359 = vsel %vm582, %v1343, %v1344
      %v1360 = vsel %vm582, %v1342, %v1343
      %v1361 = vsel %vm582, %v1341, %v1342
      %v1362 = vsel %vm582, %v1340, %v1341
      %v1363 = vsel %vm582, %v1339, %v1340
      %v1364 = vsel %vm582, %v1338, %v1339
      %v1365 = vsel %vm582, %v1337, %v1338
      %v1366 = vsel %vm582, %v1336, %v1337
      %v1367 = vsel %vm582, %v1335, %v1336
      %v1368 = vsel %vm582, %v1334, %v1335
      %v1369 = vsel %vm582, %v1333, %v1334
      %v1370 = vsel %vm582, %v1332, %v1333
      %v1371 = vsel %vm582, %v1331, %v1332
      %v1372 = vsel %vm582, %v1330, %v1331
      %v1373 = vsel %vm582, %v1329, %v1330
      %v1374 = vsel %vm582, %v1328, %v1329
      %v1375 = vsel %vm582, %v1327, %v1328
      %v1376 = vsel %vm582, %v1326, %v1327
      %v1377 = vsel %vm582, %v1325, %v1326
      %v1378 = vsel %vm582, %v1324, %v1325
      %v1379 = vsel %vm582, %v1323, %v1324
      %v1380 = vsel %vm582, %v1322, %v1323
      %v1381 = vsel %vm582, %v1321, %v1322
      %v1382 = vsel %vm582, %v1320, %v1321
      %v1383 = vsel %vm582, %v1351, %v1320
      %v1384 = vsel %vm647, 1, 0
      %v1385 = vsel %vm648, 1, 0
      %v1386 = vsel %vm649, 1, 0
      %v1387 = vsel %vm650, 1, 0
      %v1388 = vsel %vm651, 1, 0
      %v1389 = vsel %vm652, 1, 0
      %v1390 = vsel %vm653, 1, 0
      %v1391 = vsel %vm654, 1, 0
      %v1392 = vsel %vm655, 1, 0
      %v1393 = vsel %vm656, 1, 0
      %v1394 = vsel %vm657, 1, 0
      %v1395 = vsel %vm658, 1, 0
      %v1396 = vsel %vm659, 1, 0
      %v1397 = vsel %vm660, 1, 0
      %v1398 = vsel %vm661, 1, 0
      %v1399 = vsel %vm662, 1, 0
      %v1400 = vsel %vm663, 1, 0
      %v1401 = vsel %vm664, 1, 0
      %v1402 = vsel %vm665, 1, 0
      %v1403 = vsel %vm666, 1, 0
      %v1404 = vsel %vm667, 1, 0
      %v1405 = vsel %vm668, 1, 0
      %v1406 = vsel %vm669, 1, 0
      %v1407 = vsel %vm670, 1, 0
      %v1408 = vsel %vm671, 1, 0
      %v1409 = vsel %vm672, 1, 0
      %v1410 = vsel %vm673, 1, 0
      %v1411 = vsel %vm674, 1, 0
      %v1412 = vsel %vm675, 1, 0
      %v1413 = vsel %vm676, 1, 0
      %v1414 = vsel %vm677, 1, 0
      %v1415 = vsel %vm678, 1, 0
      %vm1416 = vcmp.eq.s32.totalorder %v1384, 1
      %vm1417 = vcmp.eq.s32.totalorder %v1385, 1
      %vm1418 = vcmp.eq.s32.totalorder %v1386, 1
      %vm1419 = vcmp.eq.s32.totalorder %v1387, 1
      %vm1420 = vcmp.eq.s32.totalorder %v1388, 1
      %vm1421 = vcmp.eq.s32.totalorder %v1389, 1
      %vm1422 = vcmp.eq.s32.totalorder %v1390, 1
      %vm1423 = vcmp.eq.s32.totalorder %v1391, 1
      %vm1424 = vcmp.eq.s32.totalorder %v1392, 1
      %vm1425 = vcmp.eq.s32.totalorder %v1393, 1
      %vm1426 = vcmp.eq.s32.totalorder %v1394, 1
      %vm1427 = vcmp.eq.s32.totalorder %v1395, 1
      %vm1428 = vcmp.eq.s32.totalorder %v1396, 1
      %vm1429 = vcmp.eq.s32.totalorder %v1397, 1
      %vm1430 = vcmp.eq.s32.totalorder %v1398, 1
      %vm1431 = vcmp.eq.s32.totalorder %v1399, 1
      %vm1432 = vcmp.eq.s32.totalorder %v1400, 1
      %vm1433 = vcmp.eq.s32.totalorder %v1401, 1
      %vm1434 = vcmp.eq.s32.totalorder %v1402, 1
      %vm1435 = vcmp.eq.s32.totalorder %v1403, 1
      %vm1436 = vcmp.eq.s32.totalorder %v1404, 1
      %vm1437 = vcmp.eq.s32.totalorder %v1405, 1
      %vm1438 = vcmp.eq.s32.totalorder %v1406, 1
      %vm1439 = vcmp.eq.s32.totalorder %v1407, 1
      %vm1440 = vcmp.eq.s32.totalorder %v1408, 1
      %vm1441 = vcmp.eq.s32.totalorder %v1409, 1
      %vm1442 = vcmp.eq.s32.totalorder %v1410, 1
      %vm1443 = vcmp.eq.s32.totalorder %v1411, 1
      %vm1444 = vcmp.eq.s32.totalorder %v1412, 1
      %vm1445 = vcmp.eq.s32.totalorder %v1413, 1
      %vm1446 = vcmp.eq.s32.totalorder %v1414, 1
      %vm1447 = vcmp.eq.s32.totalorder %v1415, 1
      %v1448 = vsel %vm1416, %v1383, 0.0
      %v1449 = vsel %vm1417, %v1382, 0.0
      %v1450 = vsel %vm1418, %v1381, 0.0
      %v1451 = vsel %vm1419, %v1380, 0.0
      %v1452 = vsel %vm1420, %v1379, 0.0
      %v1453 = vsel %vm1421, %v1378, 0.0
      %v1454 = vsel %vm1422, %v1377, 0.0
      %v1455 = vsel %vm1423, %v1376, 0.0
      %v1456 = vsel %vm1424, %v1375, 0.0
      %v1457 = vsel %vm1425, %v1374, 0.0
      %v1458 = vsel %vm1426, %v1373, 0.0
      %v1459 = vsel %vm1427, %v1372, 0.0
      %v1460 = vsel %vm1428, %v1371, 0.0
      %v1461 = vsel %vm1429, %v1370, 0.0
      %v1462 = vsel %vm1430, %v1369, 0.0
      %v1463 = vsel %vm1431, %v1368, 0.0
      %v1464 = vsel %vm1432, %v1367, 0.0
      %v1465 = vsel %vm1433, %v1366, 0.0
      %v1466 = vsel %vm1434, %v1365, 0.0
      %v1467 = vsel %vm1435, %v1364, 0.0
      %v1468 = vsel %vm1436, %v1363, 0.0
      %v1469 = vsel %vm1437, %v1362, 0.0
      %v1470 = vsel %vm1438, %v1361, 0.0
      %v1471 = vsel %vm1439, %v1360, 0.0
      %v1472 = vsel %vm1440, %v1359, 0.0
      %v1473 = vsel %vm1441, %v1358, 0.0
      %v1474 = vsel %vm1442, %v1357, 0.0
      %v1475 = vsel %vm1443, %v1356, 0.0
      %v1476 = vsel %vm1444, %v1355, 0.0
      %v1477 = vsel %vm1445, %v1354, 0.0
      %v1478 = vsel %vm1446, %v1353, 0.0
      %v1479 = vsel %vm1447, %v1352, 0.0
      %1480 = vst [vmem:[#allocation3 + $0x18] sm:$0xff] %v1448
      %1481 = vst [vmem:[#allocation3 + $0x60] sm:$0xff] %v1449
      %1482 = vst [vmem:[#allocation3 + $0xa8] sm:$0xff] %v1450
      %1483 = vst [vmem:[#allocation3 + $0xf0] sm:$0xff] %v1451
      %1484 = vst [vmem:[#allocation3 + $0x138] sm:$0xff] %v1452
      %1485 = vst [vmem:[#allocation3 + $0x180] sm:$0xff] %v1453
      %1486 = vst [vmem:[#allocation3 + $0x1c8] sm:$0xff] %v1454
      %1487 = vst [vmem:[#allocation3 + $0x210] sm:$0xff] %v1455
      %1488 = vst [vmem:[#allocation3 + $0x258] sm:$0xff] %v1456
      %1489 = vst [vmem:[#allocation3 + $0x2a0] sm:$0xff] %v1457
      %1490 = vst [vmem:[#allocation3 + $0x2e8] sm:$0xff] %v1458
      %1491 = vst [vmem:[#allocation3 + $0x330] sm:$0xff] %v1459
      %1492 = vst [vmem:[#allocation3 + $0x378] sm:$0xff] %v1460
      %1493 = vst [vmem:[#allocation3 + $0x3c0] sm:$0xff] %v1461
      %1494 = vst [vmem:[#allocation3 + $0x408] sm:$0xff] %v1462
      %1495 = vst [vmem:[#allocation3 + $0x450] sm:$0xff] %v1463
      %1496 = vst [vmem:[#allocation3 + $0x498] sm:$0xff] %v1464
      %1497 = vst [vmem:[#allocation3 + $0x4e0] sm:$0xff] %v1465
      %1498 = vst [vmem:[#allocation3 + $0x528] sm:$0xff] %v1466
      %1499 = vst [vmem:[#allocation3 + $0x570] sm:$0xff] %v1467
      %1500 = vst [vmem:[#allocation3 + $0x5b8] sm:$0xff] %v1468
      %1501 = vst [vmem:[#allocation3 + $0x600] sm:$0xff] %v1469
      %1502 = vst [vmem:[#allocation3 + $0x648] sm:$0xff] %v1470
      %1503 = vst [vmem:[#allocation3 + $0x690] sm:$0xff] %v1471
      %1504 = vst [vmem:[#allocation3 + $0x6d8] sm:$0xff] %v1472
      %1505 = vst [vmem:[#allocation3 + $0x720] sm:$0xff] %v1473
      %1506 = vst [vmem:[#allocation3 + $0x768] sm:$0xff] %v1474
      %1507 = vst [vmem:[#allocation3 + $0x7b0] sm:$0xff] %v1475
      %1508 = vst [vmem:[#allocation3 + $0x7f8] sm:$0xff] %v1476
      %1509 = vst [vmem:[#allocation3 + $0x840] sm:$0xff] %v1477
      %1510 = vst [vmem:[#allocation3 + $0x888] sm:$0xff] %v1478
      %1511 = vst [vmem:[#allocation3 + $0x8d0] sm:$0xff] %v1479
      %v1512 = vld [vmem:[#allocation2] sm:$0xff]
      %v1513 = vld [vmem:[#allocation2 + $0x8] sm:$0xff]
      %v1514 = vld [vmem:[#allocation2 + $0x10] sm:$0xff]
      %v1515 = vld [vmem:[#allocation2 + $0x18] sm:$0xff]
      %v1516 = vld [vmem:[#allocation2 + $0x20] sm:$0xff]
      %v1517 = vld [vmem:[#allocation2 + $0x28] sm:$0xff]
      %v1518 = vld [vmem:[#allocation2 + $0x30] sm:$0xff]
      %v1519 = vld [vmem:[#allocation2 + $0x38] sm:$0xff]
      %v1520 = vld [vmem:[#allocation2 + $0x40] sm:$0xff]
      %v1521 = vld [vmem:[#allocation2 + $0x48] sm:$0xff]
      %v1522 = vld [vmem:[#allocation2 + $0x50] sm:$0xff]
      %v1523 = vld [vmem:[#allocation2 + $0x58] sm:$0xff]
      %v1524 = vld [vmem:[#allocation2 + $0x60] sm:$0xff]
      %v1525 = vld [vmem:[#allocation2 + $0x68] sm:$0xff]
      %v1526 = vld [vmem:[#allocation2 + $0x70] sm:$0xff]
      %v1527 = vld [vmem:[#allocation2 + $0x78] sm:$0xff]
      %v1528 = vld [vmem:[#allocation2 + $0x80] sm:$0xff]
      %v1529 = vld [vmem:[#allocation2 + $0x88] sm:$0xff]
      %v1530 = vld [vmem:[#allocation2 + $0x90] sm:$0xff]
      %v1531 = vld [vmem:[#allocation2 + $0x98] sm:$0xff]
      %v1532 = vld [vmem:[#allocation2 + $0xa0] sm:$0xff]
      %v1533 = vld [vmem:[#allocation2 + $0xa8] sm:$0xff]
      %v1534 = vld [vmem:[#allocation2 + $0xb0] sm:$0xff]
      %v1535 = vld [vmem:[#allocation2 + $0xb8] sm:$0xff]
      %v1536 = vld [vmem:[#allocation2 + $0xc0] sm:$0xff]
      %v1537 = vld [vmem:[#allocation2 + $0xc8] sm:$0xff]
      %v1538 = vld [vmem:[#allocation2 + $0xd0] sm:$0xff]
      %v1539 = vld [vmem:[#allocation2 + $0xd8] sm:$0xff]
      %v1540 = vld [vmem:[#allocation2 + $0xe0] sm:$0xff]
      %v1541 = vld [vmem:[#allocation2 + $0xe8] sm:$0xff]
      %v1542 = vld [vmem:[#allocation2 + $0xf0] sm:$0xff]
      %v1543 = vld [vmem:[#allocation2 + $0xf8] sm:$0xff]
      %1544 = vst [vmem:[#allocation3 + $0x20] sm:$0xff] %v1512
      %1545 = vst [vmem:[#allocation3 + $0x68] sm:$0xff] %v1513
      %1546 = vst [vmem:[#allocation3 + $0xb0] sm:$0xff] %v1514
      %1547 = vst [vmem:[#allocation3 + $0xf8] sm:$0xff] %v1515
      %1548 = vst [vmem:[#allocation3 + $0x140] sm:$0xff] %v1516
      %1549 = vst [vmem:[#allocation3 + $0x188] sm:$0xff] %v1517
      %1550 = vst [vmem:[#allocation3 + $0x1d0] sm:$0xff] %v1518
      %1551 = vst [vmem:[#allocation3 + $0x218] sm:$0xff] %v1519
      %1552 = vst [vmem:[#allocation3 + $0x260] sm:$0xff] %v1520
      %1553 = vst [vmem:[#allocation3 + $0x2a8] sm:$0xff] %v1521
      %1554 = vst [vmem:[#allocation3 + $0x2f0] sm:$0xff] %v1522
      %1555 = vst [vmem:[#allocation3 + $0x338] sm:$0xff] %v1523
      %1556 = vst [vmem:[#allocation3 + $0x380] sm:$0xff] %v1524
      %1557 = vst [vmem:[#allocation3 + $0x3c8] sm:$0xff] %v1525
      %1558 = vst [vmem:[#allocation3 + $0x410] sm:$0xff] %v1526
      %1559 = vst [vmem:[#allocation3 + $0x458] sm:$0xff] %v1527
      %1560 = vst [vmem:[#allocation3 + $0x4a0] sm:$0xff] %v1528
      %1561 = vst [vmem:[#allocation3 + $0x4e8] sm:$0xff] %v1529
      %1562 = vst [vmem:[#allocation3 + $0x530] sm:$0xff] %v1530
      %1563 = vst [vmem:[#allocation3 + $0x578] sm:$0xff] %v1531
      %1564 = vst [vmem:[#allocation3 + $0x5c0] sm:$0xff] %v1532
      %1565 = vst [vmem:[#allocation3 + $0x608] sm:$0xff] %v1533
      %1566 = vst [vmem:[#allocation3 + $0x650] sm:$0xff] %v1534
      %1567 = vst [vmem:[#allocation3 + $0x698] sm:$0xff] %v1535
      %1568 = vst [vmem:[#allocation3 + $0x6e0] sm:$0xff] %v1536
      %1569 = vst [vmem:[#allocation3 + $0x728] sm:$0xff] %v1537
      %1570 = vst [vmem:[#allocation3 + $0x770] sm:$0xff] %v1538
      %1571 = vst [vmem:[#allocation3 + $0x7b8] sm:$0xff] %v1539
      %1572 = vst [vmem:[#allocation3 + $0x800] sm:$0xff] %v1540
      %1573 = vst [vmem:[#allocation3 + $0x848] sm:$0xff] %v1541
      %1574 = vst [vmem:[#allocation3 + $0x890] sm:$0xff] %v1542
      %1575 = vst [vmem:[#allocation3 + $0x8d8] sm:$0xff] %v1543
      %v1576 = vld [vmem:[#allocation2] sm:$0xff]
      %v1577 = vld [vmem:[#allocation2 + $0x8] sm:$0xff]
      %v1578 = vld [vmem:[#allocation2 + $0x10] sm:$0xff]
      %v1579 = vld [vmem:[#allocation2 + $0x18] sm:$0xff]
      %v1580 = vld [vmem:[#allocation2 + $0x20] sm:$0xff]
      %v1581 = vld [vmem:[#allocation2 + $0x28] sm:$0xff]
      %v1582 = vld [vmem:[#allocation2 + $0x30] sm:$0xff]
      %v1583 = vld [vmem:[#allocation2 + $0x38] sm:$0xff]
      %v1584 = vld [vmem:[#allocation2 + $0x40] sm:$0xff]
      %v1585 = vld [vmem:[#allocation2 + $0x48] sm:$0xff]
      %v1586 = vld [vmem:[#allocation2 + $0x50] sm:$0xff]
      %v1587 = vld [vmem:[#allocation2 + $0x58] sm:$0xff]
      %v1588 = vld [vmem:[#allocation2 + $0x60] sm:$0xff]
      %v1589 = vld [vmem:[#allocation2 + $0x68] sm:$0xff]
      %v1590 = vld [vmem:[#allocation2 + $0x70] sm:$0xff]
      %v1591 = vld [vmem:[#allocation2 + $0x78] sm:$0xff]
      %v1592 = vld [vmem:[#allocation2 + $0x80] sm:$0xff]
      %v1593 = vld [vmem:[#allocation2 + $0x88] sm:$0xff]
      %v1594 = vld [vmem:[#allocation2 + $0x90] sm:$0xff]
      %v1595 = vld [vmem:[#allocation2 + $0x98] sm:$0xff]
      %v1596 = vld [vmem:[#allocation2 + $0xa0] sm:$0xff]
      %v1597 = vld [vmem:[#allocation2 + $0xa8] sm:$0xff]
      %v1598 = vld [vmem:[#allocation2 + $0xb0] sm:$0xff]
      %v1599 = vld [vmem:[#allocation2 + $0xb8] sm:$0xff]
      %v1600 = vld [vmem:[#allocation2 + $0xc0] sm:$0xff]
      %v1601 = vld [vmem:[#allocation2 + $0xc8] sm:$0xff]
      %v1602 = vld [vmem:[#allocation2 + $0xd0] sm:$0xff]
      %v1603 = vld [vmem:[#allocation2 + $0xd8] sm:$0xff]
      %v1604 = vld [vmem:[#allocation2 + $0xe0] sm:$0xff]
      %v1605 = vld [vmem:[#allocation2 + $0xe8] sm:$0xff]
      %v1606 = vld [vmem:[#allocation2 + $0xf0] sm:$0xff]
      %v1607 = vld [vmem:[#allocation2 + $0xf8] sm:$0xff]
      %v1608 = vrot.slane %v1576, 1
      %v1609 = vrot.slane %v1577, 1
      %v1610 = vrot.slane %v1578, 1
      %v1611 = vrot.slane %v1579, 1
      %v1612 = vrot.slane %v1580, 1
      %v1613 = vrot.slane %v1581, 1
      %v1614 = vrot.slane %v1582, 1
      %v1615 = vrot.slane %v1583, 1
      %v1616 = vrot.slane %v1584, 1
      %v1617 = vrot.slane %v1585, 1
      %v1618 = vrot.slane %v1586, 1
      %v1619 = vrot.slane %v1587, 1
      %v1620 = vrot.slane %v1588, 1
      %v1621 = vrot.slane %v1589, 1
      %v1622 = vrot.slane %v1590, 1
      %v1623 = vrot.slane %v1591, 1
      %v1624 = vrot.slane %v1592, 1
      %v1625 = vrot.slane %v1593, 1
      %v1626 = vrot.slane %v1594, 1
      %v1627 = vrot.slane %v1595, 1
      %v1628 = vrot.slane %v1596, 1
      %v1629 = vrot.slane %v1597, 1
      %v1630 = vrot.slane %v1598, 1
      %v1631 = vrot.slane %v1599, 1
      %v1632 = vrot.slane %v1600, 1
      %v1633 = vrot.slane %v1601, 1
      %v1634 = vrot.slane %v1602, 1
      %v1635 = vrot.slane %v1603, 1
      %v1636 = vrot.slane %v1604, 1
      %v1637 = vrot.slane %v1605, 1
      %v1638 = vrot.slane %v1606, 1
      %v1639 = vrot.slane %v1607, 1
      %v1640 = vsel %vm1063, %v1638, %v1639
      %v1641 = vsel %vm1063, %v1637, %v1638
      %v1642 = vsel %vm1063, %v1636, %v1637
      %v1643 = vsel %vm1063, %v1635, %v1636
      %v1644 = vsel %vm1063, %v1634, %v1635
      %v1645 = vsel %vm1063, %v1633, %v1634
      %v1646 = vsel %vm1063, %v1632, %v1633
      %v1647 = vsel %vm1063, %v1631, %v1632
      %v1648 = vsel %vm1063, %v1630, %v1631
      %v1649 = vsel %vm1063, %v1629, %v1630
      %v1650 = vsel %vm1063, %v1628, %v1629
      %v1651 = vsel %vm1063, %v1627, %v1628
      %v1652 = vsel %vm1063, %v1626, %v1627
      %v1653 = vsel %vm1063, %v1625, %v1626
      %v1654 = vsel %vm1063, %v1624, %v1625
      %v1655 = vsel %vm1063, %v1623, %v1624
      %v1656 = vsel %vm1063, %v1622, %v1623
      %v1657 = vsel %vm1063, %v1621, %v1622
      %v1658 = vsel %vm1063, %v1620, %v1621
      %v1659 = vsel %vm1063, %v1619, %v1620
      %v1660 = vsel %vm1063, %v1618, %v1619
      %v1661 = vsel %vm1063, %v1617, %v1618
      %v1662 = vsel %vm1063, %v1616, %v1617
      %v1663 = vsel %vm1063, %v1615, %v1616
      %v1664 = vsel %vm1063, %v1614, %v1615
      %v1665 = vsel %vm1063, %v1613, %v1614
      %v1666 = vsel %vm1063, %v1612, %v1613
      %v1667 = vsel %vm1063, %v1611, %v1612
      %v1668 = vsel %vm1063, %v1610, %v1611
      %v1669 = vsel %vm1063, %v1609, %v1610
      %v1670 = vsel %vm1063, %v1608, %v1609
      %v1671 = vsel %vm1063, %v1639, %v1608
      %v1672 = vsel %vm1096, 1, 0
      %v1673 = vsel %vm1097, 1, 0
      %v1674 = vsel %vm1098, 1, 0
      %v1675 = vsel %vm1099, 1, 0
      %v1676 = vsel %vm1100, 1, 0
      %v1677 = vsel %vm1101, 1, 0
      %v1678 = vsel %vm1102, 1, 0
      %v1679 = vsel %vm1103, 1, 0
      %v1680 = vsel %vm1104, 1, 0
      %v1681 = vsel %vm1105, 1, 0
      %v1682 = vsel %vm1106, 1, 0
      %v1683 = vsel %vm1107, 1, 0
      %v1684 = vsel %vm1108, 1, 0
      %v1685 = vsel %vm1109, 1, 0
      %v1686 = vsel %vm1110, 1, 0
      %v1687 = vsel %vm1111, 1, 0
      %v1688 = vsel %vm1112, 1, 0
      %v1689 = vsel %vm1113, 1, 0
      %v1690 = vsel %vm1114, 1, 0
      %v1691 = vsel %vm1115, 1, 0
      %v1692 = vsel %vm1116, 1, 0
      %v1693 = vsel %vm1117, 1, 0
      %v1694 = vsel %vm1118, 1, 0
      %v1695 = vsel %vm1119, 1, 0
      %v1696 = vsel %vm1120, 1, 0
      %v1697 = vsel %vm1121, 1, 0
      %v1698 = vsel %vm1122, 1, 0
      %v1699 = vsel %vm1123, 1, 0
      %v1700 = vsel %vm1124, 1, 0
      %v1701 = vsel %vm1125, 1, 0
      %v1702 = vsel %vm1126, 1, 0
      %v1703 = vsel %vm1127, 1, 0
      %vm1704 = vcmp.eq.s32.totalorder %v1672, 1
      %vm1705 = vcmp.eq.s32.totalorder %v1673, 1
      %vm1706 = vcmp.eq.s32.totalorder %v1674, 1
      %vm1707 = vcmp.eq.s32.totalorder %v1675, 1
      %vm1708 = vcmp.eq.s32.totalorder %v1676, 1
      %vm1709 = vcmp.eq.s32.totalorder %v1677, 1
      %vm1710 = vcmp.eq.s32.totalorder %v1678, 1
      %vm1711 = vcmp.eq.s32.totalorder %v1679, 1
      %vm1712 = vcmp.eq.s32.totalorder %v1680, 1
      %vm1713 = vcmp.eq.s32.totalorder %v1681, 1
      %vm1714 = vcmp.eq.s32.totalorder %v1682, 1
      %vm1715 = vcmp.eq.s32.totalorder %v1683, 1
      %vm1716 = vcmp.eq.s32.totalorder %v1684, 1
      %vm1717 = vcmp.eq.s32.totalorder %v1685, 1
      %vm1718 = vcmp.eq.s32.totalorder %v1686, 1
      %vm1719 = vcmp.eq.s32.totalorder %v1687, 1
      %vm1720 = vcmp.eq.s32.totalorder %v1688, 1
      %vm1721 = vcmp.eq.s32.totalorder %v1689, 1
      %vm1722 = vcmp.eq.s32.totalorder %v1690, 1
      %vm1723 = vcmp.eq.s32.totalorder %v1691, 1
      %vm1724 = vcmp.eq.s32.totalorder %v1692, 1
      %vm1725 = vcmp.eq.s32.totalorder %v1693, 1
      %vm1726 = vcmp.eq.s32.totalorder %v1694, 1
      %vm1727 = vcmp.eq.s32.totalorder %v1695, 1
      %vm1728 = vcmp.eq.s32.totalorder %v1696, 1
      %vm1729 = vcmp.eq.s32.totalorder %v1697, 1
      %vm1730 = vcmp.eq.s32.totalorder %v1698, 1
      %vm1731 = vcmp.eq.s32.totalorder %v1699, 1
      %vm1732 = vcmp.eq.s32.totalorder %v1700, 1
      %vm1733 = vcmp.eq.s32.totalorder %v1701, 1
      %vm1734 = vcmp.eq.s32.totalorder %v1702, 1
      %vm1735 = vcmp.eq.s32.totalorder %v1703, 1
      %v1736 = vsel %vm1704, %v1670, 0.0
      %v1737 = vsel %vm1705, %v1669, 0.0
      %v1738 = vsel %vm1706, %v1668, 0.0
      %v1739 = vsel %vm1707, %v1667, 0.0
      %v1740 = vsel %vm1708, %v1666, 0.0
      %v1741 = vsel %vm1709, %v1665, 0.0
      %v1742 = vsel %vm1710, %v1664, 0.0
      %v1743 = vsel %vm1711, %v1663, 0.0
      %v1744 = vsel %vm1712, %v1662, 0.0
      %v1745 = vsel %vm1713, %v1661, 0.0
      %v1746 = vsel %vm1714, %v1660, 0.0
      %v1747 = vsel %vm1715, %v1659, 0.0
      %v1748 = vsel %vm1716, %v1658, 0.0
      %v1749 = vsel %vm1717, %v1657, 0.0
      %v1750 = vsel %vm1718, %v1656, 0.0
      %v1751 = vsel %vm1719, %v1655, 0.0
      %v1752 = vsel %vm1720, %v1654, 0.0
      %v1753 = vsel %vm1721, %v1653, 0.0
      %v1754 = vsel %vm1722, %v1652, 0.0
      %v1755 = vsel %vm1723, %v1651, 0.0
      %v1756 = vsel %vm1724, %v1650, 0.0
      %v1757 = vsel %vm1725, %v1649, 0.0
      %v1758 = vsel %vm1726, %v1648, 0.0
      %v1759 = vsel %vm1727, %v1647, 0.0
      %v1760 = vsel %vm1728, %v1646, 0.0
      %v1761 = vsel %vm1729, %v1645, 0.0
      %v1762 = vsel %vm1730, %v1644, 0.0
      %v1763 = vsel %vm1731, %v1643, 0.0
      %v1764 = vsel %vm1732, %v1642, 0.0
      %v1765 = vsel %vm1733, %v1641, 0.0
      %v1766 = vsel %vm1734, %v1640, 0.0
      %v1767 = vsel %vm1735, %v1671, 0.0
      %1768 = vst [vmem:[#allocation3 + $0x28] sm:$0xff] %v1736
      %1769 = vst [vmem:[#allocation3 + $0x70] sm:$0xff] %v1737
      %1770 = vst [vmem:[#allocation3 + $0xb8] sm:$0xff] %v1738
      %1771 = vst [vmem:[#allocation3 + $0x100] sm:$0xff] %v1739
      %1772 = vst [vmem:[#allocation3 + $0x148] sm:$0xff] %v1740
      %1773 = vst [vmem:[#allocation3 + $0x190] sm:$0xff] %v1741
      %1774 = vst [vmem:[#allocation3 + $0x1d8] sm:$0xff] %v1742
      %1775 = vst [vmem:[#allocation3 + $0x220] sm:$0xff] %v1743
      %1776 = vst [vmem:[#allocation3 + $0x268] sm:$0xff] %v1744
      %1777 = vst [vmem:[#allocation3 + $0x2b0] sm:$0xff] %v1745
      %1778 = vst [vmem:[#allocation3 + $0x2f8] sm:$0xff] %v1746
      %1779 = vst [vmem:[#allocation3 + $0x340] sm:$0xff] %v1747
      %1780 = vst [vmem:[#allocation3 + $0x388] sm:$0xff] %v1748
      %1781 = vst [vmem:[#allocation3 + $0x3d0] sm:$0xff] %v1749
      %1782 = vst [vmem:[#allocation3 + $0x418] sm:$0xff] %v1750
      %1783 = vst [vmem:[#allocation3 + $0x460] sm:$0xff] %v1751
      %1784 = vst [vmem:[#allocation3 + $0x4a8] sm:$0xff] %v1752
      %1785 = vst [vmem:[#allocation3 + $0x4f0] sm:$0xff] %v1753
      %1786 = vst [vmem:[#allocation3 + $0x538] sm:$0xff] %v1754
      %1787 = vst [vmem:[#allocation3 + $0x580] sm:$0xff] %v1755
      %1788 = vst [vmem:[#allocation3 + $0x5c8] sm:$0xff] %v1756
      %1789 = vst [vmem:[#allocation3 + $0x610] sm:$0xff] %v1757
      %1790 = vst [vmem:[#allocation3 + $0x658] sm:$0xff] %v1758
      %1791 = vst [vmem:[#allocation3 + $0x6a0] sm:$0xff] %v1759
      %1792 = vst [vmem:[#allocation3 + $0x6e8] sm:$0xff] %v1760
      %1793 = vst [vmem:[#allocation3 + $0x730] sm:$0xff] %v1761
      %1794 = vst [vmem:[#allocation3 + $0x778] sm:$0xff] %v1762
      %1795 = vst [vmem:[#allocation3 + $0x7c0] sm:$0xff] %v1763
      %1796 = vst [vmem:[#allocation3 + $0x808] sm:$0xff] %v1764
      %1797 = vst [vmem:[#allocation3 + $0x850] sm:$0xff] %v1765
      %1798 = vst [vmem:[#allocation3 + $0x898] sm:$0xff] %v1766
      %1799 = vst [vmem:[#allocation3 + $0x8e0] sm:$0xff] %v1767
      %v1800 = vld [vmem:[#allocation2] sm:$0xff]
      %v1801 = vld [vmem:[#allocation2 + $0x8] sm:$0xff]
      %v1802 = vld [vmem:[#allocation2 + $0x10] sm:$0xff]
      %v1803 = vld [vmem:[#allocation2 + $0x18] sm:$0xff]
      %v1804 = vld [vmem:[#allocation2 + $0x20] sm:$0xff]
      %v1805 = vld [vmem:[#allocation2 + $0x28] sm:$0xff]
      %v1806 = vld [vmem:[#allocation2 + $0x30] sm:$0xff]
      %v1807 = vld [vmem:[#allocation2 + $0x38] sm:$0xff]
      %v1808 = vld [vmem:[#allocation2 + $0x40] sm:$0xff]
      %v1809 = vld [vmem:[#allocation2 + $0x48] sm:$0xff]
      %v1810 = vld [vmem:[#allocation2 + $0x50] sm:$0xff]
      %v1811 = vld [vmem:[#allocation2 + $0x58] sm:$0xff]
      %v1812 = vld [vmem:[#allocation2 + $0x60] sm:$0xff]
      %v1813 = vld [vmem:[#allocation2 + $0x68] sm:$0xff]
      %v1814 = vld [vmem:[#allocation2 + $0x70] sm:$0xff]
      %v1815 = vld [vmem:[#allocation2 + $0x78] sm:$0xff]
      %v1816 = vld [vmem:[#allocation2 + $0x80] sm:$0xff]
      %v1817 = vld [vmem:[#allocation2 + $0x88] sm:$0xff]
      %v1818 = vld [vmem:[#allocation2 + $0x90] sm:$0xff]
      %v1819 = vld [vmem:[#allocation2 + $0x98] sm:$0xff]
      %v1820 = vld [vmem:[#allocation2 + $0xa0] sm:$0xff]
      %v1821 = vld [vmem:[#allocation2 + $0xa8] sm:$0xff]
      %v1822 = vld [vmem:[#allocation2 + $0xb0] sm:$0xff]
      %v1823 = vld [vmem:[#allocation2 + $0xb8] sm:$0xff]
      %v1824 = vld [vmem:[#allocation2 + $0xc0] sm:$0xff]
      %v1825 = vld [vmem:[#allocation2 + $0xc8] sm:$0xff]
      %v1826 = vld [vmem:[#allocation2 + $0xd0] sm:$0xff]
      %v1827 = vld [vmem:[#allocation2 + $0xd8] sm:$0xff]
      %v1828 = vld [vmem:[#allocation2 + $0xe0] sm:$0xff]
      %v1829 = vld [vmem:[#allocation2 + $0xe8] sm:$0xff]
      %v1830 = vld [vmem:[#allocation2 + $0xf0] sm:$0xff]
      %v1831 = vld [vmem:[#allocation2 + $0xf8] sm:$0xff]
      %v1832 = vrot.slane %v1800, 7
      %v1833 = vrot.slane %v1801, 7
      %v1834 = vrot.slane %v1802, 7
      %v1835 = vrot.slane %v1803, 7
      %v1836 = vrot.slane %v1804, 7
      %v1837 = vrot.slane %v1805, 7
      %v1838 = vrot.slane %v1806, 7
      %v1839 = vrot.slane %v1807, 7
      %v1840 = vrot.slane %v1808, 7
      %v1841 = vrot.slane %v1809, 7
      %v1842 = vrot.slane %v1810, 7
      %v1843 = vrot.slane %v1811, 7
      %v1844 = vrot.slane %v1812, 7
      %v1845 = vrot.slane %v1813, 7
      %v1846 = vrot.slane %v1814, 7
      %v1847 = vrot.slane %v1815, 7
      %v1848 = vrot.slane %v1816, 7
      %v1849 = vrot.slane %v1817, 7
      %v1850 = vrot.slane %v1818, 7
      %v1851 = vrot.slane %v1819, 7
      %v1852 = vrot.slane %v1820, 7
      %v1853 = vrot.slane %v1821, 7
      %v1854 = vrot.slane %v1822, 7
      %v1855 = vrot.slane %v1823, 7
      %v1856 = vrot.slane %v1824, 7
      %v1857 = vrot.slane %v1825, 7
      %v1858 = vrot.slane %v1826, 7
      %v1859 = vrot.slane %v1827, 7
      %v1860 = vrot.slane %v1828, 7
      %v1861 = vrot.slane %v1829, 7
      %v1862 = vrot.slane %v1830, 7
      %v1863 = vrot.slane %v1831, 7
      %v1864 = vsel %vm582, %v1862, %v1863
      %v1865 = vsel %vm582, %v1861, %v1862
      %v1866 = vsel %vm582, %v1860, %v1861
      %v1867 = vsel %vm582, %v1859, %v1860
      %v1868 = vsel %vm582, %v1858, %v1859
      %v1869 = vsel %vm582, %v1857, %v1858
      %v1870 = vsel %vm582, %v1856, %v1857
      %v1871 = vsel %vm582, %v1855, %v1856
      %v1872 = vsel %vm582, %v1854, %v1855
      %v1873 = vsel %vm582, %v1853, %v1854
      %v1874 = vsel %vm582, %v1852, %v1853
      %v1875 = vsel %vm582, %v1851, %v1852
      %v1876 = vsel %vm582, %v1850, %v1851
      %v1877 = vsel %vm582, %v1849, %v1850
      %v1878 = vsel %vm582, %v1848, %v1849
      %v1879 = vsel %vm582, %v1847, %v1848
      %v1880 = vsel %vm582, %v1846, %v1847
      %v1881 = vsel %vm582, %v1845, %v1846
      %v1882 = vsel %vm582, %v1844, %v1845
      %v1883 = vsel %vm582, %v1843, %v1844
      %v1884 = vsel %vm582, %v1842, %v1843
      %v1885 = vsel %vm582, %v1841, %v1842
      %v1886 = vsel %vm582, %v1840, %v1841
      %v1887 = vsel %vm582, %v1839, %v1840
      %v1888 = vsel %vm582, %v1838, %v1839
      %v1889 = vsel %vm582, %v1837, %v1838
      %v1890 = vsel %vm582, %v1836, %v1837
      %v1891 = vsel %vm582, %v1835, %v1836
      %v1892 = vsel %vm582, %v1834, %v1835
      %v1893 = vsel %vm582, %v1833, %v1834
      %v1894 = vsel %vm582, %v1832, %v1833
      %v1895 = vsel %vm582, %v1863, %v1832
      %vm1896 = vcmp.lt.s32.totalorder %v454, 240
      %vm1897 = vcmp.lt.s32.totalorder %v455, 240
      %vm1898 = vcmp.lt.s32.totalorder %v456, 240
      %vm1899 = vcmp.lt.s32.totalorder %v457, 240
      %vm1900 = vcmp.lt.s32.totalorder %v458, 240
      %vm1901 = vcmp.lt.s32.totalorder %v459, 240
      %vm1902 = vcmp.lt.s32.totalorder %v460, 240
      %vm1903 = vcmp.lt.s32.totalorder %v461, 240
      %vm1904 = vcmp.lt.s32.totalorder %v462, 240
      %vm1905 = vcmp.lt.s32.totalorder %v463, 240
      %vm1906 = vcmp.lt.s32.totalorder %v464, 240
      %vm1907 = vcmp.lt.s32.totalorder %v465, 240
      %vm1908 = vcmp.lt.s32.totalorder %v466, 240
      %vm1909 = vcmp.lt.s32.totalorder %v467, 240
      %vm1910 = vcmp.lt.s32.totalorder %v468, 240
      %vm1911 = vcmp.lt.s32.totalorder %v469, 240
      %vm1912 = vcmp.lt.s32.totalorder %v470, 240
      %vm1913 = vcmp.lt.s32.totalorder %v471, 240
      %vm1914 = vcmp.lt.s32.totalorder %v472, 240
      %vm1915 = vcmp.lt.s32.totalorder %v473, 240
      %vm1916 = vcmp.lt.s32.totalorder %v474, 240
      %vm1917 = vcmp.lt.s32.totalorder %v475, 240
      %vm1918 = vcmp.lt.s32.totalorder %v476, 240
      %vm1919 = vcmp.lt.s32.totalorder %v477, 240
      %vm1920 = vcmp.lt.s32.totalorder %v478, 240
      %vm1921 = vcmp.lt.s32.totalorder %v479, 240
      %vm1922 = vcmp.lt.s32.totalorder %v480, 240
      %vm1923 = vcmp.lt.s32.totalorder %v481, 240
      %vm1924 = vcmp.lt.s32.totalorder %v482, 240
      %vm1925 = vcmp.lt.s32.totalorder %v483, 240
      %vm1926 = vcmp.lt.s32.totalorder %v484, 240
      %vm1927 = vcmp.lt.s32.totalorder %v485, 240
      %vm1928 = vmand %vm1896, %vm647
      %vm1929 = vmand %vm1897, %vm648
      %vm1930 = vmand %vm1898, %vm649
      %vm1931 = vmand %vm1899, %vm650
      %vm1932 = vmand %vm1900, %vm651
      %vm1933 = vmand %vm1901, %vm652
      %vm1934 = vmand %vm1902, %vm653
      %vm1935 = vmand %vm1903, %vm654
      %vm1936 = vmand %vm1904, %vm655
      %vm1937 = vmand %vm1905, %vm656
      %vm1938 = vmand %vm1906, %vm657
      %vm1939 = vmand %vm1907, %vm658
      %vm1940 = vmand %vm1908, %vm659
      %vm1941 = vmand %vm1909, %vm660
      %vm1942 = vmand %vm1910, %vm661
      %vm1943 = vmand %vm1911, %vm662
      %vm1944 = vmand %vm1912, %vm663
      %vm1945 = vmand %vm1913, %vm664
      %vm1946 = vmand %vm1914, %vm665
      %vm1947 = vmand %vm1915, %vm666
      %vm1948 = vmand %vm1916, %vm667
      %vm1949 = vmand %vm1917, %vm668
      %vm1950 = vmand %vm1918, %vm669
      %vm1951 = vmand %vm1919, %vm670
      %vm1952 = vmand %vm1920, %vm671
      %vm1953 = vmand %vm1921, %vm672
      %vm1954 = vmand %vm1922, %vm673
      %vm1955 = vmand %vm1923, %vm674
      %vm1956 = vmand %vm1924, %vm675
      %vm1957 = vmand %vm1925, %vm676
      %vm1958 = vmand %vm1926, %vm677
      %vm1959 = vmand %vm1927, %vm678
      %v1960 = vsel %vm1928, 1, 0
      %v1961 = vsel %vm1929, 1, 0
      %v1962 = vsel %vm1930, 1, 0
      %v1963 = vsel %vm1931, 1, 0
      %v1964 = vsel %vm1932, 1, 0
      %v1965 = vsel %vm1933, 1, 0
      %v1966 = vsel %vm1934, 1, 0
      %v1967 = vsel %vm1935, 1, 0
      %v1968 = vsel %vm1936, 1, 0
      %v1969 = vsel %vm1937, 1, 0
      %v1970 = vsel %vm1938, 1, 0
      %v1971 = vsel %vm1939, 1, 0
      %v1972 = vsel %vm1940, 1, 0
      %v1973 = vsel %vm1941, 1, 0
      %v1974 = vsel %vm1942, 1, 0
      %v1975 = vsel %vm1943, 1, 0
      %v1976 = vsel %vm1944, 1, 0
      %v1977 = vsel %vm1945, 1, 0
      %v1978 = vsel %vm1946, 1, 0
      %v1979 = vsel %vm1947, 1, 0
      %v1980 = vsel %vm1948, 1, 0
      %v1981 = vsel %vm1949, 1, 0
      %v1982 = vsel %vm1950, 1, 0
      %v1983 = vsel %vm1951, 1, 0
      %v1984 = vsel %vm1952, 1, 0
      %v1985 = vsel %vm1953, 1, 0
      %v1986 = vsel %vm1954, 1, 0
      %v1987 = vsel %vm1955, 1, 0
      %v1988 = vsel %vm1956, 1, 0
      %v1989 = vsel %vm1957, 1, 0
      %v1990 = vsel %vm1958, 1, 0
      %v1991 = vsel %vm1959, 1, 0
      %vm1992 = vcmp.eq.s32.totalorder %v1960, 1
      %vm1993 = vcmp.eq.s32.totalorder %v1961, 1
      %vm1994 = vcmp.eq.s32.totalorder %v1962, 1
      %vm1995 = vcmp.eq.s32.totalorder %v1963, 1
      %vm1996 = vcmp.eq.s32.totalorder %v1964, 1
      %vm1997 = vcmp.eq.s32.totalorder %v1965, 1
      %vm1998 = vcmp.eq.s32.totalorder %v1966, 1
      %vm1999 = vcmp.eq.s32.totalorder %v1967, 1
      %vm2000 = vcmp.eq.s32.totalorder %v1968, 1
      %vm2001 = vcmp.eq.s32.totalorder %v1969, 1
      %vm2002 = vcmp.eq.s32.totalorder %v1970, 1
      %vm2003 = vcmp.eq.s32.totalorder %v1971, 1
      %vm2004 = vcmp.eq.s32.totalorder %v1972, 1
      %vm2005 = vcmp.eq.s32.totalorder %v1973, 1
      %vm2006 = vcmp.eq.s32.totalorder %v1974, 1
      %vm2007 = vcmp.eq.s32.totalorder %v1975, 1
      %vm2008 = vcmp.eq.s32.totalorder %v1976, 1
      %vm2009 = vcmp.eq.s32.totalorder %v1977, 1
      %vm2010 = vcmp.eq.s32.totalorder %v1978, 1
      %vm2011 = vcmp.eq.s32.totalorder %v1979, 1
      %vm2012 = vcmp.eq.s32.totalorder %v1980, 1
      %vm2013 = vcmp.eq.s32.totalorder %v1981, 1
      %vm2014 = vcmp.eq.s32.totalorder %v1982, 1
      %vm2015 = vcmp.eq.s32.totalorder %v1983, 1
      %vm2016 = vcmp.eq.s32.totalorder %v1984, 1
      %vm2017 = vcmp.eq.s32.totalorder %v1985, 1
      %vm2018 = vcmp.eq.s32.totalorder %v1986, 1
      %vm2019 = vcmp.eq.s32.totalorder %v1987, 1
      %vm2020 = vcmp.eq.s32.totalorder %v1988, 1
      %vm2021 = vcmp.eq.s32.totalorder %v1989, 1
      %vm2022 = vcmp.eq.s32.totalorder %v1990, 1
      %vm2023 = vcmp.eq.s32.totalorder %v1991, 1
      %v2024 = vsel %vm1992, %v1893, 0.0
      %v2025 = vsel %vm1993, %v1892, 0.0
      %v2026 = vsel %vm1994, %v1891, 0.0
      %v2027 = vsel %vm1995, %v1890, 0.0
      %v2028 = vsel %vm1996, %v1889, 0.0
      %v2029 = vsel %vm1997, %v1888, 0.0
      %v2030 = vsel %vm1998, %v1887, 0.0
      %v2031 = vsel %vm1999, %v1886, 0.0
      %v2032 = vsel %vm2000, %v1885, 0.0
      %v2033 = vsel %vm2001, %v1884, 0.0
      %v2034 = vsel %vm2002, %v1883, 0.0
      %v2035 = vsel %vm2003, %v1882, 0.0
      %v2036 = vsel %vm2004, %v1881, 0.0
      %v2037 = vsel %vm2005, %v1880, 0.0
      %v2038 = vsel %vm2006, %v1879, 0.0
      %v2039 = vsel %vm2007, %v1878, 0.0
      %v2040 = vsel %vm2008, %v1877, 0.0
      %v2041 = vsel %vm2009, %v1876, 0.0
      %v2042 = vsel %vm2010, %v1875, 0.0
      %v2043 = vsel %vm2011, %v1874, 0.0
      %v2044 = vsel %vm2012, %v1873, 0.0
      %v2045 = vsel %vm2013, %v1872, 0.0
      %v2046 = vsel %vm2014, %v1871, 0.0
      %v2047 = vsel %vm2015, %v1870, 0.0
      %v2048 = vsel %vm2016, %v1869, 0.0
      %v2049 = vsel %vm2017, %v1868, 0.0
      %v2050 = vsel %vm2018, %v1867, 0.0
      %v2051 = vsel %vm2019, %v1866, 0.0
      %v2052 = vsel %vm2020, %v1865, 0.0
      %v2053 = vsel %vm2021, %v1864, 0.0
      %v2054 = vsel %vm2022, %v1895, 0.0
      %v2055 = vsel %vm2023, %v1894, 0.0
      %2056 = vst [vmem:[#allocation3 + $0x30] sm:$0xff] %v2024
      %2057 = vst [vmem:[#allocation3 + $0x78] sm:$0xff] %v2025
      %2058 = vst [vmem:[#allocation3 + $0xc0] sm:$0xff] %v2026
      %2059 = vst [vmem:[#allocation3 + $0x108] sm:$0xff] %v2027
      %2060 = vst [vmem:[#allocation3 + $0x150] sm:$0xff] %v2028
      %2061 = vst [vmem:[#allocation3 + $0x198] sm:$0xff] %v2029
      %2062 = vst [vmem:[#allocation3 + $0x1e0] sm:$0xff] %v2030
      %2063 = vst [vmem:[#allocation3 + $0x228] sm:$0xff] %v2031
      %2064 = vst [vmem:[#allocation3 + $0x270] sm:$0xff] %v2032
      %2065 = vst [vmem:[#allocation3 + $0x2b8] sm:$0xff] %v2033
      %2066 = vst [vmem:[#allocation3 + $0x300] sm:$0xff] %v2034
      %2067 = vst [vmem:[#allocation3 + $0x348] sm:$0xff] %v2035
      %2068 = vst [vmem:[#allocation3 + $0x390] sm:$0xff] %v2036
      %2069 = vst [vmem:[#allocation3 + $0x3d8] sm:$0xff] %v2037
      %2070 = vst [vmem:[#allocation3 + $0x420] sm:$0xff] %v2038
      %2071 = vst [vmem:[#allocation3 + $0x468] sm:$0xff] %v2039
      %2072 = vst [vmem:[#allocation3 + $0x4b0] sm:$0xff] %v2040
      %2073 = vst [vmem:[#allocation3 + $0x4f8] sm:$0xff] %v2041
      %2074 = vst [vmem:[#allocation3 + $0x540] sm:$0xff] %v2042
      %2075 = vst [vmem:[#allocation3 + $0x588] sm:$0xff] %v2043
      %2076 = vst [vmem:[#allocation3 + $0x5d0] sm:$0xff] %v2044
      %2077 = vst [vmem:[#allocation3 + $0x618] sm:$0xff] %v2045
      %2078 = vst [vmem:[#allocation3 + $0x660] sm:$0xff] %v2046
      %2079 = vst [vmem:[#allocation3 + $0x6a8] sm:$0xff] %v2047
      %2080 = vst [vmem:[#allocation3 + $0x6f0] sm:$0xff] %v2048
      %2081 = vst [vmem:[#allocation3 + $0x738] sm:$0xff] %v2049
      %2082 = vst [vmem:[#allocation3 + $0x780] sm:$0xff] %v2050
      %2083 = vst [vmem:[#allocation3 + $0x7c8] sm:$0xff] %v2051
      %2084 = vst [vmem:[#allocation3 + $0x810] sm:$0xff] %v2052
      %2085 = vst [vmem:[#allocation3 + $0x858] sm:$0xff] %v2053
      %2086 = vst [vmem:[#allocation3 + $0x8a0] sm:$0xff] %v2054
      %2087 = vst [vmem:[#allocation3 + $0x8e8] sm:$0xff] %v2055
      %v2088 = vld [vmem:[#allocation2] sm:$0xff]
      %v2089 = vld [vmem:[#allocation2 + $0x8] sm:$0xff]
      %v2090 = vld [vmem:[#allocation2 + $0x10] sm:$0xff]
      %v2091 = vld [vmem:[#allocation2 + $0x18] sm:$0xff]
      %v2092 = vld [vmem:[#allocation2 + $0x20] sm:$0xff]
      %v2093 = vld [vmem:[#allocation2 + $0x28] sm:$0xff]
      %v2094 = vld [vmem:[#allocation2 + $0x30] sm:$0xff]
      %v2095 = vld [vmem:[#allocation2 + $0x38] sm:$0xff]
      %v2096 = vld [vmem:[#allocation2 + $0x40] sm:$0xff]
      %v2097 = vld [vmem:[#allocation2 + $0x48] sm:$0xff]
      %v2098 = vld [vmem:[#allocation2 + $0x50] sm:$0xff]
      %v2099 = vld [vmem:[#allocation2 + $0x58] sm:$0xff]
      %v2100 = vld [vmem:[#allocation2 + $0x60] sm:$0xff]
      %v2101 = vld [vmem:[#allocation2 + $0x68] sm:$0xff]
      %v2102 = vld [vmem:[#allocation2 + $0x70] sm:$0xff]
      %v2103 = vld [vmem:[#allocation2 + $0x78] sm:$0xff]
      %v2104 = vld [vmem:[#allocation2 + $0x80] sm:$0xff]
      %v2105 = vld [vmem:[#allocation2 + $0x88] sm:$0xff]
      %v2106 = vld [vmem:[#allocation2 + $0x90] sm:$0xff]
      %v2107 = vld [vmem:[#allocation2 + $0x98] sm:$0xff]
      %v2108 = vld [vmem:[#allocation2 + $0xa0] sm:$0xff]
      %v2109 = vld [vmem:[#allocation2 + $0xa8] sm:$0xff]
      %v2110 = vld [vmem:[#allocation2 + $0xb0] sm:$0xff]
      %v2111 = vld [vmem:[#allocation2 + $0xb8] sm:$0xff]
      %v2112 = vld [vmem:[#allocation2 + $0xc0] sm:$0xff]
      %v2113 = vld [vmem:[#allocation2 + $0xc8] sm:$0xff]
      %v2114 = vld [vmem:[#allocation2 + $0xd0] sm:$0xff]
      %v2115 = vld [vmem:[#allocation2 + $0xd8] sm:$0xff]
      %v2116 = vld [vmem:[#allocation2 + $0xe0] sm:$0xff]
      %v2117 = vld [vmem:[#allocation2 + $0xe8] sm:$0xff]
      %v2118 = vld [vmem:[#allocation2 + $0xf0] sm:$0xff]
      %v2119 = vld [vmem:[#allocation2 + $0xf8] sm:$0xff]
      %v2120 = vsel %vm1896, 1, 0
      %v2121 = vsel %vm1897, 1, 0
      %v2122 = vsel %vm1898, 1, 0
      %v2123 = vsel %vm1899, 1, 0
      %v2124 = vsel %vm1900, 1, 0
      %v2125 = vsel %vm1901, 1, 0
      %v2126 = vsel %vm1902, 1, 0
      %v2127 = vsel %vm1903, 1, 0
      %v2128 = vsel %vm1904, 1, 0
      %v2129 = vsel %vm1905, 1, 0
      %v2130 = vsel %vm1906, 1, 0
      %v2131 = vsel %vm1907, 1, 0
      %v2132 = vsel %vm1908, 1, 0
      %v2133 = vsel %vm1909, 1, 0
      %v2134 = vsel %vm1910, 1, 0
      %v2135 = vsel %vm1911, 1, 0
      %v2136 = vsel %vm1912, 1, 0
      %v2137 = vsel %vm1913, 1, 0
      %v2138 = vsel %vm1914, 1, 0
      %v2139 = vsel %vm1915, 1, 0
      %v2140 = vsel %vm1916, 1, 0
      %v2141 = vsel %vm1917, 1, 0
      %v2142 = vsel %vm1918, 1, 0
      %v2143 = vsel %vm1919, 1, 0
      %v2144 = vsel %vm1920, 1, 0
      %v2145 = vsel %vm1921, 1, 0
      %v2146 = vsel %vm1922, 1, 0
      %v2147 = vsel %vm1923, 1, 0
      %v2148 = vsel %vm1924, 1, 0
      %v2149 = vsel %vm1925, 1, 0
      %v2150 = vsel %vm1926, 1, 0
      %v2151 = vsel %vm1927, 1, 0
      %vm2152 = vcmp.eq.s32.totalorder %v2120, 1
      %vm2153 = vcmp.eq.s32.totalorder %v2121, 1
      %vm2154 = vcmp.eq.s32.totalorder %v2122, 1
      %vm2155 = vcmp.eq.s32.totalorder %v2123, 1
      %vm2156 = vcmp.eq.s32.totalorder %v2124, 1
      %vm2157 = vcmp.eq.s32.totalorder %v2125, 1
      %vm2158 = vcmp.eq.s32.totalorder %v2126, 1
      %vm2159 = vcmp.eq.s32.totalorder %v2127, 1
      %vm2160 = vcmp.eq.s32.totalorder %v2128, 1
      %vm2161 = vcmp.eq.s32.totalorder %v2129, 1
      %vm2162 = vcmp.eq.s32.totalorder %v2130, 1
      %vm2163 = vcmp.eq.s32.totalorder %v2131, 1
      %vm2164 = vcmp.eq.s32.totalorder %v2132, 1
      %vm2165 = vcmp.eq.s32.totalorder %v2133, 1
      %vm2166 = vcmp.eq.s32.totalorder %v2134, 1
      %vm2167 = vcmp.eq.s32.totalorder %v2135, 1
      %vm2168 = vcmp.eq.s32.totalorder %v2136, 1
      %vm2169 = vcmp.eq.s32.totalorder %v2137, 1
      %vm2170 = vcmp.eq.s32.totalorder %v2138, 1
      %vm2171 = vcmp.eq.s32.totalorder %v2139, 1
      %vm2172 = vcmp.eq.s32.totalorder %v2140, 1
      %vm2173 = vcmp.eq.s32.totalorder %v2141, 1
      %vm2174 = vcmp.eq.s32.totalorder %v2142, 1
      %vm2175 = vcmp.eq.s32.totalorder %v2143, 1
      %vm2176 = vcmp.eq.s32.totalorder %v2144, 1
      %vm2177 = vcmp.eq.s32.totalorder %v2145, 1
      %vm2178 = vcmp.eq.s32.totalorder %v2146, 1
      %vm2179 = vcmp.eq.s32.totalorder %v2147, 1
      %vm2180 = vcmp.eq.s32.totalorder %v2148, 1
      %vm2181 = vcmp.eq.s32.totalorder %v2149, 1
      %vm2182 = vcmp.eq.s32.totalorder %v2150, 1
      %vm2183 = vcmp.eq.s32.totalorder %v2151, 1
      %v2184 = vsel %vm2152, %v2090, 0.0
      %v2185 = vsel %vm2153, %v2091, 0.0
      %v2186 = vsel %vm2154, %v2092, 0.0
      %v2187 = vsel %vm2155, %v2093, 0.0
      %v2188 = vsel %vm2156, %v2094, 0.0
      %v2189 = vsel %vm2157, %v2095, 0.0
      %v2190 = vsel %vm2158, %v2096, 0.0
      %v2191 = vsel %vm2159, %v2097, 0.0
      %v2192 = vsel %vm2160, %v2098, 0.0
      %v2193 = vsel %vm2161, %v2099, 0.0
      %v2194 = vsel %vm2162, %v2100, 0.0
      %v2195 = vsel %vm2163, %v2101, 0.0
      %v2196 = vsel %vm2164, %v2102, 0.0
      %v2197 = vsel %vm2165, %v2103, 0.0
      %v2198 = vsel %vm2166, %v2104, 0.0
      %v2199 = vsel %vm2167, %v2105, 0.0
      %v2200 = vsel %vm2168, %v2106, 0.0
      %v2201 = vsel %vm2169, %v2107, 0.0
      %v2202 = vsel %vm2170, %v2108, 0.0
      %v2203 = vsel %vm2171, %v2109, 0.0
      %v2204 = vsel %vm2172, %v2110, 0.0
      %v2205 = vsel %vm2173, %v2111, 0.0
      %v2206 = vsel %vm2174, %v2112, 0.0
      %v2207 = vsel %vm2175, %v2113, 0.0
      %v2208 = vsel %vm2176, %v2114, 0.0
      %v2209 = vsel %vm2177, %v2115, 0.0
      %v2210 = vsel %vm2178, %v2116, 0.0
      %v2211 = vsel %vm2179, %v2117, 0.0
      %v2212 = vsel %vm2180, %v2118, 0.0
      %v2213 = vsel %vm2181, %v2119, 0.0
      %v2214 = vsel %vm2182, %v2088, 0.0
      %v2215 = vsel %vm2183, %v2089, 0.0
      %2216 = vst [vmem:[#allocation3 + $0x38] sm:$0xff] %v2184
      %2217 = vst [vmem:[#allocation3 + $0x80] sm:$0xff] %v2185
      %2218 = vst [vmem:[#allocation3 + $0xc8] sm:$0xff] %v2186
      %2219 = vst [vmem:[#allocation3 + $0x110] sm:$0xff] %v2187
      %2220 = vst [vmem:[#allocation3 + $0x158] sm:$0xff] %v2188
      %2221 = vst [vmem:[#allocation3 + $0x1a0] sm:$0xff] %v2189
      %2222 = vst [vmem:[#allocation3 + $0x1e8] sm:$0xff] %v2190
      %2223 = vst [vmem:[#allocation3 + $0x230] sm:$0xff] %v2191
      %2224 = vst [vmem:[#allocation3 + $0x278] sm:$0xff] %v2192
      %2225 = vst [vmem:[#allocation3 + $0x2c0] sm:$0xff] %v2193
      %2226 = vst [vmem:[#allocation3 + $0x308] sm:$0xff] %v2194
      %2227 = vst [vmem:[#allocation3 + $0x350] sm:$0xff] %v2195
      %2228 = vst [vmem:[#allocation3 + $0x398] sm:$0xff] %v2196
      %2229 = vst [vmem:[#allocation3 + $0x3e0] sm:$0xff] %v2197
      %2230 = vst [vmem:[#allocation3 + $0x428] sm:$0xff] %v2198
      %2231 = vst [vmem:[#allocation3 + $0x470] sm:$0xff] %v2199
      %2232 = vst [vmem:[#allocation3 + $0x4b8] sm:$0xff] %v2200
      %2233 = vst [vmem:[#allocation3 + $0x500] sm:$0xff] %v2201
      %2234 = vst [vmem:[#allocation3 + $0x548] sm:$0xff] %v2202
      %2235 = vst [vmem:[#allocation3 + $0x590] sm:$0xff] %v2203
      %2236 = vst [vmem:[#allocation3 + $0x5d8] sm:$0xff] %v2204
      %2237 = vst [vmem:[#allocation3 + $0x620] sm:$0xff] %v2205
      %2238 = vst [vmem:[#allocation3 + $0x668] sm:$0xff] %v2206
      %2239 = vst [vmem:[#allocation3 + $0x6b0] sm:$0xff] %v2207
      %2240 = vst [vmem:[#allocation3 + $0x6f8] sm:$0xff] %v2208
      %2241 = vst [vmem:[#allocation3 + $0x740] sm:$0xff] %v2209
      %2242 = vst [vmem:[#allocation3 + $0x788] sm:$0xff] %v2210
      %2243 = vst [vmem:[#allocation3 + $0x7d0] sm:$0xff] %v2211
      %2244 = vst [vmem:[#allocation3 + $0x818] sm:$0xff] %v2212
      %2245 = vst [vmem:[#allocation3 + $0x860] sm:$0xff] %v2213
      %2246 = vst [vmem:[#allocation3 + $0x8a8] sm:$0xff] %v2214
      %2247 = vst [vmem:[#allocation3 + $0x8f0] sm:$0xff] %v2215
      %v2248 = vld [vmem:[#allocation2] sm:$0xff]
      %v2249 = vld [vmem:[#allocation2 + $0x8] sm:$0xff]
      %v2250 = vld [vmem:[#allocation2 + $0x10] sm:$0xff]
      %v2251 = vld [vmem:[#allocation2 + $0x18] sm:$0xff]
      %v2252 = vld [vmem:[#allocation2 + $0x20] sm:$0xff]
      %v2253 = vld [vmem:[#allocation2 + $0x28] sm:$0xff]
      %v2254 = vld [vmem:[#allocation2 + $0x30] sm:$0xff]
      %v2255 = vld [vmem:[#allocation2 + $0x38] sm:$0xff]
      %v2256 = vld [vmem:[#allocation2 + $0x40] sm:$0xff]
      %v2257 = vld [vmem:[#allocation2 + $0x48] sm:$0xff]
      %v2258 = vld [vmem:[#allocation2 + $0x50] sm:$0xff]
      %v2259 = vld [vmem:[#allocation2 + $0x58] sm:$0xff]
      %v2260 = vld [vmem:[#allocation2 + $0x60] sm:$0xff]
      %v2261 = vld [vmem:[#allocation2 + $0x68] sm:$0xff]
      %v2262 = vld [vmem:[#allocation2 + $0x70] sm:$0xff]
      %v2263 = vld [vmem:[#allocation2 + $0x78] sm:$0xff]
      %v2264 = vld [vmem:[#allocation2 + $0x80] sm:$0xff]
      %v2265 = vld [vmem:[#allocation2 + $0x88] sm:$0xff]
      %v2266 = vld [vmem:[#allocation2 + $0x90] sm:$0xff]
      %v2267 = vld [vmem:[#allocation2 + $0x98] sm:$0xff]
      %v2268 = vld [vmem:[#allocation2 + $0xa0] sm:$0xff]
      %v2269 = vld [vmem:[#allocation2 + $0xa8] sm:$0xff]
      %v2270 = vld [vmem:[#allocation2 + $0xb0] sm:$0xff]
      %v2271 = vld [vmem:[#allocation2 + $0xb8] sm:$0xff]
      %v2272 = vld [vmem:[#allocation2 + $0xc0] sm:$0xff]
      %v2273 = vld [vmem:[#allocation2 + $0xc8] sm:$0xff]
      %v2274 = vld [vmem:[#allocation2 + $0xd0] sm:$0xff]
      %v2275 = vld [vmem:[#allocation2 + $0xd8] sm:$0xff]
      %v2276 = vld [vmem:[#allocation2 + $0xe0] sm:$0xff]
      %v2277 = vld [vmem:[#allocation2 + $0xe8] sm:$0xff]
      %v2278 = vld [vmem:[#allocation2 + $0xf0] sm:$0xff]
      %v2279 = vld [vmem:[#allocation2 + $0xf8] sm:$0xff]
      %v2280 = vrot.slane %v2248, 1
      %v2281 = vrot.slane %v2249, 1
      %v2282 = vrot.slane %v2250, 1
      %v2283 = vrot.slane %v2251, 1
      %v2284 = vrot.slane %v2252, 1
      %v2285 = vrot.slane %v2253, 1
      %v2286 = vrot.slane %v2254, 1
      %v2287 = vrot.slane %v2255, 1
      %v2288 = vrot.slane %v2256, 1
      %v2289 = vrot.slane %v2257, 1
      %v2290 = vrot.slane %v2258, 1
      %v2291 = vrot.slane %v2259, 1
      %v2292 = vrot.slane %v2260, 1
      %v2293 = vrot.slane %v2261, 1
      %v2294 = vrot.slane %v2262, 1
      %v2295 = vrot.slane %v2263, 1
      %v2296 = vrot.slane %v2264, 1
      %v2297 = vrot.slane %v2265, 1
      %v2298 = vrot.slane %v2266, 1
      %v2299 = vrot.slane %v2267, 1
      %v2300 = vrot.slane %v2268, 1
      %v2301 = vrot.slane %v2269, 1
      %v2302 = vrot.slane %v2270, 1
      %v2303 = vrot.slane %v2271, 1
      %v2304 = vrot.slane %v2272, 1
      %v2305 = vrot.slane %v2273, 1
      %v2306 = vrot.slane %v2274, 1
      %v2307 = vrot.slane %v2275, 1
      %v2308 = vrot.slane %v2276, 1
      %v2309 = vrot.slane %v2277, 1
      %v2310 = vrot.slane %v2278, 1
      %v2311 = vrot.slane %v2279, 1
      %v2312 = vsel %vm1063, %v2310, %v2311
      %v2313 = vsel %vm1063, %v2309, %v2310
      %v2314 = vsel %vm1063, %v2308, %v2309
      %v2315 = vsel %vm1063, %v2307, %v2308
      %v2316 = vsel %vm1063, %v2306, %v2307
      %v2317 = vsel %vm1063, %v2305, %v2306
      %v2318 = vsel %vm1063, %v2304, %v2305
      %v2319 = vsel %vm1063, %v2303, %v2304
      %v2320 = vsel %vm1063, %v2302, %v2303
      %v2321 = vsel %vm1063, %v2301, %v2302
      %v2322 = vsel %vm1063, %v2300, %v2301
      %v2323 = vsel %vm1063, %v2299, %v2300
      %v2324 = vsel %vm1063, %v2298, %v2299
      %v2325 = vsel %vm1063, %v2297, %v2298
      %v2326 = vsel %vm1063, %v2296, %v2297
      %v2327 = vsel %vm1063, %v2295, %v2296
      %v2328 = vsel %vm1063, %v2294, %v2295
      %v2329 = vsel %vm1063, %v2293, %v2294
      %v2330 = vsel %vm1063, %v2292, %v2293
      %v2331 = vsel %vm1063, %v2291, %v2292
      %v2332 = vsel %vm1063, %v2290, %v2291
      %v2333 = vsel %vm1063, %v2289, %v2290
      %v2334 = vsel %vm1063, %v2288, %v2289
      %v2335 = vsel %vm1063, %v2287, %v2288
      %v2336 = vsel %vm1063, %v2286, %v2287
      %v2337 = vsel %vm1063, %v2285, %v2286
      %v2338 = vsel %vm1063, %v2284, %v2285
      %v2339 = vsel %vm1063, %v2283, %v2284
      %v2340 = vsel %vm1063, %v2282, %v2283
      %v2341 = vsel %vm1063, %v2281, %v2282
      %v2342 = vsel %vm1063, %v2280, %v2281
      %v2343 = vsel %vm1063, %v2311, %v2280
      %vm2344 = vmand %vm1896, %vm1096
      %vm2345 = vmand %vm1897, %vm1097
      %vm2346 = vmand %vm1898, %vm1098
      %vm2347 = vmand %vm1899, %vm1099
      %vm2348 = vmand %vm1900, %vm1100
      %vm2349 = vmand %vm1901, %vm1101
      %vm2350 = vmand %vm1902, %vm1102
      %vm2351 = vmand %vm1903, %vm1103
      %vm2352 = vmand %vm1904, %vm1104
      %vm2353 = vmand %vm1905, %vm1105
      %vm2354 = vmand %vm1906, %vm1106
      %vm2355 = vmand %vm1907, %vm1107
      %vm2356 = vmand %vm1908, %vm1108
      %vm2357 = vmand %vm1909, %vm1109
      %vm2358 = vmand %vm1910, %vm1110
      %vm2359 = vmand %vm1911, %vm1111
      %vm2360 = vmand %vm1912, %vm1112
      %vm2361 = vmand %vm1913, %vm1113
      %vm2362 = vmand %vm1914, %vm1114
      %vm2363 = vmand %vm1915, %vm1115
      %vm2364 = vmand %vm1916, %vm1116
      %vm2365 = vmand %vm1917, %vm1117
      %vm2366 = vmand %vm1918, %vm1118
      %vm2367 = vmand %vm1919, %vm1119
      %vm2368 = vmand %vm1920, %vm1120
      %vm2369 = vmand %vm1921, %vm1121
      %vm2370 = vmand %vm1922, %vm1122
      %vm2371 = vmand %vm1923, %vm1123
      %vm2372 = vmand %vm1924, %vm1124
      %vm2373 = vmand %vm1925, %vm1125
      %vm2374 = vmand %vm1926, %vm1126
      %vm2375 = vmand %vm1927, %vm1127
      %v2376 = vsel %vm2344, 1, 0
      %v2377 = vsel %vm2345, 1, 0
      %v2378 = vsel %vm2346, 1, 0
      %v2379 = vsel %vm2347, 1, 0
      %v2380 = vsel %vm2348, 1, 0
      %v2381 = vsel %vm2349, 1, 0
      %v2382 = vsel %vm2350, 1, 0
      %v2383 = vsel %vm2351, 1, 0
      %v2384 = vsel %vm2352, 1, 0
      %v2385 = vsel %vm2353, 1, 0
      %v2386 = vsel %vm2354, 1, 0
      %v2387 = vsel %vm2355, 1, 0
      %v2388 = vsel %vm2356, 1, 0
      %v2389 = vsel %vm2357, 1, 0
      %v2390 = vsel %vm2358, 1, 0
      %v2391 = vsel %vm2359, 1, 0
      %v2392 = vsel %vm2360, 1, 0
      %v2393 = vsel %vm2361, 1, 0
      %v2394 = vsel %vm2362, 1, 0
      %v2395 = vsel %vm2363, 1, 0
      %v2396 = vsel %vm2364, 1, 0
      %v2397 = vsel %vm2365, 1, 0
      %v2398 = vsel %vm2366, 1, 0
      %v2399 = vsel %vm2367, 1, 0
      %v2400 = vsel %vm2368, 1, 0
      %v2401 = vsel %vm2369, 1, 0
      %v2402 = vsel %vm2370, 1, 0
      %v2403 = vsel %vm2371, 1, 0
      %v2404 = vsel %vm2372, 1, 0
      %v2405 = vsel %vm2373, 1, 0
      %v2406 = vsel %vm2374, 1, 0
      %v2407 = vsel %vm2375, 1, 0
      %vm2408 = vcmp.eq.s32.totalorder %v2376, 1
      %vm2409 = vcmp.eq.s32.totalorder %v2377, 1
      %vm2410 = vcmp.eq.s32.totalorder %v2378, 1
      %vm2411 = vcmp.eq.s32.totalorder %v2379, 1
      %vm2412 = vcmp.eq.s32.totalorder %v2380, 1
      %vm2413 = vcmp.eq.s32.totalorder %v2381, 1
      %vm2414 = vcmp.eq.s32.totalorder %v2382, 1
      %vm2415 = vcmp.eq.s32.totalorder %v2383, 1
      %vm2416 = vcmp.eq.s32.totalorder %v2384, 1
      %vm2417 = vcmp.eq.s32.totalorder %v2385, 1
      %vm2418 = vcmp.eq.s32.totalorder %v2386, 1
      %vm2419 = vcmp.eq.s32.totalorder %v2387, 1
      %vm2420 = vcmp.eq.s32.totalorder %v2388, 1
      %vm2421 = vcmp.eq.s32.totalorder %v2389, 1
      %vm2422 = vcmp.eq.s32.totalorder %v2390, 1
      %vm2423 = vcmp.eq.s32.totalorder %v2391, 1
      %vm2424 = vcmp.eq.s32.totalorder %v2392, 1
      %vm2425 = vcmp.eq.s32.totalorder %v2393, 1
      %vm2426 = vcmp.eq.s32.totalorder %v2394, 1
      %vm2427 = vcmp.eq.s32.totalorder %v2395, 1
      %vm2428 = vcmp.eq.s32.totalorder %v2396, 1
      %vm2429 = vcmp.eq.s32.totalorder %v2397, 1
      %vm2430 = vcmp.eq.s32.totalorder %v2398, 1
      %vm2431 = vcmp.eq.s32.totalorder %v2399, 1
      %vm2432 = vcmp.eq.s32.totalorder %v2400, 1
      %vm2433 = vcmp.eq.s32.totalorder %v2401, 1
      %vm2434 = vcmp.eq.s32.totalorder %v2402, 1
      %vm2435 = vcmp.eq.s32.totalorder %v2403, 1
      %vm2436 = vcmp.eq.s32.totalorder %v2404, 1
      %vm2437 = vcmp.eq.s32.totalorder %v2405, 1
      %vm2438 = vcmp.eq.s32.totalorder %v2406, 1
      %vm2439 = vcmp.eq.s32.totalorder %v2407, 1
      %v2440 = vsel %vm2408, %v2340, 0.0
      %v2441 = vsel %vm2409, %v2339, 0.0
      %v2442 = vsel %vm2410, %v2338, 0.0
      %v2443 = vsel %vm2411, %v2337, 0.0
      %v2444 = vsel %vm2412, %v2336, 0.0
      %v2445 = vsel %vm2413, %v2335, 0.0
      %v2446 = vsel %vm2414, %v2334, 0.0
      %v2447 = vsel %vm2415, %v2333, 0.0
      %v2448 = vsel %vm2416, %v2332, 0.0
      %v2449 = vsel %vm2417, %v2331, 0.0
      %v2450 = vsel %vm2418, %v2330, 0.0
      %v2451 = vsel %vm2419, %v2329, 0.0
      %v2452 = vsel %vm2420, %v2328, 0.0
      %v2453 = vsel %vm2421, %v2327, 0.0
      %v2454 = vsel %vm2422, %v2326, 0.0
      %v2455 = vsel %vm2423, %v2325, 0.0
      %v2456 = vsel %vm2424, %v2324, 0.0
      %v2457 = vsel %vm2425, %v2323, 0.0
      %v2458 = vsel %vm2426, %v2322, 0.0
      %v2459 = vsel %vm2427, %v2321, 0.0
      %v2460 = vsel %vm2428, %v2320, 0.0
      %v2461 = vsel %vm2429, %v2319, 0.0
      %v2462 = vsel %vm2430, %v2318, 0.0
      %v2463 = vsel %vm2431, %v2317, 0.0
      %v2464 = vsel %vm2432, %v2316, 0.0
      %v2465 = vsel %vm2433, %v2315, 0.0
      %v2466 = vsel %vm2434, %v2314, 0.0
      %v2467 = vsel %vm2435, %v2313, 0.0
      %v2468 = vsel %vm2436, %v2312, 0.0
      %v2469 = vsel %vm2437, %v2343, 0.0
      %v2470 = vsel %vm2438, %v2342, 0.0
      %v2471 = vsel %vm2439, %v2341, 0.0
      %2472 = vst [vmem:[#allocation3 + $0x40] sm:$0xff] %v2440
      %2473 = vst [vmem:[#allocation3 + $0x88] sm:$0xff] %v2441
      %2474 = vst [vmem:[#allocation3 + $0xd0] sm:$0xff] %v2442
      %2475 = vst [vmem:[#allocation3 + $0x118] sm:$0xff] %v2443
      %2476 = vst [vmem:[#allocation3 + $0x160] sm:$0xff] %v2444
      %2477 = vst [vmem:[#allocation3 + $0x1a8] sm:$0xff] %v2445
      %2478 = vst [vmem:[#allocation3 + $0x1f0] sm:$0xff] %v2446
      %2479 = vst [vmem:[#allocation3 + $0x238] sm:$0xff] %v2447
      %2480 = vst [vmem:[#allocation3 + $0x280] sm:$0xff] %v2448
      %2481 = vst [vmem:[#allocation3 + $0x2c8] sm:$0xff] %v2449
      %2482 = vst [vmem:[#allocation3 + $0x310] sm:$0xff] %v2450
      %2483 = vst [vmem:[#allocation3 + $0x358] sm:$0xff] %v2451
      %2484 = vst [vmem:[#allocation3 + $0x3a0] sm:$0xff] %v2452
      %2485 = vst [vmem:[#allocation3 + $0x3e8] sm:$0xff] %v2453
      %2486 = vst [vmem:[#allocation3 + $0x430] sm:$0xff] %v2454
      %2487 = vst [vmem:[#allocation3 + $0x478] sm:$0xff] %v2455
      %2488 = vst [vmem:[#allocation3 + $0x4c0] sm:$0xff] %v2456
      %2489 = vst [vmem:[#allocation3 + $0x508] sm:$0xff] %v2457
      %2490 = vst [vmem:[#allocation3 + $0x550] sm:$0xff] %v2458
      %2491 = vst [vmem:[#allocation3 + $0x598] sm:$0xff] %v2459
      %2492 = vst [vmem:[#allocation3 + $0x5e0] sm:$0xff] %v2460
      %2493 = vst [vmem:[#allocation3 + $0x628] sm:$0xff] %v2461
      %2494 = vst [vmem:[#allocation3 + $0x670] sm:$0xff] %v2462
      %2495 = vst [vmem:[#allocation3 + $0x6b8] sm:$0xff] %v2463
      %2496 = vst [vmem:[#allocation3 + $0x700] sm:$0xff] %v2464
      %2497 = vst [vmem:[#allocation3 + $0x748] sm:$0xff] %v2465
      %2498 = vst [vmem:[#allocation3 + $0x790] sm:$0xff] %v2466
      %2499 = vst [vmem:[#allocation3 + $0x7d8] sm:$0xff] %v2467
      %2500 = vst [vmem:[#allocation3 + $0x820] sm:$0xff] %v2468
      %2501 = vst [vmem:[#allocation3 + $0x868] sm:$0xff] %v2469
      %2502 = vst [vmem:[#allocation3 + $0x8b0] sm:$0xff] %v2470
      %2503 = vst [vmem:[#allocation3 + $0x8f8] sm:$0xff] %v2471
      %v2504 = vld [vmem:[#allocation3] sm:$0xff]
      %v2505 = vld [vmem:[#allocation3 + $0x8] sm:$0xff]
      %v2506 = vld [vmem:[#allocation3 + $0x10] sm:$0xff]
      %v2507 = vld [vmem:[#allocation3 + $0x18] sm:$0xff]
      %v2508 = vld [vmem:[#allocation3 + $0x20] sm:$0xff]
      %v2509 = vld [vmem:[#allocation3 + $0x28] sm:$0xff]
      %v2510 = vld [vmem:[#allocation3 + $0x30] sm:$0xff]
      %v2511 = vld [vmem:[#allocation3 + $0x38] sm:$0xff]
      %v2512 = vld [vmem:[#allocation3 + $0x40] sm:$0xff]
      %v2513 = vld [vmem:[#allocation3 + $0x48] sm:$0xff]
      %v2514 = vld [vmem:[#allocation3 + $0x50] sm:$0xff]
      %v2515 = vld [vmem:[#allocation3 + $0x58] sm:$0xff]
      %v2516 = vld [vmem:[#allocation3 + $0x60] sm:$0xff]
      %v2517 = vld [vmem:[#allocation3 + $0x68] sm:$0xff]
      %v2518 = vld [vmem:[#allocation3 + $0x70] sm:$0xff]
      %v2519 = vld [vmem:[#allocation3 + $0x78] sm:$0xff]
      %v2520 = vld [vmem:[#allocation3 + $0x80] sm:$0xff]
      %v2521 = vld [vmem:[#allocation3 + $0x88] sm:$0xff]
      %v2522 = vld [vmem:[#allocation3 + $0x90] sm:$0xff]
      %v2523 = vld [vmem:[#allocation3 + $0x98] sm:$0xff]
      %v2524 = vld [vmem:[#allocation3 + $0xa0] sm:$0xff]
      %v2525 = vld [vmem:[#allocation3 + $0xa8] sm:$0xff]
      %v2526 = vld [vmem:[#allocation3 + $0xb0] sm:$0xff]
      %v2527 = vld [vmem:[#allocation3 + $0xb8] sm:$0xff]
      %v2528 = vld [vmem:[#allocation3 + $0xc0] sm:$0xff]
      %v2529 = vld [vmem:[#allocation3 + $0xc8] sm:$0xff]
      %v2530 = vld [vmem:[#allocation3 + $0xd0] sm:$0xff]
      %v2531 = vld [vmem:[#allocation3 + $0xd8] sm:$0xff]
      %v2532 = vld [vmem:[#allocation3 + $0xe0] sm:$0xff]
      %v2533 = vld [vmem:[#allocation3 + $0xe8] sm:$0xff]
      %v2534 = vld [vmem:[#allocation3 + $0xf0] sm:$0xff]
      %v2535 = vld [vmem:[#allocation3 + $0xf8] sm:$0xff]
      %v2536 = vld [vmem:[#allocation3 + $0x100] sm:$0xff]
      %v2537 = vld [vmem:[#allocation3 + $0x108] sm:$0xff]
      %v2538 = vld [vmem:[#allocation3 + $0x110] sm:$0xff]
      %v2539 = vld [vmem:[#allocation3 + $0x118] sm:$0xff]
      %v2540 = vld [vmem:[#allocation3 + $0x120] sm:$0xff]
      %v2541 = vld [vmem:[#allocation3 + $0x128] sm:$0xff]
      %v2542 = vld [vmem:[#allocation3 + $0x130] sm:$0xff]
      %v2543 = vld [vmem:[#allocation3 + $0x138] sm:$0xff]
      %v2544 = vld [vmem:[#allocation3 + $0x140] sm:$0xff]
      %v2545 = vld [vmem:[#allocation3 + $0x148] sm:$0xff]
      %v2546 = vld [vmem:[#allocation3 + $0x150] sm:$0xff]
      %v2547 = vld [vmem:[#allocation3 + $0x158] sm:$0xff]
      %v2548 = vld [vmem:[#allocation3 + $0x160] sm:$0xff]
      %v2549 = vld [vmem:[#allocation3 + $0x168] sm:$0xff]
      %v2550 = vld [vmem:[#allocation3 + $0x170] sm:$0xff]
      %v2551 = vld [vmem:[#allocation3 + $0x178] sm:$0xff]
      %v2552 = vld [vmem:[#allocation3 + $0x180] sm:$0xff]
      %v2553 = vld [vmem:[#allocation3 + $0x188] sm:$0xff]
      %v2554 = vld [vmem:[#allocation3 + $0x190] sm:$0xff]
      %v2555 = vld [vmem:[#allocation3 + $0x198] sm:$0xff]
      %v2556 = vld [vmem:[#allocation3 + $0x1a0] sm:$0xff]
      %v2557 = vld [vmem:[#allocation3 + $0x1a8] sm:$0xff]
      %v2558 = vld [vmem:[#allocation3 + $0x1b0] sm:$0xff]
      %v2559 = vld [vmem:[#allocation3 + $0x1b8] sm:$0xff]
      %v2560 = vld [vmem:[#allocation3 + $0x1c0] sm:$0xff]
      %v2561 = vld [vmem:[#allocation3 + $0x1c8] sm:$0xff]
      %v2562 = vld [vmem:[#allocation3 + $0x1d0] sm:$0xff]
      %v2563 = vld [vmem:[#allocation3 + $0x1d8] sm:$0xff]
      %v2564 = vld [vmem:[#allocation3 + $0x1e0] sm:$0xff]
      %v2565 = vld [vmem:[#allocation3 + $0x1e8] sm:$0xff]
      %v2566 = vld [vmem:[#allocation3 + $0x1f0] sm:$0xff]
      %v2567 = vld [vmem:[#allocation3 + $0x1f8] sm:$0xff]
      %v2568 = vld [vmem:[#allocation3 + $0x200] sm:$0xff]
      %v2569 = vld [vmem:[#allocation3 + $0x208] sm:$0xff]
      %v2570 = vld [vmem:[#allocation3 + $0x210] sm:$0xff]
      %v2571 = vld [vmem:[#allocation3 + $0x218] sm:$0xff]
      %v2572 = vld [vmem:[#allocation3 + $0x220] sm:$0xff]
      %v2573 = vld [vmem:[#allocation3 + $0x228] sm:$0xff]
      %v2574 = vld [vmem:[#allocation3 + $0x230] sm:$0xff]
      %v2575 = vld [vmem:[#allocation3 + $0x238] sm:$0xff]
      %v2576 = vld [vmem:[#allocation3 + $0x240] sm:$0xff]
      %v2577 = vld [vmem:[#allocation3 + $0x248] sm:$0xff]
      %v2578 = vld [vmem:[#allocation3 + $0x250] sm:$0xff]
      %v2579 = vld [vmem:[#allocation3 + $0x258] sm:$0xff]
      %v2580 = vld [vmem:[#allocation3 + $0x260] sm:$0xff]
      %v2581 = vld [vmem:[#allocation3 + $0x268] sm:$0xff]
      %v2582 = vld [vmem:[#allocation3 + $0x270] sm:$0xff]
      %v2583 = vld [vmem:[#allocation3 + $0x278] sm:$0xff]
      %v2584 = vld [vmem:[#allocation3 + $0x280] sm:$0xff]
      %v2585 = vld [vmem:[#allocation3 + $0x288] sm:$0xff]
      %v2586 = vld [vmem:[#allocation3 + $0x290] sm:$0xff]
      %v2587 = vld [vmem:[#allocation3 + $0x298] sm:$0xff]
      %v2588 = vld [vmem:[#allocation3 + $0x2a0] sm:$0xff]
      %v2589 = vld [vmem:[#allocation3 + $0x2a8] sm:$0xff]
      %v2590 = vld [vmem:[#allocation3 + $0x2b0] sm:$0xff]
      %v2591 = vld [vmem:[#allocation3 + $0x2b8] sm:$0xff]
      %v2592 = vld [vmem:[#allocation3 + $0x2c0] sm:$0xff]
      %v2593 = vld [vmem:[#allocation3 + $0x2c8] sm:$0xff]
      %v2594 = vld [vmem:[#allocation3 + $0x2d0] sm:$0xff]
      %v2595 = vld [vmem:[#allocation3 + $0x2d8] sm:$0xff]
      %v2596 = vld [vmem:[#allocation3 + $0x2e0] sm:$0xff]
      %v2597 = vld [vmem:[#allocation3 + $0x2e8] sm:$0xff]
      %v2598 = vld [vmem:[#allocation3 + $0x2f0] sm:$0xff]
      %v2599 = vld [vmem:[#allocation3 + $0x2f8] sm:$0xff]
      %v2600 = vld [vmem:[#allocation3 + $0x300] sm:$0xff]
      %v2601 = vld [vmem:[#allocation3 + $0x308] sm:$0xff]
      %v2602 = vld [vmem:[#allocation3 + $0x310] sm:$0xff]
      %v2603 = vld [vmem:[#allocation3 + $0x318] sm:$0xff]
      %v2604 = vld [vmem:[#allocation3 + $0x320] sm:$0xff]
      %v2605 = vld [vmem:[#allocation3 + $0x328] sm:$0xff]
      %v2606 = vld [vmem:[#allocation3 + $0x330] sm:$0xff]
      %v2607 = vld [vmem:[#allocation3 + $0x338] sm:$0xff]
      %v2608 = vld [vmem:[#allocation3 + $0x340] sm:$0xff]
      %v2609 = vld [vmem:[#allocation3 + $0x348] sm:$0xff]
      %v2610 = vld [vmem:[#allocation3 + $0x350] sm:$0xff]
      %v2611 = vld [vmem:[#allocation3 + $0x358] sm:$0xff]
      %v2612 = vld [vmem:[#allocation3 + $0x360] sm:$0xff]
      %v2613 = vld [vmem:[#allocation3 + $0x368] sm:$0xff]
      %v2614 = vld [vmem:[#allocation3 + $0x370] sm:$0xff]
      %v2615 = vld [vmem:[#allocation3 + $0x378] sm:$0xff]
      %v2616 = vld [vmem:[#allocation3 + $0x380] sm:$0xff]
      %v2617 = vld [vmem:[#allocation3 + $0x388] sm:$0xff]
      %v2618 = vld [vmem:[#allocation3 + $0x390] sm:$0xff]
      %v2619 = vld [vmem:[#allocation3 + $0x398] sm:$0xff]
      %v2620 = vld [vmem:[#allocation3 + $0x3a0] sm:$0xff]
      %v2621 = vld [vmem:[#allocation3 + $0x3a8] sm:$0xff]
      %v2622 = vld [vmem:[#allocation3 + $0x3b0] sm:$0xff]
      %v2623 = vld [vmem:[#allocation3 + $0x3b8] sm:$0xff]
      %v2624 = vld [vmem:[#allocation3 + $0x3c0] sm:$0xff]
      %v2625 = vld [vmem:[#allocation3 + $0x3c8] sm:$0xff]
      %v2626 = vld [vmem:[#allocation3 + $0x3d0] sm:$0xff]
      %v2627 = vld [vmem:[#allocation3 + $0x3d8] sm:$0xff]
      %v2628 = vld [vmem:[#allocation3 + $0x3e0] sm:$0xff]
      %v2629 = vld [vmem:[#allocation3 + $0x3e8] sm:$0xff]
      %v2630 = vld [vmem:[#allocation3 + $0x3f0] sm:$0xff]
      %v2631 = vld [vmem:[#allocation3 + $0x3f8] sm:$0xff]
      %v2632 = vld [vmem:[#allocation3 + $0x400] sm:$0xff]
      %v2633 = vld [vmem:[#allocation3 + $0x408] sm:$0xff]
      %v2634 = vld [vmem:[#allocation3 + $0x410] sm:$0xff]
      %v2635 = vld [vmem:[#allocation3 + $0x418] sm:$0xff]
      %v2636 = vld [vmem:[#allocation3 + $0x420] sm:$0xff]
      %v2637 = vld [vmem:[#allocation3 + $0x428] sm:$0xff]
      %v2638 = vld [vmem:[#allocation3 + $0x430] sm:$0xff]
      %v2639 = vld [vmem:[#allocation3 + $0x438] sm:$0xff]
      %v2640 = vld [vmem:[#allocation3 + $0x440] sm:$0xff]
      %v2641 = vld [vmem:[#allocation3 + $0x448] sm:$0xff]
      %v2642 = vld [vmem:[#allocation3 + $0x450] sm:$0xff]
      %v2643 = vld [vmem:[#allocation3 + $0x458] sm:$0xff]
      %v2644 = vld [vmem:[#allocation3 + $0x460] sm:$0xff]
      %v2645 = vld [vmem:[#allocation3 + $0x468] sm:$0xff]
      %v2646 = vld [vmem:[#allocation3 + $0x470] sm:$0xff]
      %v2647 = vld [vmem:[#allocation3 + $0x478] sm:$0xff]
      %v2648 = vld [vmem:[#allocation3 + $0x480] sm:$0xff]
      %v2649 = vld [vmem:[#allocation3 + $0x488] sm:$0xff]
      %v2650 = vld [vmem:[#allocation3 + $0x490] sm:$0xff]
      %v2651 = vld [vmem:[#allocation3 + $0x498] sm:$0xff]
      %v2652 = vld [vmem:[#allocation3 + $0x4a0] sm:$0xff]
      %v2653 = vld [vmem:[#allocation3 + $0x4a8] sm:$0xff]
      %v2654 = vld [vmem:[#allocation3 + $0x4b0] sm:$0xff]
      %v2655 = vld [vmem:[#allocation3 + $0x4b8] sm:$0xff]
      %v2656 = vld [vmem:[#allocation3 + $0x4c0] sm:$0xff]
      %v2657 = vld [vmem:[#allocation3 + $0x4c8] sm:$0xff]
      %v2658 = vld [vmem:[#allocation3 + $0x4d0] sm:$0xff]
      %v2659 = vld [vmem:[#allocation3 + $0x4d8] sm:$0xff]
      %v2660 = vld [vmem:[#allocation3 + $0x4e0] sm:$0xff]
      %v2661 = vld [vmem:[#allocation3 + $0x4e8] sm:$0xff]
      %v2662 = vld [vmem:[#allocation3 + $0x4f0] sm:$0xff]
      %v2663 = vld [vmem:[#allocation3 + $0x4f8] sm:$0xff]
      %v2664 = vld [vmem:[#allocation3 + $0x500] sm:$0xff]
      %v2665 = vld [vmem:[#allocation3 + $0x508] sm:$0xff]
      %v2666 = vld [vmem:[#allocation3 + $0x510] sm:$0xff]
      %v2667 = vld [vmem:[#allocation3 + $0x518] sm:$0xff]
      %v2668 = vld [vmem:[#allocation3 + $0x520] sm:$0xff]
      %v2669 = vld [vmem:[#allocation3 + $0x528] sm:$0xff]
      %v2670 = vld [vmem:[#allocation3 + $0x530] sm:$0xff]
      %v2671 = vld [vmem:[#allocation3 + $0x538] sm:$0xff]
      %v2672 = vld [vmem:[#allocation3 + $0x540] sm:$0xff]
      %v2673 = vld [vmem:[#allocation3 + $0x548] sm:$0xff]
      %v2674 = vld [vmem:[#allocation3 + $0x550] sm:$0xff]
      %v2675 = vld [vmem:[#allocation3 + $0x558] sm:$0xff]
      %v2676 = vld [vmem:[#allocation3 + $0x560] sm:$0xff]
      %v2677 = vld [vmem:[#allocation3 + $0x568] sm:$0xff]
      %v2678 = vld [vmem:[#allocation3 + $0x570] sm:$0xff]
      %v2679 = vld [vmem:[#allocation3 + $0x578] sm:$0xff]
      %v2680 = vld [vmem:[#allocation3 + $0x580] sm:$0xff]
      %v2681 = vld [vmem:[#allocation3 + $0x588] sm:$0xff]
      %v2682 = vld [vmem:[#allocation3 + $0x590] sm:$0xff]
      %v2683 = vld [vmem:[#allocation3 + $0x598] sm:$0xff]
      %v2684 = vld [vmem:[#allocation3 + $0x5a0] sm:$0xff]
      %v2685 = vld [vmem:[#allocation3 + $0x5a8] sm:$0xff]
      %v2686 = vld [vmem:[#allocation3 + $0x5b0] sm:$0xff]
      %v2687 = vld [vmem:[#allocation3 + $0x5b8] sm:$0xff]
      %v2688 = vld [vmem:[#allocation3 + $0x5c0] sm:$0xff]
      %v2689 = vld [vmem:[#allocation3 + $0x5c8] sm:$0xff]
      %v2690 = vld [vmem:[#allocation3 + $0x5d0] sm:$0xff]
      %v2691 = vld [vmem:[#allocation3 + $0x5d8] sm:$0xff]
      %v2692 = vld [vmem:[#allocation3 + $0x5e0] sm:$0xff]
      %v2693 = vld [vmem:[#allocation3 + $0x5e8] sm:$0xff]
      %v2694 = vld [vmem:[#allocation3 + $0x5f0] sm:$0xff]
      %v2695 = vld [vmem:[#allocation3 + $0x5f8] sm:$0xff]
      %v2696 = vld [vmem:[#allocation3 + $0x600] sm:$0xff]
      %v2697 = vld [vmem:[#allocation3 + $0x608] sm:$0xff]
      %v2698 = vld [vmem:[#allocation3 + $0x610] sm:$0xff]
      %v2699 = vld [vmem:[#allocation3 + $0x618] sm:$0xff]
      %v2700 = vld [vmem:[#allocation3 + $0x620] sm:$0xff]
      %v2701 = vld [vmem:[#allocation3 + $0x628] sm:$0xff]
      %v2702 = vld [vmem:[#allocation3 + $0x630] sm:$0xff]
      %v2703 = vld [vmem:[#allocation3 + $0x638] sm:$0xff]
      %v2704 = vld [vmem:[#allocation3 + $0x640] sm:$0xff]
      %v2705 = vld [vmem:[#allocation3 + $0x648] sm:$0xff]
      %v2706 = vld [vmem:[#allocation3 + $0x650] sm:$0xff]
      %v2707 = vld [vmem:[#allocation3 + $0x658] sm:$0xff]
      %v2708 = vld [vmem:[#allocation3 + $0x660] sm:$0xff]
      %v2709 = vld [vmem:[#allocation3 + $0x668] sm:$0xff]
      %v2710 = vld [vmem:[#allocation3 + $0x670] sm:$0xff]
      %v2711 = vld [vmem:[#allocation3 + $0x678] sm:$0xff]
      %v2712 = vld [vmem:[#allocation3 + $0x680] sm:$0xff]
      %v2713 = vld [vmem:[#allocation3 + $0x688] sm:$0xff]
      %v2714 = vld [vmem:[#allocation3 + $0x690] sm:$0xff]
      %v2715 = vld [vmem:[#allocation3 + $0x698] sm:$0xff]
      %v2716 = vld [vmem:[#allocation3 + $0x6a0] sm:$0xff]
      %v2717 = vld [vmem:[#allocation3 + $0x6a8] sm:$0xff]
      %v2718 = vld [vmem:[#allocation3 + $0x6b0] sm:$0xff]
      %v2719 = vld [vmem:[#allocation3 + $0x6b8] sm:$0xff]
      %v2720 = vld [vmem:[#allocation3 + $0x6c0] sm:$0xff]
      %v2721 = vld [vmem:[#allocation3 + $0x6c8] sm:$0xff]
      %v2722 = vld [vmem:[#allocation3 + $0x6d0] sm:$0xff]
      %v2723 = vld [vmem:[#allocation3 + $0x6d8] sm:$0xff]
      %v2724 = vld [vmem:[#allocation3 + $0x6e0] sm:$0xff]
      %v2725 = vld [vmem:[#allocation3 + $0x6e8] sm:$0xff]
      %v2726 = vld [vmem:[#allocation3 + $0x6f0] sm:$0xff]
      %v2727 = vld [vmem:[#allocation3 + $0x6f8] sm:$0xff]
      %v2728 = vld [vmem:[#allocation3 + $0x700] sm:$0xff]
      %v2729 = vld [vmem:[#allocation3 + $0x708] sm:$0xff]
      %v2730 = vld [vmem:[#allocation3 + $0x710] sm:$0xff]
      %v2731 = vld [vmem:[#allocation3 + $0x718] sm:$0xff]
      %v2732 = vld [vmem:[#allocation3 + $0x720] sm:$0xff]
      %v2733 = vld [vmem:[#allocation3 + $0x728] sm:$0xff]
      %v2734 = vld [vmem:[#allocation3 + $0x730] sm:$0xff]
      %v2735 = vld [vmem:[#allocation3 + $0x738] sm:$0xff]
      %v2736 = vld [vmem:[#allocation3 + $0x740] sm:$0xff]
      %v2737 = vld [vmem:[#allocation3 + $0x748] sm:$0xff]
      %v2738 = vld [vmem:[#allocation3 + $0x750] sm:$0xff]
      %v2739 = vld [vmem:[#allocation3 + $0x758] sm:$0xff]
      %v2740 = vld [vmem:[#allocation3 + $0x760] sm:$0xff]
      %v2741 = vld [vmem:[#allocation3 + $0x768] sm:$0xff]
      %v2742 = vld [vmem:[#allocation3 + $0x770] sm:$0xff]
      %v2743 = vld [vmem:[#allocation3 + $0x778] sm:$0xff]
      %v2744 = vld [vmem:[#allocation3 + $0x780] sm:$0xff]
      %v2745 = vld [vmem:[#allocation3 + $0x788] sm:$0xff]
      %v2746 = vld [vmem:[#allocation3 + $0x790] sm:$0xff]
      %v2747 = vld [vmem:[#allocation3 + $0x798] sm:$0xff]
      %v2748 = vld [vmem:[#allocation3 + $0x7a0] sm:$0xff]
      %v2749 = vld [vmem:[#allocation3 + $0x7a8] sm:$0xff]
      %v2750 = vld [vmem:[#allocation3 + $0x7b0] sm:$0xff]
      %v2751 = vld [vmem:[#allocation3 + $0x7b8] sm:$0xff]
      %v2752 = vld [vmem:[#allocation3 + $0x7c0] sm:$0xff]
      %v2753 = vld [vmem:[#allocation3 + $0x7c8] sm:$0xff]
      %v2754 = vld [vmem:[#allocation3 + $0x7d0] sm:$0xff]
      %v2755 = vld [vmem:[#allocation3 + $0x7d8] sm:$0xff]
      %v2756 = vld [vmem:[#allocation3 + $0x7e0] sm:$0xff]
      %v2757 = vld [vmem:[#allocation3 + $0x7e8] sm:$0xff]
      %v2758 = vld [vmem:[#allocation3 + $0x7f0] sm:$0xff]
      %v2759 = vld [vmem:[#allocation3 + $0x7f8] sm:$0xff]
      %v2760 = vld [vmem:[#allocation3 + $0x800] sm:$0xff]
      %v2761 = vld [vmem:[#allocation3 + $0x808] sm:$0xff]
      %v2762 = vld [vmem:[#allocation3 + $0x810] sm:$0xff]
      %v2763 = vld [vmem:[#allocation3 + $0x818] sm:$0xff]
      %v2764 = vld [vmem:[#allocation3 + $0x820] sm:$0xff]
      %v2765 = vld [vmem:[#allocation3 + $0x828] sm:$0xff]
      %v2766 = vld [vmem:[#allocation3 + $0x830] sm:$0xff]
      %v2767 = vld [vmem:[#allocation3 + $0x838] sm:$0xff]
      %v2768 = vld [vmem:[#allocation3 + $0x840] sm:$0xff]
      %v2769 = vld [vmem:[#allocation3 + $0x848] sm:$0xff]
      %v2770 = vld [vmem:[#allocation3 + $0x850] sm:$0xff]
      %v2771 = vld [vmem:[#allocation3 + $0x858] sm:$0xff]
      %v2772 = vld [vmem:[#allocation3 + $0x860] sm:$0xff]
      %v2773 = vld [vmem:[#allocation3 + $0x868] sm:$0xff]
      %v2774 = vld [vmem:[#allocation3 + $0x870] sm:$0xff]
      %v2775 = vld [vmem:[#allocation3 + $0x878] sm:$0xff]
      %v2776 = vld [vmem:[#allocation3 + $0x880] sm:$0xff]
      %v2777 = vld [vmem:[#allocation3 + $0x888] sm:$0xff]
      %v2778 = vld [vmem:[#allocation3 + $0x890] sm:$0xff]
      %v2779 = vld [vmem:[#allocation3 + $0x898] sm:$0xff]
      %v2780 = vld [vmem:[#allocation3 + $0x8a0] sm:$0xff]
      %v2781 = vld [vmem:[#allocation3 + $0x8a8] sm:$0xff]
      %v2782 = vld [vmem:[#allocation3 + $0x8b0] sm:$0xff]
      %v2783 = vld [vmem:[#allocation3 + $0x8b8] sm:$0xff]
      %v2784 = vld [vmem:[#allocation3 + $0x8c0] sm:$0xff]
      %v2785 = vld [vmem:[#allocation3 + $0x8c8] sm:$0xff]
      %v2786 = vld [vmem:[#allocation3 + $0x8d0] sm:$0xff]
      %v2787 = vld [vmem:[#allocation3 + $0x8d8] sm:$0xff]
      %v2788 = vld [vmem:[#allocation3 + $0x8e0] sm:$0xff]
      %v2789 = vld [vmem:[#allocation3 + $0x8e8] sm:$0xff]
      %v2790 = vld [vmem:[#allocation3 + $0x8f0] sm:$0xff]
      %v2791 = vld [vmem:[#allocation3 + $0x8f8] sm:$0xff]
      %v2792 = vld [vmem:[%s3] sm:$0xff]
      %v2793 = vld [vmem:[%s3 + $0x8] sm:$0xff]
      %v2794 = vld [vmem:[%s3 + $0x10] sm:$0xff]
      %v2795 = vld [vmem:[%s3 + $0x18] sm:$0xff]
      %v2796 = vld [vmem:[%s3 + $0x20] sm:$0xff]
      %v2797 = vld [vmem:[%s3 + $0x28] sm:$0xff]
      %v2798 = vld [vmem:[%s3 + $0x30] sm:$0xff]
      %v2799 = vld [vmem:[%s3 + $0x38] sm:$0xff]
      %v2800 = vld [vmem:[%s3 + $0x40] sm:$0xff]
      %v2801 = vld [vmem:[%s3 + $0x48] sm:$0xff]
      %v2802 = vld [vmem:[%s3 + $0x50] sm:$0xff]
      %v2803 = vld [vmem:[%s3 + $0x58] sm:$0xff]
      %v2804 = vld [vmem:[%s3 + $0x60] sm:$0xff]
      %v2805 = vld [vmem:[%s3 + $0x68] sm:$0xff]
      %v2806 = vld [vmem:[%s3 + $0x70] sm:$0xff]
      %v2807 = vld [vmem:[%s3 + $0x78] sm:$0xff]
      %v2808 = vld [vmem:[%s3 + $0x80] sm:$0xff]
      %v2809 = vld [vmem:[%s3 + $0x88] sm:$0xff]
      %v2810 = vld [vmem:[%s3 + $0x90] sm:$0xff]
      %v2811 = vld [vmem:[%s3 + $0x98] sm:$0xff]
      %v2812 = vld [vmem:[%s3 + $0xa0] sm:$0xff]
      %v2813 = vld [vmem:[%s3 + $0xa8] sm:$0xff]
      %v2814 = vld [vmem:[%s3 + $0xb0] sm:$0xff]
      %v2815 = vld [vmem:[%s3 + $0xb8] sm:$0xff]
      %v2816 = vld [vmem:[%s3 + $0xc0] sm:$0xff]
      %v2817 = vld [vmem:[%s3 + $0xc8] sm:$0xff]
      %v2818 = vld [vmem:[%s3 + $0xd0] sm:$0xff]
      %v2819 = vld [vmem:[%s3 + $0xd8] sm:$0xff]
      %v2820 = vld [vmem:[%s3 + $0xe0] sm:$0xff]
      %v2821 = vld [vmem:[%s3 + $0xe8] sm:$0xff]
      %v2822 = vld [vmem:[%s3 + $0xf0] sm:$0xff]
      %v2823 = vld [vmem:[%s3 + $0xf8] sm:$0xff]
      %v2824 = vld [vmem:[%s3 + $0x100] sm:$0xff]
      %v2825 = vld [vmem:[%s3 + $0x108] sm:$0xff]
      %v2826 = vld [vmem:[%s3 + $0x110] sm:$0xff]
      %v2827 = vld [vmem:[%s3 + $0x118] sm:$0xff]
      %v2828 = vld [vmem:[%s3 + $0x120] sm:$0xff]
      %v2829 = vld [vmem:[%s3 + $0x128] sm:$0xff]
      %v2830 = vld [vmem:[%s3 + $0x130] sm:$0xff]
      %v2831 = vld [vmem:[%s3 + $0x138] sm:$0xff]
      %v2832 = vld [vmem:[%s3 + $0x140] sm:$0xff]
      %v2833 = vld [vmem:[%s3 + $0x148] sm:$0xff]
      %v2834 = vld [vmem:[%s3 + $0x150] sm:$0xff]
      %v2835 = vld [vmem:[%s3 + $0x158] sm:$0xff]
      %v2836 = vld [vmem:[%s3 + $0x160] sm:$0xff]
      %v2837 = vld [vmem:[%s3 + $0x168] sm:$0xff]
      %v2838 = vld [vmem:[%s3 + $0x170] sm:$0xff]
      %v2839 = vld [vmem:[%s3 + $0x178] sm:$0xff]
      %v2840 = vld [vmem:[%s3 + $0x180] sm:$0xff]
      %v2841 = vld [vmem:[%s3 + $0x188] sm:$0xff]
      %v2842 = vld [vmem:[%s3 + $0x190] sm:$0xff]
      %v2843 = vld [vmem:[%s3 + $0x198] sm:$0xff]
      %v2844 = vld [vmem:[%s3 + $0x1a0] sm:$0xff]
      %v2845 = vld [vmem:[%s3 + $0x1a8] sm:$0xff]
      %v2846 = vld [vmem:[%s3 + $0x1b0] sm:$0xff]
      %v2847 = vld [vmem:[%s3 + $0x1b8] sm:$0xff]
      %v2848 = vld [vmem:[%s3 + $0x1c0] sm:$0xff]
      %v2849 = vld [vmem:[%s3 + $0x1c8] sm:$0xff]
      %v2850 = vld [vmem:[%s3 + $0x1d0] sm:$0xff]
      %v2851 = vld [vmem:[%s3 + $0x1d8] sm:$0xff]
      %v2852 = vld [vmem:[%s3 + $0x1e0] sm:$0xff]
      %v2853 = vld [vmem:[%s3 + $0x1e8] sm:$0xff]
      %v2854 = vld [vmem:[%s3 + $0x1f0] sm:$0xff]
      %v2855 = vld [vmem:[%s3 + $0x1f8] sm:$0xff]
      %v2856 = vld [vmem:[%s3 + $0x200] sm:$0xff]
      %v2857 = vld [vmem:[%s3 + $0x208] sm:$0xff]
      %v2858 = vld [vmem:[%s3 + $0x210] sm:$0xff]
      %v2859 = vld [vmem:[%s3 + $0x218] sm:$0xff]
      %v2860 = vld [vmem:[%s3 + $0x220] sm:$0xff]
      %v2861 = vld [vmem:[%s3 + $0x228] sm:$0xff]
      %v2862 = vld [vmem:[%s3 + $0x230] sm:$0xff]
      %v2863 = vld [vmem:[%s3 + $0x238] sm:$0xff]
      %v2864 = vld [vmem:[%s3 + $0x240] sm:$0xff]
      %v2865 = vld [vmem:[%s3 + $0x248] sm:$0xff]
      %v2866 = vld [vmem:[%s3 + $0x250] sm:$0xff]
      %v2867 = vld [vmem:[%s3 + $0x258] sm:$0xff]
      %v2868 = vld [vmem:[%s3 + $0x260] sm:$0xff]
      %v2869 = vld [vmem:[%s3 + $0x268] sm:$0xff]
      %v2870 = vld [vmem:[%s3 + $0x270] sm:$0xff]
      %v2871 = vld [vmem:[%s3 + $0x278] sm:$0xff]
      %v2872 = vld [vmem:[%s3 + $0x280] sm:$0xff]
      %v2873 = vld [vmem:[%s3 + $0x288] sm:$0xff]
      %v2874 = vld [vmem:[%s3 + $0x290] sm:$0xff]
      %v2875 = vld [vmem:[%s3 + $0x298] sm:$0xff]
      %v2876 = vld [vmem:[%s3 + $0x2a0] sm:$0xff]
      %v2877 = vld [vmem:[%s3 + $0x2a8] sm:$0xff]
      %v2878 = vld [vmem:[%s3 + $0x2b0] sm:$0xff]
      %v2879 = vld [vmem:[%s3 + $0x2b8] sm:$0xff]
      %v2880 = vld [vmem:[%s3 + $0x2c0] sm:$0xff]
      %v2881 = vld [vmem:[%s3 + $0x2c8] sm:$0xff]
      %v2882 = vld [vmem:[%s3 + $0x2d0] sm:$0xff]
      %v2883 = vld [vmem:[%s3 + $0x2d8] sm:$0xff]
      %v2884 = vld [vmem:[%s3 + $0x2e0] sm:$0xff]
      %v2885 = vld [vmem:[%s3 + $0x2e8] sm:$0xff]
      %v2886 = vld [vmem:[%s3 + $0x2f0] sm:$0xff]
      %v2887 = vld [vmem:[%s3 + $0x2f8] sm:$0xff]
      %v2888 = vld [vmem:[%s3 + $0x300] sm:$0xff]
      %v2889 = vld [vmem:[%s3 + $0x308] sm:$0xff]
      %v2890 = vld [vmem:[%s3 + $0x310] sm:$0xff]
      %v2891 = vld [vmem:[%s3 + $0x318] sm:$0xff]
      %v2892 = vld [vmem:[%s3 + $0x320] sm:$0xff]
      %v2893 = vld [vmem:[%s3 + $0x328] sm:$0xff]
      %v2894 = vld [vmem:[%s3 + $0x330] sm:$0xff]
      %v2895 = vld [vmem:[%s3 + $0x338] sm:$0xff]
      %v2896 = vld [vmem:[%s3 + $0x340] sm:$0xff]
      %v2897 = vld [vmem:[%s3 + $0x348] sm:$0xff]
      %v2898 = vld [vmem:[%s3 + $0x350] sm:$0xff]
      %v2899 = vld [vmem:[%s3 + $0x358] sm:$0xff]
      %v2900 = vld [vmem:[%s3 + $0x360] sm:$0xff]
      %v2901 = vld [vmem:[%s3 + $0x368] sm:$0xff]
      %v2902 = vld [vmem:[%s3 + $0x370] sm:$0xff]
      %v2903 = vld [vmem:[%s3 + $0x378] sm:$0xff]
      %v2904 = vld [vmem:[%s3 + $0x380] sm:$0xff]
      %v2905 = vld [vmem:[%s3 + $0x388] sm:$0xff]
      %v2906 = vld [vmem:[%s3 + $0x390] sm:$0xff]
      %v2907 = vld [vmem:[%s3 + $0x398] sm:$0xff]
      %v2908 = vld [vmem:[%s3 + $0x3a0] sm:$0xff]
      %v2909 = vld [vmem:[%s3 + $0x3a8] sm:$0xff]
      %v2910 = vld [vmem:[%s3 + $0x3b0] sm:$0xff]
      %v2911 = vld [vmem:[%s3 + $0x3b8] sm:$0xff]
      %v2912 = vld [vmem:[%s3 + $0x3c0] sm:$0xff]
      %v2913 = vld [vmem:[%s3 + $0x3c8] sm:$0xff]
      %v2914 = vld [vmem:[%s3 + $0x3d0] sm:$0xff]
      %v2915 = vld [vmem:[%s3 + $0x3d8] sm:$0xff]
      %v2916 = vld [vmem:[%s3 + $0x3e0] sm:$0xff]
      %v2917 = vld [vmem:[%s3 + $0x3e8] sm:$0xff]
      %v2918 = vld [vmem:[%s3 + $0x3f0] sm:$0xff]
      %v2919 = vld [vmem:[%s3 + $0x3f8] sm:$0xff]
      %v2920 = vld [vmem:[%s3 + $0x400] sm:$0xff]
      %v2921 = vld [vmem:[%s3 + $0x408] sm:$0xff]
      %v2922 = vld [vmem:[%s3 + $0x410] sm:$0xff]
      %v2923 = vld [vmem:[%s3 + $0x418] sm:$0xff]
      %v2924 = vld [vmem:[%s3 + $0x420] sm:$0xff]
      %v2925 = vld [vmem:[%s3 + $0x428] sm:$0xff]
      %v2926 = vld [vmem:[%s3 + $0x430] sm:$0xff]
      %v2927 = vld [vmem:[%s3 + $0x438] sm:$0xff]
      %v2928 = vld [vmem:[%s3 + $0x440] sm:$0xff]
      %v2929 = vld [vmem:[%s3 + $0x448] sm:$0xff]
      %v2930 = vld [vmem:[%s3 + $0x450] sm:$0xff]
      %v2931 = vld [vmem:[%s3 + $0x458] sm:$0xff]
      %v2932 = vld [vmem:[%s3 + $0x460] sm:$0xff]
      %v2933 = vld [vmem:[%s3 + $0x468] sm:$0xff]
      %v2934 = vld [vmem:[%s3 + $0x470] sm:$0xff]
      %v2935 = vld [vmem:[%s3 + $0x478] sm:$0xff]
      %2936 = vmatpush.msra.mxu0 %v2807
      %2937 = vmatpush.msra.mxu0 %v2806
      %2938 = vmatpush.msra.mxu0 %v2805
      %2939 = vmatpush.msra.mxu0 %v2804
      %2940 = vmatpush.msra.mxu0 %v2803
      %2941 = vmatpush.msra.mxu0 %v2802
      %2942 = vmatpush.msra.mxu0 %v2801
      %2943 = vmatpush.msra.mxu0 %v2800
      %2944 = vmatpush.msra.mxu0 %v2799
      %2945 = vmatpush.msra.mxu0 %v2798
      %2946 = vmatpush.msra.mxu0 %v2797
      %2947 = vmatpush.msra.mxu0 %v2796
      %2948 = vmatpush.msra.mxu0 %v2795
      %2949 = vmatpush.msra.mxu0 %v2794
      %2950 = vmatpush.msra.mxu0 %v2793
      %2951 = vmatpush.msra.mxu0 %v2792
      %2952 = vmatmul.f32.gmra.mxu0 %v2504
      %v2953 = vpop.f32.mrf.mxu0
      %v2954 = vadd.f32 0.0, %v2953
      %2955 = vmatmul.f32.gmra.mxu0 %v2513
      %v2956 = vpop.f32.mrf.mxu0
      %v2957 = vadd.f32 0.0, %v2956
      %2958 = vmatmul.f32.gmra.mxu0 %v2522
      %v2959 = vpop.f32.mrf.mxu0
      %v2960 = vadd.f32 0.0, %v2959
      %2961 = vmatmul.f32.gmra.mxu0 %v2531
      %v2962 = vpop.f32.mrf.mxu0
      %v2963 = vadd.f32 0.0, %v2962
      %2964 = vmatmul.f32.gmra.mxu0 %v2540
      %v2965 = vpop.f32.mrf.mxu0
      %v2966 = vadd.f32 0.0, %v2965
      %2967 = vmatmul.f32.gmra.mxu0 %v2549
      %v2968 = vpop.f32.mrf.mxu0
      %v2969 = vadd.f32 0.0, %v2968
      %2970 = vmatmul.f32.gmra.mxu0 %v2558
      %v2971 = vpop.f32.mrf.mxu0
      %v2972 = vadd.f32 0.0, %v2971
      %2973 = vmatmul.f32.gmra.mxu0 %v2567
      %v2974 = vpop.f32.mrf.mxu0
      %v2975 = vadd.f32 0.0, %v2974
      %2976 = vmatmul.f32.gmra.mxu0 %v2576
      %v2977 = vpop.f32.mrf.mxu0
      %v2978 = vadd.f32 0.0, %v2977
      %2979 = vmatmul.f32.gmra.mxu0 %v2585
      %v2980 = vpop.f32.mrf.mxu0
      %v2981 = vadd.f32 0.0, %v2980
      %2982 = vmatmul.f32.gmra.mxu0 %v2594
      %v2983 = vpop.f32.mrf.mxu0
      %v2984 = vadd.f32 0.0, %v2983
      %2985 = vmatmul.f32.gmra.mxu0 %v2603
      %v2986 = vpop.f32.mrf.mxu0
      %v2987 = vadd.f32 0.0, %v2986
      %2988 = vmatmul.f32.gmra.mxu0 %v2612
      %v2989 = vpop.f32.mrf.mxu0
      %v2990 = vadd.f32 0.0, %v2989
      %2991 = vmatmul.f32.gmra.mxu0 %v2621
      %v2992 = vpop.f32.mrf.mxu0
      %v2993 = vadd.f32 0.0, %v2992
      %2994 = vmatmul.f32.gmra.mxu0 %v2630
      %v2995 = vpop.f32.mrf.mxu0
      %v2996 = vadd.f32 0.0, %v2995
      %2997 = vmatmul.f32.gmra.mxu0 %v2639
      %v2998 = vpop.f32.mrf.mxu0
      %v2999 = vadd.f32 0.0, %v2998
      %3000 = vmatmul.f32.gmra.mxu0 %v2648
      %v3001 = vpop.f32.mrf.mxu0
      %v3002 = vadd.f32 0.0, %v3001
      %3003 = vmatmul.f32.gmra.mxu0 %v2657
      %v3004 = vpop.f32.mrf.mxu0
      %v3005 = vadd.f32 0.0, %v3004
      %3006 = vmatmul.f32.gmra.mxu0 %v2666
      %v3007 = vpop.f32.mrf.mxu0
      %v3008 = vadd.f32 0.0, %v3007
      %3009 = vmatmul.f32.gmra.mxu0 %v2675
      %v3010 = vpop.f32.mrf.mxu0
      %v3011 = vadd.f32 0.0, %v3010
      %3012 = vmatmul.f32.gmra.mxu0 %v2684
      %v3013 = vpop.f32.mrf.mxu0
      %v3014 = vadd.f32 0.0, %v3013
      %3015 = vmatmul.f32.gmra.mxu0 %v2693
      %v3016 = vpop.f32.mrf.mxu0
      %v3017 = vadd.f32 0.0, %v3016
      %3018 = vmatmul.f32.gmra.mxu0 %v2702
      %v3019 = vpop.f32.mrf.mxu0
      %v3020 = vadd.f32 0.0, %v3019
      %3021 = vmatmul.f32.gmra.mxu0 %v2711
      %v3022 = vpop.f32.mrf.mxu0
      %v3023 = vadd.f32 0.0, %v3022
      %3024 = vmatmul.f32.gmra.mxu0 %v2720
      %v3025 = vpop.f32.mrf.mxu0
      %v3026 = vadd.f32 0.0, %v3025
      %3027 = vmatmul.f32.gmra.mxu0 %v2729
      %v3028 = vpop.f32.mrf.mxu0
      %v3029 = vadd.f32 0.0, %v3028
      %3030 = vmatmul.f32.gmra.mxu0 %v2738
      %v3031 = vpop.f32.mrf.mxu0
      %v3032 = vadd.f32 0.0, %v3031
      %3033 = vmatmul.f32.gmra.mxu0 %v2747
      %v3034 = vpop.f32.mrf.mxu0
      %v3035 = vadd.f32 0.0, %v3034
      %3036 = vmatmul.f32.gmra.mxu0 %v2756
      %v3037 = vpop.f32.mrf.mxu0
      %v3038 = vadd.f32 0.0, %v3037
      %3039 = vmatmul.f32.gmra.mxu0 %v2765
      %v3040 = vpop.f32.mrf.mxu0
      %v3041 = vadd.f32 0.0, %v3040
      %3042 = vmatmul.f32.gmra.mxu0 %v2774
      %v3043 = vpop.f32.mrf.mxu0
      %v3044 = vadd.f32 0.0, %v3043
      %3045 = vmatmul.f32.gmra.mxu0 %v2783
      %v3046 = vpop.f32.mrf.mxu0
      %v3047 = vadd.f32 0.0, %v3046
      %3048 = vdwg.mxu0
      %3049 = vmatpush.msra.mxu0 %v2823
      %3050 = vmatpush.msra.mxu0 %v2822
      %3051 = vmatpush.msra.mxu0 %v2821
      %3052 = vmatpush.msra.mxu0 %v2820
      %3053 = vmatpush.msra.mxu0 %v2819
      %3054 = vmatpush.msra.mxu0 %v2818
      %3055 = vmatpush.msra.mxu0 %v2817
      %3056 = vmatpush.msra.mxu0 %v2816
      %3057 = vmatpush.msra.mxu0 %v2815
      %3058 = vmatpush.msra.mxu0 %v2814
      %3059 = vmatpush.msra.mxu0 %v2813
      %3060 = vmatpush.msra.mxu0 %v2812
      %3061 = vmatpush.msra.mxu0 %v2811
      %3062 = vmatpush.msra.mxu0 %v2810
      %3063 = vmatpush.msra.mxu0 %v2809
      %3064 = vmatpush.msra.mxu0 %v2808
      %3065 = vmatmul.f32.gmra.mxu0 %v2505
      %v3066 = vpop.f32.mrf.mxu0
      %v3067 = vadd.f32 %v2954, %v3066
      %3068 = vmatmul.f32.gmra.mxu0 %v2514
      %v3069 = vpop.f32.mrf.mxu0
      %v3070 = vadd.f32 %v2957, %v3069
      %3071 = vmatmul.f32.gmra.mxu0 %v2523
      %v3072 = vpop.f32.mrf.mxu0
      %v3073 = vadd.f32 %v2960, %v3072
      %3074 = vmatmul.f32.gmra.mxu0 %v2532
      %v3075 = vpop.f32.mrf.mxu0
      %v3076 = vadd.f32 %v2963, %v3075
      %3077 = vmatmul.f32.gmra.mxu0 %v2541
      %v3078 = vpop.f32.mrf.mxu0
      %v3079 = vadd.f32 %v2966, %v3078
      %3080 = vmatmul.f32.gmra.mxu0 %v2550
      %v3081 = vpop.f32.mrf.mxu0
      %v3082 = vadd.f32 %v2969, %v3081
      %3083 = vmatmul.f32.gmra.mxu0 %v2559
      %v3084 = vpop.f32.mrf.mxu0
      %v3085 = vadd.f32 %v2972, %v3084
      %3086 = vmatmul.f32.gmra.mxu0 %v2568
      %v3087 = vpop.f32.mrf.mxu0
      %v3088 = vadd.f32 %v2975, %v3087
      %3089 = vmatmul.f32.gmra.mxu0 %v2577
      %v3090 = vpop.f32.mrf.mxu0
      %v3091 = vadd.f32 %v2978, %v3090
      %3092 = vmatmul.f32.gmra.mxu0 %v2586
      %v3093 = vpop.f32.mrf.mxu0
      %v3094 = vadd.f32 %v2981, %v3093
      %3095 = vmatmul.f32.gmra.mxu0 %v2595
      %v3096 = vpop.f32.mrf.mxu0
      %v3097 = vadd.f32 %v2984, %v3096
      %3098 = vmatmul.f32.gmra.mxu0 %v2604
      %v3099 = vpop.f32.mrf.mxu0
      %v3100 = vadd.f32 %v2987, %v3099
      %3101 = vmatmul.f32.gmra.mxu0 %v2613
      %v3102 = vpop.f32.mrf.mxu0
      %v3103 = vadd.f32 %v2990, %v3102
      %3104 = vmatmul.f32.gmra.mxu0 %v2622
      %v3105 = vpop.f32.mrf.mxu0
      %v3106 = vadd.f32 %v2993, %v3105
      %3107 = vmatmul.f32.gmra.mxu0 %v2631
      %v3108 = vpop.f32.mrf.mxu0
      %v3109 = vadd.f32 %v2996, %v3108
      %3110 = vmatmul.f32.gmra.mxu0 %v2640
      %v3111 = vpop.f32.mrf.mxu0
      %v3112 = vadd.f32 %v2999, %v3111
      %3113 = vmatmul.f32.gmra.mxu0 %v2649
      %v3114 = vpop.f32.mrf.mxu0
      %v3115 = vadd.f32 %v3002, %v3114
      %3116 = vmatmul.f32.gmra.mxu0 %v2658
      %v3117 = vpop.f32.mrf.mxu0
      %v3118 = vadd.f32 %v3005, %v3117
      %3119 = vmatmul.f32.gmra.mxu0 %v2667
      %v3120 = vpop.f32.mrf.mxu0
      %v3121 = vadd.f32 %v3008, %v3120
      %3122 = vmatmul.f32.gmra.mxu0 %v2676
      %v3123 = vpop.f32.mrf.mxu0
      %v3124 = vadd.f32 %v3011, %v3123
      %3125 = vmatmul.f32.gmra.mxu0 %v2685
      %v3126 = vpop.f32.mrf.mxu0
      %v3127 = vadd.f32 %v3014, %v3126
      %3128 = vmatmul.f32.gmra.mxu0 %v2694
      %v3129 = vpop.f32.mrf.mxu0
      %v3130 = vadd.f32 %v3017, %v3129
      %3131 = vmatmul.f32.gmra.mxu0 %v2703
      %v3132 = vpop.f32.mrf.mxu0
      %v3133 = vadd.f32 %v3020, %v3132
      %3134 = vmatmul.f32.gmra.mxu0 %v2712
      %v3135 = vpop.f32.mrf.mxu0
      %v3136 = vadd.f32 %v3023, %v3135
      %3137 = vmatmul.f32.gmra.mxu0 %v2721
      %v3138 = vpop.f32.mrf.mxu0
      %v3139 = vadd.f32 %v3026, %v3138
      %3140 = vmatmul.f32.gmra.mxu0 %v2730
      %v3141 = vpop.f32.mrf.mxu0
      %v3142 = vadd.f32 %v3029, %v3141
      %3143 = vmatmul.f32.gmra.mxu0 %v2739
      %v3144 = vpop.f32.mrf.mxu0
      %v3145 = vadd.f32 %v3032, %v3144
      %3146 = vmatmul.f32.gmra.mxu0 %v2748
      %v3147 = vpop.f32.mrf.mxu0
      %v3148 = vadd.f32 %v3035, %v3147
      %3149 = vmatmul.f32.gmra.mxu0 %v2757
      %v3150 = vpop.f32.mrf.mxu0
      %v3151 = vadd.f32 %v3038, %v3150
      %3152 = vmatmul.f32.gmra.mxu0 %v2766
      %v3153 = vpop.f32.mrf.mxu0
      %v3154 = vadd.f32 %v3041, %v3153
      %3155 = vmatmul.f32.gmra.mxu0 %v2775
      %v3156 = vpop.f32.mrf.mxu0
      %v3157 = vadd.f32 %v3044, %v3156
      %3158 = vmatmul.f32.gmra.mxu0 %v2784
      %v3159 = vpop.f32.mrf.mxu0
      %v3160 = vadd.f32 %v3047, %v3159
      %3161 = vdwg.mxu0
      %3162 = vmatpush.msra.mxu0 %v2839
      %3163 = vmatpush.msra.mxu0 %v2838
      %3164 = vmatpush.msra.mxu0 %v2837
      %3165 = vmatpush.msra.mxu0 %v2836
      %3166 = vmatpush.msra.mxu0 %v2835
      %3167 = vmatpush.msra.mxu0 %v2834
      %3168 = vmatpush.msra.mxu0 %v2833
      %3169 = vmatpush.msra.mxu0 %v2832
      %3170 = vmatpush.msra.mxu0 %v2831
      %3171 = vmatpush.msra.mxu0 %v2830
      %3172 = vmatpush.msra.mxu0 %v2829
      %3173 = vmatpush.msra.mxu0 %v2828
      %3174 = vmatpush.msra.mxu0 %v2827
      %3175 = vmatpush.msra.mxu0 %v2826
      %3176 = vmatpush.msra.mxu0 %v2825
      %3177 = vmatpush.msra.mxu0 %v2824
      %3178 = vmatmul.f32.gmra.mxu0 %v2506
      %v3179 = vpop.f32.mrf.mxu0
      %v3180 = vadd.f32 %v3067, %v3179
      %3181 = vmatmul.f32.gmra.mxu0 %v2515
      %v3182 = vpop.f32.mrf.mxu0
      %v3183 = vadd.f32 %v3070, %v3182
      %3184 = vmatmul.f32.gmra.mxu0 %v2524
      %v3185 = vpop.f32.mrf.mxu0
      %v3186 = vadd.f32 %v3073, %v3185
      %3187 = vmatmul.f32.gmra.mxu0 %v2533
      %v3188 = vpop.f32.mrf.mxu0
      %v3189 = vadd.f32 %v3076, %v3188
      %3190 = vmatmul.f32.gmra.mxu0 %v2542
      %v3191 = vpop.f32.mrf.mxu0
      %v3192 = vadd.f32 %v3079, %v3191
      %3193 = vmatmul.f32.gmra.mxu0 %v2551
      %v3194 = vpop.f32.mrf.mxu0
      %v3195 = vadd.f32 %v3082, %v3194
      %3196 = vmatmul.f32.gmra.mxu0 %v2560
      %v3197 = vpop.f32.mrf.mxu0
      %v3198 = vadd.f32 %v3085, %v3197
      %3199 = vmatmul.f32.gmra.mxu0 %v2569
      %v3200 = vpop.f32.mrf.mxu0
      %v3201 = vadd.f32 %v3088, %v3200
      %3202 = vmatmul.f32.gmra.mxu0 %v2578
      %v3203 = vpop.f32.mrf.mxu0
      %v3204 = vadd.f32 %v3091, %v3203
      %3205 = vmatmul.f32.gmra.mxu0 %v2587
      %v3206 = vpop.f32.mrf.mxu0
      %v3207 = vadd.f32 %v3094, %v3206
      %3208 = vmatmul.f32.gmra.mxu0 %v2596
      %v3209 = vpop.f32.mrf.mxu0
      %v3210 = vadd.f32 %v3097, %v3209
      %3211 = vmatmul.f32.gmra.mxu0 %v2605
      %v3212 = vpop.f32.mrf.mxu0
      %v3213 = vadd.f32 %v3100, %v3212
      %3214 = vmatmul.f32.gmra.mxu0 %v2614
      %v3215 = vpop.f32.mrf.mxu0
      %v3216 = vadd.f32 %v3103, %v3215
      %3217 = vmatmul.f32.gmra.mxu0 %v2623
      %v3218 = vpop.f32.mrf.mxu0
      %v3219 = vadd.f32 %v3106, %v3218
      %3220 = vmatmul.f32.gmra.mxu0 %v2632
      %v3221 = vpop.f32.mrf.mxu0
      %v3222 = vadd.f32 %v3109, %v3221
      %3223 = vmatmul.f32.gmra.mxu0 %v2641
      %v3224 = vpop.f32.mrf.mxu0
      %v3225 = vadd.f32 %v3112, %v3224
      %3226 = vmatmul.f32.gmra.mxu0 %v2650
      %v3227 = vpop.f32.mrf.mxu0
      %v3228 = vadd.f32 %v3115, %v3227
      %3229 = vmatmul.f32.gmra.mxu0 %v2659
      %v3230 = vpop.f32.mrf.mxu0
      %v3231 = vadd.f32 %v3118, %v3230
      %3232 = vmatmul.f32.gmra.mxu0 %v2668
      %v3233 = vpop.f32.mrf.mxu0
      %v3234 = vadd.f32 %v3121, %v3233
      %3235 = vmatmul.f32.gmra.mxu0 %v2677
      %v3236 = vpop.f32.mrf.mxu0
      %v3237 = vadd.f32 %v3124, %v3236
      %3238 = vmatmul.f32.gmra.mxu0 %v2686
      %v3239 = vpop.f32.mrf.mxu0
      %v3240 = vadd.f32 %v3127, %v3239
      %3241 = vmatmul.f32.gmra.mxu0 %v2695
      %v3242 = vpop.f32.mrf.mxu0
      %v3243 = vadd.f32 %v3130, %v3242
      %3244 = vmatmul.f32.gmra.mxu0 %v2704
      %v3245 = vpop.f32.mrf.mxu0
      %v3246 = vadd.f32 %v3133, %v3245
      %3247 = vmatmul.f32.gmra.mxu0 %v2713
      %v3248 = vpop.f32.mrf.mxu0
      %v3249 = vadd.f32 %v3136, %v3248
      %3250 = vmatmul.f32.gmra.mxu0 %v2722
      %v3251 = vpop.f32.mrf.mxu0
      %v3252 = vadd.f32 %v3139, %v3251
      %3253 = vmatmul.f32.gmra.mxu0 %v2731
      %v3254 = vpop.f32.mrf.mxu0
      %v3255 = vadd.f32 %v3142, %v3254
      %3256 = vmatmul.f32.gmra.mxu0 %v2740
      %v3257 = vpop.f32.mrf.mxu0
      %v3258 = vadd.f32 %v3145, %v3257
      %3259 = vmatmul.f32.gmra.mxu0 %v2749
      %v3260 = vpop.f32.mrf.mxu0
      %v3261 = vadd.f32 %v3148, %v3260
      %3262 = vmatmul.f32.gmra.mxu0 %v2758
      %v3263 = vpop.f32.mrf.mxu0
      %v3264 = vadd.f32 %v3151, %v3263
      %3265 = vmatmul.f32.gmra.mxu0 %v2767
      %v3266 = vpop.f32.mrf.mxu0
      %v3267 = vadd.f32 %v3154, %v3266
      %3268 = vmatmul.f32.gmra.mxu0 %v2776
      %v3269 = vpop.f32.mrf.mxu0
      %v3270 = vadd.f32 %v3157, %v3269
      %3271 = vmatmul.f32.gmra.mxu0 %v2785
      %v3272 = vpop.f32.mrf.mxu0
      %v3273 = vadd.f32 %v3160, %v3272
      %3274 = vdwg.mxu0
      %3275 = vmatpush.msra.mxu0 %v2855
      %3276 = vmatpush.msra.mxu0 %v2854
      %3277 = vmatpush.msra.mxu0 %v2853
      %3278 = vmatpush.msra.mxu0 %v2852
      %3279 = vmatpush.msra.mxu0 %v2851
      %3280 = vmatpush.msra.mxu0 %v2850
      %3281 = vmatpush.msra.mxu0 %v2849
      %3282 = vmatpush.msra.mxu0 %v2848
      %3283 = vmatpush.msra.mxu0 %v2847
      %3284 = vmatpush.msra.mxu0 %v2846
      %3285 = vmatpush.msra.mxu0 %v2845
      %3286 = vmatpush.msra.mxu0 %v2844
      %3287 = vmatpush.msra.mxu0 %v2843
      %3288 = vmatpush.msra.mxu0 %v2842
      %3289 = vmatpush.msra.mxu0 %v2841
      %3290 = vmatpush.msra.mxu0 %v2840
      %3291 = vmatmul.f32.gmra.mxu0 %v2507
      %v3292 = vpop.f32.mrf.mxu0
      %v3293 = vadd.f32 %v3180, %v3292
      %3294 = vmatmul.f32.gmra.mxu0 %v2516
      %v3295 = vpop.f32.mrf.mxu0
      %v3296 = vadd.f32 %v3183, %v3295
      %3297 = vmatmul.f32.gmra.mxu0 %v2525
      %v3298 = vpop.f32.mrf.mxu0
      %v3299 = vadd.f32 %v3186, %v3298
      %3300 = vmatmul.f32.gmra.mxu0 %v2534
      %v3301 = vpop.f32.mrf.mxu0
      %v3302 = vadd.f32 %v3189, %v3301
      %3303 = vmatmul.f32.gmra.mxu0 %v2543
      %v3304 = vpop.f32.mrf.mxu0
      %v3305 = vadd.f32 %v3192, %v3304
      %3306 = vmatmul.f32.gmra.mxu0 %v2552
      %v3307 = vpop.f32.mrf.mxu0
      %v3308 = vadd.f32 %v3195, %v3307
      %3309 = vmatmul.f32.gmra.mxu0 %v2561
      %v3310 = vpop.f32.mrf.mxu0
      %v3311 = vadd.f32 %v3198, %v3310
      %3312 = vmatmul.f32.gmra.mxu0 %v2570
      %v3313 = vpop.f32.mrf.mxu0
      %v3314 = vadd.f32 %v3201, %v3313
      %3315 = vmatmul.f32.gmra.mxu0 %v2579
      %v3316 = vpop.f32.mrf.mxu0
      %v3317 = vadd.f32 %v3204, %v3316
      %3318 = vmatmul.f32.gmra.mxu0 %v2588
      %v3319 = vpop.f32.mrf.mxu0
      %v3320 = vadd.f32 %v3207, %v3319
      %3321 = vmatmul.f32.gmra.mxu0 %v2597
      %v3322 = vpop.f32.mrf.mxu0
      %v3323 = vadd.f32 %v3210, %v3322
      %3324 = vmatmul.f32.gmra.mxu0 %v2606
      %v3325 = vpop.f32.mrf.mxu0
      %v3326 = vadd.f32 %v3213, %v3325
      %3327 = vmatmul.f32.gmra.mxu0 %v2615
      %v3328 = vpop.f32.mrf.mxu0
      %v3329 = vadd.f32 %v3216, %v3328
      %3330 = vmatmul.f32.gmra.mxu0 %v2624
      %v3331 = vpop.f32.mrf.mxu0
      %v3332 = vadd.f32 %v3219, %v3331
      %3333 = vmatmul.f32.gmra.mxu0 %v2633
      %v3334 = vpop.f32.mrf.mxu0
      %v3335 = vadd.f32 %v3222, %v3334
      %3336 = vmatmul.f32.gmra.mxu0 %v2642
      %v3337 = vpop.f32.mrf.mxu0
      %v3338 = vadd.f32 %v3225, %v3337
      %3339 = vmatmul.f32.gmra.mxu0 %v2651
      %v3340 = vpop.f32.mrf.mxu0
      %v3341 = vadd.f32 %v3228, %v3340
      %3342 = vmatmul.f32.gmra.mxu0 %v2660
      %v3343 = vpop.f32.mrf.mxu0
      %v3344 = vadd.f32 %v3231, %v3343
      %3345 = vmatmul.f32.gmra.mxu0 %v2669
      %v3346 = vpop.f32.mrf.mxu0
      %v3347 = vadd.f32 %v3234, %v3346
      %3348 = vmatmul.f32.gmra.mxu0 %v2678
      %v3349 = vpop.f32.mrf.mxu0
      %v3350 = vadd.f32 %v3237, %v3349
      %3351 = vmatmul.f32.gmra.mxu0 %v2687
      %v3352 = vpop.f32.mrf.mxu0
      %v3353 = vadd.f32 %v3240, %v3352
      %3354 = vmatmul.f32.gmra.mxu0 %v2696
      %v3355 = vpop.f32.mrf.mxu0
      %v3356 = vadd.f32 %v3243, %v3355
      %3357 = vmatmul.f32.gmra.mxu0 %v2705
      %v3358 = vpop.f32.mrf.mxu0
      %v3359 = vadd.f32 %v3246, %v3358
      %3360 = vmatmul.f32.gmra.mxu0 %v2714
      %v3361 = vpop.f32.mrf.mxu0
      %v3362 = vadd.f32 %v3249, %v3361
      %3363 = vmatmul.f32.gmra.mxu0 %v2723
      %v3364 = vpop.f32.mrf.mxu0
      %v3365 = vadd.f32 %v3252, %v3364
      %3366 = vmatmul.f32.gmra.mxu0 %v2732
      %v3367 = vpop.f32.mrf.mxu0
      %v3368 = vadd.f32 %v3255, %v3367
      %3369 = vmatmul.f32.gmra.mxu0 %v2741
      %v3370 = vpop.f32.mrf.mxu0
      %v3371 = vadd.f32 %v3258, %v3370
      %3372 = vmatmul.f32.gmra.mxu0 %v2750
      %v3373 = vpop.f32.mrf.mxu0
      %v3374 = vadd.f32 %v3261, %v3373
      %3375 = vmatmul.f32.gmra.mxu0 %v2759
      %v3376 = vpop.f32.mrf.mxu0
      %v3377 = vadd.f32 %v3264, %v3376
      %3378 = vmatmul.f32.gmra.mxu0 %v2768
      %v3379 = vpop.f32.mrf.mxu0
      %v3380 = vadd.f32 %v3267, %v3379
      %3381 = vmatmul.f32.gmra.mxu0 %v2777
      %v3382 = vpop.f32.mrf.mxu0
      %v3383 = vadd.f32 %v3270, %v3382
      %3384 = vmatmul.f32.gmra.mxu0 %v2786
      %v3385 = vpop.f32.mrf.mxu0
      %v3386 = vadd.f32 %v3273, %v3385
      %3387 = vdwg.mxu0
      %3388 = vmatpush.msra.mxu0 %v2871
      %3389 = vmatpush.msra.mxu0 %v2870
      %3390 = vmatpush.msra.mxu0 %v2869
      %3391 = vmatpush.msra.mxu0 %v2868
      %3392 = vmatpush.msra.mxu0 %v2867
      %3393 = vmatpush.msra.mxu0 %v2866
      %3394 = vmatpush.msra.mxu0 %v2865
      %3395 = vmatpush.msra.mxu0 %v2864
      %3396 = vmatpush.msra.mxu0 %v2863
      %3397 = vmatpush.msra.mxu0 %v2862
      %3398 = vmatpush.msra.mxu0 %v2861
      %3399 = vmatpush.msra.mxu0 %v2860
      %3400 = vmatpush.msra.mxu0 %v2859
      %3401 = vmatpush.msra.mxu0 %v2858
      %3402 = vmatpush.msra.mxu0 %v2857
      %3403 = vmatpush.msra.mxu0 %v2856
      %3404 = vmatmul.f32.gmra.mxu0 %v2508
      %v3405 = vpop.f32.mrf.mxu0
      %v3406 = vadd.f32 %v3293, %v3405
      %3407 = vmatmul.f32.gmra.mxu0 %v2517
      %v3408 = vpop.f32.mrf.mxu0
      %v3409 = vadd.f32 %v3296, %v3408
      %3410 = vmatmul.f32.gmra.mxu0 %v2526
      %v3411 = vpop.f32.mrf.mxu0
      %v3412 = vadd.f32 %v3299, %v3411
      %3413 = vmatmul.f32.gmra.mxu0 %v2535
      %v3414 = vpop.f32.mrf.mxu0
      %v3415 = vadd.f32 %v3302, %v3414
      %3416 = vmatmul.f32.gmra.mxu0 %v2544
      %v3417 = vpop.f32.mrf.mxu0
      %v3418 = vadd.f32 %v3305, %v3417
      %3419 = vmatmul.f32.gmra.mxu0 %v2553
      %v3420 = vpop.f32.mrf.mxu0
      %v3421 = vadd.f32 %v3308, %v3420
      %3422 = vmatmul.f32.gmra.mxu0 %v2562
      %v3423 = vpop.f32.mrf.mxu0
      %v3424 = vadd.f32 %v3311, %v3423
      %3425 = vmatmul.f32.gmra.mxu0 %v2571
      %v3426 = vpop.f32.mrf.mxu0
      %v3427 = vadd.f32 %v3314, %v3426
      %3428 = vmatmul.f32.gmra.mxu0 %v2580
      %v3429 = vpop.f32.mrf.mxu0
      %v3430 = vadd.f32 %v3317, %v3429
      %3431 = vmatmul.f32.gmra.mxu0 %v2589
      %v3432 = vpop.f32.mrf.mxu0
      %v3433 = vadd.f32 %v3320, %v3432
      %3434 = vmatmul.f32.gmra.mxu0 %v2598
      %v3435 = vpop.f32.mrf.mxu0
      %v3436 = vadd.f32 %v3323, %v3435
      %3437 = vmatmul.f32.gmra.mxu0 %v2607
      %v3438 = vpop.f32.mrf.mxu0
      %v3439 = vadd.f32 %v3326, %v3438
      %3440 = vmatmul.f32.gmra.mxu0 %v2616
      %v3441 = vpop.f32.mrf.mxu0
      %v3442 = vadd.f32 %v3329, %v3441
      %3443 = vmatmul.f32.gmra.mxu0 %v2625
      %v3444 = vpop.f32.mrf.mxu0
      %v3445 = vadd.f32 %v3332, %v3444
      %3446 = vmatmul.f32.gmra.mxu0 %v2634
      %v3447 = vpop.f32.mrf.mxu0
      %v3448 = vadd.f32 %v3335, %v3447
      %3449 = vmatmul.f32.gmra.mxu0 %v2643
      %v3450 = vpop.f32.mrf.mxu0
      %v3451 = vadd.f32 %v3338, %v3450
      %3452 = vmatmul.f32.gmra.mxu0 %v2652
      %v3453 = vpop.f32.mrf.mxu0
      %v3454 = vadd.f32 %v3341, %v3453
      %3455 = vmatmul.f32.gmra.mxu0 %v2661
      %v3456 = vpop.f32.mrf.mxu0
      %v3457 = vadd.f32 %v3344, %v3456
      %3458 = vmatmul.f32.gmra.mxu0 %v2670
      %v3459 = vpop.f32.mrf.mxu0
      %v3460 = vadd.f32 %v3347, %v3459
      %3461 = vmatmul.f32.gmra.mxu0 %v2679
      %v3462 = vpop.f32.mrf.mxu0
      %v3463 = vadd.f32 %v3350, %v3462
      %3464 = vmatmul.f32.gmra.mxu0 %v2688
      %v3465 = vpop.f32.mrf.mxu0
      %v3466 = vadd.f32 %v3353, %v3465
      %3467 = vmatmul.f32.gmra.mxu0 %v2697
      %v3468 = vpop.f32.mrf.mxu0
      %v3469 = vadd.f32 %v3356, %v3468
      %3470 = vmatmul.f32.gmra.mxu0 %v2706
      %v3471 = vpop.f32.mrf.mxu0
      %v3472 = vadd.f32 %v3359, %v3471
      %3473 = vmatmul.f32.gmra.mxu0 %v2715
      %v3474 = vpop.f32.mrf.mxu0
      %v3475 = vadd.f32 %v3362, %v3474
      %3476 = vmatmul.f32.gmra.mxu0 %v2724
      %v3477 = vpop.f32.mrf.mxu0
      %v3478 = vadd.f32 %v3365, %v3477
      %3479 = vmatmul.f32.gmra.mxu0 %v2733
      %v3480 = vpop.f32.mrf.mxu0
      %v3481 = vadd.f32 %v3368, %v3480
      %3482 = vmatmul.f32.gmra.mxu0 %v2742
      %v3483 = vpop.f32.mrf.mxu0
      %v3484 = vadd.f32 %v3371, %v3483
      %3485 = vmatmul.f32.gmra.mxu0 %v2751
      %v3486 = vpop.f32.mrf.mxu0
      %v3487 = vadd.f32 %v3374, %v3486
      %3488 = vmatmul.f32.gmra.mxu0 %v2760
      %v3489 = vpop.f32.mrf.mxu0
      %v3490 = vadd.f32 %v3377, %v3489
      %3491 = vmatmul.f32.gmra.mxu0 %v2769
      %v3492 = vpop.f32.mrf.mxu0
      %v3493 = vadd.f32 %v3380, %v3492
      %3494 = vmatmul.f32.gmra.mxu0 %v2778
      %v3495 = vpop.f32.mrf.mxu0
      %v3496 = vadd.f32 %v3383, %v3495
      %3497 = vmatmul.f32.gmra.mxu0 %v2787
      %v3498 = vpop.f32.mrf.mxu0
      %v3499 = vadd.f32 %v3386, %v3498
      %3500 = vdwg.mxu0
      %3501 = vmatpush.msra.mxu0 %v2887
      %3502 = vmatpush.msra.mxu0 %v2886
      %3503 = vmatpush.msra.mxu0 %v2885
      %3504 = vmatpush.msra.mxu0 %v2884
      %3505 = vmatpush.msra.mxu0 %v2883
      %3506 = vmatpush.msra.mxu0 %v2882
      %3507 = vmatpush.msra.mxu0 %v2881
      %3508 = vmatpush.msra.mxu0 %v2880
      %3509 = vmatpush.msra.mxu0 %v2879
      %3510 = vmatpush.msra.mxu0 %v2878
      %3511 = vmatpush.msra.mxu0 %v2877
      %3512 = vmatpush.msra.mxu0 %v2876
      %3513 = vmatpush.msra.mxu0 %v2875
      %3514 = vmatpush.msra.mxu0 %v2874
      %3515 = vmatpush.msra.mxu0 %v2873
      %3516 = vmatpush.msra.mxu0 %v2872
      %3517 = vmatmul.f32.gmra.mxu0 %v2509
      %v3518 = vpop.f32.mrf.mxu0
      %v3519 = vadd.f32 %v3406, %v3518
      %3520 = vmatmul.f32.gmra.mxu0 %v2518
      %v3521 = vpop.f32.mrf.mxu0
      %v3522 = vadd.f32 %v3409, %v3521
      %3523 = vmatmul.f32.gmra.mxu0 %v2527
      %v3524 = vpop.f32.mrf.mxu0
      %v3525 = vadd.f32 %v3412, %v3524
      %3526 = vmatmul.f32.gmra.mxu0 %v2536
      %v3527 = vpop.f32.mrf.mxu0
      %v3528 = vadd.f32 %v3415, %v3527
      %3529 = vmatmul.f32.gmra.mxu0 %v2545
      %v3530 = vpop.f32.mrf.mxu0
      %v3531 = vadd.f32 %v3418, %v3530
      %3532 = vmatmul.f32.gmra.mxu0 %v2554
      %v3533 = vpop.f32.mrf.mxu0
      %v3534 = vadd.f32 %v3421, %v3533
      %3535 = vmatmul.f32.gmra.mxu0 %v2563
      %v3536 = vpop.f32.mrf.mxu0
      %v3537 = vadd.f32 %v3424, %v3536
      %3538 = vmatmul.f32.gmra.mxu0 %v2572
      %v3539 = vpop.f32.mrf.mxu0
      %v3540 = vadd.f32 %v3427, %v3539
      %3541 = vmatmul.f32.gmra.mxu0 %v2581
      %v3542 = vpop.f32.mrf.mxu0
      %v3543 = vadd.f32 %v3430, %v3542
      %3544 = vmatmul.f32.gmra.mxu0 %v2590
      %v3545 = vpop.f32.mrf.mxu0
      %v3546 = vadd.f32 %v3433, %v3545
      %3547 = vmatmul.f32.gmra.mxu0 %v2599
      %v3548 = vpop.f32.mrf.mxu0
      %v3549 = vadd.f32 %v3436, %v3548
      %3550 = vmatmul.f32.gmra.mxu0 %v2608
      %v3551 = vpop.f32.mrf.mxu0
      %v3552 = vadd.f32 %v3439, %v3551
      %3553 = vmatmul.f32.gmra.mxu0 %v2617
      %v3554 = vpop.f32.mrf.mxu0
      %v3555 = vadd.f32 %v3442, %v3554
      %3556 = vmatmul.f32.gmra.mxu0 %v2626
      %v3557 = vpop.f32.mrf.mxu0
      %v3558 = vadd.f32 %v3445, %v3557
      %3559 = vmatmul.f32.gmra.mxu0 %v2635
      %v3560 = vpop.f32.mrf.mxu0
      %v3561 = vadd.f32 %v3448, %v3560
      %3562 = vmatmul.f32.gmra.mxu0 %v2644
      %v3563 = vpop.f32.mrf.mxu0
      %v3564 = vadd.f32 %v3451, %v3563
      %3565 = vmatmul.f32.gmra.mxu0 %v2653
      %v3566 = vpop.f32.mrf.mxu0
      %v3567 = vadd.f32 %v3454, %v3566
      %3568 = vmatmul.f32.gmra.mxu0 %v2662
      %v3569 = vpop.f32.mrf.mxu0
      %v3570 = vadd.f32 %v3457, %v3569
      %3571 = vmatmul.f32.gmra.mxu0 %v2671
      %v3572 = vpop.f32.mrf.mxu0
      %v3573 = vadd.f32 %v3460, %v3572
      %3574 = vmatmul.f32.gmra.mxu0 %v2680
      %v3575 = vpop.f32.mrf.mxu0
      %v3576 = vadd.f32 %v3463, %v3575
      %3577 = vmatmul.f32.gmra.mxu0 %v2689
      %v3578 = vpop.f32.mrf.mxu0
      %v3579 = vadd.f32 %v3466, %v3578
      %3580 = vmatmul.f32.gmra.mxu0 %v2698
      %v3581 = vpop.f32.mrf.mxu0
      %v3582 = vadd.f32 %v3469, %v3581
      %3583 = vmatmul.f32.gmra.mxu0 %v2707
      %v3584 = vpop.f32.mrf.mxu0
      %v3585 = vadd.f32 %v3472, %v3584
      %3586 = vmatmul.f32.gmra.mxu0 %v2716
      %v3587 = vpop.f32.mrf.mxu0
      %v3588 = vadd.f32 %v3475, %v3587
      %3589 = vmatmul.f32.gmra.mxu0 %v2725
      %v3590 = vpop.f32.mrf.mxu0
      %v3591 = vadd.f32 %v3478, %v3590
      %3592 = vmatmul.f32.gmra.mxu0 %v2734
      %v3593 = vpop.f32.mrf.mxu0
      %v3594 = vadd.f32 %v3481, %v3593
      %3595 = vmatmul.f32.gmra.mxu0 %v2743
      %v3596 = vpop.f32.mrf.mxu0
      %v3597 = vadd.f32 %v3484, %v3596
      %3598 = vmatmul.f32.gmra.mxu0 %v2752
      %v3599 = vpop.f32.mrf.mxu0
      %v3600 = vadd.f32 %v3487, %v3599
      %3601 = vmatmul.f32.gmra.mxu0 %v2761
      %v3602 = vpop.f32.mrf.mxu0
      %v3603 = vadd.f32 %v3490, %v3602
      %3604 = vmatmul.f32.gmra.mxu0 %v2770
      %v3605 = vpop.f32.mrf.mxu0
      %v3606 = vadd.f32 %v3493, %v3605
      %3607 = vmatmul.f32.gmra.mxu0 %v2779
      %v3608 = vpop.f32.mrf.mxu0
      %v3609 = vadd.f32 %v3496, %v3608
      %3610 = vmatmul.f32.gmra.mxu0 %v2788
      %v3611 = vpop.f32.mrf.mxu0
      %v3612 = vadd.f32 %v3499, %v3611
      %3613 = vdwg.mxu0
      %3614 = vmatpush.msra.mxu0 %v2903
      %3615 = vmatpush.msra.mxu0 %v2902
      %3616 = vmatpush.msra.mxu0 %v2901
      %3617 = vmatpush.msra.mxu0 %v2900
      %3618 = vmatpush.msra.mxu0 %v2899
      %3619 = vmatpush.msra.mxu0 %v2898
      %3620 = vmatpush.msra.mxu0 %v2897
      %3621 = vmatpush.msra.mxu0 %v2896
      %3622 = vmatpush.msra.mxu0 %v2895
      %3623 = vmatpush.msra.mxu0 %v2894
      %3624 = vmatpush.msra.mxu0 %v2893
      %3625 = vmatpush.msra.mxu0 %v2892
      %3626 = vmatpush.msra.mxu0 %v2891
      %3627 = vmatpush.msra.mxu0 %v2890
      %3628 = vmatpush.msra.mxu0 %v2889
      %3629 = vmatpush.msra.mxu0 %v2888
      %3630 = vmatmul.f32.gmra.mxu0 %v2510
      %v3631 = vpop.f32.mrf.mxu0
      %v3632 = vadd.f32 %v3519, %v3631
      %3633 = vmatmul.f32.gmra.mxu0 %v2519
      %v3634 = vpop.f32.mrf.mxu0
      %v3635 = vadd.f32 %v3522, %v3634
      %3636 = vmatmul.f32.gmra.mxu0 %v2528
      %v3637 = vpop.f32.mrf.mxu0
      %v3638 = vadd.f32 %v3525, %v3637
      %3639 = vmatmul.f32.gmra.mxu0 %v2537
      %v3640 = vpop.f32.mrf.mxu0
      %v3641 = vadd.f32 %v3528, %v3640
      %3642 = vmatmul.f32.gmra.mxu0 %v2546
      %v3643 = vpop.f32.mrf.mxu0
      %v3644 = vadd.f32 %v3531, %v3643
      %3645 = vmatmul.f32.gmra.mxu0 %v2555
      %v3646 = vpop.f32.mrf.mxu0
      %v3647 = vadd.f32 %v3534, %v3646
      %3648 = vmatmul.f32.gmra.mxu0 %v2564
      %v3649 = vpop.f32.mrf.mxu0
      %v3650 = vadd.f32 %v3537, %v3649
      %3651 = vmatmul.f32.gmra.mxu0 %v2573
      %v3652 = vpop.f32.mrf.mxu0
      %v3653 = vadd.f32 %v3540, %v3652
      %3654 = vmatmul.f32.gmra.mxu0 %v2582
      %v3655 = vpop.f32.mrf.mxu0
      %v3656 = vadd.f32 %v3543, %v3655
      %3657 = vmatmul.f32.gmra.mxu0 %v2591
      %v3658 = vpop.f32.mrf.mxu0
      %v3659 = vadd.f32 %v3546, %v3658
      %3660 = vmatmul.f32.gmra.mxu0 %v2600
      %v3661 = vpop.f32.mrf.mxu0
      %v3662 = vadd.f32 %v3549, %v3661
      %3663 = vmatmul.f32.gmra.mxu0 %v2609
      %v3664 = vpop.f32.mrf.mxu0
      %v3665 = vadd.f32 %v3552, %v3664
      %3666 = vmatmul.f32.gmra.mxu0 %v2618
      %v3667 = vpop.f32.mrf.mxu0
      %v3668 = vadd.f32 %v3555, %v3667
      %3669 = vmatmul.f32.gmra.mxu0 %v2627
      %v3670 = vpop.f32.mrf.mxu0
      %v3671 = vadd.f32 %v3558, %v3670
      %3672 = vmatmul.f32.gmra.mxu0 %v2636
      %v3673 = vpop.f32.mrf.mxu0
      %v3674 = vadd.f32 %v3561, %v3673
      %3675 = vmatmul.f32.gmra.mxu0 %v2645
      %v3676 = vpop.f32.mrf.mxu0
      %v3677 = vadd.f32 %v3564, %v3676
      %3678 = vmatmul.f32.gmra.mxu0 %v2654
      %v3679 = vpop.f32.mrf.mxu0
      %v3680 = vadd.f32 %v3567, %v3679
      %3681 = vmatmul.f32.gmra.mxu0 %v2663
      %v3682 = vpop.f32.mrf.mxu0
      %v3683 = vadd.f32 %v3570, %v3682
      %3684 = vmatmul.f32.gmra.mxu0 %v2672
      %v3685 = vpop.f32.mrf.mxu0
      %v3686 = vadd.f32 %v3573, %v3685
      %3687 = vmatmul.f32.gmra.mxu0 %v2681
      %v3688 = vpop.f32.mrf.mxu0
      %v3689 = vadd.f32 %v3576, %v3688
      %3690 = vmatmul.f32.gmra.mxu0 %v2690
      %v3691 = vpop.f32.mrf.mxu0
      %v3692 = vadd.f32 %v3579, %v3691
      %3693 = vmatmul.f32.gmra.mxu0 %v2699
      %v3694 = vpop.f32.mrf.mxu0
      %v3695 = vadd.f32 %v3582, %v3694
      %3696 = vmatmul.f32.gmra.mxu0 %v2708
      %v3697 = vpop.f32.mrf.mxu0
      %v3698 = vadd.f32 %v3585, %v3697
      %3699 = vmatmul.f32.gmra.mxu0 %v2717
      %v3700 = vpop.f32.mrf.mxu0
      %v3701 = vadd.f32 %v3588, %v3700
      %3702 = vmatmul.f32.gmra.mxu0 %v2726
      %v3703 = vpop.f32.mrf.mxu0
      %v3704 = vadd.f32 %v3591, %v3703
      %3705 = vmatmul.f32.gmra.mxu0 %v2735
      %v3706 = vpop.f32.mrf.mxu0
      %v3707 = vadd.f32 %v3594, %v3706
      %3708 = vmatmul.f32.gmra.mxu0 %v2744
      %v3709 = vpop.f32.mrf.mxu0
      %v3710 = vadd.f32 %v3597, %v3709
      %3711 = vmatmul.f32.gmra.mxu0 %v2753
      %v3712 = vpop.f32.mrf.mxu0
      %v3713 = vadd.f32 %v3600, %v3712
      %3714 = vmatmul.f32.gmra.mxu0 %v2762
      %v3715 = vpop.f32.mrf.mxu0
      %v3716 = vadd.f32 %v3603, %v3715
      %3717 = vmatmul.f32.gmra.mxu0 %v2771
      %v3718 = vpop.f32.mrf.mxu0
      %v3719 = vadd.f32 %v3606, %v3718
      %3720 = vmatmul.f32.gmra.mxu0 %v2780
      %v3721 = vpop.f32.mrf.mxu0
      %v3722 = vadd.f32 %v3609, %v3721
      %3723 = vmatmul.f32.gmra.mxu0 %v2789
      %v3724 = vpop.f32.mrf.mxu0
      %v3725 = vadd.f32 %v3612, %v3724
      %3726 = vdwg.mxu0
      %3727 = vmatpush.msra.mxu0 %v2919
      %3728 = vmatpush.msra.mxu0 %v2918
      %3729 = vmatpush.msra.mxu0 %v2917
      %3730 = vmatpush.msra.mxu0 %v2916
      %3731 = vmatpush.msra.mxu0 %v2915
      %3732 = vmatpush.msra.mxu0 %v2914
      %3733 = vmatpush.msra.mxu0 %v2913
      %3734 = vmatpush.msra.mxu0 %v2912
      %3735 = vmatpush.msra.mxu0 %v2911
      %3736 = vmatpush.msra.mxu0 %v2910
      %3737 = vmatpush.msra.mxu0 %v2909
      %3738 = vmatpush.msra.mxu0 %v2908
      %3739 = vmatpush.msra.mxu0 %v2907
      %3740 = vmatpush.msra.mxu0 %v2906
      %3741 = vmatpush.msra.mxu0 %v2905
      %3742 = vmatpush.msra.mxu0 %v2904
      %3743 = vmatmul.f32.gmra.mxu0 %v2511
      %v3744 = vpop.f32.mrf.mxu0
      %v3745 = vadd.f32 %v3632, %v3744
      %3746 = vmatmul.f32.gmra.mxu0 %v2520
      %v3747 = vpop.f32.mrf.mxu0
      %v3748 = vadd.f32 %v3635, %v3747
      %3749 = vmatmul.f32.gmra.mxu0 %v2529
      %v3750 = vpop.f32.mrf.mxu0
      %v3751 = vadd.f32 %v3638, %v3750
      %3752 = vmatmul.f32.gmra.mxu0 %v2538
      %v3753 = vpop.f32.mrf.mxu0
      %v3754 = vadd.f32 %v3641, %v3753
      %3755 = vmatmul.f32.gmra.mxu0 %v2547
      %v3756 = vpop.f32.mrf.mxu0
      %v3757 = vadd.f32 %v3644, %v3756
      %3758 = vmatmul.f32.gmra.mxu0 %v2556
      %v3759 = vpop.f32.mrf.mxu0
      %v3760 = vadd.f32 %v3647, %v3759
      %3761 = vmatmul.f32.gmra.mxu0 %v2565
      %v3762 = vpop.f32.mrf.mxu0
      %v3763 = vadd.f32 %v3650, %v3762
      %3764 = vmatmul.f32.gmra.mxu0 %v2574
      %v3765 = vpop.f32.mrf.mxu0
      %v3766 = vadd.f32 %v3653, %v3765
      %3767 = vmatmul.f32.gmra.mxu0 %v2583
      %v3768 = vpop.f32.mrf.mxu0
      %v3769 = vadd.f32 %v3656, %v3768
      %3770 = vmatmul.f32.gmra.mxu0 %v2592
      %v3771 = vpop.f32.mrf.mxu0
      %v3772 = vadd.f32 %v3659, %v3771
      %3773 = vmatmul.f32.gmra.mxu0 %v2601
      %v3774 = vpop.f32.mrf.mxu0
      %v3775 = vadd.f32 %v3662, %v3774
      %3776 = vmatmul.f32.gmra.mxu0 %v2610
      %v3777 = vpop.f32.mrf.mxu0
      %v3778 = vadd.f32 %v3665, %v3777
      %3779 = vmatmul.f32.gmra.mxu0 %v2619
      %v3780 = vpop.f32.mrf.mxu0
      %v3781 = vadd.f32 %v3668, %v3780
      %3782 = vmatmul.f32.gmra.mxu0 %v2628
      %v3783 = vpop.f32.mrf.mxu0
      %v3784 = vadd.f32 %v3671, %v3783
      %3785 = vmatmul.f32.gmra.mxu0 %v2637
      %v3786 = vpop.f32.mrf.mxu0
      %v3787 = vadd.f32 %v3674, %v3786
      %3788 = vmatmul.f32.gmra.mxu0 %v2646
      %v3789 = vpop.f32.mrf.mxu0
      %v3790 = vadd.f32 %v3677, %v3789
      %3791 = vmatmul.f32.gmra.mxu0 %v2655
      %v3792 = vpop.f32.mrf.mxu0
      %v3793 = vadd.f32 %v3680, %v3792
      %3794 = vmatmul.f32.gmra.mxu0 %v2664
      %v3795 = vpop.f32.mrf.mxu0
      %v3796 = vadd.f32 %v3683, %v3795
      %3797 = vmatmul.f32.gmra.mxu0 %v2673
      %v3798 = vpop.f32.mrf.mxu0
      %v3799 = vadd.f32 %v3686, %v3798
      %3800 = vmatmul.f32.gmra.mxu0 %v2682
      %v3801 = vpop.f32.mrf.mxu0
      %v3802 = vadd.f32 %v3689, %v3801
      %3803 = vmatmul.f32.gmra.mxu0 %v2691
      %v3804 = vpop.f32.mrf.mxu0
      %v3805 = vadd.f32 %v3692, %v3804
      %3806 = vmatmul.f32.gmra.mxu0 %v2700
      %v3807 = vpop.f32.mrf.mxu0
      %v3808 = vadd.f32 %v3695, %v3807
      %3809 = vmatmul.f32.gmra.mxu0 %v2709
      %v3810 = vpop.f32.mrf.mxu0
      %v3811 = vadd.f32 %v3698, %v3810
      %3812 = vmatmul.f32.gmra.mxu0 %v2718
      %v3813 = vpop.f32.mrf.mxu0
      %v3814 = vadd.f32 %v3701, %v3813
      %3815 = vmatmul.f32.gmra.mxu0 %v2727
      %v3816 = vpop.f32.mrf.mxu0
      %v3817 = vadd.f32 %v3704, %v3816
      %3818 = vmatmul.f32.gmra.mxu0 %v2736
      %v3819 = vpop.f32.mrf.mxu0
      %v3820 = vadd.f32 %v3707, %v3819
      %3821 = vmatmul.f32.gmra.mxu0 %v2745
      %v3822 = vpop.f32.mrf.mxu0
      %v3823 = vadd.f32 %v3710, %v3822
      %3824 = vmatmul.f32.gmra.mxu0 %v2754
      %v3825 = vpop.f32.mrf.mxu0
      %v3826 = vadd.f32 %v3713, %v3825
      %3827 = vmatmul.f32.gmra.mxu0 %v2763
      %v3828 = vpop.f32.mrf.mxu0
      %v3829 = vadd.f32 %v3716, %v3828
      %3830 = vmatmul.f32.gmra.mxu0 %v2772
      %v3831 = vpop.f32.mrf.mxu0
      %v3832 = vadd.f32 %v3719, %v3831
      %3833 = vmatmul.f32.gmra.mxu0 %v2781
      %v3834 = vpop.f32.mrf.mxu0
      %v3835 = vadd.f32 %v3722, %v3834
      %3836 = vmatmul.f32.gmra.mxu0 %v2790
      %v3837 = vpop.f32.mrf.mxu0
      %v3838 = vadd.f32 %v3725, %v3837
      %3839 = vdwg.mxu0
      %3840 = vmatpush.msra.mxu0 %v2935
      %3841 = vmatpush.msra.mxu0 %v2934
      %3842 = vmatpush.msra.mxu0 %v2933
      %3843 = vmatpush.msra.mxu0 %v2932
      %3844 = vmatpush.msra.mxu0 %v2931
      %3845 = vmatpush.msra.mxu0 %v2930
      %3846 = vmatpush.msra.mxu0 %v2929
      %3847 = vmatpush.msra.mxu0 %v2928
      %3848 = vmatpush.msra.mxu0 %v2927
      %3849 = vmatpush.msra.mxu0 %v2926
      %3850 = vmatpush.msra.mxu0 %v2925
      %3851 = vmatpush.msra.mxu0 %v2924
      %3852 = vmatpush.msra.mxu0 %v2923
      %3853 = vmatpush.msra.mxu0 %v2922
      %3854 = vmatpush.msra.mxu0 %v2921
      %3855 = vmatpush.msra.mxu0 %v2920
      %3856 = vmatmul.f32.gmra.mxu0 %v2512
      %v3857 = vpop.f32.mrf.mxu0
      %v3858 = vadd.f32 %v3745, %v3857
      %3859 = vmatmul.f32.gmra.mxu0 %v2521
      %v3860 = vpop.f32.mrf.mxu0
      %v3861 = vadd.f32 %v3748, %v3860
      %3862 = vmatmul.f32.gmra.mxu0 %v2530
      %v3863 = vpop.f32.mrf.mxu0
      %v3864 = vadd.f32 %v3751, %v3863
      %3865 = vmatmul.f32.gmra.mxu0 %v2539
      %v3866 = vpop.f32.mrf.mxu0
      %v3867 = vadd.f32 %v3754, %v3866
      %3868 = vmatmul.f32.gmra.mxu0 %v2548
      %v3869 = vpop.f32.mrf.mxu0
      %v3870 = vadd.f32 %v3757, %v3869
      %3871 = vmatmul.f32.gmra.mxu0 %v2557
      %v3872 = vpop.f32.mrf.mxu0
      %v3873 = vadd.f32 %v3760, %v3872
      %3874 = vmatmul.f32.gmra.mxu0 %v2566
      %v3875 = vpop.f32.mrf.mxu0
      %v3876 = vadd.f32 %v3763, %v3875
      %3877 = vmatmul.f32.gmra.mxu0 %v2575
      %v3878 = vpop.f32.mrf.mxu0
      %v3879 = vadd.f32 %v3766, %v3878
      %3880 = vmatmul.f32.gmra.mxu0 %v2584
      %v3881 = vpop.f32.mrf.mxu0
      %v3882 = vadd.f32 %v3769, %v3881
      %3883 = vmatmul.f32.gmra.mxu0 %v2593
      %v3884 = vpop.f32.mrf.mxu0
      %v3885 = vadd.f32 %v3772, %v3884
      %3886 = vmatmul.f32.gmra.mxu0 %v2602
      %v3887 = vpop.f32.mrf.mxu0
      %v3888 = vadd.f32 %v3775, %v3887
      %3889 = vmatmul.f32.gmra.mxu0 %v2611
      %v3890 = vpop.f32.mrf.mxu0
      %v3891 = vadd.f32 %v3778, %v3890
      %3892 = vmatmul.f32.gmra.mxu0 %v2620
      %v3893 = vpop.f32.mrf.mxu0
      %v3894 = vadd.f32 %v3781, %v3893
      %3895 = vmatmul.f32.gmra.mxu0 %v2629
      %v3896 = vpop.f32.mrf.mxu0
      %v3897 = vadd.f32 %v3784, %v3896
      %3898 = vmatmul.f32.gmra.mxu0 %v2638
      %v3899 = vpop.f32.mrf.mxu0
      %v3900 = vadd.f32 %v3787, %v3899
      %3901 = vmatmul.f32.gmra.mxu0 %v2647
      %v3902 = vpop.f32.mrf.mxu0
      %v3903 = vadd.f32 %v3790, %v3902
      %3904 = vmatmul.f32.gmra.mxu0 %v2656
      %v3905 = vpop.f32.mrf.mxu0
      %v3906 = vadd.f32 %v3793, %v3905
      %3907 = vmatmul.f32.gmra.mxu0 %v2665
      %v3908 = vpop.f32.mrf.mxu0
      %v3909 = vadd.f32 %v3796, %v3908
      %3910 = vmatmul.f32.gmra.mxu0 %v2674
      %v3911 = vpop.f32.mrf.mxu0
      %v3912 = vadd.f32 %v3799, %v3911
      %3913 = vmatmul.f32.gmra.mxu0 %v2683
      %v3914 = vpop.f32.mrf.mxu0
      %v3915 = vadd.f32 %v3802, %v3914
      %3916 = vmatmul.f32.gmra.mxu0 %v2692
      %v3917 = vpop.f32.mrf.mxu0
      %v3918 = vadd.f32 %v3805, %v3917
      %3919 = vmatmul.f32.gmra.mxu0 %v2701
      %v3920 = vpop.f32.mrf.mxu0
      %v3921 = vadd.f32 %v3808, %v3920
      %3922 = vmatmul.f32.gmra.mxu0 %v2710
      %v3923 = vpop.f32.mrf.mxu0
      %v3924 = vadd.f32 %v3811, %v3923
      %3925 = vmatmul.f32.gmra.mxu0 %v2719
      %v3926 = vpop.f32.mrf.mxu0
      %v3927 = vadd.f32 %v3814, %v3926
      %3928 = vmatmul.f32.gmra.mxu0 %v2728
      %v3929 = vpop.f32.mrf.mxu0
      %v3930 = vadd.f32 %v3817, %v3929
      %3931 = vmatmul.f32.gmra.mxu0 %v2737
      %v3932 = vpop.f32.mrf.mxu0
      %v3933 = vadd.f32 %v3820, %v3932
      %3934 = vmatmul.f32.gmra.mxu0 %v2746
      %v3935 = vpop.f32.mrf.mxu0
      %v3936 = vadd.f32 %v3823, %v3935
      %3937 = vmatmul.f32.gmra.mxu0 %v2755
      %v3938 = vpop.f32.mrf.mxu0
      %v3939 = vadd.f32 %v3826, %v3938
      %3940 = vmatmul.f32.gmra.mxu0 %v2764
      %v3941 = vpop.f32.mrf.mxu0
      %v3942 = vadd.f32 %v3829, %v3941
      %3943 = vmatmul.f32.gmra.mxu0 %v2773
      %v3944 = vpop.f32.mrf.mxu0
      %v3945 = vadd.f32 %v3832, %v3944
      %3946 = vmatmul.f32.gmra.mxu0 %v2782
      %v3947 = vpop.f32.mrf.mxu0
      %v3948 = vadd.f32 %v3835, %v3947
      %3949 = vmatmul.f32.gmra.mxu0 %v2791
      %v3950 = vpop.f32.mrf.mxu0
      %v3951 = vadd.f32 %v3838, %v3950
      %3952 = vdwg.mxu0
      %3953 = vst [vmem:[%s246] sm:$0xff] %v3858
      %3954 = vst [vmem:[%s246 + $0x8] sm:$0xff] %v3861
      %3955 = vst [vmem:[%s246 + $0x10] sm:$0xff] %v3864
      %3956 = vst [vmem:[%s246 + $0x18] sm:$0xff] %v3867
      %3957 = vst [vmem:[%s246 + $0x20] sm:$0xff] %v3870
      %3958 = vst [vmem:[%s246 + $0x28] sm:$0xff] %v3873
      %3959 = vst [vmem:[%s246 + $0x30] sm:$0xff] %v3876
      %3960 = vst [vmem:[%s246 + $0x38] sm:$0xff] %v3879
      %3961 = vst [vmem:[%s246 + $0x40] sm:$0xff] %v3882
      %3962 = vst [vmem:[%s246 + $0x48] sm:$0xff] %v3885
      %3963 = vst [vmem:[%s246 + $0x50] sm:$0xff] %v3888
      %3964 = vst [vmem:[%s246 + $0x58] sm:$0xff] %v3891
      %3965 = vst [vmem:[%s246 + $0x60] sm:$0xff] %v3894
      %3966 = vst [vmem:[%s246 + $0x68] sm:$0xff] %v3897
      %3967 = vst [vmem:[%s246 + $0x70] sm:$0xff] %v3900
      %3968 = vst [vmem:[%s246 + $0x78] sm:$0xff] %v3903
      %3969 = vst [vmem:[%s246 + $0x80] sm:$0xff] %v3906
      %3970 = vst [vmem:[%s246 + $0x88] sm:$0xff] %v3909
      %3971 = vst [vmem:[%s246 + $0x90] sm:$0xff] %v3912
      %3972 = vst [vmem:[%s246 + $0x98] sm:$0xff] %v3915
      %3973 = vst [vmem:[%s246 + $0xa0] sm:$0xff] %v3918
      %3974 = vst [vmem:[%s246 + $0xa8] sm:$0xff] %v3921
      %3975 = vst [vmem:[%s246 + $0xb0] sm:$0xff] %v3924
      %3976 = vst [vmem:[%s246 + $0xb8] sm:$0xff] %v3927
      %3977 = vst [vmem:[%s246 + $0xc0] sm:$0xff] %v3930
      %3978 = vst [vmem:[%s246 + $0xc8] sm:$0xff] %v3933
      %3979 = vst [vmem:[%s246 + $0xd0] sm:$0xff] %v3936
      %3980 = vst [vmem:[%s246 + $0xd8] sm:$0xff] %v3939
      %3981 = vst [vmem:[%s246 + $0xe0] sm:$0xff] %v3942
      %3982 = vst [vmem:[%s246 + $0xe8] sm:$0xff] %v3945
      %3983 = vst [vmem:[%s246 + $0xf0] sm:$0xff] %v3948
      %3984 = vst [vmem:[%s246 + $0xf8] sm:$0xff] %v3951
      %v3985 = vld [vmem:[%s5] sm:$0x1]
      %v3986 = vadd.f32 %v3858, %v3861
      %v3987 = vadd.f32 %v3986, %v3864
      %v3988 = vadd.f32 %v3987, %v3867
      %v3989 = vadd.f32 %v3988, %v3870
      %v3990 = vadd.f32 %v3989, %v3873
      %v3991 = vadd.f32 %v3990, %v3876
      %v3992 = vadd.f32 %v3991, %v3879
      %v3993 = vadd.f32 %v3992, %v3882
      %v3994 = vadd.f32 %v3993, %v3885
      %v3995 = vadd.f32 %v3994, %v3888
      %v3996 = vadd.f32 %v3995, %v3891
      %v3997 = vadd.f32 %v3996, %v3894
      %v3998 = vadd.f32 %v3997, %v3897
      %v3999 = vadd.f32 %v3998, %v3900
      %v4000 = vadd.f32 %v3999, %v3903
      %v4001 = vadd.f32 %v4000, %v3906
      %v4002 = vadd.f32 %v4001, %v3909
      %v4003 = vadd.f32 %v4002, %v3912
      %v4004 = vadd.f32 %v4003, %v3915
      %v4005 = vadd.f32 %v4004, %v3918
      %v4006 = vadd.f32 %v4005, %v3921
      %v4007 = vadd.f32 %v4006, %v3924
      %v4008 = vadd.f32 %v4007, %v3927
      %v4009 = vadd.f32 %v4008, %v3930
      %v4010 = vadd.f32 %v4009, %v3933
      %v4011 = vadd.f32 %v4010, %v3936
      %v4012 = vadd.f32 %v4011, %v3939
      %v4013 = vadd.f32 %v4012, %v3942
      %v4014 = vadd.f32 %v4013, %v3945
      %v4015 = vadd.f32 %v4014, %v3948
      %v4016 = vadd.f32 %v4015, %v3951
      %v4017 = vrot.slane %v4016, 4
      %v4018 = vadd.f32 %v4016, %v4017
      %v4019 = vrot.slane %v4018, 2
      %v4020 = vadd.f32 %v4018, %v4019
      %v4021 = vrot.slane %v4020, 1
      %v4022 = vadd.f32 %v4020, %v4021
      %v4023 = vadd.f32 %v3985, %v4022
      %4024 = vst [vmem:[%s5] sm:$0x1] %v4023
      %v4025 = vld [vmem:[%s6] sm:$0x1]
      %v4026 = vmul.f32 %v3858, %v3858
      %v4027 = vmul.f32 %v3861, %v3861
      %v4028 = vmul.f32 %v3864, %v3864
      %v4029 = vmul.f32 %v3867, %v3867
      %v4030 = vmul.f32 %v3870, %v3870
      %v4031 = vmul.f32 %v3873, %v3873
      %v4032 = vmul.f32 %v3876, %v3876
      %v4033 = vmul.f32 %v3879, %v3879
      %v4034 = vmul.f32 %v3882, %v3882
      %v4035 = vmul.f32 %v3885, %v3885
      %v4036 = vmul.f32 %v3888, %v3888
      %v4037 = vmul.f32 %v3891, %v3891
      %v4038 = vmul.f32 %v3894, %v3894
      %v4039 = vmul.f32 %v3897, %v3897
      %v4040 = vmul.f32 %v3900, %v3900
      %v4041 = vmul.f32 %v3903, %v3903
      %v4042 = vmul.f32 %v3906, %v3906
      %v4043 = vmul.f32 %v3909, %v3909
      %v4044 = vmul.f32 %v3912, %v3912
      %v4045 = vmul.f32 %v3915, %v3915
      %v4046 = vmul.f32 %v3918, %v3918
      %v4047 = vmul.f32 %v3921, %v3921
      %v4048 = vmul.f32 %v3924, %v3924
      %v4049 = vmul.f32 %v3927, %v3927
      %v4050 = vmul.f32 %v3930, %v3930
      %v4051 = vmul.f32 %v3933, %v3933
      %v4052 = vmul.f32 %v3936, %v3936
      %v4053 = vmul.f32 %v3939, %v3939
      %v4054 = vmul.f32 %v3942, %v3942
      %v4055 = vmul.f32 %v3945, %v3945
      %v4056 = vmul.f32 %v3948, %v3948
      %v4057 = vmul.f32 %v3951, %v3951
      %v4058 = vadd.f32 %v4026, %v4027
      %v4059 = vadd.f32 %v4058, %v4028
      %v4060 = vadd.f32 %v4059, %v4029
      %v4061 = vadd.f32 %v4060, %v4030
      %v4062 = vadd.f32 %v4061, %v4031
      %v4063 = vadd.f32 %v4062, %v4032
      %v4064 = vadd.f32 %v4063, %v4033
      %v4065 = vadd.f32 %v4064, %v4034
      %v4066 = vadd.f32 %v4065, %v4035
      %v4067 = vadd.f32 %v4066, %v4036
      %v4068 = vadd.f32 %v4067, %v4037
      %v4069 = vadd.f32 %v4068, %v4038
      %v4070 = vadd.f32 %v4069, %v4039
      %v4071 = vadd.f32 %v4070, %v4040
      %v4072 = vadd.f32 %v4071, %v4041
      %v4073 = vadd.f32 %v4072, %v4042
      %v4074 = vadd.f32 %v4073, %v4043
      %v4075 = vadd.f32 %v4074, %v4044
      %v4076 = vadd.f32 %v4075, %v4045
      %v4077 = vadd.f32 %v4076, %v4046
      %v4078 = vadd.f32 %v4077, %v4047
      %v4079 = vadd.f32 %v4078, %v4048
      %v4080 = vadd.f32 %v4079, %v4049
      %v4081 = vadd.f32 %v4080, %v4050
      %v4082 = vadd.f32 %v4081, %v4051
      %v4083 = vadd.f32 %v4082, %v4052
      %v4084 = vadd.f32 %v4083, %v4053
      %v4085 = vadd.f32 %v4084, %v4054
      %v4086 = vadd.f32 %v4085, %v4055
      %v4087 = vadd.f32 %v4086, %v4056
      %v4088 = vadd.f32 %v4087, %v4057
      %v4089 = vrot.slane %v4088, 4
      %v4090 = vadd.f32 %v4088, %v4089
      %v4091 = vrot.slane %v4090, 2
      %v4092 = vadd.f32 %v4090, %v4091
      %v4093 = vrot.slane %v4092, 1
      %v4094 = vadd.f32 %v4092, %v4093
      %v4095 = vadd.f32 %v4025, %v4094
      %4096 = vst [vmem:[%s6] sm:$0x1] %v4095
      %p4097 = scmp.lt.s32.totalorder %s18, 1
      %s4098 = scalar_select %p4097, %s18, 1
      %s4099 = smul.addr %s4098, 32
      %s4100 = smul.addr %s4099, 8
      %s4101 = scalar_lea.vmem %s4, %s4100
      // Predicated region
      $region41: #{residual_forward.4} parent=35 // pred_check
        %p4102 = pneg %p125
      $region42: #{residual_forward.4} parent=35 // pred_check_branch
        %4104 = sbr.rel (%p4102) target = $region44
      $region43: #{residual_forward.4} parent=35 // pred_region
        _
      $region44: #{residual_forward.4} parent=35 // pred_fallthru
        _
      // Predicated region
      $region45: #{residual_forward.4} parent=35 // pred_check
        %p4105 = pneg %p146
      $region46: #{residual_forward.4} parent=35 // pred_check_branch
        %4107 = sbr.rel (%p4105) target = $region48
      $region47: #{residual_forward.4} parent=35 // pred_region
        _
      $region48: #{residual_forward.4} parent=35 // pred_fallthru
        _
      // Predicated region
      $region49: #{residual_forward.4} parent=35 // pred_check
        %p4108 = pneg %p167
      $region50: #{residual_forward.4} parent=35 // pred_check_branch
        %4110 = sbr.rel (%p4108) target = $region52
      $region51: #{residual_forward.4} parent=35 // pred_region
        _
      $region52: #{residual_forward.4} parent=35 // pred_fallthru
        _
      // Predicated region
      $region53: #{residual_forward.4} parent=35 // pred_check
        %p4111 = pneg %p146
      $region54: #{residual_forward.4} parent=35 // pred_check_branch
        %4113 = sbr.rel (%p4111) target = $region56
      $region55: #{residual_forward.4} parent=35 // pred_region
        _
      $region56: #{residual_forward.4} parent=35 // pred_fallthru
        _
      // Predicated region
      $region57: #{residual_forward.4} parent=35 // pred_check
        %p4114 = pneg %p167
      $region58: #{residual_forward.4} parent=35 // pred_check_branch
        %4116 = sbr.rel (%p4114) target = $region60
      $region59: #{residual_forward.4} parent=35 // pred_region
        _
      $region60: #{residual_forward.4} parent=35 // pred_fallthru
        _
    $region36: #{residual_forward.4} parent=5 // pred_fallthru
      _
    %p4117 = scmp.le.s32.totalorder 2, %s13
    // Predicated region
    $region61: #{residual_forward.4} parent=5 // pred_check
      %p4118 = pneg %p4117
    $region62: #{residual_forward.4} parent=5 // pred_check_branch
      %4120 = sbr.rel (%p4118) target = $region64
    $region63: #{residual_forward.4} parent=5 // pred_region
      %s4121 = ssub.s32 %s13, 2
      // Predicated region
      $region65: #{residual_forward.4} parent=63 // pred_check
        %p4122 = pneg %p131
      $region66: #{residual_forward.4} parent=63 // pred_check_branch
        %4124 = sbr.rel (%p4122) target = $region68
      $region67: #{residual_forward.4} parent=63 // pred_region
        %p4125 = scmp.lt.s32.totalorder %s19, 1
        %s4126 = scalar_select %p4125, %s19, 1
        %s4127 = smul.addr %s4126, 32
        %s4128 = smul.addr %s4127, 8
        %s4129 = scalar_lea.vmem %s4, %s4128
      $region68: #{residual_forward.4} parent=63 // pred_fallthru
        _
    $region64: #{residual_forward.4} parent=5 // pred_fallthru
      _
  $region6: #{residual_forward.4} parent=0 // loop_footer
    %s17 = sadd.s32 1, %s13
  $region7: #{residual_forward.4} parent=0 // loop_footer_branch
    %12 = sbr.rel target = $region3
  $region8: #{residual_forward.4} parent=0 // loop_exit
    _

// kernel: residual_forward.5
$region0: #{residual_forward.5}
  #allocation0 [shape = 'u32[]', space=smem, size = 0x4, offset = 0x4, fixed_abs, tag = 'smem constant byte address 0x4 - core index']
  #allocation1 [shape = 'u32[72,128]{1,0:T(1,128)}', space=vmem, size = 0x9000, scoped, tag = 'internal scratch']
  #allocation2 [shape = 'f32[256,128]{1,0:T(8,128)}', space=vmem, size = 0x20000, scoped, tag = 'scratch operand']
  #allocation3 [shape = 'f32[256,1280]{1,0:T(8,128)}', space=vmem, size = 0x140000, scoped, tag = 'scratch operand']
  %s0 = inlined_call_operand.vmem [shape: f32[2,256,128], index: 0, kind: input, shape index: {}]
  %s1 = inlined_call_operand.vmem [shape: f32[2,256,128], index: 1, kind: input, shape index: {}]
  %s2 = inlined_call_operand.vmem [shape: f32[1,128], index: 2, kind: input, shape index: {}]
  %s3 = inlined_call_operand.vmem [shape: f32[1,128], index: 3, kind: input, shape index: {}]
  %s4 = inlined_call_operand.vmem [shape: f32[1280,128], index: 4, kind: input, shape index: {}]
  %s5 = inlined_call_operand.vmem [shape: f32[2,256,128], index: 5, kind: output, shape index: {}]
  %s6 = sld [smem:[#allocation0]]
  $region53: #{residual_forward.5} parent=0
    _
  %s8 = ssub.s32 1, %s6
  %s9 = scalar_select 0, %s8, %s6
  loop: start=0, step=1, limit=4
  $region2: #{residual_forward.5} parent=0 // loop_pre_header
    _
  $region3: #{residual_forward.5} parent=0 // loop_header
    %s11 = sphi 0, %s15
    %p12 = scmp.ge.s32.totalorder %s11, 4
    %s21 = sphi 0, %s23
    %s24 = sphi 0, %s21
    %s25 = sphi 0, %s24
    %s41 = sphi 0, %s25
    %s47 = sphi 0, %s49
    %s50 = sphi 0, %s47
    %s51 = sphi 0, %s50
    %s67 = sphi 0, %s51
    %s71 = sphi 0, %s71
    %s73 = sphi 0, %s71
    %s74 = sphi 0, %s73
    %s88 = sphi 0, %s74
    %s92 = sphi 0, %s92
    %s94 = sphi 0, %s92
    %s95 = sphi 0, %s94
    %s109 = sphi 0, %s95
    %s113 = sphi 0, %s113
    %s115 = sphi 0, %s113
    %s116 = sphi 0, %s115
    %s130 = sphi 0, %s116
    %s136 = sphi 0, %s138
    %s139 = sphi 0, %s136
    %s140 = sphi 0, %s139
    %s156 = sphi 0, %s140
  $region4: #{residual_forward.5} parent=0 // loop_header_branch
    %14 = sbr.rel (%p12) target = $region8
  $region5: #{residual_forward.5} parent=0 // loop_body
    %s16 = ssub.s32 %s11, 1
    %s17 = ssub.s32 %s11, 2
    %s18 = sadd.s32 %s11, 1
    %s19 = ssub.s32 %s11, %s18
    %p20 = scmp.eq.s32.totalorder %s19, 0
    %s22 = sadd.s32 %s21, 1
    %s23 = scalar_select %p20, %s21, %s22
    %p26 = pneg %p20
    %p27 = scmp.eq.s32.totalorder %s11, 1
    %p28 = por %p26, %p27
    %p29 = scmp.ne.s32.totalorder %s21, %s24
    %p30 = scmp.eq.s32.totalorder %s11, 0
    %p31 = por %p29, %p30
    %p32 = scmp.ne.s32.totalorder %s21, %s24
    %p33 = scmp.eq.s32.totalorder %s16, 1
    %p34 = por %p32, %p33
    %p35 = scmp.ne.s32.totalorder %s24, %s25
    %p36 = scmp.eq.s32.totalorder %s16, 0
    %p37 = por %p35, %p36
    %p38 = scmp.ne.s32.totalorder %s24, %s25
    %p39 = scmp.eq.s32.totalorder %s17, 1
    %p40 = por %p38, %p39
    %p42 = scmp.ne.s32.totalorder %s25, %s41
    %p43 = scmp.eq.s32.totalorder %s17, 0
    %p44 = por %p42, %p43
    %s45 = ssub.s32 %s11, %s18
    %p46 = scmp.eq.s32.totalorder %s45, 0
    %s48 = sadd.s32 %s47, 1
    %s49 = scalar_select %p46, %s47, %s48
    %p52 = pneg %p46
    %p53 = scmp.eq.s32.totalorder %s11, 1
    %p54 = por %p52, %p53
    %p55 = scmp.ne.s32.totalorder %s47, %s50
    %p56 = scmp.eq.s32.totalorder %s11, 0
    %p57 = por %p55, %p56
    %p58 = scmp.ne.s32.totalorder %s47, %s50
    %p59 = scmp.eq.s32.totalorder %s16, 1
    %p60 = por %p58, %p59
    %p61 = scmp.ne.s32.totalorder %s50, %s51
    %p62 = scmp.eq.s32.totalorder %s16, 0
    %p63 = por %p61, %p62
    %p64 = scmp.ne.s32.totalorder %s50, %s51
    %p65 = scmp.eq.s32.totalorder %s17, 1
    %p66 = por %p64, %p65
    %p68 = scmp.ne.s32.totalorder %s51, %s67
    %p69 = scmp.eq.s32.totalorder %s17, 0
    %p70 = por %p68, %p69
    %s72 = sadd.s32 %s71, 1
    %p75 = scmp.eq.s32.totalorder %s11, 1
    %p76 = scmp.ne.s32.totalorder %s71, %s73
    %p77 = scmp.eq.s32.totalorder %s11, 0
    %p78 = por %p76, %p77
    %p79 = scmp.ne.s32.totalorder %s71, %s73
    %p80 = scmp.eq.s32.totalorder %s16, 1
    %p81 = por %p79, %p80
    %p82 = scmp.ne.s32.totalorder %s73, %s74
    %p83 = scmp.eq.s32.totalorder %s16, 0
    %p84 = por %p82, %p83
    %p85 = scmp.ne.s32.totalorder %s73, %s74
    %p86 = scmp.eq.s32.totalorder %s17, 1
    %p87 = por %p85, %p86
    %p89 = scmp.ne.s32.totalorder %s74, %s88
    %p90 = scmp.eq.s32.totalorder %s17, 0
    %p91 = por %p89, %p90
    %s93 = sadd.s32 %s92, 1
    %p96 = scmp.eq.s32.totalorder %s11, 1
    %p97 = scmp.ne.s32.totalorder %s92, %s94
    %p98 = scmp.eq.s32.totalorder %s11, 0
    %p99 = por %p97, %p98
    %p100 = scmp.ne.s32.totalorder %s92, %s94
    %p101 = scmp.eq.s32.totalorder %s16, 1
    %p102 = por %p100, %p101
    %p103 = scmp.ne.s32.totalorder %s94, %s95
    %p104 = scmp.eq.s32.totalorder %s16, 0
    %p105 = por %p103, %p104
    %p106 = scmp.ne.s32.totalorder %s94, %s95
    %p107 = scmp.eq.s32.totalorder %s17, 1
    %p108 = por %p106, %p107
    %p110 = scmp.ne.s32.totalorder %s95, %s109
    %p111 = scmp.eq.s32.totalorder %s17, 0
    %p112 = por %p110, %p111
    %s114 = sadd.s32 %s113, 1
    %p117 = scmp.eq.s32.totalorder %s11, 1
    %p118 = scmp.ne.s32.totalorder %s113, %s115
    %p119 = scmp.eq.s32.totalorder %s11, 0
    %p120 = por %p118, %p119
    %p121 = scmp.ne.s32.totalorder %s113, %s115
    %p122 = scmp.eq.s32.totalorder %s16, 1
    %p123 = por %p121, %p122
    %p124 = scmp.ne.s32.totalorder %s115, %s116
    %p125 = scmp.eq.s32.totalorder %s16, 0
    %p126 = por %p124, %p125
    %p127 = scmp.ne.s32.totalorder %s115, %s116
    %p128 = scmp.eq.s32.totalorder %s17, 1
    %p129 = por %p127, %p128
    %p131 = scmp.ne.s32.totalorder %s116, %s130
    %p132 = scmp.eq.s32.totalorder %s17, 0
    %p133 = por %p131, %p132
    %s134 = ssub.s32 %s11, %s18
    %p135 = scmp.eq.s32.totalorder %s134, 0
    %s137 = sadd.s32 %s136, 1
    %s138 = scalar_select %p135, %s136, %s137
    %p141 = pneg %p135
    %p142 = scmp.eq.s32.totalorder %s11, 1
    %p143 = por %p141, %p142
    %p144 = scmp.ne.s32.totalorder %s136, %s139
    %p145 = scmp.eq.s32.totalorder %s11, 0
    %p146 = por %p144, %p145
    %p147 = scmp.ne.s32.totalorder %s136, %s139
    %p148 = scmp.eq.s32.totalorder %s16, 1
    %p149 = por %p147, %p148
    %p150 = scmp.ne.s32.totalorder %s139, %s140
    %p151 = scmp.eq.s32.totalorder %s16, 0
    %p152 = por %p150, %p151
    %p153 = scmp.ne.s32.totalorder %s139, %s140
    %p154 = scmp.eq.s32.totalorder %s17, 1
    %p155 = por %p153, %p154
    %p157 = scmp.ne.s32.totalorder %s140, %s156
    %p158 = scmp.eq.s32.totalorder %s17, 0
    %p159 = por %p157, %p158
    %p160 = scmp.le.s32.totalorder 1, %s11
    %p161 = scmp.lt.s32.totalorder %s11, 3
    %p162 = pnand %p160, %p161
    %p163 = pneg %p162
    // Predicated region
    $region9: #{residual_forward.5} parent=5 // pred_check
      _
    $region10: #{residual_forward.5} parent=5 // pred_check_branch
      %165 = sbr.rel (%p162) target = $region12
    $region11: #{residual_forward.5} parent=5 // pred_region
      %s166 = ssub.s32 %s11, 1
      // Predicated region
      $region13: #{residual_forward.5} parent=11 // pred_check
        %p167 = pneg %p84
      $region14: #{residual_forward.5} parent=11 // pred_check_branch
        %169 = sbr.rel (%p167) target = $region16
      $region15: #{residual_forward.5} parent=11 // pred_region
        _
      $region16: #{residual_forward.5} parent=11 // pred_fallthru
        _
      // Predicated region
      $region17: #{residual_forward.5} parent=11 // pred_check
        %p170 = pneg %p105
      $region18: #{residual_forward.5} parent=11 // pred_check_branch
        %172 = sbr.rel (%p170) target = $region20
      $region19: #{residual_forward.5} parent=11 // pred_region
        _
      $region20: #{residual_forward.5} parent=11 // pred_fallthru
        _
      // Predicated region
      $region21: #{residual_forward.5} parent=11 // pred_check
        %p173 = pneg %p126
      $region22: #{residual_forward.5} parent=11 // pred_check_branch
        %175 = sbr.rel (%p173) target = $region24
      $region23: #{residual_forward.5} parent=11 // pred_region
        _
      $region24: #{residual_forward.5} parent=11 // pred_fallthru
        _
    $region12: #{residual_forward.5} parent=5 // pred_fallthru
      _
    %p176 = scmp.lt.s32.totalorder %s11, 2
    // Predicated region
    $region25: #{residual_forward.5} parent=5 // pred_check
      %p177 = pneg %p176
    $region26: #{residual_forward.5} parent=5 // pred_check_branch
      %179 = sbr.rel (%p177) target = $region28
    $region27: #{residual_forward.5} parent=5 // pred_region
      // Predicated region
      $region29: #{residual_forward.5} parent=27 // pred_check
        %p180 = pneg %p31
      $region30: #{residual_forward.5} parent=27 // pred_check_branch
        %182 = sbr.rel (%p180) target = $region32
      $region31: #{residual_forward.5} parent=27 // pred_region
        %p183 = scmp.lt.s32.totalorder %s11, 1
        %s184 = scalar_select %p183, %s11, 1
        %s185 = smul.addr %s184, 32
        %s186 = smul.addr %s185, 8
        %s187 = scalar_lea.vmem %s0, %s186
      $region32: #{residual_forward.5} parent=27 // pred_fallthru
        _
      // Predicated region
      $region33: #{residual_forward.5} parent=27 // pred_check
        %p188 = pneg %p57
      $region34: #{residual_forward.5} parent=27 // pred_check_branch
        %190 = sbr.rel (%p188) target = $region36
      $region35: #{residual_forward.5} parent=27 // pred_region
        %p191 = scmp.lt.s32.totalorder %s11, 1
        %s192 = scalar_select %p191, %s11, 1
        %s193 = smul.addr %s192, 32
        %s194 = smul.addr %s193, 8
        %s195 = scalar_lea.vmem %s1, %s194
      $region36: #{residual_forward.5} parent=27 // pred_fallthru
        _
    $region28: #{residual_forward.5} parent=5 // pred_fallthru
      _
    %p196 = scmp.le.s32.totalorder 1, %s11
    %p197 = scmp.lt.s32.totalorder %s11, 3
    %p198 = pnand %p196, %p197
    %p199 = pneg %p198
    // Predicated region
    $region37: #{residual_forward.5} parent=5 // pred_check
      _
    $region38: #{residual_forward.5} parent=5 // pred_check_branch
      %201 = sbr.rel (%p198) target = $region40
    $region39: #{residual_forward.5} parent=5 // pred_region
      %s202 = ssub.s32 %s11, 1
      %p203 = scmp.lt.s32.totalorder %s16, 1
      %s204 = scalar_select %p203, %s16, 1
      %s205 = smul.addr %s204, 32
      %s206 = smul.addr %s205, 8
      %s207 = scalar_lea.vmem %s0, %s206
      %p208 = pneg %p37
      %p209 = pneg %p34
      %p210 = scmp.lt.s32.totalorder %s16, 1
      %s211 = scalar_select %p210, %s16, 1
      %s212 = smul.addr %s211, 32
      %s213 = smul.addr %s212, 8
      %s214 = scalar_lea.vmem %s1, %s213
      %p215 = pneg %p63
      %p216 = pneg %p60
      %p217 = pneg %p84
      %p218 = pneg %p81
      %p219 = pneg %p105
      %p220 = pneg %p102
      %p221 = pneg %p126
      %p222 = pneg %p123
      %p223 = pneg %p152
      %p224 = pneg %p149
      %p225 = scmp.lt.s32.totalorder %s16, 1
      %s226 = scalar_select %p225, %s16, 1
      %s227 = smul.addr %s226, 32
      %s228 = smul.addr %s227, 8
      %s229 = scalar_lea.vmem %s5, %s228
      %p230 = scmp.lt.s32.totalorder %s16, 1
      %s231 = scalar_select %p230, %s16, 1
      %s232 = smul.addr %s231, 32
      %s233 = smul.addr %s232, 8
      %s234 = scalar_lea.vmem %s0, %s233
      %p235 = scmp.lt.s32.totalorder %s16, 1
      %s236 = scalar_select %p235, %s16, 1
      %s237 = smul.addr %s236, 32
      %s238 = smul.addr %s237, 8
      %s239 = scalar_lea.vmem %s1, %s238
      %p240 = scmp.lt.s32.totalorder %s16, 1
      %s241 = scalar_select %p240, %s16, 1
      %s242 = smul.addr %s241, 32
      %s243 = smul.addr %s242, 8
      %s244 = scalar_lea.vmem %s5, %s243
      %v245 = vld [vmem:[%s234] sm:$0xff]
      %v246 = vld [vmem:[%s234 + $0x8] sm:$0xff]
      %v247 = vld [vmem:[%s234 + $0x10] sm:$0xff]
      %v248 = vld [vmem:[%s234 + $0x18] sm:$0xff]
      %v249 = vld [vmem:[%s234 + $0x20] sm:$0xff]
      %v250 = vld [vmem:[%s234 + $0x28] sm:$0xff]
      %v251 = vld [vmem:[%s234 + $0x30] sm:$0xff]
      %v252 = vld [vmem:[%s234 + $0x38] sm:$0xff]
      %v253 = vld [vmem:[%s234 + $0x40] sm:$0xff]
      %v254 = vld [vmem:[%s234 + $0x48] sm:$0xff]
      %v255 = vld [vmem:[%s234 + $0x50] sm:$0xff]
      %v256 = vld [vmem:[%s234 + $0x58] sm:$0xff]
      %v257 = vld [vmem:[%s234 + $0x60] sm:$0xff]
      %v258 = vld [vmem:[%s234 + $0x68] sm:$0xff]
      %v259 = vld [vmem:[%s234 + $0x70] sm:$0xff]
      %v260 = vld [vmem:[%s234 + $0x78] sm:$0xff]
      %v261 = vld [vmem:[%s234 + $0x80] sm:$0xff]
      %v262 = vld [vmem:[%s234 + $0x88] sm:$0xff]
      %v263 = vld [vmem:[%s234 + $0x90] sm:$0xff]
      %v264 = vld [vmem:[%s234 + $0x98] sm:$0xff]
      %v265 = vld [vmem:[%s234 + $0xa0] sm:$0xff]
      %v266 = vld [vmem:[%s234 + $0xa8] sm:$0xff]
      %v267 = vld [vmem:[%s234 + $0xb0] sm:$0xff]
      %v268 = vld [vmem:[%s234 + $0xb8] sm:$0xff]
      %v269 = vld [vmem:[%s234 + $0xc0] sm:$0xff]
      %v270 = vld [vmem:[%s234 + $0xc8] sm:$0xff]
      %v271 = vld [vmem:[%s234 + $0xd0] sm:$0xff]
      %v272 = vld [vmem:[%s234 + $0xd8] sm:$0xff]
      %v273 = vld [vmem:[%s234 + $0xe0] sm:$0xff]
      %v274 = vld [vmem:[%s234 + $0xe8] sm:$0xff]
      %v275 = vld [vmem:[%s234 + $0xf0] sm:$0xff]
      %v276 = vld [vmem:[%s234 + $0xf8] sm:$0xff]
      %v277 = vld [vmem:[%s2] sm:$0x1]
      %v279 = vperm.slane %v277, 0
      %v281 = vmul.f32 %v245, %v279
      %v282 = vmul.f32 %v246, %v279
      %v283 = vmul.f32 %v247, %v279
      %v284 = vmul.f32 %v248, %v279
      %v285 = vmul.f32 %v249, %v279
      %v286 = vmul.f32 %v250, %v279
      %v287 = vmul.f32 %v251, %v279
      %v288 = vmul.f32 %v252, %v279
      %v289 = vmul.f32 %v253, %v279
      %v290 = vmul.f32 %v254, %v279
      %v291 = vmul.f32 %v255, %v279
      %v292 = vmul.f32 %v256, %v279
      %v293 = vmul.f32 %v257, %v279
      %v294 = vmul.f32 %v258, %v279
      %v295 = vmul.f32 %v259, %v279
      %v296 = vmul.f32 %v260, %v279
      %v297 = vmul.f32 %v261, %v279
      %v298 = vmul.f32 %v262, %v279
      %v299 = vmul.f32 %v263, %v279
      %v300 = vmul.f32 %v264, %v279
      %v301 = vmul.f32 %v265, %v279
      %v302 = vmul.f32 %v266, %v279
      %v303 = vmul.f32 %v267, %v279
      %v304 = vmul.f32 %v268, %v279
      %v305 = vmul.f32 %v269, %v279
      %v306 = vmul.f32 %v270, %v279
      %v307 = vmul.f32 %v271, %v279
      %v308 = vmul.f32 %v272, %v279
      %v309 = vmul.f32 %v273, %v279
      %v310 = vmul.f32 %v274, %v279
      %v311 = vmul.f32 %v275, %v279
      %v312 = vmul.f32 %v276, %v279
      %v313 = vld [vmem:[%s3] sm:$0x1]
      %v315 = vperm.slane %v313, 0
      %v317 = vadd.f32 %v281, %v315
      %v318 = vadd.f32 %v282, %v315
      %v319 = vadd.f32 %v283, %v315
      %v320 = vadd.f32 %v284, %v315
      %v321 = vadd.f32 %v285, %v315
      %v322 = vadd.f32 %v286, %v315
      %v323 = vadd.f32 %v287, %v315
      %v324 = vadd.f32 %v288, %v315
      %v325 = vadd.f32 %v289, %v315
      %v326 = vadd.f32 %v290, %v315
      %v327 = vadd.f32 %v291, %v315
      %v328 = vadd.f32 %v292, %v315
      %v329 = vadd.f32 %v293, %v315
      %v330 = vadd.f32 %v294, %v315
      %v331 = vadd.f32 %v295, %v315
      %v332 = vadd.f32 %v296, %v315
      %v333 = vadd.f32 %v297, %v315
      %v334 = vadd.f32 %v298, %v315
      %v335 = vadd.f32 %v299, %v315
      %v336 = vadd.f32 %v300, %v315
      %v337 = vadd.f32 %v301, %v315
      %v338 = vadd.f32 %v302, %v315
      %v339 = vadd.f32 %v303, %v315
      %v340 = vadd.f32 %v304, %v315
      %v341 = vadd.f32 %v305, %v315
      %v342 = vadd.f32 %v306, %v315
      %v343 = vadd.f32 %v307, %v315
      %v344 = vadd.f32 %v308, %v315
      %v345 = vadd.f32 %v309, %v315
      %v346 = vadd.f32 %v310, %v315
      %v347 = vadd.f32 %v311, %v315
      %v348 = vadd.f32 %v312, %v315
      %v349 = vmul.f32 %v317, 0.1
      %v350 = vmul.f32 %v318, 0.1
      %v351 = vmul.f32 %v319, 0.1
      %v352 = vmul.f32 %v320, 0.1
      %v353 = vmul.f32 %v321, 0.1
      %v354 = vmul.f32 %v322, 0.1
      %v355 = vmul.f32 %v323, 0.1
      %v356 = vmul.f32 %v324, 0.1
      %v357 = vmul.f32 %v325, 0.1
      %v358 = vmul.f32 %v326, 0.1
      %v359 = vmul.f32 %v327, 0.1
      %v360 = vmul.f32 %v328, 0.1
      %v361 = vmul.f32 %v329, 0.1
      %v362 = vmul.f32 %v330, 0.1
      %v363 = vmul.f32 %v331, 0.1
      %v364 = vmul.f32 %v332, 0.1
      %v365 = vmul.f32 %v333, 0.1
      %v366 = vmul.f32 %v334, 0.1
      %v367 = vmul.f32 %v335, 0.1
      %v368 = vmul.f32 %v336, 0.1
      %v369 = vmul.f32 %v337, 0.1
      %v370 = vmul.f32 %v338, 0.1
      %v371 = vmul.f32 %v339, 0.1
      %v372 = vmul.f32 %v340, 0.1
      %v373 = vmul.f32 %v341, 0.1
      %v374 = vmul.f32 %v342, 0.1
      %v375 = vmul.f32 %v343, 0.1
      %v376 = vmul.f32 %v344, 0.1
      %v377 = vmul.f32 %v345, 0.1
      %v378 = vmul.f32 %v346, 0.1
      %v379 = vmul.f32 %v347, 0.1
      %v380 = vmul.f32 %v348, 0.1
      %v381 = vmax.f32 %v317, %v349
      %v382 = vmax.f32 %v318, %v350
      %v383 = vmax.f32 %v319, %v351
      %v384 = vmax.f32 %v320, %v352
      %v385 = vmax.f32 %v321, %v353
      %v386 = vmax.f32 %v322, %v354
      %v387 = vmax.f32 %v323, %v355
      %v388 = vmax.f32 %v324, %v356
      %v389 = vmax.f32 %v325, %v357
      %v390 = vmax.f32 %v326, %v358
      %v391 = vmax.f32 %v327, %v359
      %v392 = vmax.f32 %v328, %v360
      %v393 = vmax.f32 %v329, %v361
      %v394 = vmax.f32 %v330, %v362
      %v395 = vmax.f32 %v331, %v363
      %v396 = vmax.f32 %v332, %v364
      %v397 = vmax.f32 %v333, %v365
      %v398 = vmax.f32 %v334, %v366
      %v399 = vmax.f32 %v335, %v367
      %v400 = vmax.f32 %v336, %v368
      %v401 = vmax.f32 %v337, %v369
      %v402 = vmax.f32 %v338, %v370
      %v403 = vmax.f32 %v339, %v371
      %v404 = vmax.f32 %v340, %v372
      %v405 = vmax.f32 %v341, %v373
      %v406 = vmax.f32 %v342, %v374
      %v407 = vmax.f32 %v343, %v375
      %v408 = vmax.f32 %v344, %v376
      %v409 = vmax.f32 %v345, %v377
      %v410 = vmax.f32 %v346, %v378
      %v411 = vmax.f32 %v347, %v379
      %v412 = vmax.f32 %v348, %v380
      %413 = vst [vmem:[#allocation2] sm:$0xff] %v381
      %414 = vst [vmem:[#allocation2 + $0x8] sm:$0xff] %v382
      %415 = vst [vmem:[#allocation2 + $0x10] sm:$0xff] %v383
      %416 = vst [vmem:[#allocation2 + $0x18] sm:$0xff] %v384
      %417 = vst [vmem:[#allocation2 + $0x20] sm:$0xff] %v385
      %418 = vst [vmem:[#allocation2 + $0x28] sm:$0xff] %v386
      %419 = vst [vmem:[#allocation2 + $0x30] sm:$0xff] %v387
      %420 = vst [vmem:[#allocation2 + $0x38] sm:$0xff] %v388
      %421 = vst [vmem:[#allocation2 + $0x40] sm:$0xff] %v389
      %422 = vst [vmem:[#allocation2 + $0x48] sm:$0xff] %v390
      %423 = vst [vmem:[#allocation2 + $0x50] sm:$0xff] %v391
      %424 = vst [vmem:[#allocation2 + $0x58] sm:$0xff] %v392
      %425 = vst [vmem:[#allocation2 + $0x60] sm:$0xff] %v393
      %426 = vst [vmem:[#allocation2 + $0x68] sm:$0xff] %v394
      %427 = vst [vmem:[#allocation2 + $0x70] sm:$0xff] %v395
      %428 = vst [vmem:[#allocation2 + $0x78] sm:$0xff] %v396
      %429 = vst [vmem:[#allocation2 + $0x80] sm:$0xff] %v397
      %430 = vst [vmem:[#allocation2 + $0x88] sm:$0xff] %v398
      %431 = vst [vmem:[#allocation2 + $0x90] sm:$0xff] %v399
      %432 = vst [vmem:[#allocation2 + $0x98] sm:$0xff] %v400
      %433 = vst [vmem:[#allocation2 + $0xa0] sm:$0xff] %v401
      %434 = vst [vmem:[#allocation2 + $0xa8] sm:$0xff] %v402
      %435 = vst [vmem:[#allocation2 + $0xb0] sm:$0xff] %v403
      %436 = vst [vmem:[#allocation2 + $0xb8] sm:$0xff] %v404
      %437 = vst [vmem:[#allocation2 + $0xc0] sm:$0xff] %v405
      %438 = vst [vmem:[#allocation2 + $0xc8] sm:$0xff] %v406
      %439 = vst [vmem:[#allocation2 + $0xd0] sm:$0xff] %v407
      %440 = vst [vmem:[#allocation2 + $0xd8] sm:$0xff] %v408
      %441 = vst [vmem:[#allocation2 + $0xe0] sm:$0xff] %v409
      %442 = vst [vmem:[#allocation2 + $0xe8] sm:$0xff] %v410
      %443 = vst [vmem:[#allocation2 + $0xf0] sm:$0xff] %v411
      %444 = vst [vmem:[#allocation2 + $0xf8] sm:$0xff] %v412
      %v445 = vlaneseq
      %v446 = vshrl.u32 %v445, 7
      %v447 = vadd.s32 %v446, 8
      %v448 = vadd.s32 %v446, 16
      %v449 = vadd.s32 %v446, 24
      %v450 = vadd.s32 %v446, 32
      %v451 = vadd.s32 %v446, 40
      %v452 = vadd.s32 %v446, 48
      %v453 = vadd.s32 %v446, 56
      %v454 = vadd.s32 %v446, 64
      %v455 = vadd.s32 %v446, 72
      %v456 = vadd.s32 %v446, 80
      %v457 = vadd.s32 %v446, 88
      %v458 = vadd.s32 %v446, 96
      %v459 = vadd.s32 %v446, 104
      %v460 = vadd.s32 %v446, 112
      %v461 = vadd.s32 %v446, 120
      %v462 = vadd.s32 %v446, 128
      %v463 = vadd.s32 %v446, 136
      %v464 = vadd.s32 %v446, 144
      %v465 = vadd.s32 %v446, 152
      %v466 = vadd.s32 %v446, 160
      %v467 = vadd.s32 %v446, 168
      %v468 = vadd.s32 %v446, 176
      %v469 = vadd.s32 %v446, 184
      %v470 = vadd.s32 %v446, 192
      %v471 = vadd.s32 %v446, 200
      %v472 = vadd.s32 %v446, 208
      %v473 = vadd.s32 %v446, 216
      %v474 = vadd.s32 %v446, 224
      %v475 = vadd.s32 %v446, 232
      %v476 = vadd.s32 %v446, 240
      %v477 = vadd.s32 %v446, 248
      %v478 = vand.u32 %v446, 15
      %v479 = vand.u32 %v447, 15
      %v480 = vand.u32 %v448, 15
      %v481 = vand.u32 %v449, 15
      %v482 = vand.u32 %v450, 15
      %v483 = vand.u32 %v451, 15
      %v484 = vand.u32 %v452, 15
      %v485 = vand.u32 %v453, 15
      %v486 = vand.u32 %v454, 15
      %v487 = vand.u32 %v455, 15
      %v488 = vand.u32 %v456, 15
      %v489 = vand.u32 %v457, 15
      %v490 = vand.u32 %v458, 15
      %v491 = vand.u32 %v459, 15
      %v492 = vand.u32 %v460, 15
      %v493 = vand.u32 %v461, 15
      %v494 = vand.u32 %v462, 15
      %v495 = vand.u32 %v463, 15
      %v496 = vand.u32 %v464, 15
      %v497 = vand.u32 %v465, 15
      %v498 = vand.u32 %v466, 15
      %v499 = vand.u32 %v467, 15
      %v500 = vand.u32 %v468, 15
      %v501 = vand.u32 %v469, 15
      %v502 = vand.u32 %v470, 15
      %v503 = vand.u32 %v471, 15
      %v504 = vand.u32 %v472, 15
      %v505 = vand.u32 %v473, 15
      %v506 = vand.u32 %v474, 15
      %v507 = vand.u32 %v475, 15
      %v508 = vand.u32 %v476, 15
      %v509 = vand.u32 %v477, 15
      %v510 = vld [vmem:[#allocation2] sm:$0xff]
      %v511 = vld [vmem:[#allocation2 + $0x8] sm:$0xff]
      %v512 = vld [vmem:[#allocation2 + $0x10] sm:$0xff]
      %v513 = vld [vmem:[#allocation2 + $0x18] sm:$0xff]
      %v514 = vld [vmem:[#allocation2 + $0x20] sm:$0xff]
      %v515 = vld [vmem:[#allocation2 + $0x28] sm:$0xff]
      %v516 = vld [vmem:[#allocation2 + $0x30] sm:$0xff]
      %v517 = vld [vmem:[#allocation2 + $0x38] sm:$0xff]
      %v518 = vld [vmem:[#allocation2 + $0x40] sm:$0xff]
      %v519 = vld [vmem:[#allocation2 + $0x48] sm:$0xff]
      %v520 = vld [vmem:[#allocation2 + $0x50] sm:$0xff]
      %v521 = vld [vmem:[#allocation2 + $0x58] sm:$0xff]
      %v522 = vld [vmem:[#allocation2 + $0x60] sm:$0xff]
      %v523 = vld [vmem:[#allocation2 + $0x68] sm:$0xff]
      %v524 = vld [vmem:[#allocation2 + $0x70] sm:$0xff]
      %v525 = vld [vmem:[#allocation2 + $0x78] sm:$0xff]
      %v526 = vld [vmem:[#allocation2 + $0x80] sm:$0xff]
      %v527 = vld [vmem:[#allocation2 + $0x88] sm:$0xff]
      %v528 = vld [vmem:[#allocation2 + $0x90] sm:$0xff]
      %v529 = vld [vmem:[#allocation2 + $0x98] sm:$0xff]
      %v530 = vld [vmem:[#allocation2 + $0xa0] sm:$0xff]
      %v531 = vld [vmem:[#allocation2 + $0xa8] sm:$0xff]
      %v532 = vld [vmem:[#allocation2 + $0xb0] sm:$0xff]
      %v533 = vld [vmem:[#allocation2 + $0xb8] sm:$0xff]
      %v534 = vld [vmem:[#allocation2 + $0xc0] sm:$0xff]
      %v535 = vld [vmem:[#allocation2 + $0xc8] sm:$0xff]
      %v536 = vld [vmem:[#allocation2 + $0xd0] sm:$0xff]
      %v537 = vld [vmem:[#allocation2 + $0xd8] sm:$0xff]
      %v538 = vld [vmem:[#allocation2 + $0xe0] sm:$0xff]
      %v539 = vld [vmem:[#allocation2 + $0xe8] sm:$0xff]
      %v540 = vld [vmem:[#allocation2 + $0xf0] sm:$0xff]
      %v541 = vld [vmem:[#allocation2 + $0xf8] sm:$0xff]
      %v542 = vrot.slane %v510, 7
      %v543 = vrot.slane %v511, 7
      %v544 = vrot.slane %v512, 7
      %v545 = vrot.slane %v513, 7
      %v546 = vrot.slane %v514, 7
      %v547 = vrot.slane %v515, 7
      %v548 = vrot.slane %v516, 7
      %v549 = vrot.slane %v517, 7
      %v550 = vrot.slane %v518, 7
      %v551 = vrot.slane %v519, 7
      %v552 = vrot.slane %v520, 7
      %v553 = vrot.slane %v521, 7
      %v554 = vrot.slane %v522, 7
      %v555 = vrot.slane %v523, 7
      %v556 = vrot.slane %v524, 7
      %v557 = vrot.slane %v525, 7
      %v558 = vrot.slane %v526, 7
      %v559 = vrot.slane %v527, 7
      %v560 = vrot.slane %v528, 7
      %v561 = vrot.slane %v529, 7
      %v562 = vrot.slane %v530, 7
      %v563 = vrot.slane %v531, 7
      %v564 = vrot.slane %v532, 7
      %v565 = vrot.slane %v533, 7
      %v566 = vrot.slane %v534, 7
      %v567 = vrot.slane %v535, 7
      %v568 = vrot.slane %v536, 7
      %v569 = vrot.slane %v537, 7
      %v570 = vrot.slane %v538, 7
      %v571 = vrot.slane %v539, 7
      %v572 = vrot.slane %v540, 7
      %v573 = vrot.slane %v541, 7
      %vm574 = vcmp.lt.s32.totalorder %v446, 1
      %v575 = vsel %vm574, %v572, %v573
      %v576 = vsel %vm574, %v571, %v572
      %v577 = vsel %vm574, %v570, %v571
      %v578 = vsel %vm574, %v569, %v570
      %v579 = vsel %vm574, %v568, %v569
      %v580 = vsel %vm574, %v567, %v568
      %v581 = vsel %vm574, %v566, %v567
      %v582 = vsel %vm574, %v565, %v566
      %v583 = vsel %vm574, %v564, %v565
      %v584 = vsel %vm574, %v563, %v564
      %v585 = vsel %vm574, %v562, %v563
      %v586 = vsel %vm574, %v561, %v562
      %v587 = vsel %vm574, %v560, %v561
      %v588 = vsel %vm574, %v559, %v560
      %v589 = vsel %vm574, %v558, %v559
      %v590 = vsel %vm574, %v557, %v558
      %v591 = vsel %vm574, %v556, %v557
      %v592 = vsel %vm574, %v555, %v556
      %v593 = vsel %vm574, %v554, %v555
      %v594 = vsel %vm574, %v553, %v554
      %v595 = vsel %vm574, %v552, %v553
      %v596 = vsel %vm574, %v551, %v552
      %v597 = vsel %vm574, %v550, %v551
      %v598 = vsel %vm574, %v549, %v550
      %v599 = vsel %vm574, %v548, %v549
      %v600 = vsel %vm574, %v547, %v548
      %v601 = vsel %vm574, %v546, %v547
      %v602 = vsel %vm574, %v545, %v546
      %v603 = vsel %vm574, %v544, %v545
      %v604 = vsel %vm574, %v543, %v544
      %v605 = vsel %vm574, %v542, %v543
      %v606 = vsel %vm574, %v573, %v542
      %vm607 = vcmp.ge.s32.totalorder %v446, 16
      %vm608 = vcmp.ge.s32.totalorder %v447, 16
      %vm609 = vcmp.ge.s32.totalorder %v448, 16
      %vm610 = vcmp.ge.s32.totalorder %v449, 16
      %vm611 = vcmp.ge.s32.totalorder %v450, 16
      %vm612 = vcmp.ge.s32.totalorder %v451, 16
      %vm613 = vcmp.ge.s32.totalorder %v452, 16
      %vm614 = vcmp.ge.s32.totalorder %v453, 16
      %vm615 = vcmp.ge.s32.totalorder %v454, 16
      %vm616 = vcmp.ge.s32.totalorder %v455, 16
      %vm617 = vcmp.ge.s32.totalorder %v456, 16
      %vm618 = vcmp.ge.s32.totalorder %v457, 16
      %vm619 = vcmp.ge.s32.totalorder %v458, 16
      %vm620 = vcmp.ge.s32.totalorder %v459, 16
      %vm621 = vcmp.ge.s32.totalorder %v460, 16
      %vm622 = vcmp.ge.s32.totalorder %v461, 16
      %vm623 = vcmp.ge.s32.totalorder %v462, 16
      %vm624 = vcmp.ge.s32.totalorder %v463, 16
      %vm625 = vcmp.ge.s32.totalorder %v464, 16
      %vm626 = vcmp.ge.s32.totalorder %v465, 16
      %vm627 = vcmp.ge.s32.totalorder %v466, 16
      %vm628 = vcmp.ge.s32.totalorder %v467, 16
      %vm629 = vcmp.ge.s32.totalorder %v468, 16
      %vm630 = vcmp.ge.s32.totalorder %v469, 16
      %vm631 = vcmp.ge.s32.totalorder %v470, 16
      %vm632 = vcmp.ge.s32.totalorder %v471, 16
      %vm633 = vcmp.ge.s32.totalorder %v472, 16
      %vm634 = vcmp.ge.s32.totalorder %v473, 16
      %vm635 = vcmp.ge.s32.totalorder %v474, 16
      %vm636 = vcmp.ge.s32.totalorder %v475, 16
      %vm637 = vcmp.ge.s32.totalorder %v476, 16
      %vm638 = vcmp.ge.s32.totalorder %v477, 16
      %vm639 = vcmp.ge.s32.totalorder %v478, 1
      %vm640 = vcmp.ge.s32.totalorder %v479, 1
      %vm641 = vcmp.ge.s32.totalorder %v480, 1
      %vm642 = vcmp.ge.s32.totalorder %v481, 1
      %vm643 = vcmp.ge.s32.totalorder %v482, 1
      %vm644 = vcmp.ge.s32.totalorder %v483, 1
      %vm645 = vcmp.ge.s32.totalorder %v484, 1
      %vm646 = vcmp.ge.s32.totalorder %v485, 1
      %vm647 = vcmp.ge.s32.totalorder %v486, 1
      %vm648 = vcmp.ge.s32.totalorder %v487, 1
      %vm649 = vcmp.ge.s32.totalorder %v488, 1
      %vm650 = vcmp.ge.s32.totalorder %v489, 1
      %vm651 = vcmp.ge.s32.totalorder %v490, 1
      %vm652 = vcmp.ge.s32.totalorder %v491, 1
      %vm653 = vcmp.ge.s32.totalorder %v492, 1
      %vm654 = vcmp.ge.s32.totalorder %v493, 1
      %vm655 = vcmp.ge.s32.totalorder %v494, 1
      %vm656 = vcmp.ge.s32.totalorder %v495, 1
      %vm657 = vcmp.ge.s32.totalorder %v496, 1
      %vm658 = vcmp.ge.s32.totalorder %v497, 1
      %vm659 = vcmp.ge.s32.totalorder %v498, 1
      %vm660 = vcmp.ge.s32.totalorder %v499, 1
      %vm661 = vcmp.ge.s32.totalorder %v500, 1
      %vm662 = vcmp.ge.s32.totalorder %v501, 1
      %vm663 = vcmp.ge.s32.totalorder %v502, 1
      %vm664 = vcmp.ge.s32.totalorder %v503, 1
      %vm665 = vcmp.ge.s32.totalorder %v504, 1
      %vm666 = vcmp.ge.s32.totalorder %v505, 1
      %vm667 = vcmp.ge.s32.totalorder %v506, 1
      %vm668 = vcmp.ge.s32.totalorder %v507, 1
      %vm669 = vcmp.ge.s32.totalorder %v508, 1
      %vm670 = vcmp.ge.s32.totalorder %v509, 1
      %vm671 = vmand %vm607, %vm639
      %vm672 = vmand %vm608, %vm640
      %vm673 = vmand %vm609, %vm641
      %vm674 = vmand %vm610, %vm642
      %vm675 = vmand %vm611, %vm643
      %vm676 = vmand %vm612, %vm644
      %vm677 = vmand %vm613, %vm645
      %vm678 = vmand %vm614, %vm646
      %vm679 = vmand %vm615, %vm647
      %vm680 = vmand %vm616, %vm648
      %vm681 = vmand %vm617, %vm649
      %vm682 = vmand %vm618, %vm650
      %vm683 = vmand %vm619, %vm651
      %vm684 = vmand %vm620, %vm652
      %vm685 = vmand %vm621, %vm653
      %vm686 = vmand %vm622, %vm654
      %vm687 = vmand %vm623, %vm655
      %vm688 = vmand %vm624, %vm656
      %vm689 = vmand %vm625, %vm657
      %vm690 = vmand %vm626, %vm658
      %vm691 = vmand %vm627, %vm659
      %vm692 = vmand %vm628, %vm660
      %vm693 = vmand %vm629, %vm661
      %vm694 = vmand %vm630, %vm662
      %vm695 = vmand %vm631, %vm663
      %vm696 = vmand %vm632, %vm664
      %vm697 = vmand %vm633, %vm665
      %vm698 = vmand %vm634, %vm666
      %vm699 = vmand %vm635, %vm667
      %vm700 = vmand %vm636, %vm668
      %vm701 = vmand %vm637, %vm669
      %vm702 = vmand %vm638, %vm670
      %v703 = vsel %vm671, 1, 0
      %v704 = vsel %vm672, 1, 0
      %v705 = vsel %vm673, 1, 0
      %v706 = vsel %vm674, 1, 0
      %v707 = vsel %vm675, 1, 0
      %v708 = vsel %vm676, 1, 0
      %v709 = vsel %vm677, 1, 0
      %v710 = vsel %vm678, 1, 0
      %v711 = vsel %vm679, 1, 0
      %v712 = vsel %vm680, 1, 0
      %v713 = vsel %vm681, 1, 0
      %v714 = vsel %vm682, 1, 0
      %v715 = vsel %vm683, 1, 0
      %v716 = vsel %vm684, 1, 0
      %v717 = vsel %vm685, 1, 0
      %v718 = vsel %vm686, 1, 0
      %v719 = vsel %vm687, 1, 0
      %v720 = vsel %vm688, 1, 0
      %v721 = vsel %vm689, 1, 0
      %v722 = vsel %vm690, 1, 0
      %v723 = vsel %vm691, 1, 0
      %v724 = vsel %vm692, 1, 0
      %v725 = vsel %vm693, 1, 0
      %v726 = vsel %vm694, 1, 0
      %v727 = vsel %vm695, 1, 0
      %v728 = vsel %vm696, 1, 0
      %v729 = vsel %vm697, 1, 0
      %v730 = vsel %vm698, 1, 0
      %v731 = vsel %vm699, 1, 0
      %v732 = vsel %vm700, 1, 0
      %v733 = vsel %vm701, 1, 0
      %v734 = vsel %vm702, 1, 0
      %vm735 = vcmp.eq.s32.totalorder %v703, 1
      %vm736 = vcmp.eq.s32.totalorder %v704, 1
      %vm737 = vcmp.eq.s32.totalorder %v705, 1
      %vm738 = vcmp.eq.s32.totalorder %v706, 1
      %vm739 = vcmp.eq.s32.totalorder %v707, 1
      %vm740 = vcmp.eq.s32.totalorder %v708, 1
      %vm741 = vcmp.eq.s32.totalorder %v709, 1
      %vm742 = vcmp.eq.s32.totalorder %v710, 1
      %vm743 = vcmp.eq.s32.totalorder %v711, 1
      %vm744 = vcmp.eq.s32.totalorder %v712, 1
      %vm745 = vcmp.eq.s32.totalorder %v713, 1
      %vm746 = vcmp.eq.s32.totalorder %v714, 1
      %vm747 = vcmp.eq.s32.totalorder %v715, 1
      %vm748 = vcmp.eq.s32.totalorder %v716, 1
      %vm749 = vcmp.eq.s32.totalorder %v717, 1
      %vm750 = vcmp.eq.s32.totalorder %v718, 1
      %vm751 = vcmp.eq.s32.totalorder %v719, 1
      %vm752 = vcmp.eq.s32.totalorder %v720, 1
      %vm753 = vcmp.eq.s32.totalorder %v721, 1
      %vm754 = vcmp.eq.s32.totalorder %v722, 1
      %vm755 = vcmp.eq.s32.totalorder %v723, 1
      %vm756 = vcmp.eq.s32.totalorder %v724, 1
      %vm757 = vcmp.eq.s32.totalorder %v725, 1
      %vm758 = vcmp.eq.s32.totalorder %v726, 1
      %vm759 = vcmp.eq.s32.totalorder %v727, 1
      %vm760 = vcmp.eq.s32.totalorder %v728, 1
      %vm761 = vcmp.eq.s32.totalorder %v729, 1
      %vm762 = vcmp.eq.s32.totalorder %v730, 1
      %vm763 = vcmp.eq.s32.totalorder %v731, 1
      %vm764 = vcmp.eq.s32.totalorder %v732, 1
      %vm765 = vcmp.eq.s32.totalorder %v733, 1
      %vm766 = vcmp.eq.s32.totalorder %v734, 1
      %v767 = vsel %vm735, %v576, 0.0
      %v768 = vsel %vm736, %v575, 0.0
      %v769 = vsel %vm737, %v606, 0.0
      %v770 = vsel %vm738, %v605, 0.0
      %v771 = vsel %vm739, %v604, 0.0
      %v772 = vsel %vm740, %v603, 0.0
      %v773 = vsel %vm741, %v602, 0.0
      %v774 = vsel %vm742, %v601, 0.0
      %v775 = vsel %vm743, %v600, 0.0
      %v776 = vsel %vm744, %v599, 0.0
      %v777 = vsel %vm745, %v598, 0.0
      %v778 = vsel %vm746, %v597, 0.0
      %v779 = vsel %vm747, %v596, 0.0
      %v780 = vsel %vm748, %v595, 0.0
      %v781 = vsel %vm749, %v594, 0.0
      %v782 = vsel %vm750, %v593, 0.0
      %v783 = vsel %vm751, %v592, 0.0
      %v784 = vsel %vm752, %v591, 0.0
      %v785 = vsel %vm753, %v590, 0.0
      %v786 = vsel %vm754, %v589, 0.0
      %v787 = vsel %vm755, %v588, 0.0
      %v788 = vsel %vm756, %v587, 0.0
      %v789 = vsel %vm757, %v586, 0.0
      %v790 = vsel %vm758, %v585, 0.0
      %v791 = vsel %vm759, %v584, 0.0
      %v792 = vsel %vm760, %v583, 0.0
      %v793 = vsel %vm761, %v582, 0.0
      %v794 = vsel %vm762, %v581, 0.0
      %v795 = vsel %vm763, %v580, 0.0
      %v796 = vsel %vm764, %v579, 0.0
      %v797 = vsel %vm765, %v578, 0.0
      %v798 = vsel %vm766, %v577, 0.0
      %799 = vst [vmem:[#allocation3] sm:$0xff] %v767
      %800 = vst [vmem:[#allocation3 + $0x50] sm:$0xff] %v768
      %801 = vst [vmem:[#allocation3 + $0xa0] sm:$0xff] %v769
      %802 = vst [vmem:[#allocation3 + $0xf0] sm:$0xff] %v770
      %803 = vst [vmem:[#allocation3 + $0x140] sm:$0xff] %v771
      %804 = vst [vmem:[#allocation3 + $0x190] sm:$0xff] %v772
      %805 = vst [vmem:[#allocation3 + $0x1e0] sm:$0xff] %v773
      %806 = vst [vmem:[#allocation3 + $0x230] sm:$0xff] %v774
      %807 = vst [vmem:[#allocation3 + $0x280] sm:$0xff] %v775
      %808 = vst [vmem:[#allocation3 + $0x2d0] sm:$0xff] %v776
      %809 = vst [vmem:[#allocation3 + $0x320] sm:$0xff] %v777
      %810 = vst [vmem:[#allocation3 + $0x370] sm:$0xff] %v778
      %811 = vst [vmem:[#allocation3 + $0x3c0] sm:$0xff] %v779
      %812 = vst [vmem:[#allocation3 + $0x410] sm:$0xff] %v780
      %813 = vst [vmem:[#allocation3 + $0x460] sm:$0xff] %v781
      %814 = vst [vmem:[#allocation3 + $0x4b0] sm:$0xff] %v782
      %815 = vst [vmem:[#allocation3 + $0x500] sm:$0xff] %v783
      %816 = vst [vmem:[#allocation3 + $0x550] sm:$0xff] %v784
      %817 = vst [vmem:[#allocation3 + $0x5a0] sm:$0xff] %v785
      %818 = vst [vmem:[#allocation3 + $0x5f0] sm:$0xff] %v786
      %819 = vst [vmem:[#allocation3 + $0x640] sm:$0xff] %v787
      %820 = vst [vmem:[#allocation3 + $0x690] sm:$0xff] %v788
      %821 = vst [vmem:[#allocation3 + $0x6e0] sm:$0xff] %v789
      %822 = vst [vmem:[#allocation3 + $0x730] sm:$0xff] %v790
      %823 = vst [vmem:[#allocation3 + $0x780] sm:$0xff] %v791
      %824 = vst [vmem:[#allocation3 + $0x7d0] sm:$0xff] %v792
      %825 = vst [vmem:[#allocation3 + $0x820] sm:$0xff] %v793
      %826 = vst [vmem:[#allocation3 + $0x870] sm:$0xff] %v794
      %827 = vst [vmem:[#allocation3 + $0x8c0] sm:$0xff] %v795
      %828 = vst [vmem:[#allocation3 + $0x910] sm:$0xff] %v796
      %829 = vst [vmem:[#allocation3 + $0x960] sm:$0xff] %v797
      %830 = vst [vmem:[#allocation3 + $0x9b0] sm:$0xff] %v798
      %v831 = vld [vmem:[#allocation2] sm:$0xff]
      %v832 = vld [vmem:[#allocation2 + $0x8] sm:$0xff]
      %v833 = vld [vmem:[#allocation2 + $0x10] sm:$0xff]
      %v834 = vld [vmem:[#allocation2 + $0x18] sm:$0xff]
      %v835 = vld [vmem:[#allocation2 + $0x20] sm:$0xff]
      %v836 = vld [vmem:[#allocation2 + $0x28] sm:$0xff]
      %v837 = vld [vmem:[#allocation2 + $0x30] sm:$0xff]
      %v838 = vld [vmem:[#allocation2 + $0x38] sm:$0xff]
      %v839 = vld [vmem:[#allocation2 + $0x40] sm:$0xff]
      %v840 = vld [vmem:[#allocation2 + $0x48] sm:$0xff]
      %v841 = vld [vmem:[#allocation2 + $0x50] sm:$0xff]
      %v842 = vld [vmem:[#allocation2 + $0x58] sm:$0xff]
      %v843 = vld [vmem:[#allocation2 + $0x60] sm:$0xff]
      %v844 = vld [vmem:[#allocation2 + $0x68] sm:$0xff]
      %v845 = vld [vmem:[#allocation2 + $0x70] sm:$0xff]
      %v846 = vld [vmem:[#allocation2 + $0x78] sm:$0xff]
      %v847 = vld [vmem:[#allocation2 + $0x80] sm:$0xff]
      %v848 = vld [vmem:[#allocation2 + $0x88] sm:$0xff]
      %v849 = vld [vmem:[#allocation2 + $0x90] sm:$0xff]
      %v850 = vld [vmem:[#allocation2 + $0x98] sm:$0xff]
      %v851 = vld [vmem:[#allocation2 + $0xa0] sm:$0xff]
      %v852 = vld [vmem:[#allocation2 + $0xa8] sm:$0xff]
      %v853 = vld [vmem:[#allocation2 + $0xb0] sm:$0xff]
      %v854 = vld [vmem:[#allocation2 + $0xb8] sm:$0xff]
      %v855 = vld [vmem:[#allocation2 + $0xc0] sm:$0xff]
      %v856 = vld [vmem:[#allocation2 + $0xc8] sm:$0xff]
      %v857 = vld [vmem:[#allocation2 + $0xd0] sm:$0xff]
      %v858 = vld [vmem:[#allocation2 + $0xd8] sm:$0xff]
      %v859 = vld [vmem:[#allocation2 + $0xe0] sm:$0xff]
      %v860 = vld [vmem:[#allocation2 + $0xe8] sm:$0xff]
      %v861 = vld [vmem:[#allocation2 + $0xf0] sm:$0xff]
      %v862 = vld [vmem:[#allocation2 + $0xf8] sm:$0xff]
      %v863 = vsel %vm607, 1, 0
      %v864 = vsel %vm608, 1, 0
      %v865 = vsel %vm609, 1, 0
      %v866 = vsel %vm610, 1, 0
      %v867 = vsel %vm611, 1, 0
      %v868 = vsel %vm612, 1, 0
      %v869 = vsel %vm613, 1, 0
      %v870 = vsel %vm614, 1, 0
      %v871 = vsel %vm615, 1, 0
      %v872 = vsel %vm616, 1, 0
      %v873 = vsel %vm617, 1, 0
      %v874 = vsel %vm618, 1, 0
      %v875 = vsel %vm619, 1, 0
      %v876 = vsel %vm620, 1, 0
      %v877 = vsel %vm621, 1, 0
      %v878 = vsel %vm622, 1, 0
      %v879 = vsel %vm623, 1, 0
      %v880 = vsel %vm624, 1, 0
      %v881 = vsel %vm625, 1, 0
      %v882 = vsel %vm626, 1, 0
      %v883 = vsel %vm627, 1, 0
      %v884 = vsel %vm628, 1, 0
      %v885 = vsel %vm629, 1, 0
      %v886 = vsel %vm630, 1, 0
      %v887 = vsel %vm631, 1, 0
      %v888 = vsel %vm632, 1, 0
      %v889 = vsel %vm633, 1, 0
      %v890 = vsel %vm634, 1, 0
      %v891 = vsel %vm635, 1, 0
      %v892 = vsel %vm636, 1, 0
      %v893 = vsel %vm637, 1, 0
      %v894 = vsel %vm638, 1, 0
      %vm895 = vcmp.eq.s32.totalorder %v863, 1
      %vm896 = vcmp.eq.s32.totalorder %v864, 1
      %vm897 = vcmp.eq.s32.totalorder %v865, 1
      %vm898 = vcmp.eq.s32.totalorder %v866, 1
      %vm899 = vcmp.eq.s32.totalorder %v867, 1
      %vm900 = vcmp.eq.s32.totalorder %v868, 1
      %vm901 = vcmp.eq.s32.totalorder %v869, 1
      %vm902 = vcmp.eq.s32.totalorder %v870, 1
      %vm903 = vcmp.eq.s32.totalorder %v871, 1
      %vm904 = vcmp.eq.s32.totalorder %v872, 1
      %vm905 = vcmp.eq.s32.totalorder %v873, 1
      %vm906 = vcmp.eq.s32.totalorder %v874, 1
      %vm907 = vcmp.eq.s32.totalorder %v875, 1
      %vm908 = vcmp.eq.s32.totalorder %v876, 1
      %vm909 = vcmp.eq.s32.totalorder %v877, 1
      %vm910 = vcmp.eq.s32.totalorder %v878, 1
      %vm911 = vcmp.eq.s32.totalorder %v879, 1
      %vm912 = vcmp.eq.s32.totalorder %v880, 1
      %vm913 = vcmp.eq.s32.totalorder %v881, 1
      %vm914 = vcmp.eq.s32.totalorder %v882, 1
      %vm915 = vcmp.eq.s32.totalorder %v883, 1
      %vm916 = vcmp.eq.s32.totalorder %v884, 1
      %vm917 = vcmp.eq.s32.totalorder %v885, 1
      %vm918 = vcmp.eq.s32.totalorder %v886, 1
      %vm919 = vcmp.eq.s32.totalorder %v887, 1
      %vm920 = vcmp.eq.s32.totalorder %v888, 1
      %vm921 = vcmp.eq.s32.totalorder %v889, 1
      %vm922 = vcmp.eq.s32.totalorder %v890, 1
      %vm923 = vcmp.eq.s32.totalorder %v891, 1
      %vm924 = vcmp.eq.s32.totalorder %v892, 1
      %vm925 = vcmp.eq.s32.totalorder %v893, 1
      %vm926 = vcmp.eq.s32.totalorder %v894, 1
      %v927 = vsel %vm895, %v861, 0.0
      %v928 = vsel %vm896, %v862, 0.0
      %v929 = vsel %vm897, %v831, 0.0
      %v930 = vsel %vm898, %v832, 0.0
      %v931 = vsel %vm899, %v833, 0.0
      %v932 = vsel %vm900, %v834, 0.0
      %v933 = vsel %vm901, %v835, 0.0
      %v934 = vsel %vm902, %v836, 0.0
      %v935 = vsel %vm903, %v837, 0.0
      %v936 = vsel %vm904, %v838, 0.0
      %v937 = vsel %vm905, %v839, 0.0
      %v938 = vsel %vm906, %v840, 0.0
      %v939 = vsel %vm907, %v841, 0.0
      %v940 = vsel %vm908, %v842, 0.0
      %v941 = vsel %vm909, %v843, 0.0
      %v942 = vsel %vm910, %v844, 0.0
      %v943 = vsel %vm911, %v845, 0.0
      %v944 = vsel %vm912, %v846, 0.0
      %v945 = vsel %vm913, %v847, 0.0
      %v946 = vsel %vm914, %v848, 0.0
      %v947 = vsel %vm915, %v849, 0.0
      %v948 = vsel %vm916, %v850, 0.0
      %v949 = vsel %vm917, %v851, 0.0
      %v950 = vsel %vm918, %v852, 0.0
      %v951 = vsel %vm919, %v853, 0.0
      %v952 = vsel %vm920, %v854, 0.0
      %v953 = vsel %vm921, %v855, 0.0
      %v954 = vsel %vm922, %v856, 0.0
      %v955 = vsel %vm923, %v857, 0.0
      %v956 = vsel %vm924, %v858, 0.0
      %v957 = vsel %vm925, %v859, 0.0
      %v958 = vsel %vm926, %v860, 0.0
      %959 = vst [vmem:[#allocation3 + $0x8] sm:$0xff] %v927
      %960 = vst [vmem:[#allocation3 + $0x58] sm:$0xff] %v928
      %961 = vst [vmem:[#allocation3 + $0xa8] sm:$0xff] %v929
      %962 = vst [vmem:[#allocation3 + $0xf8] sm:$0xff] %v930
      %963 = vst [vmem:[#allocation3 + $0x148] sm:$0xff] %v931
      %964 = vst [vmem:[#allocation3 + $0x198] sm:$0xff] %v932
      %965 = vst [vmem:[#allocation3 + $0x1e8] sm:$0xff] %v933
      %966 = vst [vmem:[#allocation3 + $0x238] sm:$0xff] %v934
      %967 = vst [vmem:[#allocation3 + $0x288] sm:$0xff] %v935
      %968 = vst [vmem:[#allocation3 + $0x2d8] sm:$0xff] %v936
      %969 = vst [vmem:[#allocation3 + $0x328] sm:$0xff] %v937
      %970 = vst [vmem:[#allocation3 + $0x378] sm:$0xff] %v938
      %971 = vst [vmem:[#allocation3 + $0x3c8] sm:$0xff] %v939
      %972 = vst [vmem:[#allocation3 + $0x418] sm:$0xff] %v940
      %973 = vst [vmem:[#allocation3 + $0x468] sm:$0xff] %v941
      %974 = vst [vmem:[#allocation3 + $0x4b8] sm:$0xff] %v942
      %975 = vst [vmem:[#allocation3 + $0x508] sm:$0xff] %v943
      %976 = vst [vmem:[#allocation3 + $0x558] sm:$0xff] %v944
      %977 = vst [vmem:[#allocation3 + $0x5a8] sm:$0xff] %v945
      %978 = vst [vmem:[#allocation3 + $0x5f8] sm:$0xff] %v946
      %979 = vst [vmem:[#allocation3 + $0x648] sm:$0xff] %v947
      %980 = vst [vmem:[#allocation3 + $0x698] sm:$0xff] %v948
      %981 = vst [vmem:[#allocation3 + $0x6e8] sm:$0xff] %v949
      %982 = vst [vmem:[#allocation3 + $0x738] sm:$0xff] %v950
      %983 = vst [vmem:[#allocation3 + $0x788] sm:$0xff] %v951
      %984 = vst [vmem:[#allocation3 + $0x7d8] sm:$0xff] %v952
      %985 = vst [vmem:[#allocation3 + $0x828] sm:$0xff] %v953
      %986 = vst [vmem:[#allocation3 + $0x878] sm:$0xff] %v954
      %987 = vst [vmem:[#allocation3 + $0x8c8] sm:$0xff] %v955
      %988 = vst [vmem:[#allocation3 + $0x918] sm:$0xff] %v956
      %989 = vst [vmem:[#allocation3 + $0x968] sm:$0xff] %v957
      %990 = vst [vmem:[#allocation3 + $0x9b8] sm:$0xff] %v958
      %v991 = vld [vmem:[#allocation2] sm:$0xff]
      %v992 = vld [vmem:[#allocation2 + $0x8] sm:$0xff]
      %v993 = vld [vmem:[#allocation2 + $0x10] sm:$0xff]
      %v994 = vld [vmem:[#allocation2 + $0x18] sm:$0xff]
      %v995 = vld [vmem:[#allocation2 + $0x20] sm:$0xff]
      %v996 = vld [vmem:[#allocation2 + $0x28] sm:$0xff]
      %v997 = vld [vmem:[#allocation2 + $0x30] sm:$0xff]
      %v998 = vld [vmem:[#allocation2 + $0x38] sm:$0xff]
      %v999 = vld [vmem:[#allocation2 + $0x40] sm:$0xff]
      %v1000 = vld [vmem:[#allocation2 + $0x48] sm:$0xff]
      %v1001 = vld [vmem:[#allocation2 + $0x50] sm:$0xff]
      %v1002 = vld [vmem:[#allocation2 + $0x58] sm:$0xff]
      %v1003 = vld [vmem:[#allocation2 + $0x60] sm:$0xff]
      %v1004 = vld [vmem:[#allocation2 + $0x68] sm:$0xff]
      %v1005 = vld [vmem:[#allocation2 + $0x70] sm:$0xff]
      %v1006 = vld [vmem:[#allocation2 + $0x78] sm:$0xff]
      %v1007 = vld [vmem:[#allocation2 + $0x80] sm:$0xff]
      %v1008 = vld [vmem:[#allocation2 + $0x88] sm:$0xff]
      %v1009 = vld [vmem:[#allocation2 + $0x90] sm:$0xff]
      %v1010 = vld [vmem:[#allocation2 + $0x98] sm:$0xff]
      %v1011 = vld [vmem:[#allocation2 + $0xa0] sm:$0xff]
      %v1012 = vld [vmem:[#allocation2 + $0xa8] sm:$0xff]
      %v1013 = vld [vmem:[#allocation2 + $0xb0] sm:$0xff]
      %v1014 = vld [vmem:[#allocation2 + $0xb8] sm:$0xff]
      %v1015 = vld [vmem:[#allocation2 + $0xc0] sm:$0xff]
      %v1016 = vld [vmem:[#allocation2 + $0xc8] sm:$0xff]
      %v1017 = vld [vmem:[#allocation2 + $0xd0] sm:$0xff]
      %v1018 = vld [vmem:[#allocation2 + $0xd8] sm:$0xff]
      %v1019 = vld [vmem:[#allocation2 + $0xe0] sm:$0xff]
      %v1020 = vld [vmem:[#allocation2 + $0xe8] sm:$0xff]
      %v1021 = vld [vmem:[#allocation2 + $0xf0] sm:$0xff]
      %v1022 = vld [vmem:[#allocation2 + $0xf8] sm:$0xff]
      %v1023 = vrot.slane %v991, 1
      %v1024 = vrot.slane %v992, 1
      %v1025 = vrot.slane %v993, 1
      %v1026 = vrot.slane %v994, 1
      %v1027 = vrot.slane %v995, 1
      %v1028 = vrot.slane %v996, 1
      %v1029 = vrot.slane %v997, 1
      %v1030 = vrot.slane %v998, 1
      %v1031 = vrot.slane %v999, 1
      %v1032 = vrot.slane %v1000, 1
      %v1033 = vrot.slane %v1001, 1
      %v1034 = vrot.slane %v1002, 1
      %v1035 = vrot.slane %v1003, 1
      %v1036 = vrot.slane %v1004, 1
      %v1037 = vrot.slane %v1005, 1
      %v1038 = vrot.slane %v1006, 1
      %v1039 = vrot.slane %v1007, 1
      %v1040 = vrot.slane %v1008, 1
      %v1041 = vrot.slane %v1009, 1
      %v1042 = vrot.slane %v1010, 1
      %v1043 = vrot.slane %v1011, 1
      %v1044 = vrot.slane %v1012, 1
      %v1045 = vrot.slane %v1013, 1
      %v1046 = vrot.slane %v1014, 1
      %v1047 = vrot.slane %v1015, 1
      %v1048 = vrot.slane %v1016, 1
      %v1049 = vrot.slane %v1017, 1
      %v1050 = vrot.slane %v1018, 1
      %v1051 = vrot.slane %v1019, 1
      %v1052 = vrot.slane %v1020, 1
      %v1053 = vrot.slane %v1021, 1
      %v1054 = vrot.slane %v1022, 1
      %vm1055 = vcmp.lt.s32.totalorder %v446, 7
      %v1056 = vsel %vm1055, %v1053, %v1054
      %v1057 = vsel %vm1055, %v1052, %v1053
      %v1058 = vsel %vm1055, %v1051, %v1052
      %v1059 = vsel %vm1055, %v1050, %v1051
      %v1060 = vsel %vm1055, %v1049, %v1050
      %v1061 = vsel %vm1055, %v1048, %v1049
      %v1062 = vsel %vm1055, %v1047, %v1048
      %v1063 = vsel %vm1055, %v1046, %v1047
      %v1064 = vsel %vm1055, %v1045, %v1046
      %v1065 = vsel %vm1055, %v1044, %v1045
      %v1066 = vsel %vm1055, %v1043, %v1044
      %v1067 = vsel %vm1055, %v1042, %v1043
      %v1068 = vsel %vm1055, %v1041, %v1042
      %v1069 = vsel %vm1055, %v1040, %v1041
      %v1070 = vsel %vm1055, %v1039, %v1040
      %v1071 = vsel %vm1055, %v1038, %v1039
      %v1072 = vsel %vm1055, %v1037, %v1038
      %v1073 = vsel %vm1055, %v1036, %v1037
      %v1074 = vsel %vm1055, %v1035, %v1036
      %v1075 = vsel %vm1055, %v1034, %v1035
      %v1076 = vsel %vm1055, %v1033, %v1034
      %v1077 = vsel %vm1055, %v1032, %v1033
      %v1078 = vsel %vm1055, %v1031, %v1032
      %v1079 = vsel %vm1055, %v1030, %v1031
      %v1080 = vsel %vm1055, %v1029, %v1030
      %v1081 = vsel %vm1055, %v1028, %v1029
      %v1082 = vsel %vm1055, %v1027, %v1028
      %v1083 = vsel %vm1055, %v1026, %v1027
      %v1084 = vsel %vm1055, %v1025, %v1026
      %v1085 = vsel %vm1055, %v1024, %v1025
      %v1086 = vsel %vm1055, %v1023, %v1024
      %v1087 = vsel %vm1055, %v1054, %v1023
      %vm1088 = vcmp.lt.s32.totalorder %v478, 15
      %vm1089 = vcmp.lt.s32.totalorder %v479, 15
      %vm1090 = vcmp.lt.s32.totalorder %v480, 15
      %vm1091 = vcmp.lt.s32.totalorder %v481, 15
      %vm1092 = vcmp.lt.s32.totalorder %v482, 15
      %vm1093 = vcmp.lt.s32.totalorder %v483, 15
      %vm1094 = vcmp.lt.s32.totalorder %v484, 15
      %vm1095 = vcmp.lt.s32.totalorder %v485, 15
      %vm1096 = vcmp.lt.s32.totalorder %v486, 15
      %vm1097 = vcmp.lt.s32.totalorder %v487, 15
      %vm1098 = vcmp.lt.s32.totalorder %v488, 15
      %vm1099 = vcmp.lt.s32.totalorder %v489, 15
      %vm1100 = vcmp.lt.s32.totalorder %v490, 15
      %vm1101 = vcmp.lt.s32.totalorder %v491, 15
      %vm1102 = vcmp.lt.s32.totalorder %v492, 15
      %vm1103 = vcmp.lt.s32.totalorder %v493, 15
      %vm1104 = vcmp.lt.s32.totalorder %v494, 15
      %vm1105 = vcmp.lt.s32.totalorder %v495, 15
      %vm1106 = vcmp.lt.s32.totalorder %v496, 15
      %vm1107 = vcmp.lt.s32.totalorder %v497, 15
      %vm1108 = vcmp.lt.s32.totalorder %v498, 15
      %vm1109 = vcmp.lt.s32.totalorder %v499, 15
      %vm1110 = vcmp.lt.s32.totalorder %v500, 15
      %vm1111 = vcmp.lt.s32.totalorder %v501, 15
      %vm1112 = vcmp.lt.s32.totalorder %v502, 15
      %vm1113 = vcmp.lt.s32.totalorder %v503, 15
      %vm1114 = vcmp.lt.s32.totalorder %v504, 15
      %vm1115 = vcmp.lt.s32.totalorder %v505, 15
      %vm1116 = vcmp.lt.s32.totalorder %v506, 15
      %vm1117 = vcmp.lt.s32.totalorder %v507, 15
      %vm1118 = vcmp.lt.s32.totalorder %v508, 15
      %vm1119 = vcmp.lt.s32.totalorder %v509, 15
      %vm1120 = vmand %vm607, %vm1088
      %vm1121 = vmand %vm608, %vm1089
      %vm1122 = vmand %vm609, %vm1090
      %vm1123 = vmand %vm610, %vm1091
      %vm1124 = vmand %vm611, %vm1092
      %vm1125 = vmand %vm612, %vm1093
      %vm1126 = vmand %vm613, %vm1094
      %vm1127 = vmand %vm614, %vm1095
      %vm1128 = vmand %vm615, %vm1096
      %vm1129 = vmand %vm616, %vm1097
      %vm1130 = vmand %vm617, %vm1098
      %vm1131 = vmand %vm618, %vm1099
      %vm1132 = vmand %vm619, %vm1100
      %vm1133 = vmand %vm620, %vm1101
      %vm1134 = vmand %vm621, %vm1102
      %vm1135 = vmand %vm622, %vm1103
      %vm1136 = vmand %vm623, %vm1104
      %vm1137 = vmand %vm624, %vm1105
      %vm1138 = vmand %vm625, %vm1106
      %vm1139 = vmand %vm626, %vm1107
      %vm1140 = vmand %vm627, %vm1108
      %vm1141 = vmand %vm628, %vm1109
      %vm1142 = vmand %vm629, %vm1110
      %vm1143 = vmand %vm630, %vm1111
      %vm1144 = vmand %vm631, %vm1112
      %vm1145 = vmand %vm632, %vm1113
      %vm1146 = vmand %vm633, %vm1114
      %vm1147 = vmand %vm634, %vm1115
      %vm1148 = vmand %vm635, %vm1116
      %vm1149 = vmand %vm636, %vm1117
      %vm1150 = vmand %vm637, %vm1118
      %vm1151 = vmand %vm638, %vm1119
      %v1152 = vsel %vm1120, 1, 0
      %v1153 = vsel %vm1121, 1, 0
      %v1154 = vsel %vm1122, 1, 0
      %v1155 = vsel %vm1123, 1, 0
      %v1156 = vsel %vm1124, 1, 0
      %v1157 = vsel %vm1125, 1, 0
      %v1158 = vsel %vm1126, 1, 0
      %v1159 = vsel %vm1127, 1, 0
      %v1160 = vsel %vm1128, 1, 0
      %v1161 = vsel %vm1129, 1, 0
      %v1162 = vsel %vm1130, 1, 0
      %v1163 = vsel %vm1131, 1, 0
      %v1164 = vsel %vm1132, 1, 0
      %v1165 = vsel %vm1133, 1, 0
      %v1166 = vsel %vm1134, 1, 0
      %v1167 = vsel %vm1135, 1, 0
      %v1168 = vsel %vm1136, 1, 0
      %v1169 = vsel %vm1137, 1, 0
      %v1170 = vsel %vm1138, 1, 0
      %v1171 = vsel %vm1139, 1, 0
      %v1172 = vsel %vm1140, 1, 0
      %v1173 = vsel %vm1141, 1, 0
      %v1174 = vsel %vm1142, 1, 0
      %v1175 = vsel %vm1143, 1, 0
      %v1176 = vsel %vm1144, 1, 0
      %v1177 = vsel %vm1145, 1, 0
      %v1178 = vsel %vm1146, 1, 0
      %v1179 = vsel %vm1147, 1, 0
      %v1180 = vsel %vm1148, 1, 0
      %v1181 = vsel %vm1149, 1, 0
      %v1182 = vsel %vm1150, 1, 0
      %v1183 = vsel %vm1151, 1, 0
      %vm1184 = vcmp.eq.s32.totalorder %v1152, 1
      %vm1185 = vcmp.eq.s32.totalorder %v1153, 1
      %vm1186 = vcmp.eq.s32.totalorder %v1154, 1
      %vm1187 = vcmp.eq.s32.totalorder %v1155, 1
      %vm1188 = vcmp.eq.s32.totalorder %v1156, 1
      %vm1189 = vcmp.eq.s32.totalorder %v1157, 1
      %vm1190 = vcmp.eq.s32.totalorder %v1158, 1
      %vm1191 = vcmp.eq.s32.totalorder %v1159, 1
      %vm1192 = vcmp.eq.s32.totalorder %v1160, 1
      %vm1193 = vcmp.eq.s32.totalorder %v1161, 1
      %vm1194 = vcmp.eq.s32.totalorder %v1162, 1
      %vm1195 = vcmp.eq.s32.totalorder %v1163, 1
      %vm1196 = vcmp.eq.s32.totalorder %v1164, 1
      %vm1197 = vcmp.eq.s32.totalorder %v1165, 1
      %vm1198 = vcmp.eq.s32.totalorder %v1166, 1
      %vm1199 = vcmp.eq.s32.totalorder %v1167, 1
      %vm1200 = vcmp.eq.s32.totalorder %v1168, 1
      %vm1201 = vcmp.eq.s32.totalorder %v1169, 1
      %vm1202 = vcmp.eq.s32.totalorder %v1170, 1
      %vm1203 = vcmp.eq.s32.totalorder %v1171, 1
      %vm1204 = vcmp.eq.s32.totalorder %v1172, 1
      %vm1205 = vcmp.eq.s32.totalorder %v1173, 1
      %vm1206 = vcmp.eq.s32.totalorder %v1174, 1
      %vm1207 = vcmp.eq.s32.totalorder %v1175, 1
      %vm1208 = vcmp.eq.s32.totalorder %v1176, 1
      %vm1209 = vcmp.eq.s32.totalorder %v1177, 1
      %vm1210 = vcmp.eq.s32.totalorder %v1178, 1
      %vm1211 = vcmp.eq.s32.totalorder %v1179, 1
      %vm1212 = vcmp.eq.s32.totalorder %v1180, 1
      %vm1213 = vcmp.eq.s32.totalorder %v1181, 1
      %vm1214 = vcmp.eq.s32.totalorder %v1182, 1
      %vm1215 = vcmp.eq.s32.totalorder %v1183, 1
      %v1216 = vsel %vm1184, %v1056, 0.0
      %v1217 = vsel %vm1185, %v1087, 0.0
      %v1218 = vsel %vm1186, %v1086, 0.0
      %v1219 = vsel %vm1187, %v1085, 0.0
      %v1220 = vsel %vm1188, %v1084, 0.0
      %v1221 = vsel %vm1189, %v1083, 0.0
      %v1222 = vsel %vm1190, %v1082, 0.0
      %v1223 = vsel %vm1191, %v1081, 0.0
      %v1224 = vsel %vm1192, %v1080, 0.0
      %v1225 = vsel %vm1193, %v1079, 0.0
      %v1226 = vsel %vm1194, %v1078, 0.0
      %v1227 = vsel %vm1195, %v1077, 0.0
      %v1228 = vsel %vm1196, %v1076, 0.0
      %v1229 = vsel %vm1197, %v1075, 0.0
      %v1230 = vsel %vm1198, %v1074, 0.0
      %v1231 = vsel %vm1199, %v1073, 0.0
      %v1232 = vsel %vm1200, %v1072, 0.0
      %v1233 = vsel %vm1201, %v1071, 0.0
      %v1234 = vsel %vm1202, %v1070, 0.0
      %v1235 = vsel %vm1203, %v1069, 0.0
      %v1236 = vsel %vm1204, %v1068, 0.0
      %v1237 = vsel %vm1205, %v1067, 0.0
      %v1238 = vsel %vm1206, %v1066, 0.0
      %v1239 = vsel %vm1207, %v1065, 0.0
      %v1240 = vsel %vm1208, %v1064, 0.0
      %v1241 = vsel %vm1209, %v1063, 0.0
      %v1242 = vsel %vm1210, %v1062, 0.0
      %v1243 = vsel %vm1211, %v1061, 0.0
      %v1244 = vsel %vm1212, %v1060, 0.0
      %v1245 = vsel %vm1213, %v1059, 0.0
      %v1246 = vsel %vm1214, %v1058, 0.0
      %v1247 = vsel %vm1215, %v1057, 0.0
      %1248 = vst [vmem:[#allocation3 + $0x10] sm:$0xff] %v1216
      %1249 = vst [vmem:[#allocation3 + $0x60] sm:$0xff] %v1217
      %1250 = vst [vmem:[#allocation3 + $0xb0] sm:$0xff] %v1218
      %1251 = vst [vmem:[#allocation3 + $0x100] sm:$0xff] %v1219
      %1252 = vst [vmem:[#allocation3 + $0x150] sm:$0xff] %v1220
      %1253 = vst [vmem:[#allocation3 + $0x1a0] sm:$0xff] %v1221
      %1254 = vst [vmem:[#allocation3 + $0x1f0] sm:$0xff] %v1222
      %1255 = vst [vmem:[#allocation3 + $0x240] sm:$0xff] %v1223
      %1256 = vst [vmem:[#allocation3 + $0x290] sm:$0xff] %v1224
      %1257 = vst [vmem:[#allocation3 + $0x2e0] sm:$0xff] %v1225
      %1258 = vst [vmem:[#allocation3 + $0x330] sm:$0xff] %v1226
      %1259 = vst [vmem:[#allocation3 + $0x380] sm:$0xff] %v1227
      %1260 = vst [vmem:[#allocation3 + $0x3d0] sm:$0xff] %v1228
      %1261 = vst [vmem:[#allocation3 + $0x420] sm:$0xff] %v1229
      %1262 = vst [vmem:[#allocation3 + $0x470] sm:$0xff] %v1230
      %1263 = vst [vmem:[#allocation3 + $0x4c0] sm:$0xff] %v1231
      %1264 = vst [vmem:[#allocation3 + $0x510] sm:$0xff] %v1232
      %1265 = vst [vmem:[#allocation3 + $0x560] sm:$0xff] %v1233
      %1266 = vst [vmem:[#allocation3 + $0x5b0] sm:$0xff] %v1234
      %1267 = vst [vmem:[#allocation3 + $0x600] sm:$0xff] %v1235
      %1268 = vst [vmem:[#allocation3 + $0x650] sm:$0xff] %v1236
      %1269 = vst [vmem:[#allocation3 + $0x6a0] sm:$0xff] %v1237
      %1270 = vst [vmem:[#allocation3 + $0x6f0] sm:$0xff] %v1238
      %1271 = vst [vmem:[#allocation3 + $0x740] sm:$0xff] %v1239
      %1272 = vst [vmem:[#allocation3 + $0x790] sm:$0xff] %v1240
      %1273 = vst [vmem:[#allocation3 + $0x7e0] sm:$0xff] %v1241
      %1274 = vst [vmem:[#allocation3 + $0x830] sm:$0xff] %v1242
      %1275 = vst [vmem:[#allocation3 + $0x880] sm:$0xff] %v1243
      %1276 = vst [vmem:[#allocation3 + $0x8d0] sm:$0xff] %v1244
      %1277 = vst [vmem:[#allocation3 + $0x920] sm:$0xff] %v1245
      %1278 = vst [vmem:[#allocation3 + $0x970] sm:$0xff] %v1246
      %1279 = vst [vmem:[#allocation3 + $0x9c0] sm:$0xff] %v1247
      %v1280 = vld [vmem:[#allocation2] sm:$0xff]
      %v1281 = vld [vmem:[#allocation2 + $0x8] sm:$0xff]
      %v1282 = vld [vmem:[#allocation2 + $0x10] sm:$0xff]
      %v1283 = vld [vmem:[#allocation2 + $0x18] sm:$0xff]
      %v1284 = vld [vmem:[#allocation2 + $0x20] sm:$0xff]
      %v1285 = vld [vmem:[#allocation2 + $0x28] sm:$0xff]
      %v1286 = vld [vmem:[#allocation2 + $0x30] sm:$0xff]
      %v1287 = vld [vmem:[#allocation2 + $0x38] sm:$0xff]
      %v1288 = vld [vmem:[#allocation2 + $0x40] sm:$0xff]
      %v1289 = vld [vmem:[#allocation2 + $0x48] sm:$0xff]
      %v1290 = vld [vmem:[#allocation2 + $0x50] sm:$0xff]
      %v1291 = vld [vmem:[#allocation2 + $0x58] sm:$0xff]
      %v1292 = vld [vmem:[#allocation2 + $0x60] sm:$0xff]
      %v1293 = vld [vmem:[#allocation2 + $0x68] sm:$0xff]
      %v1294 = vld [vmem:[#allocation2 + $0x70] sm:$0xff]
      %v1295 = vld [vmem:[#allocation2 + $0x78] sm:$0xff]
      %v1296 = vld [vmem:[#allocation2 + $0x80] sm:$0xff]
      %v1297 = vld [vmem:[#allocation2 + $0x88] sm:$0xff]
      %v1298 = vld [vmem:[#allocation2 + $0x90] sm:$0xff]
      %v1299 = vld [vmem:[#allocation2 + $0x98] sm:$0xff]
      %v1300 = vld [vmem:[#allocation2 + $0xa0] sm:$0xff]
      %v1301 = vld [vmem:[#allocation2 + $0xa8] sm:$0xff]
      %v1302 = vld [vmem:[#allocation2 + $0xb0] sm:$0xff]
      %v1303 = vld [vmem:[#allocation2 + $0xb8] sm:$0xff]
      %v1304 = vld [vmem:[#allocation2 + $0xc0] sm:$0xff]
      %v1305 = vld [vmem:[#allocation2 + $0xc8] sm:$0xff]
      %v1306 = vld [vmem:[#allocation2 + $0xd0] sm:$0xff]
      %v1307 = vld [vmem:[#allocation2 + $0xd8] sm:$0xff]
      %v1308 = vld [vmem:[#allocation2 + $0xe0] sm:$0xff]
      %v1309 = vld [vmem:[#allocation2 + $0xe8] sm:$0xff]
      %v1310 = vld [vmem:[#allocation2 + $0xf0] sm:$0xff]
      %v1311 = vld [vmem:[#allocation2 + $0xf8] sm:$0xff]
      %v1312 = vrot.slane %v1280, 7
      %v1313 = vrot.slane %v1281, 7
      %v1314 = vrot.slane %v1282, 7
      %v1315 = vrot.slane %v1283, 7
      %v1316 = vrot.slane %v1284, 7
      %v1317 = vrot.slane %v1285, 7
      %v1318 = vrot.slane %v1286, 7
      %v1319 = vrot.slane %v1287, 7
      %v1320 = vrot.slane %v1288, 7
      %v1321 = vrot.slane %v1289, 7
      %v1322 = vrot.slane %v1290, 7
      %v1323 = vrot.slane %v1291, 7
      %v1324 = vrot.slane %v1292, 7
      %v1325 = vrot.slane %v1293, 7
      %v1326 = vrot.slane %v1294, 7
      %v1327 = vrot.slane %v1295, 7
      %v1328 = vrot.slane %v1296, 7
      %v1329 = vrot.slane %v1297, 7
      %v1330 = vrot.slane %v1298, 7
      %v1331 = vrot.slane %v1299, 7
      %v1332 = vrot.slane %v1300, 7
      %v1333 = vrot.slane %v1301, 7
      %v1334 = vrot.slane %v1302, 7
      %v1335 = vrot.slane %v1303, 7
      %v1336 = vrot.slane %v1304, 7
      %v1337 = vrot.slane %v1305, 7
      %v1338 = vrot.slane %v1306, 7
      %v1339 = vrot.slane %v1307, 7
      %v1340 = vrot.slane %v1308, 7
      %v1341 = vrot.slane %v1309, 7
      %v1342 = vrot.slane %v1310, 7
      %v1343 = vrot.slane %v1311, 7
      %v1344 = vsel %vm574, %v1342, %v1343
      %v1345 = vsel %vm574, %v1341, %v1342
      %v1346 = vsel %vm574, %v1340, %v1341
      %v1347 = vsel %vm574, %v1339, %v1340
      %v1348 = vsel %vm574, %v1338, %v1339
      %v1349 = vsel %vm574, %v1337, %v1338
      %v1350 = vsel %vm574, %v1336, %v1337
      %v1351 = vsel %vm574, %v1335, %v1336
      %v1352 = vsel %vm574, %v1334, %v1335
      %v1353 = vsel %vm574, %v1333, %v1334
      %v1354 = vsel %vm574, %v1332, %v1333
      %v1355 = vsel %vm574, %v1331, %v1332
      %v1356 = vsel %vm574, %v1330, %v1331
      %v1357 = vsel %vm574, %v1329, %v1330
      %v1358 = vsel %vm574, %v1328, %v1329
      %v1359 = vsel %vm574, %v1327, %v1328
      %v1360 = vsel %vm574, %v1326, %v1327
      %v1361 = vsel %vm574, %v1325, %v1326
      %v1362 = vsel %vm574, %v1324, %v1325
      %v1363 = vsel %vm574, %v1323, %v1324
      %v1364 = vsel %vm574, %v1322, %v1323
      %v1365 = vsel %vm574, %v1321, %v1322
      %v1366 = vsel %vm574, %v1320, %v1321
      %v1367 = vsel %vm574, %v1319, %v1320
      %v1368 = vsel %vm574, %v1318, %v1319
      %v1369 = vsel %vm574, %v1317, %v1318
      %v1370 = vsel %vm574, %v1316, %v1317
      %v1371 = vsel %vm574, %v1315, %v1316
      %v1372 = vsel %vm574, %v1314, %v1315
      %v1373 = vsel %vm574, %v1313, %v1314
      %v1374 = vsel %vm574, %v1312, %v1313
      %v1375 = vsel %vm574, %v1343, %v1312
      %v1376 = vsel %vm639, 1, 0
      %v1377 = vsel %vm640, 1, 0
      %v1378 = vsel %vm641, 1, 0
      %v1379 = vsel %vm642, 1, 0
      %v1380 = vsel %vm643, 1, 0
      %v1381 = vsel %vm644, 1, 0
      %v1382 = vsel %vm645, 1, 0
      %v1383 = vsel %vm646, 1, 0
      %v1384 = vsel %vm647, 1, 0
      %v1385 = vsel %vm648, 1, 0
      %v1386 = vsel %vm649, 1, 0
      %v1387 = vsel %vm650, 1, 0
      %v1388 = vsel %vm651, 1, 0
      %v1389 = vsel %vm652, 1, 0
      %v1390 = vsel %vm653, 1, 0
      %v1391 = vsel %vm654, 1, 0
      %v1392 = vsel %vm655, 1, 0
      %v1393 = vsel %vm656, 1, 0
      %v1394 = vsel %vm657, 1, 0
      %v1395 = vsel %vm658, 1, 0
      %v1396 = vsel %vm659, 1, 0
      %v1397 = vsel %vm660, 1, 0
      %v1398 = vsel %vm661, 1, 0
      %v1399 = vsel %vm662, 1, 0
      %v1400 = vsel %vm663, 1, 0
      %v1401 = vsel %vm664, 1, 0
      %v1402 = vsel %vm665, 1, 0
      %v1403 = vsel %vm666, 1, 0
      %v1404 = vsel %vm667, 1, 0
      %v1405 = vsel %vm668, 1, 0
      %v1406 = vsel %vm669, 1, 0
      %v1407 = vsel %vm670, 1, 0
      %vm1408 = vcmp.eq.s32.totalorder %v1376, 1
      %vm1409 = vcmp.eq.s32.totalorder %v1377, 1
      %vm1410 = vcmp.eq.s32.totalorder %v1378, 1
      %vm1411 = vcmp.eq.s32.totalorder %v1379, 1
      %vm1412 = vcmp.eq.s32.totalorder %v1380, 1
      %vm1413 = vcmp.eq.s32.totalorder %v1381, 1
      %vm1414 = vcmp.eq.s32.totalorder %v1382, 1
      %vm1415 = vcmp.eq.s32.totalorder %v1383, 1
      %vm1416 = vcmp.eq.s32.totalorder %v1384, 1
      %vm1417 = vcmp.eq.s32.totalorder %v1385, 1
      %vm1418 = vcmp.eq.s32.totalorder %v1386, 1
      %vm1419 = vcmp.eq.s32.totalorder %v1387, 1
      %vm1420 = vcmp.eq.s32.totalorder %v1388, 1
      %vm1421 = vcmp.eq.s32.totalorder %v1389, 1
      %vm1422 = vcmp.eq.s32.totalorder %v1390, 1
      %vm1423 = vcmp.eq.s32.totalorder %v1391, 1
      %vm1424 = vcmp.eq.s32.totalorder %v1392, 1
      %vm1425 = vcmp.eq.s32.totalorder %v1393, 1
      %vm1426 = vcmp.eq.s32.totalorder %v1394, 1
      %vm1427 = vcmp.eq.s32.totalorder %v1395, 1
      %vm1428 = vcmp.eq.s32.totalorder %v1396, 1
      %vm1429 = vcmp.eq.s32.totalorder %v1397, 1
      %vm1430 = vcmp.eq.s32.totalorder %v1398, 1
      %vm1431 = vcmp.eq.s32.totalorder %v1399, 1
      %vm1432 = vcmp.eq.s32.totalorder %v1400, 1
      %vm1433 = vcmp.eq.s32.totalorder %v1401, 1
      %vm1434 = vcmp.eq.s32.totalorder %v1402, 1
      %vm1435 = vcmp.eq.s32.totalorder %v1403, 1
      %vm1436 = vcmp.eq.s32.totalorder %v1404, 1
      %vm1437 = vcmp.eq.s32.totalorder %v1405, 1
      %vm1438 = vcmp.eq.s32.totalorder %v1406, 1
      %vm1439 = vcmp.eq.s32.totalorder %v1407, 1
      %v1440 = vsel %vm1408, %v1375, 0.0
      %v1441 = vsel %vm1409, %v1374, 0.0
      %v1442 = vsel %vm1410, %v1373, 0.0
      %v1443 = vsel %vm1411, %v1372, 0.0
      %v1444 = vsel %vm1412, %v1371, 0.0
      %v1445 = vsel %vm1413, %v1370, 0.0
      %v1446 = vsel %vm1414, %v1369, 0.0
      %v1447 = vsel %vm1415, %v1368, 0.0
      %v1448 = vsel %vm1416, %v1367, 0.0
      %v1449 = vsel %vm1417, %v1366, 0.0
      %v1450 = vsel %vm1418, %v1365, 0.0
      %v1451 = vsel %vm1419, %v1364, 0.0
      %v1452 = vsel %vm1420, %v1363, 0.0
      %v1453 = vsel %vm1421, %v1362, 0.0
      %v1454 = vsel %vm1422, %v1361, 0.0
      %v1455 = vsel %vm1423, %v1360, 0.0
      %v1456 = vsel %vm1424, %v1359, 0.0
      %v1457 = vsel %vm1425, %v1358, 0.0
      %v1458 = vsel %vm1426, %v1357, 0.0
      %v1459 = vsel %vm1427, %v1356, 0.0
      %v1460 = vsel %vm1428, %v1355, 0.0
      %v1461 = vsel %vm1429, %v1354, 0.0
      %v1462 = vsel %vm1430, %v1353, 0.0
      %v1463 = vsel %vm1431, %v1352, 0.0
      %v1464 = vsel %vm1432, %v1351, 0.0
      %v1465 = vsel %vm1433, %v1350, 0.0
      %v1466 = vsel %vm1434, %v1349, 0.0
      %v1467 = vsel %vm1435, %v1348, 0.0
      %v1468 = vsel %vm1436, %v1347, 0.0
      %v1469 = vsel %vm1437, %v1346, 0.0
      %v1470 = vsel %vm1438, %v1345, 0.0
      %v1471 = vsel %vm1439, %v1344, 0.0
      %1472 = vst [vmem:[#allocation3 + $0x18] sm:$0xff] %v1440
      %1473 = vst [vmem:[#allocation3 + $0x68] sm:$0xff] %v1441
      %1474 = vst [vmem:[#allocation3 + $0xb8] sm:$0xff] %v1442
      %1475 = vst [vmem:[#allocation3 + $0x108] sm:$0xff] %v1443
      %1476 = vst [vmem:[#allocation3 + $0x158] sm:$0xff] %v1444
      %1477 = vst [vmem:[#allocation3 + $0x1a8] sm:$0xff] %v1445
      %1478 = vst [vmem:[#allocation3 + $0x1f8] sm:$0xff] %v1446
      %1479 = vst [vmem:[#allocation3 + $0x248] sm:$0xff] %v1447
      %1480 = vst [vmem:[#allocation3 + $0x298] sm:$0xff] %v1448
      %1481 = vst [vmem:[#allocation3 + $0x2e8] sm:$0xff] %v1449
      %1482 = vst [vmem:[#allocation3 + $0x338] sm:$0xff] %v1450
      %1483 = vst [vmem:[#allocation3 + $0x388] sm:$0xff] %v1451
      %1484 = vst [vmem:[#allocation3 + $0x3d8] sm:$0xff] %v1452
      %1485 = vst [vmem:[#allocation3 + $0x428] sm:$0xff] %v1453
      %1486 = vst [vmem:[#allocation3 + $0x478] sm:$0xff] %v1454
      %1487 = vst [vmem:[#allocation3 + $0x4c8] sm:$0xff] %v1455
      %1488 = vst [vmem:[#allocation3 + $0x518] sm:$0xff] %v1456
      %1489 = vst [vmem:[#allocation3 + $0x568] sm:$0xff] %v1457
      %1490 = vst [vmem:[#allocation3 + $0x5b8] sm:$0xff] %v1458
      %1491 = vst [vmem:[#allocation3 + $0x608] sm:$0xff] %v1459
      %1492 = vst [vmem:[#allocation3 + $0x658] sm:$0xff] %v1460
      %1493 = vst [vmem:[#allocation3 + $0x6a8] sm:$0xff] %v1461
      %1494 = vst [vmem:[#allocation3 + $0x6f8] sm:$0xff] %v1462
      %1495 = vst [vmem:[#allocation3 + $0x748] sm:$0xff] %v1463
      %1496 = vst [vmem:[#allocation3 + $0x798] sm:$0xff] %v1464
      %1497 = vst [vmem:[#allocation3 + $0x7e8] sm:$0xff] %v1465
      %1498 = vst [vmem:[#allocation3 + $0x838] sm:$0xff] %v1466
      %1499 = vst [vmem:[#allocation3 + $0x888] sm:$0xff] %v1467
      %1500 = vst [vmem:[#allocation3 + $0x8d8] sm:$0xff] %v1468
      %1501 = vst [vmem:[#allocation3 + $0x928] sm:$0xff] %v1469
      %1502 = vst [vmem:[#allocation3 + $0x978] sm:$0xff] %v1470
      %1503 = vst [vmem:[#allocation3 + $0x9c8] sm:$0xff] %v1471
      %v1504 = vld [vmem:[#allocation2] sm:$0xff]
      %v1505 = vld [vmem:[#allocation2 + $0x8] sm:$0xff]
      %v1506 = vld [vmem:[#allocation2 + $0x10] sm:$0xff]
      %v1507 = vld [vmem:[#allocation2 + $0x18] sm:$0xff]
      %v1508 = vld [vmem:[#allocation2 + $0x20] sm:$0xff]
      %v1509 = vld [vmem:[#allocation2 + $0x28] sm:$0xff]
      %v1510 = vld [vmem:[#allocation2 + $0x30] sm:$0xff]
      %v1511 = vld [vmem:[#allocation2 + $0x38] sm:$0xff]
      %v1512 = vld [vmem:[#allocation2 + $0x40] sm:$0xff]
      %v1513 = vld [vmem:[#allocation2 + $0x48] sm:$0xff]
      %v1514 = vld [vmem:[#allocation2 + $0x50] sm:$0xff]
      %v1515 = vld [vmem:[#allocation2 + $0x58] sm:$0xff]
      %v1516 = vld [vmem:[#allocation2 + $0x60] sm:$0xff]
      %v1517 = vld [vmem:[#allocation2 + $0x68] sm:$0xff]
      %v1518 = vld [vmem:[#allocation2 + $0x70] sm:$0xff]
      %v1519 = vld [vmem:[#allocation2 + $0x78] sm:$0xff]
      %v1520 = vld [vmem:[#allocation2 + $0x80] sm:$0xff]
      %v1521 = vld [vmem:[#allocation2 + $0x88] sm:$0xff]
      %v1522 = vld [vmem:[#allocation2 + $0x90] sm:$0xff]
      %v1523 = vld [vmem:[#allocation2 + $0x98] sm:$0xff]
      %v1524 = vld [vmem:[#allocation2 + $0xa0] sm:$0xff]
      %v1525 = vld [vmem:[#allocation2 + $0xa8] sm:$0xff]
      %v1526 = vld [vmem:[#allocation2 + $0xb0] sm:$0xff]
      %v1527 = vld [vmem:[#allocation2 + $0xb8] sm:$0xff]
      %v1528 = vld [vmem:[#allocation2 + $0xc0] sm:$0xff]
      %v1529 = vld [vmem:[#allocation2 + $0xc8] sm:$0xff]
      %v1530 = vld [vmem:[#allocation2 + $0xd0] sm:$0xff]
      %v1531 = vld [vmem:[#allocation2 + $0xd8] sm:$0xff]
      %v1532 = vld [vmem:[#allocation2 + $0xe0] sm:$0xff]
      %v1533 = vld [vmem:[#allocation2 + $0xe8] sm:$0xff]
      %v1534 = vld [vmem:[#allocation2 + $0xf0] sm:$0xff]
      %v1535 = vld [vmem:[#allocation2 + $0xf8] sm:$0xff]
      %1536 = vst [vmem:[#allocation3 + $0x20] sm:$0xff] %v1504
      %1537 = vst [vmem:[#allocation3 + $0x70] sm:$0xff] %v1505
      %1538 = vst [vmem:[#allocation3 + $0xc0] sm:$0xff] %v1506
      %1539 = vst [vmem:[#allocation3 + $0x110] sm:$0xff] %v1507
      %1540 = vst [vmem:[#allocation3 + $0x160] sm:$0xff] %v1508
      %1541 = vst [vmem:[#allocation3 + $0x1b0] sm:$0xff] %v1509
      %1542 = vst [vmem:[#allocation3 + $0x200] sm:$0xff] %v1510
      %1543 = vst [vmem:[#allocation3 + $0x250] sm:$0xff] %v1511
      %1544 = vst [vmem:[#allocation3 + $0x2a0] sm:$0xff] %v1512
      %1545 = vst [vmem:[#allocation3 + $0x2f0] sm:$0xff] %v1513
      %1546 = vst [vmem:[#allocation3 + $0x340] sm:$0xff] %v1514
      %1547 = vst [vmem:[#allocation3 + $0x390] sm:$0xff] %v1515
      %1548 = vst [vmem:[#allocation3 + $0x3e0] sm:$0xff] %v1516
      %1549 = vst [vmem:[#allocation3 + $0x430] sm:$0xff] %v1517
      %1550 = vst [vmem:[#allocation3 + $0x480] sm:$0xff] %v1518
      %1551 = vst [vmem:[#allocation3 + $0x4d0] sm:$0xff] %v1519
      %1552 = vst [vmem:[#allocation3 + $0x520] sm:$0xff] %v1520
      %1553 = vst [vmem:[#allocation3 + $0x570] sm:$0xff] %v1521
      %1554 = vst [vmem:[#allocation3 + $0x5c0] sm:$0xff] %v1522
      %1555 = vst [vmem:[#allocation3 + $0x610] sm:$0xff] %v1523
      %1556 = vst [vmem:[#allocation3 + $0x660] sm:$0xff] %v1524
      %1557 = vst [vmem:[#allocation3 + $0x6b0] sm:$0xff] %v1525
      %1558 = vst [vmem:[#allocation3 + $0x700] sm:$0xff] %v1526
      %1559 = vst [vmem:[#allocation3 + $0x750] sm:$0xff] %v1527
      %1560 = vst [vmem:[#allocation3 + $0x7a0] sm:$0xff] %v1528
      %1561 = vst [vmem:[#allocation3 + $0x7f0] sm:$0xff] %v1529
      %1562 = vst [vmem:[#allocation3 + $0x840] sm:$0xff] %v1530
      %1563 = vst [vmem:[#allocation3 + $0x890] sm:$0xff] %v1531
      %1564 = vst [vmem:[#allocation3 + $0x8e0] sm:$0xff] %v1532
      %1565 = vst [vmem:[#allocation3 + $0x930] sm:$0xff] %v1533
      %1566 = vst [vmem:[#allocation3 + $0x980] sm:$0xff] %v1534
      %1567 = vst [vmem:[#allocation3 + $0x9d0] sm:$0xff] %v1535
      %v1568 = vld [vmem:[#allocation2] sm:$0xff]
      %v1569 = vld [vmem:[#allocation2 + $0x8] sm:$0xff]
      %v1570 = vld [vmem:[#allocation2 + $0x10] sm:$0xff]
      %v1571 = vld [vmem:[#allocation2 + $0x18] sm:$0xff]
      %v1572 = vld [vmem:[#allocation2 + $0x20] sm:$0xff]
      %v1573 = vld [vmem:[#allocation2 + $0x28] sm:$0xff]
      %v1574 = vld [vmem:[#allocation2 + $0x30] sm:$0xff]
      %v1575 = vld [vmem:[#allocation2 + $0x38] sm:$0xff]
      %v1576 = vld [vmem:[#allocation2 + $0x40] sm:$0xff]
      %v1577 = vld [vmem:[#allocation2 + $0x48] sm:$0xff]
      %v1578 = vld [vmem:[#allocation2 + $0x50] sm:$0xff]
      %v1579 = vld [vmem:[#allocation2 + $0x58] sm:$0xff]
      %v1580 = vld [vmem:[#allocation2 + $0x60] sm:$0xff]
      %v1581 = vld [vmem:[#allocation2 + $0x68] sm:$0xff]
      %v1582 = vld [vmem:[#allocation2 + $0x70] sm:$0xff]
      %v1583 = vld [vmem:[#allocation2 + $0x78] sm:$0xff]
      %v1584 = vld [vmem:[#allocation2 + $0x80] sm:$0xff]
      %v1585 = vld [vmem:[#allocation2 + $0x88] sm:$0xff]
      %v1586 = vld [vmem:[#allocation2 + $0x90] sm:$0xff]
      %v1587 = vld [vmem:[#allocation2 + $0x98] sm:$0xff]
      %v1588 = vld [vmem:[#allocation2 + $0xa0] sm:$0xff]
      %v1589 = vld [vmem:[#allocation2 + $0xa8] sm:$0xff]
      %v1590 = vld [vmem:[#allocation2 + $0xb0] sm:$0xff]
      %v1591 = vld [vmem:[#allocation2 + $0xb8] sm:$0xff]
      %v1592 = vld [vmem:[#allocation2 + $0xc0] sm:$0xff]
      %v1593 = vld [vmem:[#allocation2 + $0xc8] sm:$0xff]
      %v1594 = vld [vmem:[#allocation2 + $0xd0] sm:$0xff]
      %v1595 = vld [vmem:[#allocation2 + $0xd8] sm:$0xff]
      %v1596 = vld [vmem:[#allocation2 + $0xe0] sm:$0xff]
      %v1597 = vld [vmem:[#allocation2 + $0xe8] sm:$0xff]
      %v1598 = vld [vmem:[#allocation2 + $0xf0] sm:$0xff]
      %v1599 = vld [vmem:[#allocation2 + $0xf8] sm:$0xff]
      %v1600 = vrot.slane %v1568, 1
      %v1601 = vrot.slane %v1569, 1
      %v1602 = vrot.slane %v1570, 1
      %v1603 = vrot.slane %v1571, 1
      %v1604 = vrot.slane %v1572, 1
      %v1605 = vrot.slane %v1573, 1
      %v1606 = vrot.slane %v1574, 1
      %v1607 = vrot.slane %v1575, 1
      %v1608 = vrot.slane %v1576, 1
      %v1609 = vrot.slane %v1577, 1
      %v1610 = vrot.slane %v1578, 1
      %v1611 = vrot.slane %v1579, 1
      %v1612 = vrot.slane %v1580, 1
      %v1613 = vrot.slane %v1581, 1
      %v1614 = vrot.slane %v1582, 1
      %v1615 = vrot.slane %v1583, 1
      %v1616 = vrot.slane %v1584, 1
      %v1617 = vrot.slane %v1585, 1
      %v1618 = vrot.slane %v1586, 1
      %v1619 = vrot.slane %v1587, 1
      %v1620 = vrot.slane %v1588, 1
      %v1621 = vrot.slane %v1589, 1
      %v1622 = vrot.slane %v1590, 1
      %v1623 = vrot.slane %v1591, 1
      %v1624 = vrot.slane %v1592, 1
      %v1625 = vrot.slane %v1593, 1
      %v1626 = vrot.slane %v1594, 1
      %v1627 = vrot.slane %v1595, 1
      %v1628 = vrot.slane %v1596, 1
      %v1629 = vrot.slane %v1597, 1
      %v1630 = vrot.slane %v1598, 1
      %v1631 = vrot.slane %v1599, 1
      %v1632 = vsel %vm1055, %v1630, %v1631
      %v1633 = vsel %vm1055, %v1629, %v1630
      %v1634 = vsel %vm1055, %v1628, %v1629
      %v1635 = vsel %vm1055, %v1627, %v1628
      %v1636 = vsel %vm1055, %v1626, %v1627
      %v1637 = vsel %vm1055, %v1625, %v1626
      %v1638 = vsel %vm1055, %v1624, %v1625
      %v1639 = vsel %vm1055, %v1623, %v1624
      %v1640 = vsel %vm1055, %v1622, %v1623
      %v1641 = vsel %vm1055, %v1621, %v1622
      %v1642 = vsel %vm1055, %v1620, %v1621
      %v1643 = vsel %vm1055, %v1619, %v1620
      %v1644 = vsel %vm1055, %v1618, %v1619
      %v1645 = vsel %vm1055, %v1617, %v1618
      %v1646 = vsel %vm1055, %v1616, %v1617
      %v1647 = vsel %vm1055, %v1615, %v1616
      %v1648 = vsel %vm1055, %v1614, %v1615
      %v1649 = vsel %vm1055, %v1613, %v1614
      %v1650 = vsel %vm1055, %v1612, %v1613
      %v1651 = vsel %vm1055, %v1611, %v1612
      %v1652 = vsel %vm1055, %v1610, %v1611
      %v1653 = vsel %vm1055, %v1609, %v1610
      %v1654 = vsel %vm1055, %v1608, %v1609
      %v1655 = vsel %vm1055, %v1607, %v1608
      %v1656 = vsel %vm1055, %v1606, %v1607
      %v1657 = vsel %vm1055, %v1605, %v1606
      %v1658 = vsel %vm1055, %v1604, %v1605
      %v1659 = vsel %vm1055, %v1603, %v1604
      %v1660 = vsel %vm1055, %v1602, %v1603
      %v1661 = vsel %vm1055, %v1601, %v1602
      %v1662 = vsel %vm1055, %v1600, %v1601
      %v1663 = vsel %vm1055, %v1631, %v1600
      %v1664 = vsel %vm1088, 1, 0
      %v1665 = vsel %vm1089, 1, 0
      %v1666 = vsel %vm1090, 1, 0
      %v1667 = vsel %vm1091, 1, 0
      %v1668 = vsel %vm1092, 1, 0
      %v1669 = vsel %vm1093, 1, 0
      %v1670 = vsel %vm1094, 1, 0
      %v1671 = vsel %vm1095, 1, 0
      %v1672 = vsel %vm1096, 1, 0
      %v1673 = vsel %vm1097, 1, 0
      %v1674 = vsel %vm1098, 1, 0
      %v1675 = vsel %vm1099, 1, 0
      %v1676 = vsel %vm1100, 1, 0
      %v1677 = vsel %vm1101, 1, 0
      %v1678 = vsel %vm1102, 1, 0
      %v1679 = vsel %vm1103, 1, 0
      %v1680 = vsel %vm1104, 1, 0
      %v1681 = vsel %vm1105, 1, 0
      %v1682 = vsel %vm1106, 1, 0
      %v1683 = vsel %vm1107, 1, 0
      %v1684 = vsel %vm1108, 1, 0
      %v1685 = vsel %vm1109, 1, 0
      %v1686 = vsel %vm1110, 1, 0
      %v1687 = vsel %vm1111, 1, 0
      %v1688 = vsel %vm1112, 1, 0
      %v1689 = vsel %vm1113, 1, 0
      %v1690 = vsel %vm1114, 1, 0
      %v1691 = vsel %vm1115, 1, 0
      %v1692 = vsel %vm1116, 1, 0
      %v1693 = vsel %vm1117, 1, 0
      %v1694 = vsel %vm1118, 1, 0
      %v1695 = vsel %vm1119, 1, 0
      %vm1696 = vcmp.eq.s32.totalorder %v1664, 1
      %vm1697 = vcmp.eq.s32.totalorder %v1665, 1
      %vm1698 = vcmp.eq.s32.totalorder %v1666, 1
      %vm1699 = vcmp.eq.s32.totalorder %v1667, 1
      %vm1700 = vcmp.eq.s32.totalorder %v1668, 1
      %vm1701 = vcmp.eq.s32.totalorder %v1669, 1
      %vm1702 = vcmp.eq.s32.totalorder %v1670, 1
      %vm1703 = vcmp.eq.s32.totalorder %v1671, 1
      %vm1704 = vcmp.eq.s32.totalorder %v1672, 1
      %vm1705 = vcmp.eq.s32.totalorder %v1673, 1
      %vm1706 = vcmp.eq.s32.totalorder %v1674, 1
      %vm1707 = vcmp.eq.s32.totalorder %v1675, 1
      %vm1708 = vcmp.eq.s32.totalorder %v1676, 1
      %vm1709 = vcmp.eq.s32.totalorder %v1677, 1
      %vm1710 = vcmp.eq.s32.totalorder %v1678, 1
      %vm1711 = vcmp.eq.s32.totalorder %v1679, 1
      %vm1712 = vcmp.eq.s32.totalorder %v1680, 1
      %vm1713 = vcmp.eq.s32.totalorder %v1681, 1
      %vm1714 = vcmp.eq.s32.totalorder %v1682, 1
      %vm1715 = vcmp.eq.s32.totalorder %v1683, 1
      %vm1716 = vcmp.eq.s32.totalorder %v1684, 1
      %vm1717 = vcmp.eq.s32.totalorder %v1685, 1
      %vm1718 = vcmp.eq.s32.totalorder %v1686, 1
      %vm1719 = vcmp.eq.s32.totalorder %v1687, 1
      %vm1720 = vcmp.eq.s32.totalorder %v1688, 1
      %vm1721 = vcmp.eq.s32.totalorder %v1689, 1
      %vm1722 = vcmp.eq.s32.totalorder %v1690, 1
      %vm1723 = vcmp.eq.s32.totalorder %v1691, 1
      %vm1724 = vcmp.eq.s32.totalorder %v1692, 1
      %vm1725 = vcmp.eq.s32.totalorder %v1693, 1
      %vm1726 = vcmp.eq.s32.totalorder %v1694, 1
      %vm1727 = vcmp.eq.s32.totalorder %v1695, 1
      %v1728 = vsel %vm1696, %v1662, 0.0
      %v1729 = vsel %vm1697, %v1661, 0.0
      %v1730 = vsel %vm1698, %v1660, 0.0
      %v1731 = vsel %vm1699, %v1659, 0.0
      %v1732 = vsel %vm1700, %v1658, 0.0
      %v1733 = vsel %vm1701, %v1657, 0.0
      %v1734 = vsel %vm1702, %v1656, 0.0
      %v1735 = vsel %vm1703, %v1655, 0.0
      %v1736 = vsel %vm1704, %v1654, 0.0
      %v1737 = vsel %vm1705, %v1653, 0.0
      %v1738 = vsel %vm1706, %v1652, 0.0
      %v1739 = vsel %vm1707, %v1651, 0.0
      %v1740 = vsel %vm1708, %v1650, 0.0
      %v1741 = vsel %vm1709, %v1649, 0.0
      %v1742 = vsel %vm1710, %v1648, 0.0
      %v1743 = vsel %vm1711, %v1647, 0.0
      %v1744 = vsel %vm1712, %v1646, 0.0
      %v1745 = vsel %vm1713, %v1645, 0.0
      %v1746 = vsel %vm1714, %v1644, 0.0
      %v1747 = vsel %vm1715, %v1643, 0.0
      %v1748 = vsel %vm1716, %v1642, 0.0
      %v1749 = vsel %vm1717, %v1641, 0.0
      %v1750 = vsel %vm1718, %v1640, 0.0
      %v1751 = vsel %vm1719, %v1639, 0.0
      %v1752 = vsel %vm1720, %v1638, 0.0
      %v1753 = vsel %vm1721, %v1637, 0.0
      %v1754 = vsel %vm1722, %v1636, 0.0
      %v1755 = vsel %vm1723, %v1635, 0.0
      %v1756 = vsel %vm1724, %v1634, 0.0
      %v1757 = vsel %vm1725, %v1633, 0.0
      %v1758 = vsel %vm1726, %v1632, 0.0
      %v1759 = vsel %vm1727, %v1663, 0.0
      %1760 = vst [vmem:[#allocation3 + $0x28] sm:$0xff] %v1728
      %1761 = vst [vmem:[#allocation3 + $0x78] sm:$0xff] %v1729
      %1762 = vst [vmem:[#allocation3 + $0xc8] sm:$0xff] %v1730
      %1763 = vst [vmem:[#allocation3 + $0x118] sm:$0xff] %v1731
      %1764 = vst [vmem:[#allocation3 + $0x168] sm:$0xff] %v1732
      %1765 = vst [vmem:[#allocation3 + $0x1b8] sm:$0xff] %v1733
      %1766 = vst [vmem:[#allocation3 + $0x208] sm:$0xff] %v1734
      %1767 = vst [vmem:[#allocation3 + $0x258] sm:$0xff] %v1735
      %1768 = vst [vmem:[#allocation3 + $0x2a8] sm:$0xff] %v1736
      %1769 = vst [vmem:[#allocation3 + $0x2f8] sm:$0xff] %v1737
      %1770 = vst [vmem:[#allocation3 + $0x348] sm:$0xff] %v1738
      %1771 = vst [vmem:[#allocation3 + $0x398] sm:$0xff] %v1739
      %1772 = vst [vmem:[#allocation3 + $0x3e8] sm:$0xff] %v1740
      %1773 = vst [vmem:[#allocation3 + $0x438] sm:$0xff] %v1741
      %1774 = vst [vmem:[#allocation3 + $0x488] sm:$0xff] %v1742
      %1775 = vst [vmem:[#allocation3 + $0x4d8] sm:$0xff] %v1743
      %1776 = vst [vmem:[#allocation3 + $0x528] sm:$0xff] %v1744
      %1777 = vst [vmem:[#allocation3 + $0x578] sm:$0xff] %v1745
      %1778 = vst [vmem:[#allocation3 + $0x5c8] sm:$0xff] %v1746
      %1779 = vst [vmem:[#allocation3 + $0x618] sm:$0xff] %v1747
      %1780 = vst [vmem:[#allocation3 + $0x668] sm:$0xff] %v1748
      %1781 = vst [vmem:[#allocation3 + $0x6b8] sm:$0xff] %v1749
      %1782 = vst [vmem:[#allocation3 + $0x708] sm:$0xff] %v1750
      %1783 = vst [vmem:[#allocation3 + $0x758] sm:$0xff] %v1751
      %1784 = vst [vmem:[#allocation3 + $0x7a8] sm:$0xff] %v1752
      %1785 = vst [vmem:[#allocation3 + $0x7f8] sm:$0xff] %v1753
      %1786 = vst [vmem:[#allocation3 + $0x848] sm:$0xff] %v1754
      %1787 = vst [vmem:[#allocation3 + $0x898] sm:$0xff] %v1755
      %1788 = vst [vmem:[#allocation3 + $0x8e8] sm:$0xff] %v1756
      %1789 = vst [vmem:[#allocation3 + $0x938] sm:$0xff] %v1757
      %1790 = vst [vmem:[#allocation3 + $0x988] sm:$0xff] %v1758
      %1791 = vst [vmem:[#allocation3 + $0x9d8] sm:$0xff] %v1759
      %v1792 = vld [vmem:[#allocation2] sm:$0xff]
      %v1793 = vld [vmem:[#allocation2 + $0x8] sm:$0xff]
      %v1794 = vld [vmem:[#allocation2 + $0x10] sm:$0xff]
      %v1795 = vld [vmem:[#allocation2 + $0x18] sm:$0xff]
      %v1796 = vld [vmem:[#allocation2 + $0x20] sm:$0xff]
      %v1797 = vld [vmem:[#allocation2 + $0x28] sm:$0xff]
      %v1798 = vld [vmem:[#allocation2 + $0x30] sm:$0xff]
      %v1799 = vld [vmem:[#allocation2 + $0x38] sm:$0xff]
      %v1800 = vld [vmem:[#allocation2 + $0x40] sm:$0xff]
      %v1801 = vld [vmem:[#allocation2 + $0x48] sm:$0xff]
      %v1802 = vld [vmem:[#allocation2 + $0x50] sm:$0xff]
      %v1803 = vld [vmem:[#allocation2 + $0x58] sm:$0xff]
      %v1804 = vld [vmem:[#allocation2 + $0x60] sm:$0xff]
      %v1805 = vld [vmem:[#allocation2 + $0x68] sm:$0xff]
      %v1806 = vld [vmem:[#allocation2 + $0x70] sm:$0xff]
      %v1807 = vld [vmem:[#allocation2 + $0x78] sm:$0xff]
      %v1808 = vld [vmem:[#allocation2 + $0x80] sm:$0xff]
      %v1809 = vld [vmem:[#allocation2 + $0x88] sm:$0xff]
      %v1810 = vld [vmem:[#allocation2 + $0x90] sm:$0xff]
      %v1811 = vld [vmem:[#allocation2 + $0x98] sm:$0xff]
      %v1812 = vld [vmem:[#allocation2 + $0xa0] sm:$0xff]
      %v1813 = vld [vmem:[#allocation2 + $0xa8] sm:$0xff]
      %v1814 = vld [vmem:[#allocation2 + $0xb0] sm:$0xff]
      %v1815 = vld [vmem:[#allocation2 + $0xb8] sm:$0xff]
      %v1816 = vld [vmem:[#allocation2 + $0xc0] sm:$0xff]
      %v1817 = vld [vmem:[#allocation2 + $0xc8] sm:$0xff]
      %v1818 = vld [vmem:[#allocation2 + $0xd0] sm:$0xff]
      %v1819 = vld [vmem:[#allocation2 + $0xd8] sm:$0xff]
      %v1820 = vld [vmem:[#allocation2 + $0xe0] sm:$0xff]
      %v1821 = vld [vmem:[#allocation2 + $0xe8] sm:$0xff]
      %v1822 = vld [vmem:[#allocation2 + $0xf0] sm:$0xff]
      %v1823 = vld [vmem:[#allocation2 + $0xf8] sm:$0xff]
      %v1824 = vrot.slane %v1792, 7
      %v1825 = vrot.slane %v1793, 7
      %v1826 = vrot.slane %v1794, 7
      %v1827 = vrot.slane %v1795, 7
      %v1828 = vrot.slane %v1796, 7
      %v1829 = vrot.slane %v1797, 7
      %v1830 = vrot.slane %v1798, 7
      %v1831 = vrot.slane %v1799, 7
      %v1832 = vrot.slane %v1800, 7
      %v1833 = vrot.slane %v1801, 7
      %v1834 = vrot.slane %v1802, 7
      %v1835 = vrot.slane %v1803, 7
      %v1836 = vrot.slane %v1804, 7
      %v1837 = vrot.slane %v1805, 7
      %v1838 = vrot.slane %v1806, 7
      %v1839 = vrot.slane %v1807, 7
      %v1840 = vrot.slane %v1808, 7
      %v1841 = vrot.slane %v1809, 7
      %v1842 = vrot.slane %v1810, 7
      %v1843 = vrot.slane %v1811, 7
      %v1844 = vrot.slane %v1812, 7
      %v1845 = vrot.slane %v1813, 7
      %v1846 = vrot.slane %v1814, 7
      %v1847 = vrot.slane %v1815, 7
      %v1848 = vrot.slane %v1816, 7
      %v1849 = vrot.slane %v1817, 7
      %v1850 = vrot.slane %v1818, 7
      %v1851 = vrot.slane %v1819, 7
      %v1852 = vrot.slane %v1820, 7
      %v1853 = vrot.slane %v1821, 7
      %v1854 = vrot.slane %v1822, 7
      %v1855 = vrot.slane %v1823, 7
      %v1856 = vsel %vm574, %v1854, %v1855
      %v1857 = vsel %vm574, %v1853, %v1854
      %v1858 = vsel %vm574, %v1852, %v1853
      %v1859 = vsel %vm574, %v1851, %v1852
      %v1860 = vsel %vm574, %v1850, %v1851
      %v1861 = vsel %vm574, %v1849, %v1850
      %v1862 = vsel %vm574, %v1848, %v1849
      %v1863 = vsel %vm574, %v1847, %v1848
      %v1864 = vsel %vm574, %v1846, %v1847
      %v1865 = vsel %vm574, %v1845, %v1846
      %v1866 = vsel %vm574, %v1844, %v1845
      %v1867 = vsel %vm574, %v1843, %v1844
      %v1868 = vsel %vm574, %v1842, %v1843
      %v1869 = vsel %vm574, %v1841, %v1842
      %v1870 = vsel %vm574, %v1840, %v1841
      %v1871 = vsel %vm574, %v1839, %v1840
      %v1872 = vsel %vm574, %v1838, %v1839
      %v1873 = vsel %vm574, %v1837, %v1838
      %v1874 = vsel %vm574, %v1836, %v1837
      %v1875 = vsel %vm574, %v1835, %v1836
      %v1876 = vsel %vm574, %v1834, %v1835
      %v1877 = vsel %vm574, %v1833, %v1834
      %v1878 = vsel %vm574, %v1832, %v1833
      %v1879 = vsel %vm574, %v1831, %v1832
      %v1880 = vsel %vm574, %v1830, %v1831
      %v1881 = vsel %vm574, %v1829, %v1830
      %v1882 = vsel %vm574, %v1828, %v1829
      %v1883 = vsel %vm574, %v1827, %v1828
      %v1884 = vsel %vm574, %v1826, %v1827
      %v1885 = vsel %vm574, %v1825, %v1826
      %v1886 = vsel %vm574, %v1824, %v1825
      %v1887 = vsel %vm574, %v1855, %v1824
      %vm1888 = vcmp.lt.s32.totalorder %v446, 240
      %vm1889 = vcmp.lt.s32.totalorder %v447, 240
      %vm1890 = vcmp.lt.s32.totalorder %v448, 240
      %vm1891 = vcmp.lt.s32.totalorder %v449, 240
      %vm1892 = vcmp.lt.s32.totalorder %v450, 240
      %vm1893 = vcmp.lt.s32.totalorder %v451, 240
      %vm1894 = vcmp.lt.s32.totalorder %v452, 240
      %vm1895 = vcmp.lt.s32.totalorder %v453, 240
      %vm1896 = vcmp.lt.s32.totalorder %v454, 240
      %vm1897 = vcmp.lt.s32.totalorder %v455, 240
      %vm1898 = vcmp.lt.s32.totalorder %v456, 240
      %vm1899 = vcmp.lt.s32.totalorder %v457, 240
      %vm1900 = vcmp.lt.s32.totalorder %v458, 240
      %vm1901 = vcmp.lt.s32.totalorder %v459, 240
      %vm1902 = vcmp.lt.s32.totalorder %v460, 240
      %vm1903 = vcmp.lt.s32.totalorder %v461, 240
      %vm1904 = vcmp.lt.s32.totalorder %v462, 240
      %vm1905 = vcmp.lt.s32.totalorder %v463, 240
      %vm1906 = vcmp.lt.s32.totalorder %v464, 240
      %vm1907 = vcmp.lt.s32.totalorder %v465, 240
      %vm1908 = vcmp.lt.s32.totalorder %v466, 240
      %vm1909 = vcmp.lt.s32.totalorder %v467, 240
      %vm1910 = vcmp.lt.s32.totalorder %v468, 240
      %vm1911 = vcmp.lt.s32.totalorder %v469, 240
      %vm1912 = vcmp.lt.s32.totalorder %v470, 240
      %vm1913 = vcmp.lt.s32.totalorder %v471, 240
      %vm1914 = vcmp.lt.s32.totalorder %v472, 240
      %vm1915 = vcmp.lt.s32.totalorder %v473, 240
      %vm1916 = vcmp.lt.s32.totalorder %v474, 240
      %vm1917 = vcmp.lt.s32.totalorder %v475, 240
      %vm1918 = vcmp.lt.s32.totalorder %v476, 240
      %vm1919 = vcmp.lt.s32.totalorder %v477, 240
      %vm1920 = vmand %vm1888, %vm639
      %vm1921 = vmand %vm1889, %vm640
      %vm1922 = vmand %vm1890, %vm641
      %vm1923 = vmand %vm1891, %vm642
      %vm1924 = vmand %vm1892, %vm643
      %vm1925 = vmand %vm1893, %vm644
      %vm1926 = vmand %vm1894, %vm645
      %vm1927 = vmand %vm1895, %vm646
      %vm1928 = vmand %vm1896, %vm647
      %vm1929 = vmand %vm1897, %vm648
      %vm1930 = vmand %vm1898, %vm649
      %vm1931 = vmand %vm1899, %vm650
      %vm1932 = vmand %vm1900, %vm651
      %vm1933 = vmand %vm1901, %vm652
      %vm1934 = vmand %vm1902, %vm653
      %vm1935 = vmand %vm1903, %vm654
      %vm1936 = vmand %vm1904, %vm655
      %vm1937 = vmand %vm1905, %vm656
      %vm1938 = vmand %vm1906, %vm657
      %vm1939 = vmand %vm1907, %vm658
      %vm1940 = vmand %vm1908, %vm659
      %vm1941 = vmand %vm1909, %vm660
      %vm1942 = vmand %vm1910, %vm661
      %vm1943 = vmand %vm1911, %vm662
      %vm1944 = vmand %vm1912, %vm663
      %vm1945 = vmand %vm1913, %vm664
      %vm1946 = vmand %vm1914, %vm665
      %vm1947 = vmand %vm1915, %vm666
      %vm1948 = vmand %vm1916, %vm667
      %vm1949 = vmand %vm1917, %vm668
      %vm1950 = vmand %vm1918, %vm669
      %vm1951 = vmand %vm1919, %vm670
      %v1952 = vsel %vm1920, 1, 0
      %v1953 = vsel %vm1921, 1, 0
      %v1954 = vsel %vm1922, 1, 0
      %v1955 = vsel %vm1923, 1, 0
      %v1956 = vsel %vm1924, 1, 0
      %v1957 = vsel %vm1925, 1, 0
      %v1958 = vsel %vm1926, 1, 0
      %v1959 = vsel %vm1927, 1, 0
      %v1960 = vsel %vm1928, 1, 0
      %v1961 = vsel %vm1929, 1, 0
      %v1962 = vsel %vm1930, 1, 0
      %v1963 = vsel %vm1931, 1, 0
      %v1964 = vsel %vm1932, 1, 0
      %v1965 = vsel %vm1933, 1, 0
      %v1966 = vsel %vm1934, 1, 0
      %v1967 = vsel %vm1935, 1, 0
      %v1968 = vsel %vm1936, 1, 0
      %v1969 = vsel %vm1937, 1, 0
      %v1970 = vsel %vm1938, 1, 0
      %v1971 = vsel %vm1939, 1, 0
      %v1972 = vsel %vm1940, 1, 0
      %v1973 = vsel %vm1941, 1, 0
      %v1974 = vsel %vm1942, 1, 0
      %v1975 = vsel %vm1943, 1, 0
      %v1976 = vsel %vm1944, 1, 0
      %v1977 = vsel %vm1945, 1, 0
      %v1978 = vsel %vm1946, 1, 0
      %v1979 = vsel %vm1947, 1, 0
      %v1980 = vsel %vm1948, 1, 0
      %v1981 = vsel %vm1949, 1, 0
      %v1982 = vsel %vm1950, 1, 0
      %v1983 = vsel %vm1951, 1, 0
      %vm1984 = vcmp.eq.s32.totalorder %v1952, 1
      %vm1985 = vcmp.eq.s32.totalorder %v1953, 1
      %vm1986 = vcmp.eq.s32.totalorder %v1954, 1
      %vm1987 = vcmp.eq.s32.totalorder %v1955, 1
      %vm1988 = vcmp.eq.s32.totalorder %v1956, 1
      %vm1989 = vcmp.eq.s32.totalorder %v1957, 1
      %vm1990 = vcmp.eq.s32.totalorder %v1958, 1
      %vm1991 = vcmp.eq.s32.totalorder %v1959, 1
      %vm1992 = vcmp.eq.s32.totalorder %v1960, 1
      %vm1993 = vcmp.eq.s32.totalorder %v1961, 1
      %vm1994 = vcmp.eq.s32.totalorder %v1962, 1
      %vm1995 = vcmp.eq.s32.totalorder %v1963, 1
      %vm1996 = vcmp.eq.s32.totalorder %v1964, 1
      %vm1997 = vcmp.eq.s32.totalorder %v1965, 1
      %vm1998 = vcmp.eq.s32.totalorder %v1966, 1
      %vm1999 = vcmp.eq.s32.totalorder %v1967, 1
      %vm2000 = vcmp.eq.s32.totalorder %v1968, 1
      %vm2001 = vcmp.eq.s32.totalorder %v1969, 1
      %vm2002 = vcmp.eq.s32.totalorder %v1970, 1
      %vm2003 = vcmp.eq.s32.totalorder %v1971, 1
      %vm2004 = vcmp.eq.s32.totalorder %v1972, 1
      %vm2005 = vcmp.eq.s32.totalorder %v1973, 1
      %vm2006 = vcmp.eq.s32.totalorder %v1974, 1
      %vm2007 = vcmp.eq.s32.totalorder %v1975, 1
      %vm2008 = vcmp.eq.s32.totalorder %v1976, 1
      %vm2009 = vcmp.eq.s32.totalorder %v1977, 1
      %vm2010 = vcmp.eq.s32.totalorder %v1978, 1
      %vm2011 = vcmp.eq.s32.totalorder %v1979, 1
      %vm2012 = vcmp.eq.s32.totalorder %v1980, 1
      %vm2013 = vcmp.eq.s32.totalorder %v1981, 1
      %vm2014 = vcmp.eq.s32.totalorder %v1982, 1
      %vm2015 = vcmp.eq.s32.totalorder %v1983, 1
      %v2016 = vsel %vm1984, %v1885, 0.0
      %v2017 = vsel %vm1985, %v1884, 0.0
      %v2018 = vsel %vm1986, %v1883, 0.0
      %v2019 = vsel %vm1987, %v1882, 0.0
      %v2020 = vsel %vm1988, %v1881, 0.0
      %v2021 = vsel %vm1989, %v1880, 0.0
      %v2022 = vsel %vm1990, %v1879, 0.0
      %v2023 = vsel %vm1991, %v1878, 0.0
      %v2024 = vsel %vm1992, %v1877, 0.0
      %v2025 = vsel %vm1993, %v1876, 0.0
      %v2026 = vsel %vm1994, %v1875, 0.0
      %v2027 = vsel %vm1995, %v1874, 0.0
      %v2028 = vsel %vm1996, %v1873, 0.0
      %v2029 = vsel %vm1997, %v1872, 0.0
      %v2030 = vsel %vm1998, %v1871, 0.0
      %v2031 = vsel %vm1999, %v1870, 0.0
      %v2032 = vsel %vm2000, %v1869, 0.0
      %v2033 = vsel %vm2001, %v1868, 0.0
      %v2034 = vsel %vm2002, %v1867, 0.0
      %v2035 = vsel %vm2003, %v1866, 0.0
      %v2036 = vsel %vm2004, %v1865, 0.0
      %v2037 = vsel %vm2005, %v1864, 0.0
      %v2038 = vsel %vm2006, %v1863, 0.0
      %v2039 = vsel %vm2007, %v1862, 0.0
      %v2040 = vsel %vm2008, %v1861, 0.0
      %v2041 = vsel %vm2009, %v1860, 0.0
      %v2042 = vsel %vm2010, %v1859, 0.0
      %v2043 = vsel %vm2011, %v1858, 0.0
      %v2044 = vsel %vm2012, %v1857, 0.0
      %v2045 = vsel %vm2013, %v1856, 0.0
      %v2046 = vsel %vm2014, %v1887, 0.0
      %v2047 = vsel %vm2015, %v1886, 0.0
      %2048 = vst [vmem:[#allocation3 + $0x30] sm:$0xff] %v2016
      %2049 = vst [vmem:[#allocation3 + $0x80] sm:$0xff] %v2017
      %2050 = vst [vmem:[#allocation3 + $0xd0] sm:$0xff] %v2018
      %2051 = vst [vmem:[#allocation3 + $0x120] sm:$0xff] %v2019
      %2052 = vst [vmem:[#allocation3 + $0x170] sm:$0xff] %v2020
      %2053 = vst [vmem:[#allocation3 + $0x1c0] sm:$0xff] %v2021
      %2054 = vst [vmem:[#allocation3 + $0x210] sm:$0xff] %v2022
      %2055 = vst [vmem:[#allocation3 + $0x260] sm:$0xff] %v2023
      %2056 = vst [vmem:[#allocation3 + $0x2b0] sm:$0xff] %v2024
      %2057 = vst [vmem:[#allocation3 + $0x300] sm:$0xff] %v2025
      %2058 = vst [vmem:[#allocation3 + $0x350] sm:$0xff] %v2026
      %2059 = vst [vmem:[#allocation3 + $0x3a0] sm:$0xff] %v2027
      %2060 = vst [vmem:[#allocation3 + $0x3f0] sm:$0xff] %v2028
      %2061 = vst [vmem:[#allocation3 + $0x440] sm:$0xff] %v2029
      %2062 = vst [vmem:[#allocation3 + $0x490] sm:$0xff] %v2030
      %2063 = vst [vmem:[#allocation3 + $0x4e0] sm:$0xff] %v2031
      %2064 = vst [vmem:[#allocation3 + $0x530] sm:$0xff] %v2032
      %2065 = vst [vmem:[#allocation3 + $0x580] sm:$0xff] %v2033
      %2066 = vst [vmem:[#allocation3 + $0x5d0] sm:$0xff] %v2034
      %2067 = vst [vmem:[#allocation3 + $0x620] sm:$0xff] %v2035
      %2068 = vst [vmem:[#allocation3 + $0x670] sm:$0xff] %v2036
      %2069 = vst [vmem:[#allocation3 + $0x6c0] sm:$0xff] %v2037
      %2070 = vst [vmem:[#allocation3 + $0x710] sm:$0xff] %v2038
      %2071 = vst [vmem:[#allocation3 + $0x760] sm:$0xff] %v2039
      %2072 = vst [vmem:[#allocation3 + $0x7b0] sm:$0xff] %v2040
      %2073 = vst [vmem:[#allocation3 + $0x800] sm:$0xff] %v2041
      %2074 = vst [vmem:[#allocation3 + $0x850] sm:$0xff] %v2042
      %2075 = vst [vmem:[#allocation3 + $0x8a0] sm:$0xff] %v2043
      %2076 = vst [vmem:[#allocation3 + $0x8f0] sm:$0xff] %v2044
      %2077 = vst [vmem:[#allocation3 + $0x940] sm:$0xff] %v2045
      %2078 = vst [vmem:[#allocation3 + $0x990] sm:$0xff] %v2046
      %2079 = vst [vmem:[#allocation3 + $0x9e0] sm:$0xff] %v2047
      %v2080 = vld [vmem:[#allocation2] sm:$0xff]
      %v2081 = vld [vmem:[#allocation2 + $0x8] sm:$0xff]
      %v2082 = vld [vmem:[#allocation2 + $0x10] sm:$0xff]
      %v2083 = vld [vmem:[#allocation2 + $0x18] sm:$0xff]
      %v2084 = vld [vmem:[#allocation2 + $0x20] sm:$0xff]
      %v2085 = vld [vmem:[#allocation2 + $0x28] sm:$0xff]
      %v2086 = vld [vmem:[#allocation2 + $0x30] sm:$0xff]
      %v2087 = vld [vmem:[#allocation2 + $0x38] sm:$0xff]
      %v2088 = vld [vmem:[#allocation2 + $0x40] sm:$0xff]
      %v2089 = vld [vmem:[#allocation2 + $0x48] sm:$0xff]
      %v2090 = vld [vmem:[#allocation2 + $0x50] sm:$0xff]
      %v2091 = vld [vmem:[#allocation2 + $0x58] sm:$0xff]
      %v2092 = vld [vmem:[#allocation2 + $0x60] sm:$0xff]
      %v2093 = vld [vmem:[#allocation2 + $0x68] sm:$0xff]
      %v2094 = vld [vmem:[#allocation2 + $0x70] sm:$0xff]
      %v2095 = vld [vmem:[#allocation2 + $0x78] sm:$0xff]
      %v2096 = vld [vmem:[#allocation2 + $0x80] sm:$0xff]
      %v2097 = vld [vmem:[#allocation2 + $0x88] sm:$0xff]
      %v2098 = vld [vmem:[#allocation2 + $0x90] sm:$0xff]
      %v2099 = vld [vmem:[#allocation2 + $0x98] sm:$0xff]
      %v2100 = vld [vmem:[#allocation2 + $0xa0] sm:$0xff]
      %v2101 = vld [vmem:[#allocation2 + $0xa8] sm:$0xff]
      %v2102 = vld [vmem:[#allocation2 + $0xb0] sm:$0xff]
      %v2103 = vld [vmem:[#allocation2 + $0xb8] sm:$0xff]
      %v2104 = vld [vmem:[#allocation2 + $0xc0] sm:$0xff]
      %v2105 = vld [vmem:[#allocation2 + $0xc8] sm:$0xff]
      %v2106 = vld [vmem:[#allocation2 + $0xd0] sm:$0xff]
      %v2107 = vld [vmem:[#allocation2 + $0xd8] sm:$0xff]
      %v2108 = vld [vmem:[#allocation2 + $0xe0] sm:$0xff]
      %v2109 = vld [vmem:[#allocation2 + $0xe8] sm:$0xff]
      %v2110 = vld [vmem:[#allocation2 + $0xf0] sm:$0xff]
      %v2111 = vld [vmem:[#allocation2 + $0xf8] sm:$0xff]
      %v2112 = vsel %vm1888, 1, 0
      %v2113 = vsel %vm1889, 1, 0
      %v2114 = vsel %vm1890, 1, 0
      %v2115 = vsel %vm1891, 1, 0
      %v2116 = vsel %vm1892, 1, 0
      %v2117 = vsel %vm1893, 1, 0
      %v2118 = vsel %vm1894, 1, 0
      %v2119 = vsel %vm1895, 1, 0
      %v2120 = vsel %vm1896, 1, 0
      %v2121 = vsel %vm1897, 1, 0
      %v2122 = vsel %vm1898, 1, 0
      %v2123 = vsel %vm1899, 1, 0
      %v2124 = vsel %vm1900, 1, 0
      %v2125 = vsel %vm1901, 1, 0
      %v2126 = vsel %vm1902, 1, 0
      %v2127 = vsel %vm1903, 1, 0
      %v2128 = vsel %vm1904, 1, 0
      %v2129 = vsel %vm1905, 1, 0
      %v2130 = vsel %vm1906, 1, 0
      %v2131 = vsel %vm1907, 1, 0
      %v2132 = vsel %vm1908, 1, 0
      %v2133 = vsel %vm1909, 1, 0
      %v2134 = vsel %vm1910, 1, 0
      %v2135 = vsel %vm1911, 1, 0
      %v2136 = vsel %vm1912, 1, 0
      %v2137 = vsel %vm1913, 1, 0
      %v2138 = vsel %vm1914, 1, 0
      %v2139 = vsel %vm1915, 1, 0
      %v2140 = vsel %vm1916, 1, 0
      %v2141 = vsel %vm1917, 1, 0
      %v2142 = vsel %vm1918, 1, 0
      %v2143 = vsel %vm1919, 1, 0
      %vm2144 = vcmp.eq.s32.totalorder %v2112, 1
      %vm2145 = vcmp.eq.s32.totalorder %v2113, 1
      %vm2146 = vcmp.eq.s32.totalorder %v2114, 1
      %vm2147 = vcmp.eq.s32.totalorder %v2115, 1
      %vm2148 = vcmp.eq.s32.totalorder %v2116, 1
      %vm2149 = vcmp.eq.s32.totalorder %v2117, 1
      %vm2150 = vcmp.eq.s32.totalorder %v2118, 1
      %vm2151 = vcmp.eq.s32.totalorder %v2119, 1
      %vm2152 = vcmp.eq.s32.totalorder %v2120, 1
      %vm2153 = vcmp.eq.s32.totalorder %v2121, 1
      %vm2154 = vcmp.eq.s32.totalorder %v2122, 1
      %vm2155 = vcmp.eq.s32.totalorder %v2123, 1
      %vm2156 = vcmp.eq.s32.totalorder %v2124, 1
      %vm2157 = vcmp.eq.s32.totalorder %v2125, 1
      %vm2158 = vcmp.eq.s32.totalorder %v2126, 1
      %vm2159 = vcmp.eq.s32.totalorder %v2127, 1
      %vm2160 = vcmp.eq.s32.totalorder %v2128, 1
      %vm2161 = vcmp.eq.s32.totalorder %v2129, 1
      %vm2162 = vcmp.eq.s32.totalorder %v2130, 1
      %vm2163 = vcmp.eq.s32.totalorder %v2131, 1
      %vm2164 = vcmp.eq.s32.totalorder %v2132, 1
      %vm2165 = vcmp.eq.s32.totalorder %v2133, 1
      %vm2166 = vcmp.eq.s32.totalorder %v2134, 1
      %vm2167 = vcmp.eq.s32.totalorder %v2135, 1
      %vm2168 = vcmp.eq.s32.totalorder %v2136, 1
      %vm2169 = vcmp.eq.s32.totalorder %v2137, 1
      %vm2170 = vcmp.eq.s32.totalorder %v2138, 1
      %vm2171 = vcmp.eq.s32.totalorder %v2139, 1
      %vm2172 = vcmp.eq.s32.totalorder %v2140, 1
      %vm2173 = vcmp.eq.s32.totalorder %v2141, 1
      %vm2174 = vcmp.eq.s32.totalorder %v2142, 1
      %vm2175 = vcmp.eq.s32.totalorder %v2143, 1
      %v2176 = vsel %vm2144, %v2082, 0.0
      %v2177 = vsel %vm2145, %v2083, 0.0
      %v2178 = vsel %vm2146, %v2084, 0.0
      %v2179 = vsel %vm2147, %v2085, 0.0
      %v2180 = vsel %vm2148, %v2086, 0.0
      %v2181 = vsel %vm2149, %v2087, 0.0
      %v2182 = vsel %vm2150, %v2088, 0.0
      %v2183 = vsel %vm2151, %v2089, 0.0
      %v2184 = vsel %vm2152, %v2090, 0.0
      %v2185 = vsel %vm2153, %v2091, 0.0
      %v2186 = vsel %vm2154, %v2092, 0.0
      %v2187 = vsel %vm2155, %v2093, 0.0
      %v2188 = vsel %vm2156, %v2094, 0.0
      %v2189 = vsel %vm2157, %v2095, 0.0
      %v2190 = vsel %vm2158, %v2096, 0.0
      %v2191 = vsel %vm2159, %v2097, 0.0
      %v2192 = vsel %vm2160, %v2098, 0.0
      %v2193 = vsel %vm2161, %v2099, 0.0
      %v2194 = vsel %vm2162, %v2100, 0.0
      %v2195 = vsel %vm2163, %v2101, 0.0
      %v2196 = vsel %vm2164, %v2102, 0.0
      %v2197 = vsel %vm2165, %v2103, 0.0
      %v2198 = vsel %vm2166, %v2104, 0.0
      %v2199 = vsel %vm2167, %v2105, 0.0
      %v2200 = vsel %vm2168, %v2106, 0.0
      %v2201 = vsel %vm2169, %v2107, 0.0
      %v2202 = vsel %vm2170, %v2108, 0.0
      %v2203 = vsel %vm2171, %v2109, 0.0
      %v2204 = vsel %vm2172, %v2110, 0.0
      %v2205 = vsel %vm2173, %v2111, 0.0
      %v2206 = vsel %vm2174, %v2080, 0.0
      %v2207 = vsel %vm2175, %v2081, 0.0
      %2208 = vst [vmem:[#allocation3 + $0x38] sm:$0xff] %v2176
      %2209 = vst [vmem:[#allocation3 + $0x88] sm:$0xff] %v2177
      %2210 = vst [vmem:[#allocation3 + $0xd8] sm:$0xff] %v2178
      %2211 = vst [vmem:[#allocation3 + $0x128] sm:$0xff] %v2179
      %2212 = vst [vmem:[#allocation3 + $0x178] sm:$0xff] %v2180
      %2213 = vst [vmem:[#allocation3 + $0x1c8] sm:$0xff] %v2181
      %2214 = vst [vmem:[#allocation3 + $0x218] sm:$0xff] %v2182
      %2215 = vst [vmem:[#allocation3 + $0x268] sm:$0xff] %v2183
      %2216 = vst [vmem:[#allocation3 + $0x2b8] sm:$0xff] %v2184
      %2217 = vst [vmem:[#allocation3 + $0x308] sm:$0xff] %v2185
      %2218 = vst [vmem:[#allocation3 + $0x358] sm:$0xff] %v2186
      %2219 = vst [vmem:[#allocation3 + $0x3a8] sm:$0xff] %v2187
      %2220 = vst [vmem:[#allocation3 + $0x3f8] sm:$0xff] %v2188
      %2221 = vst [vmem:[#allocation3 + $0x448] sm:$0xff] %v2189
      %2222 = vst [vmem:[#allocation3 + $0x498] sm:$0xff] %v2190
      %2223 = vst [vmem:[#allocation3 + $0x4e8] sm:$0xff] %v2191
      %2224 = vst [vmem:[#allocation3 + $0x538] sm:$0xff] %v2192
      %2225 = vst [vmem:[#allocation3 + $0x588] sm:$0xff] %v2193
      %2226 = vst [vmem:[#allocation3 + $0x5d8] sm:$0xff] %v2194
      %2227 = vst [vmem:[#allocation3 + $0x628] sm:$0xff] %v2195
      %2228 = vst [vmem:[#allocation3 + $0x678] sm:$0xff] %v2196
      %2229 = vst [vmem:[#allocation3 + $0x6c8] sm:$0xff] %v2197
      %2230 = vst [vmem:[#allocation3 + $0x718] sm:$0xff] %v2198
      %2231 = vst [vmem:[#allocation3 + $0x768] sm:$0xff] %v2199
      %2232 = vst [vmem:[#allocation3 + $0x7b8] sm:$0xff] %v2200
      %2233 = vst [vmem:[#allocation3 + $0x808] sm:$0xff] %v2201
      %2234 = vst [vmem:[#allocation3 + $0x858] sm:$0xff] %v2202
      %2235 = vst [vmem:[#allocation3 + $0x8a8] sm:$0xff] %v2203
      %2236 = vst [vmem:[#allocation3 + $0x8f8] sm:$0xff] %v2204
      %2237 = vst [vmem:[#allocation3 + $0x948] sm:$0xff] %v2205
      %2238 = vst [vmem:[#allocation3 + $0x998] sm:$0xff] %v2206
      %2239 = vst [vmem:[#allocation3 + $0x9e8] sm:$0xff] %v2207
      %v2240 = vld [vmem:[#allocation2] sm:$0xff]
      %v2241 = vld [vmem:[#allocation2 + $0x8] sm:$0xff]
      %v2242 = vld [vmem:[#allocation2 + $0x10] sm:$0xff]
      %v2243 = vld [vmem:[#allocation2 + $0x18] sm:$0xff]
      %v2244 = vld [vmem:[#allocation2 + $0x20] sm:$0xff]
      %v2245 = vld [vmem:[#allocation2 + $0x28] sm:$0xff]
      %v2246 = vld [vmem:[#allocation2 + $0x30] sm:$0xff]
      %v2247 = vld [vmem:[#allocation2 + $0x38] sm:$0xff]
      %v2248 = vld [vmem:[#allocation2 + $0x40] sm:$0xff]
      %v2249 = vld [vmem:[#allocation2 + $0x48] sm:$0xff]
      %v2250 = vld [vmem:[#allocation2 + $0x50] sm:$0xff]
      %v2251 = vld [vmem:[#allocation2 + $0x58] sm:$0xff]
      %v2252 = vld [vmem:[#allocation2 + $0x60] sm:$0xff]
      %v2253 = vld [vmem:[#allocation2 + $0x68] sm:$0xff]
      %v2254 = vld [vmem:[#allocation2 + $0x70] sm:$0xff]
      %v2255 = vld [vmem:[#allocation2 + $0x78] sm:$0xff]
      %v2256 = vld [vmem:[#allocation2 + $0x80] sm:$0xff]
      %v2257 = vld [vmem:[#allocation2 + $0x88] sm:$0xff]
      %v2258 = vld [vmem:[#allocation2 + $0x90] sm:$0xff]
      %v2259 = vld [vmem:[#allocation2 + $0x98] sm:$0xff]
      %v2260 = vld [vmem:[#allocation2 + $0xa0] sm:$0xff]
      %v2261 = vld [vmem:[#allocation2 + $0xa8] sm:$0xff]
      %v2262 = vld [vmem:[#allocation2 + $0xb0] sm:$0xff]
      %v2263 = vld [vmem:[#allocation2 + $0xb8] sm:$0xff]
      %v2264 = vld [vmem:[#allocation2 + $0xc0] sm:$0xff]
      %v2265 = vld [vmem:[#allocation2 + $0xc8] sm:$0xff]
      %v2266 = vld [vmem:[#allocation2 + $0xd0] sm:$0xff]
      %v2267 = vld [vmem:[#allocation2 + $0xd8] sm:$0xff]
      %v2268 = vld [vmem:[#allocation2 + $0xe0] sm:$0xff]
      %v2269 = vld [vmem:[#allocation2 + $0xe8] sm:$0xff]
      %v2270 = vld [vmem:[#allocation2 + $0xf0] sm:$0xff]
      %v2271 = vld [vmem:[#allocation2 + $0xf8] sm:$0xff]
      %v2272 = vrot.slane %v2240, 1
      %v2273 = vrot.slane %v2241, 1
      %v2274 = vrot.slane %v2242, 1
      %v2275 = vrot.slane %v2243, 1
      %v2276 = vrot.slane %v2244, 1
      %v2277 = vrot.slane %v2245, 1
      %v2278 = vrot.slane %v2246, 1
      %v2279 = vrot.slane %v2247, 1
      %v2280 = vrot.slane %v2248, 1
      %v2281 = vrot.slane %v2249, 1
      %v2282 = vrot.slane %v2250, 1
      %v2283 = vrot.slane %v2251, 1
      %v2284 = vrot.slane %v2252, 1
      %v2285 = vrot.slane %v2253, 1
      %v2286 = vrot.slane %v2254, 1
      %v2287 = vrot.slane %v2255, 1
      %v2288 = vrot.slane %v2256, 1
      %v2289 = vrot.slane %v2257, 1
      %v2290 = vrot.slane %v2258, 1
      %v2291 = vrot.slane %v2259, 1
      %v2292 = vrot.slane %v2260, 1
      %v2293 = vrot.slane %v2261, 1
      %v2294 = vrot.slane %v2262, 1
      %v2295 = vrot.slane %v2263, 1
      %v2296 = vrot.slane %v2264, 1
      %v2297 = vrot.slane %v2265, 1
      %v2298 = vrot.slane %v2266, 1
      %v2299 = vrot.slane %v2267, 1
      %v2300 = vrot.slane %v2268, 1
      %v2301 = vrot.slane %v2269, 1
      %v2302 = vrot.slane %v2270, 1
      %v2303 = vrot.slane %v2271, 1
      %v2304 = vsel %vm1055, %v2302, %v2303
      %v2305 = vsel %vm1055, %v2301, %v2302
      %v2306 = vsel %vm1055, %v2300, %v2301
      %v2307 = vsel %vm1055, %v2299, %v2300
      %v2308 = vsel %vm1055, %v2298, %v2299
      %v2309 = vsel %vm1055, %v2297, %v2298
      %v2310 = vsel %vm1055, %v2296, %v2297
      %v2311 = vsel %vm1055, %v2295, %v2296
      %v2312 = vsel %vm1055, %v2294, %v2295
      %v2313 = vsel %vm1055, %v2293, %v2294
      %v2314 = vsel %vm1055, %v2292, %v2293
      %v2315 = vsel %vm1055, %v2291, %v2292
      %v2316 = vsel %vm1055, %v2290, %v2291
      %v2317 = vsel %vm1055, %v2289, %v2290
      %v2318 = vsel %vm1055, %v2288, %v2289
      %v2319 = vsel %vm1055, %v2287, %v2288
      %v2320 = vsel %vm1055, %v2286, %v2287
      %v2321 = vsel %vm1055, %v2285, %v2286
      %v2322 = vsel %vm1055, %v2284, %v2285
      %v2323 = vsel %vm1055, %v2283, %v2284
      %v2324 = vsel %vm1055, %v2282, %v2283
      %v2325 = vsel %vm1055, %v2281, %v2282
      %v2326 = vsel %vm1055, %v2280, %v2281
      %v2327 = vsel %vm1055, %v2279, %v2280
      %v2328 = vsel %vm1055, %v2278, %v2279
      %v2329 = vsel %vm1055, %v2277, %v2278
      %v2330 = vsel %vm1055, %v2276, %v2277
      %v2331 = vsel %vm1055, %v2275, %v2276
      %v2332 = vsel %vm1055, %v2274, %v2275
      %v2333 = vsel %vm1055, %v2273, %v2274
      %v2334 = vsel %vm1055, %v2272, %v2273
      %v2335 = vsel %vm1055, %v2303, %v2272
      %vm2336 = vmand %vm1888, %vm1088
      %vm2337 = vmand %vm1889, %vm1089
      %vm2338 = vmand %vm1890, %vm1090
      %vm2339 = vmand %vm1891, %vm1091
      %vm2340 = vmand %vm1892, %vm1092
      %vm2341 = vmand %vm1893, %vm1093
      %vm2342 = vmand %vm1894, %vm1094
      %vm2343 = vmand %vm1895, %vm1095
      %vm2344 = vmand %vm1896, %vm1096
      %vm2345 = vmand %vm1897, %vm1097
      %vm2346 = vmand %vm1898, %vm1098
      %vm2347 = vmand %vm1899, %vm1099
      %vm2348 = vmand %vm1900, %vm1100
      %vm2349 = vmand %vm1901, %vm1101
      %vm2350 = vmand %vm1902, %vm1102
      %vm2351 = vmand %vm1903, %vm1103
      %vm2352 = vmand %vm1904, %vm1104
      %vm2353 = vmand %vm1905, %vm1105
      %vm2354 = vmand %vm1906, %vm1106
      %vm2355 = vmand %vm1907, %vm1107
      %vm2356 = vmand %vm1908, %vm1108
      %vm2357 = vmand %vm1909, %vm1109
      %vm2358 = vmand %vm1910, %vm1110
      %vm2359 = vmand %vm1911, %vm1111
      %vm2360 = vmand %vm1912, %vm1112
      %vm2361 = vmand %vm1913, %vm1113
      %vm2362 = vmand %vm1914, %vm1114
      %vm2363 = vmand %vm1915, %vm1115
      %vm2364 = vmand %vm1916, %vm1116
      %vm2365 = vmand %vm1917, %vm1117
      %vm2366 = vmand %vm1918, %vm1118
      %vm2367 = vmand %vm1919, %vm1119
      %v2368 = vsel %vm2336, 1, 0
      %v2369 = vsel %vm2337, 1, 0
      %v2370 = vsel %vm2338, 1, 0
      %v2371 = vsel %vm2339, 1, 0
      %v2372 = vsel %vm2340, 1, 0
      %v2373 = vsel %vm2341, 1, 0
      %v2374 = vsel %vm2342, 1, 0
      %v2375 = vsel %vm2343, 1, 0
      %v2376 = vsel %vm2344, 1, 0
      %v2377 = vsel %vm2345, 1, 0
      %v2378 = vsel %vm2346, 1, 0
      %v2379 = vsel %vm2347, 1, 0
      %v2380 = vsel %vm2348, 1, 0
      %v2381 = vsel %vm2349, 1, 0
      %v2382 = vsel %vm2350, 1, 0
      %v2383 = vsel %vm2351, 1, 0
      %v2384 = vsel %vm2352, 1, 0
      %v2385 = vsel %vm2353, 1, 0
      %v2386 = vsel %vm2354, 1, 0
      %v2387 = vsel %vm2355, 1, 0
      %v2388 = vsel %vm2356, 1, 0
      %v2389 = vsel %vm2357, 1, 0
      %v2390 = vsel %vm2358, 1, 0
      %v2391 = vsel %vm2359, 1, 0
      %v2392 = vsel %vm2360, 1, 0
      %v2393 = vsel %vm2361, 1, 0
      %v2394 = vsel %vm2362, 1, 0
      %v2395 = vsel %vm2363, 1, 0
      %v2396 = vsel %vm2364, 1, 0
      %v2397 = vsel %vm2365, 1, 0
      %v2398 = vsel %vm2366, 1, 0
      %v2399 = vsel %vm2367, 1, 0
      %vm2400 = vcmp.eq.s32.totalorder %v2368, 1
      %vm2401 = vcmp.eq.s32.totalorder %v2369, 1
      %vm2402 = vcmp.eq.s32.totalorder %v2370, 1
      %vm2403 = vcmp.eq.s32.totalorder %v2371, 1
      %vm2404 = vcmp.eq.s32.totalorder %v2372, 1
      %vm2405 = vcmp.eq.s32.totalorder %v2373, 1
      %vm2406 = vcmp.eq.s32.totalorder %v2374, 1
      %vm2407 = vcmp.eq.s32.totalorder %v2375, 1
      %vm2408 = vcmp.eq.s32.totalorder %v2376, 1
      %vm2409 = vcmp.eq.s32.totalorder %v2377, 1
      %vm2410 = vcmp.eq.s32.totalorder %v2378, 1
      %vm2411 = vcmp.eq.s32.totalorder %v2379, 1
      %vm2412 = vcmp.eq.s32.totalorder %v2380, 1
      %vm2413 = vcmp.eq.s32.totalorder %v2381, 1
      %vm2414 = vcmp.eq.s32.totalorder %v2382, 1
      %vm2415 = vcmp.eq.s32.totalorder %v2383, 1
      %vm2416 = vcmp.eq.s32.totalorder %v2384, 1
      %vm2417 = vcmp.eq.s32.totalorder %v2385, 1
      %vm2418 = vcmp.eq.s32.totalorder %v2386, 1
      %vm2419 = vcmp.eq.s32.totalorder %v2387, 1
      %vm2420 = vcmp.eq.s32.totalorder %v2388, 1
      %vm2421 = vcmp.eq.s32.totalorder %v2389, 1
      %vm2422 = vcmp.eq.s32.totalorder %v2390, 1
      %vm2423 = vcmp.eq.s32.totalorder %v2391, 1
      %vm2424 = vcmp.eq.s32.totalorder %v2392, 1
      %vm2425 = vcmp.eq.s32.totalorder %v2393, 1
      %vm2426 = vcmp.eq.s32.totalorder %v2394, 1
      %vm2427 = vcmp.eq.s32.totalorder %v2395, 1
      %vm2428 = vcmp.eq.s32.totalorder %v2396, 1
      %vm2429 = vcmp.eq.s32.totalorder %v2397, 1
      %vm2430 = vcmp.eq.s32.totalorder %v2398, 1
      %vm2431 = vcmp.eq.s32.totalorder %v2399, 1
      %v2432 = vsel %vm2400, %v2332, 0.0
      %v2433 = vsel %vm2401, %v2331, 0.0
      %v2434 = vsel %vm2402, %v2330, 0.0
      %v2435 = vsel %vm2403, %v2329, 0.0
      %v2436 = vsel %vm2404, %v2328, 0.0
      %v2437 = vsel %vm2405, %v2327, 0.0
      %v2438 = vsel %vm2406, %v2326, 0.0
      %v2439 = vsel %vm2407, %v2325, 0.0
      %v2440 = vsel %vm2408, %v2324, 0.0
      %v2441 = vsel %vm2409, %v2323, 0.0
      %v2442 = vsel %vm2410, %v2322, 0.0
      %v2443 = vsel %vm2411, %v2321, 0.0
      %v2444 = vsel %vm2412, %v2320, 0.0
      %v2445 = vsel %vm2413, %v2319, 0.0
      %v2446 = vsel %vm2414, %v2318, 0.0
      %v2447 = vsel %vm2415, %v2317, 0.0
      %v2448 = vsel %vm2416, %v2316, 0.0
      %v2449 = vsel %vm2417, %v2315, 0.0
      %v2450 = vsel %vm2418, %v2314, 0.0
      %v2451 = vsel %vm2419, %v2313, 0.0
      %v2452 = vsel %vm2420, %v2312, 0.0
      %v2453 = vsel %vm2421, %v2311, 0.0
      %v2454 = vsel %vm2422, %v2310, 0.0
      %v2455 = vsel %vm2423, %v2309, 0.0
      %v2456 = vsel %vm2424, %v2308, 0.0
      %v2457 = vsel %vm2425, %v2307, 0.0
      %v2458 = vsel %vm2426, %v2306, 0.0
      %v2459 = vsel %vm2427, %v2305, 0.0
      %v2460 = vsel %vm2428, %v2304, 0.0
      %v2461 = vsel %vm2429, %v2335, 0.0
      %v2462 = vsel %vm2430, %v2334, 0.0
      %v2463 = vsel %vm2431, %v2333, 0.0
      %2464 = vst [vmem:[#allocation3 + $0x40] sm:$0xff] %v2432
      %2465 = vst [vmem:[#allocation3 + $0x90] sm:$0xff] %v2433
      %2466 = vst [vmem:[#allocation3 + $0xe0] sm:$0xff] %v2434
      %2467 = vst [vmem:[#allocation3 + $0x130] sm:$0xff] %v2435
      %2468 = vst [vmem:[#allocation3 + $0x180] sm:$0xff] %v2436
      %2469 = vst [vmem:[#allocation3 + $0x1d0] sm:$0xff] %v2437
      %2470 = vst [vmem:[#allocation3 + $0x220] sm:$0xff] %v2438
      %2471 = vst [vmem:[#allocation3 + $0x270] sm:$0xff] %v2439
      %2472 = vst [vmem:[#allocation3 + $0x2c0] sm:$0xff] %v2440
      %2473 = vst [vmem:[#allocation3 + $0x310] sm:$0xff] %v2441
      %2474 = vst [vmem:[#allocation3 + $0x360] sm:$0xff] %v2442
      %2475 = vst [vmem:[#allocation3 + $0x3b0] sm:$0xff] %v2443
      %2476 = vst [vmem:[#allocation3 + $0x400] sm:$0xff] %v2444
      %2477 = vst [vmem:[#allocation3 + $0x450] sm:$0xff] %v2445
      %2478 = vst [vmem:[#allocation3 + $0x4a0] sm:$0xff] %v2446
      %2479 = vst [vmem:[#allocation3 + $0x4f0] sm:$0xff] %v2447
      %2480 = vst [vmem:[#allocation3 + $0x540] sm:$0xff] %v2448
      %2481 = vst [vmem:[#allocation3 + $0x590] sm:$0xff] %v2449
      %2482 = vst [vmem:[#allocation3 + $0x5e0] sm:$0xff] %v2450
      %2483 = vst [vmem:[#allocation3 + $0x630] sm:$0xff] %v2451
      %2484 = vst [vmem:[#allocation3 + $0x680] sm:$0xff] %v2452
      %2485 = vst [vmem:[#allocation3 + $0x6d0] sm:$0xff] %v2453
      %2486 = vst [vmem:[#allocation3 + $0x720] sm:$0xff] %v2454
      %2487 = vst [vmem:[#allocation3 + $0x770] sm:$0xff] %v2455
      %2488 = vst [vmem:[#allocation3 + $0x7c0] sm:$0xff] %v2456
      %2489 = vst [vmem:[#allocation3 + $0x810] sm:$0xff] %v2457
      %2490 = vst [vmem:[#allocation3 + $0x860] sm:$0xff] %v2458
      %2491 = vst [vmem:[#allocation3 + $0x8b0] sm:$0xff] %v2459
      %2492 = vst [vmem:[#allocation3 + $0x900] sm:$0xff] %v2460
      %2493 = vst [vmem:[#allocation3 + $0x950] sm:$0xff] %v2461
      %2494 = vst [vmem:[#allocation3 + $0x9a0] sm:$0xff] %v2462
      %2495 = vst [vmem:[#allocation3 + $0x9f0] sm:$0xff] %v2463
      %v2496 = vld [vmem:[%s239] sm:$0xff]
      %v2497 = vld [vmem:[%s239 + $0x8] sm:$0xff]
      %v2498 = vld [vmem:[%s239 + $0x10] sm:$0xff]
      %v2499 = vld [vmem:[%s239 + $0x18] sm:$0xff]
      %v2500 = vld [vmem:[%s239 + $0x20] sm:$0xff]
      %v2501 = vld [vmem:[%s239 + $0x28] sm:$0xff]
      %v2502 = vld [vmem:[%s239 + $0x30] sm:$0xff]
      %v2503 = vld [vmem:[%s239 + $0x38] sm:$0xff]
      %v2504 = vld [vmem:[%s239 + $0x40] sm:$0xff]
      %v2505 = vld [vmem:[%s239 + $0x48] sm:$0xff]
      %v2506 = vld [vmem:[%s239 + $0x50] sm:$0xff]
      %v2507 = vld [vmem:[%s239 + $0x58] sm:$0xff]
      %v2508 = vld [vmem:[%s239 + $0x60] sm:$0xff]
      %v2509 = vld [vmem:[%s239 + $0x68] sm:$0xff]
      %v2510 = vld [vmem:[%s239 + $0x70] sm:$0xff]
      %v2511 = vld [vmem:[%s239 + $0x78] sm:$0xff]
      %v2512 = vld [vmem:[%s239 + $0x80] sm:$0xff]
      %v2513 = vld [vmem:[%s239 + $0x88] sm:$0xff]
      %v2514 = vld [vmem:[%s239 + $0x90] sm:$0xff]
      %v2515 = vld [vmem:[%s239 + $0x98] sm:$0xff]
      %v2516 = vld [vmem:[%s239 + $0xa0] sm:$0xff]
      %v2517 = vld [vmem:[%s239 + $0xa8] sm:$0xff]
      %v2518 = vld [vmem:[%s239 + $0xb0] sm:$0xff]
      %v2519 = vld [vmem:[%s239 + $0xb8] sm:$0xff]
      %v2520 = vld [vmem:[%s239 + $0xc0] sm:$0xff]
      %v2521 = vld [vmem:[%s239 + $0xc8] sm:$0xff]
      %v2522 = vld [vmem:[%s239 + $0xd0] sm:$0xff]
      %v2523 = vld [vmem:[%s239 + $0xd8] sm:$0xff]
      %v2524 = vld [vmem:[%s239 + $0xe0] sm:$0xff]
      %v2525 = vld [vmem:[%s239 + $0xe8] sm:$0xff]
      %v2526 = vld [vmem:[%s239 + $0xf0] sm:$0xff]
      %v2527 = vld [vmem:[%s239 + $0xf8] sm:$0xff]
      %2528 = vst [vmem:[#allocation3 + $0x48] sm:$0xff] %v2496
      %2529 = vst [vmem:[#allocation3 + $0x98] sm:$0xff] %v2497
      %2530 = vst [vmem:[#allocation3 + $0xe8] sm:$0xff] %v2498
      %2531 = vst [vmem:[#allocation3 + $0x138] sm:$0xff] %v2499
      %2532 = vst [vmem:[#allocation3 + $0x188] sm:$0xff] %v2500
      %2533 = vst [vmem:[#allocation3 + $0x1d8] sm:$0xff] %v2501
      %2534 = vst [vmem:[#allocation3 + $0x228] sm:$0xff] %v2502
      %2535 = vst [vmem:[#allocation3 + $0x278] sm:$0xff] %v2503
      %2536 = vst [vmem:[#allocation3 + $0x2c8] sm:$0xff] %v2504
      %2537 = vst [vmem:[#allocation3 + $0x318] sm:$0xff] %v2505
      %2538 = vst [vmem:[#allocation3 + $0x368] sm:$0xff] %v2506
      %2539 = vst [vmem:[#allocation3 + $0x3b8] sm:$0xff] %v2507
      %2540 = vst [vmem:[#allocation3 + $0x408] sm:$0xff] %v2508
      %2541 = vst [vmem:[#allocation3 + $0x458] sm:$0xff] %v2509
      %2542 = vst [vmem:[#allocation3 + $0x4a8] sm:$0xff] %v2510
      %2543 = vst [vmem:[#allocation3 + $0x4f8] sm:$0xff] %v2511
      %2544 = vst [vmem:[#allocation3 + $0x548] sm:$0xff] %v2512
      %2545 = vst [vmem:[#allocation3 + $0x598] sm:$0xff] %v2513
      %2546 = vst [vmem:[#allocation3 + $0x5e8] sm:$0xff] %v2514
      %2547 = vst [vmem:[#allocation3 + $0x638] sm:$0xff] %v2515
      %2548 = vst [vmem:[#allocation3 + $0x688] sm:$0xff] %v2516
      %2549 = vst [vmem:[#allocation3 + $0x6d8] sm:$0xff] %v2517
      %2550 = vst [vmem:[#allocation3 + $0x728] sm:$0xff] %v2518
      %2551 = vst [vmem:[#allocation3 + $0x778] sm:$0xff] %v2519
      %2552 = vst [vmem:[#allocation3 + $0x7c8] sm:$0xff] %v2520
      %2553 = vst [vmem:[#allocation3 + $0x818] sm:$0xff] %v2521
      %2554 = vst [vmem:[#allocation3 + $0x868] sm:$0xff] %v2522
      %2555 = vst [vmem:[#allocation3 + $0x8b8] sm:$0xff] %v2523
      %2556 = vst [vmem:[#allocation3 + $0x908] sm:$0xff] %v2524
      %2557 = vst [vmem:[#allocation3 + $0x958] sm:$0xff] %v2525
      %2558 = vst [vmem:[#allocation3 + $0x9a8] sm:$0xff] %v2526
      %2559 = vst [vmem:[#allocation3 + $0x9f8] sm:$0xff] %v2527
      %v2560 = vld [vmem:[#allocation3] sm:$0xff]
      %v2561 = vld [vmem:[#allocation3 + $0x8] sm:$0xff]
      %v2562 = vld [vmem:[#allocation3 + $0x10] sm:$0xff]
      %v2563 = vld [vmem:[#allocation3 + $0x18] sm:$0xff]
      %v2564 = vld [vmem:[#allocation3 + $0x20] sm:$0xff]
      %v2565 = vld [vmem:[#allocation3 + $0x28] sm:$0xff]
      %v2566 = vld [vmem:[#allocation3 + $0x30] sm:$0xff]
      %v2567 = vld [vmem:[#allocation3 + $0x38] sm:$0xff]
      %v2568 = vld [vmem:[#allocation3 + $0x40] sm:$0xff]
      %v2569 = vld [vmem:[#allocation3 + $0x48] sm:$0xff]
      %v2570 = vld [vmem:[#allocation3 + $0x50] sm:$0xff]
      %v2571 = vld [vmem:[#allocation3 + $0x58] sm:$0xff]
      %v2572 = vld [vmem:[#allocation3 + $0x60] sm:$0xff]
      %v2573 = vld [vmem:[#allocation3 + $0x68] sm:$0xff]
      %v2574 = vld [vmem:[#allocation3 + $0x70] sm:$0xff]
      %v2575 = vld [vmem:[#allocation3 + $0x78] sm:$0xff]
      %v2576 = vld [vmem:[#allocation3 + $0x80] sm:$0xff]
      %v2577 = vld [vmem:[#allocation3 + $0x88] sm:$0xff]
      %v2578 = vld [vmem:[#allocation3 + $0x90] sm:$0xff]
      %v2579 = vld [vmem:[#allocation3 + $0x98] sm:$0xff]
      %v2580 = vld [vmem:[#allocation3 + $0xa0] sm:$0xff]
      %v2581 = vld [vmem:[#allocation3 + $0xa8] sm:$0xff]
      %v2582 = vld [vmem:[#allocation3 + $0xb0] sm:$0xff]
      %v2583 = vld [vmem:[#allocation3 + $0xb8] sm:$0xff]
      %v2584 = vld [vmem:[#allocation3 + $0xc0] sm:$0xff]
      %v2585 = vld [vmem:[#allocation3 + $0xc8] sm:$0xff]
      %v2586 = vld [vmem:[#allocation3 + $0xd0] sm:$0xff]
      %v2587 = vld [vmem:[#allocation3 + $0xd8] sm:$0xff]
      %v2588 = vld [vmem:[#allocation3 + $0xe0] sm:$0xff]
      %v2589 = vld [vmem:[#allocation3 + $0xe8] sm:$0xff]
      %v2590 = vld [vmem:[#allocation3 + $0xf0] sm:$0xff]
      %v2591 = vld [vmem:[#allocation3 + $0xf8] sm:$0xff]
      %v2592 = vld [vmem:[#allocation3 + $0x100] sm:$0xff]
      %v2593 = vld [vmem:[#allocation3 + $0x108] sm:$0xff]
      %v2594 = vld [vmem:[#allocation3 + $0x110] sm:$0xff]
      %v2595 = vld [vmem:[#allocation3 + $0x118] sm:$0xff]
      %v2596 = vld [vmem:[#allocation3 + $0x120] sm:$0xff]
      %v2597 = vld [vmem:[#allocation3 + $0x128] sm:$0xff]
      %v2598 = vld [vmem:[#allocation3 + $0x130] sm:$0xff]
      %v2599 = vld [vmem:[#allocation3 + $0x138] sm:$0xff]
      %v2600 = vld [vmem:[#allocation3 + $0x140] sm:$0xff]
      %v2601 = vld [vmem:[#allocation3 + $0x148] sm:$0xff]
      %v2602 = vld [vmem:[#allocation3 + $0x150] sm:$0xff]
      %v2603 = vld [vmem:[#allocation3 + $0x158] sm:$0xff]
      %v2604 = vld [vmem:[#allocation3 + $0x160] sm:$0xff]
      %v2605 = vld [vmem:[#allocation3 + $0x168] sm:$0xff]
      %v2606 = vld [vmem:[#allocation3 + $0x170] sm:$0xff]
      %v2607 = vld [vmem:[#allocation3 + $0x178] sm:$0xff]
      %v2608 = vld [vmem:[#allocation3 + $0x180] sm:$0xff]
      %v2609 = vld [vmem:[#allocation3 + $0x188] sm:$0xff]
      %v2610 = vld [vmem:[#allocation3 + $0x190] sm:$0xff]
      %v2611 = vld [vmem:[#allocation3 + $0x198] sm:$0xff]
      %v2612 = vld [vmem:[#allocation3 + $0x1a0] sm:$0xff]
      %v2613 = vld [vmem:[#allocation3 + $0x1a8] sm:$0xff]
      %v2614 = vld [vmem:[#allocation3 + $0x1b0] sm:$0xff]
      %v2615 = vld [vmem:[#allocation3 + $0x1b8] sm:$0xff]
      %v2616 = vld [vmem:[#allocation3 + $0x1c0] sm:$0xff]
      %v2617 = vld [vmem:[#allocation3 + $0x1c8] sm:$0xff]
      %v2618 = vld [vmem:[#allocation3 + $0x1d0] sm:$0xff]
      %v2619 = vld [vmem:[#allocation3 + $0x1d8] sm:$0xff]
      %v2620 = vld [vmem:[#allocation3 + $0x1e0] sm:$0xff]
      %v2621 = vld [vmem:[#allocation3 + $0x1e8] sm:$0xff]
      %v2622 = vld [vmem:[#allocation3 + $0x1f0] sm:$0xff]
      %v2623 = vld [vmem:[#allocation3 + $0x1f8] sm:$0xff]
      %v2624 = vld [vmem:[#allocation3 + $0x200] sm:$0xff]
      %v2625 = vld [vmem:[#allocation3 + $0x208] sm:$0xff]
      %v2626 = vld [vmem:[#allocation3 + $0x210] sm:$0xff]
      %v2627 = vld [vmem:[#allocation3 + $0x218] sm:$0xff]
      %v2628 = vld [vmem:[#allocation3 + $0x220] sm:$0xff]
      %v2629 = vld [vmem:[#allocation3 + $0x228] sm:$0xff]
      %v2630 = vld [vmem:[#allocation3 + $0x230] sm:$0xff]
      %v2631 = vld [vmem:[#allocation3 + $0x238] sm:$0xff]
      %v2632 = vld [vmem:[#allocation3 + $0x240] sm:$0xff]
      %v2633 = vld [vmem:[#allocation3 + $0x248] sm:$0xff]
      %v2634 = vld [vmem:[#allocation3 + $0x250] sm:$0xff]
      %v2635 = vld [vmem:[#allocation3 + $0x258] sm:$0xff]
      %v2636 = vld [vmem:[#allocation3 + $0x260] sm:$0xff]
      %v2637 = vld [vmem:[#allocation3 + $0x268] sm:$0xff]
      %v2638 = vld [vmem:[#allocation3 + $0x270] sm:$0xff]
      %v2639 = vld [vmem:[#allocation3 + $0x278] sm:$0xff]
      %v2640 = vld [vmem:[#allocation3 + $0x280] sm:$0xff]
      %v2641 = vld [vmem:[#allocation3 + $0x288] sm:$0xff]
      %v2642 = vld [vmem:[#allocation3 + $0x290] sm:$0xff]
      %v2643 = vld [vmem:[#allocation3 + $0x298] sm:$0xff]
      %v2644 = vld [vmem:[#allocation3 + $0x2a0] sm:$0xff]
      %v2645 = vld [vmem:[#allocation3 + $0x2a8] sm:$0xff]
      %v2646 = vld [vmem:[#allocation3 + $0x2b0] sm:$0xff]
      %v2647 = vld [vmem:[#allocation3 + $0x2b8] sm:$0xff]
      %v2648 = vld [vmem:[#allocation3 + $0x2c0] sm:$0xff]
      %v2649 = vld [vmem:[#allocation3 + $0x2c8] sm:$0xff]
      %v2650 = vld [vmem:[#allocation3 + $0x2d0] sm:$0xff]
      %v2651 = vld [vmem:[#allocation3 + $0x2d8] sm:$0xff]
      %v2652 = vld [vmem:[#allocation3 + $0x2e0] sm:$0xff]
      %v2653 = vld [vmem:[#allocation3 + $0x2e8] sm:$0xff]
      %v2654 = vld [vmem:[#allocation3 + $0x2f0] sm:$0xff]
      %v2655 = vld [vmem:[#allocation3 + $0x2f8] sm:$0xff]
      %v2656 = vld [vmem:[#allocation3 + $0x300] sm:$0xff]
      %v2657 = vld [vmem:[#allocation3 + $0x308] sm:$0xff]
      %v2658 = vld [vmem:[#allocation3 + $0x310] sm:$0xff]
      %v2659 = vld [vmem:[#allocation3 + $0x318] sm:$0xff]
      %v2660 = vld [vmem:[#allocation3 + $0x320] sm:$0xff]
      %v2661 = vld [vmem:[#allocation3 + $0x328] sm:$0xff]
      %v2662 = vld [vmem:[#allocation3 + $0x330] sm:$0xff]
      %v2663 = vld [vmem:[#allocation3 + $0x338] sm:$0xff]
      %v2664 = vld [vmem:[#allocation3 + $0x340] sm:$0xff]
      %v2665 = vld [vmem:[#allocation3 + $0x348] sm:$0xff]
      %v2666 = vld [vmem:[#allocation3 + $0x350] sm:$0xff]
      %v2667 = vld [vmem:[#allocation3 + $0x358] sm:$0xff]
      %v2668 = vld [vmem:[#allocation3 + $0x360] sm:$0xff]
      %v2669 = vld [vmem:[#allocation3 + $0x368] sm:$0xff]
      %v2670 = vld [vmem:[#allocation3 + $0x370] sm:$0xff]
      %v2671 = vld [vmem:[#allocation3 + $0x378] sm:$0xff]
      %v2672 = vld [vmem:[#allocation3 + $0x380] sm:$0xff]
      %v2673 = vld [vmem:[#allocation3 + $0x388] sm:$0xff]
      %v2674 = vld [vmem:[#allocation3 + $0x390] sm:$0xff]
      %v2675 = vld [vmem:[#allocation3 + $0x398] sm:$0xff]
      %v2676 = vld [vmem:[#allocation3 + $0x3a0] sm:$0xff]
      %v2677 = vld [vmem:[#allocation3 + $0x3a8] sm:$0xff]
      %v2678 = vld [vmem:[#allocation3 + $0x3b0] sm:$0xff]
      %v2679 = vld [vmem:[#allocation3 + $0x3b8] sm:$0xff]
      %v2680 = vld [vmem:[#allocation3 + $0x3c0] sm:$0xff]
      %v2681 = vld [vmem:[#allocation3 + $0x3c8] sm:$0xff]
      %v2682 = vld [vmem:[#allocation3 + $0x3d0] sm:$0xff]
      %v2683 = vld [vmem:[#allocation3 + $0x3d8] sm:$0xff]
      %v2684 = vld [vmem:[#allocation3 + $0x3e0] sm:$0xff]
      %v2685 = vld [vmem:[#allocation3 + $0x3e8] sm:$0xff]
      %v2686 = vld [vmem:[#allocation3 + $0x3f0] sm:$0xff]
      %v2687 = vld [vmem:[#allocation3 + $0x3f8] sm:$0xff]
      %v2688 = vld [vmem:[#allocation3 + $0x400] sm:$0xff]
      %v2689 = vld [vmem:[#allocation3 + $0x408] sm:$0xff]
      %v2690 = vld [vmem:[#allocation3 + $0x410] sm:$0xff]
      %v2691 = vld [vmem:[#allocation3 + $0x418] sm:$0xff]
      %v2692 = vld [vmem:[#allocation3 + $0x420] sm:$0xff]
      %v2693 = vld [vmem:[#allocation3 + $0x428] sm:$0xff]
      %v2694 = vld [vmem:[#allocation3 + $0x430] sm:$0xff]
      %v2695 = vld [vmem:[#allocation3 + $0x438] sm:$0xff]
      %v2696 = vld [vmem:[#allocation3 + $0x440] sm:$0xff]
      %v2697 = vld [vmem:[#allocation3 + $0x448] sm:$0xff]
      %v2698 = vld [vmem:[#allocation3 + $0x450] sm:$0xff]
      %v2699 = vld [vmem:[#allocation3 + $0x458] sm:$0xff]
      %v2700 = vld [vmem:[#allocation3 + $0x460] sm:$0xff]
      %v2701 = vld [vmem:[#allocation3 + $0x468] sm:$0xff]
      %v2702 = vld [vmem:[#allocation3 + $0x470] sm:$0xff]
      %v2703 = vld [vmem:[#allocation3 + $0x478] sm:$0xff]
      %v2704 = vld [vmem:[#allocation3 + $0x480] sm:$0xff]
      %v2705 = vld [vmem:[#allocation3 + $0x488] sm:$0xff]
      %v2706 = vld [vmem:[#allocation3 + $0x490] sm:$0xff]
      %v2707 = vld [vmem:[#allocation3 + $0x498] sm:$0xff]
      %v2708 = vld [vmem:[#allocation3 + $0x4a0] sm:$0xff]
      %v2709 = vld [vmem:[#allocation3 + $0x4a8] sm:$0xff]
      %v2710 = vld [vmem:[#allocation3 + $0x4b0] sm:$0xff]
      %v2711 = vld [vmem:[#allocation3 + $0x4b8] sm:$0xff]
      %v2712 = vld [vmem:[#allocation3 + $0x4c0] sm:$0xff]
      %v2713 = vld [vmem:[#allocation3 + $0x4c8] sm:$0xff]
      %v2714 = vld [vmem:[#allocation3 + $0x4d0] sm:$0xff]
      %v2715 = vld [vmem:[#allocation3 + $0x4d8] sm:$0xff]
      %v2716 = vld [vmem:[#allocation3 + $0x4e0] sm:$0xff]
      %v2717 = vld [vmem:[#allocation3 + $0x4e8] sm:$0xff]
      %v2718 = vld [vmem:[#allocation3 + $0x4f0] sm:$0xff]
      %v2719 = vld [vmem:[#allocation3 + $0x4f8] sm:$0xff]
      %v2720 = vld [vmem:[#allocation3 + $0x500] sm:$0xff]
      %v2721 = vld [vmem:[#allocation3 + $0x508] sm:$0xff]
      %v2722 = vld [vmem:[#allocation3 + $0x510] sm:$0xff]
      %v2723 = vld [vmem:[#allocation3 + $0x518] sm:$0xff]
      %v2724 = vld [vmem:[#allocation3 + $0x520] sm:$0xff]
      %v2725 = vld [vmem:[#allocation3 + $0x528] sm:$0xff]
      %v2726 = vld [vmem:[#allocation3 + $0x530] sm:$0xff]
      %v2727 = vld [vmem:[#allocation3 + $0x538] sm:$0xff]
      %v2728 = vld [vmem:[#allocation3 + $0x540] sm:$0xff]
      %v2729 = vld [vmem:[#allocation3 + $0x548] sm:$0xff]
      %v2730 = vld [vmem:[#allocation3 + $0x550] sm:$0xff]
      %v2731 = vld [vmem:[#allocation3 + $0x558] sm:$0xff]
      %v2732 = vld [vmem:[#allocation3 + $0x560] sm:$0xff]
      %v2733 = vld [vmem:[#allocation3 + $0x568] sm:$0xff]
      %v2734 = vld [vmem:[#allocation3 + $0x570] sm:$0xff]
      %v2735 = vld [vmem:[#allocation3 + $0x578] sm:$0xff]
      %v2736 = vld [vmem:[#allocation3 + $0x580] sm:$0xff]
      %v2737 = vld [vmem:[#allocation3 + $0x588] sm:$0xff]
      %v2738 = vld [vmem:[#allocation3 + $0x590] sm:$0xff]
      %v2739 = vld [vmem:[#allocation3 + $0x598] sm:$0xff]
      %v2740 = vld [vmem:[#allocation3 + $0x5a0] sm:$0xff]
      %v2741 = vld [vmem:[#allocation3 + $0x5a8] sm:$0xff]
      %v2742 = vld [vmem:[#allocation3 + $0x5b0] sm:$0xff]
      %v2743 = vld [vmem:[#allocation3 + $0x5b8] sm:$0xff]
      %v2744 = vld [vmem:[#allocation3 + $0x5c0] sm:$0xff]
      %v2745 = vld [vmem:[#allocation3 + $0x5c8] sm:$0xff]
      %v2746 = vld [vmem:[#allocation3 + $0x5d0] sm:$0xff]
      %v2747 = vld [vmem:[#allocation3 + $0x5d8] sm:$0xff]
      %v2748 = vld [vmem:[#allocation3 + $0x5e0] sm:$0xff]
      %v2749 = vld [vmem:[#allocation3 + $0x5e8] sm:$0xff]
      %v2750 = vld [vmem:[#allocation3 + $0x5f0] sm:$0xff]
      %v2751 = vld [vmem:[#allocation3 + $0x5f8] sm:$0xff]
      %v2752 = vld [vmem:[#allocation3 + $0x600] sm:$0xff]
      %v2753 = vld [vmem:[#allocation3 + $0x608] sm:$0xff]
      %v2754 = vld [vmem:[#allocation3 + $0x610] sm:$0xff]
      %v2755 = vld [vmem:[#allocation3 + $0x618] sm:$0xff]
      %v2756 = vld [vmem:[#allocation3 + $0x620] sm:$0xff]
      %v2757 = vld [vmem:[#allocation3 + $0x628] sm:$0xff]
      %v2758 = vld [vmem:[#allocation3 + $0x630] sm:$0xff]
      %v2759 = vld [vmem:[#allocation3 + $0x638] sm:$0xff]
      %v2760 = vld [vmem:[#allocation3 + $0x640] sm:$0xff]
      %v2761 = vld [vmem:[#allocation3 + $0x648] sm:$0xff]
      %v2762 = vld [vmem:[#allocation3 + $0x650] sm:$0xff]
      %v2763 = vld [vmem:[#allocation3 + $0x658] sm:$0xff]
      %v2764 = vld [vmem:[#allocation3 + $0x660] sm:$0xff]
      %v2765 = vld [vmem:[#allocation3 + $0x668] sm:$0xff]
      %v2766 = vld [vmem:[#allocation3 + $0x670] sm:$0xff]
      %v2767 = vld [vmem:[#allocation3 + $0x678] sm:$0xff]
      %v2768 = vld [vmem:[#allocation3 + $0x680] sm:$0xff]
      %v2769 = vld [vmem:[#allocation3 + $0x688] sm:$0xff]
      %v2770 = vld [vmem:[#allocation3 + $0x690] sm:$0xff]
      %v2771 = vld [vmem:[#allocation3 + $0x698] sm:$0xff]
      %v2772 = vld [vmem:[#allocation3 + $0x6a0] sm:$0xff]
      %v2773 = vld [vmem:[#allocation3 + $0x6a8] sm:$0xff]
      %v2774 = vld [vmem:[#allocation3 + $0x6b0] sm:$0xff]
      %v2775 = vld [vmem:[#allocation3 + $0x6b8] sm:$0xff]
      %v2776 = vld [vmem:[#allocation3 + $0x6c0] sm:$0xff]
      %v2777 = vld [vmem:[#allocation3 + $0x6c8] sm:$0xff]
      %v2778 = vld [vmem:[#allocation3 + $0x6d0] sm:$0xff]
      %v2779 = vld [vmem:[#allocation3 + $0x6d8] sm:$0xff]
      %v2780 = vld [vmem:[#allocation3 + $0x6e0] sm:$0xff]
      %v2781 = vld [vmem:[#allocation3 + $0x6e8] sm:$0xff]
      %v2782 = vld [vmem:[#allocation3 + $0x6f0] sm:$0xff]
      %v2783 = vld [vmem:[#allocation3 + $0x6f8] sm:$0xff]
      %v2784 = vld [vmem:[#allocation3 + $0x700] sm:$0xff]
      %v2785 = vld [vmem:[#allocation3 + $0x708] sm:$0xff]
      %v2786 = vld [vmem:[#allocation3 + $0x710] sm:$0xff]
      %v2787 = vld [vmem:[#allocation3 + $0x718] sm:$0xff]
      %v2788 = vld [vmem:[#allocation3 + $0x720] sm:$0xff]
      %v2789 = vld [vmem:[#allocation3 + $0x728] sm:$0xff]
      %v2790 = vld [vmem:[#allocation3 + $0x730] sm:$0xff]
      %v2791 = vld [vmem:[#allocation3 + $0x738] sm:$0xff]
      %v2792 = vld [vmem:[#allocation3 + $0x740] sm:$0xff]
      %v2793 = vld [vmem:[#allocation3 + $0x748] sm:$0xff]
      %v2794 = vld [vmem:[#allocation3 + $0x750] sm:$0xff]
      %v2795 = vld [vmem:[#allocation3 + $0x758] sm:$0xff]
      %v2796 = vld [vmem:[#allocation3 + $0x760] sm:$0xff]
      %v2797 = vld [vmem:[#allocation3 + $0x768] sm:$0xff]
      %v2798 = vld [vmem:[#allocation3 + $0x770] sm:$0xff]
      %v2799 = vld [vmem:[#allocation3 + $0x778] sm:$0xff]
      %v2800 = vld [vmem:[#allocation3 + $0x780] sm:$0xff]
      %v2801 = vld [vmem:[#allocation3 + $0x788] sm:$0xff]
      %v2802 = vld [vmem:[#allocation3 + $0x790] sm:$0xff]
      %v2803 = vld [vmem:[#allocation3 + $0x798] sm:$0xff]
      %v2804 = vld [vmem:[#allocation3 + $0x7a0] sm:$0xff]
      %v2805 = vld [vmem:[#allocation3 + $0x7a8] sm:$0xff]
      %v2806 = vld [vmem:[#allocation3 + $0x7b0] sm:$0xff]
      %v2807 = vld [vmem:[#allocation3 + $0x7b8] sm:$0xff]
      %v2808 = vld [vmem:[#allocation3 + $0x7c0] sm:$0xff]
      %v2809 = vld [vmem:[#allocation3 + $0x7c8] sm:$0xff]
      %v2810 = vld [vmem:[#allocation3 + $0x7d0] sm:$0xff]
      %v2811 = vld [vmem:[#allocation3 + $0x7d8] sm:$0xff]
      %v2812 = vld [vmem:[#allocation3 + $0x7e0] sm:$0xff]
      %v2813 = vld [vmem:[#allocation3 + $0x7e8] sm:$0xff]
      %v2814 = vld [vmem:[#allocation3 + $0x7f0] sm:$0xff]
      %v2815 = vld [vmem:[#allocation3 + $0x7f8] sm:$0xff]
      %v2816 = vld [vmem:[#allocation3 + $0x800] sm:$0xff]
      %v2817 = vld [vmem:[#allocation3 + $0x808] sm:$0xff]
      %v2818 = vld [vmem:[#allocation3 + $0x810] sm:$0xff]
      %v2819 = vld [vmem:[#allocation3 + $0x818] sm:$0xff]
      %v2820 = vld [vmem:[#allocation3 + $0x820] sm:$0xff]
      %v2821 = vld [vmem:[#allocation3 + $0x828] sm:$0xff]
      %v2822 = vld [vmem:[#allocation3 + $0x830] sm:$0xff]
      %v2823 = vld [vmem:[#allocation3 + $0x838] sm:$0xff]
      %v2824 = vld [vmem:[#allocation3 + $0x840] sm:$0xff]
      %v2825 = vld [vmem:[#allocation3 + $0x848] sm:$0xff]
      %v2826 = vld [vmem:[#allocation3 + $0x850] sm:$0xff]
      %v2827 = vld [vmem:[#allocation3 + $0x858] sm:$0xff]
      %v2828 = vld [vmem:[#allocation3 + $0x860] sm:$0xff]
      %v2829 = vld [vmem:[#allocation3 + $0x868] sm:$0xff]
      %v2830 = vld [vmem:[#allocation3 + $0x870] sm:$0xff]
      %v2831 = vld [vmem:[#allocation3 + $0x878] sm:$0xff]
      %v2832 = vld [vmem:[#allocation3 + $0x880] sm:$0xff]
      %v2833 = vld [vmem:[#allocation3 + $0x888] sm:$0xff]
      %v2834 = vld [vmem:[#allocation3 + $0x890] sm:$0xff]
      %v2835 = vld [vmem:[#allocation3 + $0x898] sm:$0xff]
      %v2836 = vld [vmem:[#allocation3 + $0x8a0] sm:$0xff]
      %v2837 = vld [vmem:[#allocation3 + $0x8a8] sm:$0xff]
      %v2838 = vld [vmem:[#allocation3 + $0x8b0] sm:$0xff]
      %v2839 = vld [vmem:[#allocation3 + $0x8b8] sm:$0xff]
      %v2840 = vld [vmem:[#allocation3 + $0x8c0] sm:$0xff]
      %v2841 = vld [vmem:[#allocation3 + $0x8c8] sm:$0xff]
      %v2842 = vld [vmem:[#allocation3 + $0x8d0] sm:$0xff]
      %v2843 = vld [vmem:[#allocation3 + $0x8d8] sm:$0xff]
      %v2844 = vld [vmem:[#allocation3 + $0x8e0] sm:$0xff]
      %v2845 = vld [vmem:[#allocation3 + $0x8e8] sm:$0xff]
      %v2846 = vld [vmem:[#allocation3 + $0x8f0] sm:$0xff]
      %v2847 = vld [vmem:[#allocation3 + $0x8f8] sm:$0xff]
      %v2848 = vld [vmem:[#allocation3 + $0x900] sm:$0xff]
      %v2849 = vld [vmem:[#allocation3 + $0x908] sm:$0xff]
      %v2850 = vld [vmem:[#allocation3 + $0x910] sm:$0xff]
      %v2851 = vld [vmem:[#allocation3 + $0x918] sm:$0xff]
      %v2852 = vld [vmem:[#allocation3 + $0x920] sm:$0xff]
      %v2853 = vld [vmem:[#allocation3 + $0x928] sm:$0xff]
      %v2854 = vld [vmem:[#allocation3 + $0x930] sm:$0xff]
      %v2855 = vld [vmem:[#allocation3 + $0x938] sm:$0xff]
      %v2856 = vld [vmem:[#allocation3 + $0x940] sm:$0xff]
      %v2857 = vld [vmem:[#allocation3 + $0x948] sm:$0xff]
      %v2858 = vld [vmem:[#allocation3 + $0x950] sm:$0xff]
      %v2859 = vld [vmem:[#allocation3 + $0x958] sm:$0xff]
      %v2860 = vld [vmem:[#allocation3 + $0x960] sm:$0xff]
      %v2861 = vld [vmem:[#allocation3 + $0x968] sm:$0xff]
      %v2862 = vld [vmem:[#allocation3 + $0x970] sm:$0xff]
      %v2863 = vld [vmem:[#allocation3 + $0x978] sm:$0xff]
      %v2864 = vld [vmem:[#allocation3 + $0x980] sm:$0xff]
      %v2865 = vld [vmem:[#allocation3 + $0x988] sm:$0xff]
      %v2866 = vld [vmem:[#allocation3 + $0x990] sm:$0xff]
      %v2867 = vld [vmem:[#allocation3 + $0x998] sm:$0xff]
      %v2868 = vld [vmem:[#allocation3 + $0x9a0] sm:$0xff]
      %v2869 = vld [vmem:[#allocation3 + $0x9a8] sm:$0xff]
      %v2870 = vld [vmem:[#allocation3 + $0x9b0] sm:$0xff]
      %v2871 = vld [vmem:[#allocation3 + $0x9b8] sm:$0xff]
      %v2872 = vld [vmem:[#allocation3 + $0x9c0] sm:$0xff]
      %v2873 = vld [vmem:[#allocation3 + $0x9c8] sm:$0xff]
      %v2874 = vld [vmem:[#allocation3 + $0x9d0] sm:$0xff]
      %v2875 = vld [vmem:[#allocation3 + $0x9d8] sm:$0xff]
      %v2876 = vld [vmem:[#allocation3 + $0x9e0] sm:$0xff]
      %v2877 = vld [vmem:[#allocation3 + $0x9e8] sm:$0xff]
      %v2878 = vld [vmem:[#allocation3 + $0x9f0] sm:$0xff]
      %v2879 = vld [vmem:[#allocation3 + $0x9f8] sm:$0xff]
      %v2880 = vld [vmem:[%s4] sm:$0xff]
      %v2881 = vld [vmem:[%s4 + $0x8] sm:$0xff]
      %v2882 = vld [vmem:[%s4 + $0x10] sm:$0xff]
      %v2883 = vld [vmem:[%s4 + $0x18] sm:$0xff]
      %v2884 = vld [vmem:[%s4 + $0x20] sm:$0xff]
      %v2885 = vld [vmem:[%s4 + $0x28] sm:$0xff]
      %v2886 = vld [vmem:[%s4 + $0x30] sm:$0xff]
      %v2887 = vld [vmem:[%s4 + $0x38] sm:$0xff]
      %v2888 = vld [vmem:[%s4 + $0x40] sm:$0xff]
      %v2889 = vld [vmem:[%s4 + $0x48] sm:$0xff]
      %v2890 = vld [vmem:[%s4 + $0x50] sm:$0xff]
      %v2891 = vld [vmem:[%s4 + $0x58] sm:$0xff]
      %v2892 = vld [vmem:[%s4 + $0x60] sm:$0xff]
      %v2893 = vld [vmem:[%s4 + $0x68] sm:$0xff]
      %v2894 = vld [vmem:[%s4 + $0x70] sm:$0xff]
      %v2895 = vld [vmem:[%s4 + $0x78] sm:$0xff]
      %v2896 = vld [vmem:[%s4 + $0x80] sm:$0xff]
      %v2897 = vld [vmem:[%s4 + $0x88] sm:$0xff]
      %v2898 = vld [vmem:[%s4 + $0x90] sm:$0xff]
      %v2899 = vld [vmem:[%s4 + $0x98] sm:$0xff]
      %v2900 = vld [vmem:[%s4 + $0xa0] sm:$0xff]
      %v2901 = vld [vmem:[%s4 + $0xa8] sm:$0xff]
      %v2902 = vld [vmem:[%s4 + $0xb0] sm:$0xff]
      %v2903 = vld [vmem:[%s4 + $0xb8] sm:$0xff]
      %v2904 = vld [vmem:[%s4 + $0xc0] sm:$0xff]
      %v2905 = vld [vmem:[%s4 + $0xc8] sm:$0xff]
      %v2906 = vld [vmem:[%s4 + $0xd0] sm:$0xff]
      %v2907 = vld [vmem:[%s4 + $0xd8] sm:$0xff]
      %v2908 = vld [vmem:[%s4 + $0xe0] sm:$0xff]
      %v2909 = vld [vmem:[%s4 + $0xe8] sm:$0xff]
      %v2910 = vld [vmem:[%s4 + $0xf0] sm:$0xff]
      %v2911 = vld [vmem:[%s4 + $0xf8] sm:$0xff]
      %v2912 = vld [vmem:[%s4 + $0x100] sm:$0xff]
      %v2913 = vld [vmem:[%s4 + $0x108] sm:$0xff]
      %v2914 = vld [vmem:[%s4 + $0x110] sm:$0xff]
      %v2915 = vld [vmem:[%s4 + $0x118] sm:$0xff]
      %v2916 = vld [vmem:[%s4 + $0x120] sm:$0xff]
      %v2917 = vld [vmem:[%s4 + $0x128] sm:$0xff]
      %v2918 = vld [vmem:[%s4 + $0x130] sm:$0xff]
      %v2919 = vld [vmem:[%s4 + $0x138] sm:$0xff]
      %v2920 = vld [vmem:[%s4 + $0x140] sm:$0xff]
      %v2921 = vld [vmem:[%s4 + $0x148] sm:$0xff]
      %v2922 = vld [vmem:[%s4 + $0x150] sm:$0xff]
      %v2923 = vld [vmem:[%s4 + $0x158] sm:$0xff]
      %v2924 = vld [vmem:[%s4 + $0x160] sm:$0xff]
      %v2925 = vld [vmem:[%s4 + $0x168] sm:$0xff]
      %v2926 = vld [vmem:[%s4 + $0x170] sm:$0xff]
      %v2927 = vld [vmem:[%s4 + $0x178] sm:$0xff]
      %v2928 = vld [vmem:[%s4 + $0x180] sm:$0xff]
      %v2929 = vld [vmem:[%s4 + $0x188] sm:$0xff]
      %v2930 = vld [vmem:[%s4 + $0x190] sm:$0xff]
      %v2931 = vld [vmem:[%s4 + $0x198] sm:$0xff]
      %v2932 = vld [vmem:[%s4 + $0x1a0] sm:$0xff]
      %v2933 = vld [vmem:[%s4 + $0x1a8] sm:$0xff]
      %v2934 = vld [vmem:[%s4 + $0x1b0] sm:$0xff]
      %v2935 = vld [vmem:[%s4 + $0x1b8] sm:$0xff]
      %v2936 = vld [vmem:[%s4 + $0x1c0] sm:$0xff]
      %v2937 = vld [vmem:[%s4 + $0x1c8] sm:$0xff]
      %v2938 = vld [vmem:[%s4 + $0x1d0] sm:$0xff]
      %v2939 = vld [vmem:[%s4 + $0x1d8] sm:$0xff]
      %v2940 = vld [vmem:[%s4 + $0x1e0] sm:$0xff]
      %v2941 = vld [vmem:[%s4 + $0x1e8] sm:$0xff]
      %v2942 = vld [vmem:[%s4 + $0x1f0] sm:$0xff]
      %v2943 = vld [vmem:[%s4 + $0x1f8] sm:$0xff]
      %v2944 = vld [vmem:[%s4 + $0x200] sm:$0xff]
      %v2945 = vld [vmem:[%s4 + $0x208] sm:$0xff]
      %v2946 = vld [vmem:[%s4 + $0x210] sm:$0xff]
      %v2947 = vld [vmem:[%s4 + $0x218] sm:$0xff]
      %v2948 = vld [vmem:[%s4 + $0x220] sm:$0xff]
      %v2949 = vld [vmem:[%s4 + $0x228] sm:$0xff]
      %v2950 = vld [vmem:[%s4 + $0x230] sm:$0xff]
      %v2951 = vld [vmem:[%s4 + $0x238] sm:$0xff]
      %v2952 = vld [vmem:[%s4 + $0x240] sm:$0xff]
      %v2953 = vld [vmem:[%s4 + $0x248] sm:$0xff]
      %v2954 = vld [vmem:[%s4 + $0x250] sm:$0xff]
      %v2955 = vld [vmem:[%s4 + $0x258] sm:$0xff]
      %v2956 = vld [vmem:[%s4 + $0x260] sm:$0xff]
      %v2957 = vld [vmem:[%s4 + $0x268] sm:$0xff]
      %v2958 = vld [vmem:[%s4 + $0x270] sm:$0xff]
      %v2959 = vld [vmem:[%s4 + $0x278] sm:$0xff]
      %v2960 = vld [vmem:[%s4 + $0x280] sm:$0xff]
      %v2961 = vld [vmem:[%s4 + $0x288] sm:$0xff]
      %v2962 = vld [vmem:[%s4 + $0x290] sm:$0xff]
      %v2963 = vld [vmem:[%s4 + $0x298] sm:$0xff]
      %v2964 = vld [vmem:[%s4 + $0x2a0] sm:$0xff]
      %v2965 = vld [vmem:[%s4 + $0x2a8] sm:$0xff]
      %v2966 = vld [vmem:[%s4 + $0x2b0] sm:$0xff]
      %v2967 = vld [vmem:[%s4 + $0x2b8] sm:$0xff]
      %v2968 = vld [vmem:[%s4 + $0x2c0] sm:$0xff]
      %v2969 = vld [vmem:[%s4 + $0x2c8] sm:$0xff]
      %v2970 = vld [vmem:[%s4 + $0x2d0] sm:$0xff]
      %v2971 = vld [vmem:[%s4 + $0x2d8] sm:$0xff]
      %v2972 = vld [vmem:[%s4 + $0x2e0] sm:$0xff]
      %v2973 = vld [vmem:[%s4 + $0x2e8] sm:$0xff]
      %v2974 = vld [vmem:[%s4 + $0x2f0] sm:$0xff]
      %v2975 = vld [vmem:[%s4 + $0x2f8] sm:$0xff]
      %v2976 = vld [vmem:[%s4 + $0x300] sm:$0xff]
      %v2977 = vld [vmem:[%s4 + $0x308] sm:$0xff]
      %v2978 = vld [vmem:[%s4 + $0x310] sm:$0xff]
      %v2979 = vld [vmem:[%s4 + $0x318] sm:$0xff]
      %v2980 = vld [vmem:[%s4 + $0x320] sm:$0xff]
      %v2981 = vld [vmem:[%s4 + $0x328] sm:$0xff]
      %v2982 = vld [vmem:[%s4 + $0x330] sm:$0xff]
      %v2983 = vld [vmem:[%s4 + $0x338] sm:$0xff]
      %v2984 = vld [vmem:[%s4 + $0x340] sm:$0xff]
      %v2985 = vld [vmem:[%s4 + $0x348] sm:$0xff]
      %v2986 = vld [vmem:[%s4 + $0x350] sm:$0xff]
      %v2987 = vld [vmem:[%s4 + $0x358] sm:$0xff]
      %v2988 = vld [vmem:[%s4 + $0x360] sm:$0xff]
      %v2989 = vld [vmem:[%s4 + $0x368] sm:$0xff]
      %v2990 = vld [vmem:[%s4 + $0x370] sm:$0xff]
      %v2991 = vld [vmem:[%s4 + $0x378] sm:$0xff]
      %v2992 = vld [vmem:[%s4 + $0x380] sm:$0xff]
      %v2993 = vld [vmem:[%s4 + $0x388] sm:$0xff]
      %v2994 = vld [vmem:[%s4 + $0x390] sm:$0xff]
      %v2995 = vld [vmem:[%s4 + $0x398] sm:$0xff]
      %v2996 = vld [vmem:[%s4 + $0x3a0] sm:$0xff]
      %v2997 = vld [vmem:[%s4 + $0x3a8] sm:$0xff]
      %v2998 = vld [vmem:[%s4 + $0x3b0] sm:$0xff]
      %v2999 = vld [vmem:[%s4 + $0x3b8] sm:$0xff]
      %v3000 = vld [vmem:[%s4 + $0x3c0] sm:$0xff]
      %v3001 = vld [vmem:[%s4 + $0x3c8] sm:$0xff]
      %v3002 = vld [vmem:[%s4 + $0x3d0] sm:$0xff]
      %v3003 = vld [vmem:[%s4 + $0x3d8] sm:$0xff]
      %v3004 = vld [vmem:[%s4 + $0x3e0] sm:$0xff]
      %v3005 = vld [vmem:[%s4 + $0x3e8] sm:$0xff]
      %v3006 = vld [vmem:[%s4 + $0x3f0] sm:$0xff]
      %v3007 = vld [vmem:[%s4 + $0x3f8] sm:$0xff]
      %v3008 = vld [vmem:[%s4 + $0x400] sm:$0xff]
      %v3009 = vld [vmem:[%s4 + $0x408] sm:$0xff]
      %v3010 = vld [vmem:[%s4 + $0x410] sm:$0xff]
      %v3011 = vld [vmem:[%s4 + $0x418] sm:$0xff]
      %v3012 = vld [vmem:[%s4 + $0x420] sm:$0xff]
      %v3013 = vld [vmem:[%s4 + $0x428] sm:$0xff]
      %v3014 = vld [vmem:[%s4 + $0x430] sm:$0xff]
      %v3015 = vld [vmem:[%s4 + $0x438] sm:$0xff]
      %v3016 = vld [vmem:[%s4 + $0x440] sm:$0xff]
      %v3017 = vld [vmem:[%s4 + $0x448] sm:$0xff]
      %v3018 = vld [vmem:[%s4 + $0x450] sm:$0xff]
      %v3019 = vld [vmem:[%s4 + $0x458] sm:$0xff]
      %v3020 = vld [vmem:[%s4 + $0x460] sm:$0xff]
      %v3021 = vld [vmem:[%s4 + $0x468] sm:$0xff]
      %v3022 = vld [vmem:[%s4 + $0x470] sm:$0xff]
      %v3023 = vld [vmem:[%s4 + $0x478] sm:$0xff]
      %v3024 = vld [vmem:[%s4 + $0x480] sm:$0xff]
      %v3025 = vld [vmem:[%s4 + $0x488] sm:$0xff]
      %v3026 = vld [vmem:[%s4 + $0x490] sm:$0xff]
      %v3027 = vld [vmem:[%s4 + $0x498] sm:$0xff]
      %v3028 = vld [vmem:[%s4 + $0x4a0] sm:$0xff]
      %v3029 = vld [vmem:[%s4 + $0x4a8] sm:$0xff]
      %v3030 = vld [vmem:[%s4 + $0x4b0] sm:$0xff]
      %v3031 = vld [vmem:[%s4 + $0x4b8] sm:$0xff]
      %v3032 = vld [vmem:[%s4 + $0x4c0] sm:$0xff]
      %v3033 = vld [vmem:[%s4 + $0x4c8] sm:$0xff]
      %v3034 = vld [vmem:[%s4 + $0x4d0] sm:$0xff]
      %v3035 = vld [vmem:[%s4 + $0x4d8] sm:$0xff]
      %v3036 = vld [vmem:[%s4 + $0x4e0] sm:$0xff]
      %v3037 = vld [vmem:[%s4 + $0x4e8] sm:$0xff]
      %v3038 = vld [vmem:[%s4 + $0x4f0] sm:$0xff]
      %v3039 = vld [vmem:[%s4 + $0x4f8] sm:$0xff]
      %3040 = vmatpush.msra.mxu0 %v2895
      %3041 = vmatpush.msra.mxu0 %v2894
      %3042 = vmatpush.msra.mxu0 %v2893
      %3043 = vmatpush.msra.mxu0 %v2892
      %3044 = vmatpush.msra.mxu0 %v2891
      %3045 = vmatpush.msra.mxu0 %v2890
      %3046 = vmatpush.msra.mxu0 %v2889
      %3047 = vmatpush.msra.mxu0 %v2888
      %3048 = vmatpush.msra.mxu0 %v2887
      %3049 = vmatpush.msra.mxu0 %v2886
      %3050 = vmatpush.msra.mxu0 %v2885
      %3051 = vmatpush.msra.mxu0 %v2884
      %3052 = vmatpush.msra.mxu0 %v2883
      %3053 = vmatpush.msra.mxu0 %v2882
      %3054 = vmatpush.msra.mxu0 %v2881
      %3055 = vmatpush.msra.mxu0 %v2880
      %3056 = vmatmul.f32.gmra.mxu0 %v2560
      %v3057 = vpop.f32.mrf.mxu0
      %v3058 = vadd.f32 0.0, %v3057
      %3059 = vmatmul.f32.gmra.mxu0 %v2570
      %v3060 = vpop.f32.mrf.mxu0
      %v3061 = vadd.f32 0.0, %v3060
      %3062 = vmatmul.f32.gmra.mxu0 %v2580
      %v3063 = vpop.f32.mrf.mxu0
      %v3064 = vadd.f32 0.0, %v3063
      %3065 = vmatmul.f32.gmra.mxu0 %v2590
      %v3066 = vpop.f32.mrf.mxu0
      %v3067 = vadd.f32 0.0, %v3066
      %3068 = vmatmul.f32.gmra.mxu0 %v2600
      %v3069 = vpop.f32.mrf.mxu0
      %v3070 = vadd.f32 0.0, %v3069
      %3071 = vmatmul.f32.gmra.mxu0 %v2610
      %v3072 = vpop.f32.mrf.mxu0
      %v3073 = vadd.f32 0.0, %v3072
      %3074 = vmatmul.f32.gmra.mxu0 %v2620
      %v3075 = vpop.f32.mrf.mxu0
      %v3076 = vadd.f32 0.0, %v3075
      %3077 = vmatmul.f32.gmra.mxu0 %v2630
      %v3078 = vpop.f32.mrf.mxu0
      %v3079 = vadd.f32 0.0, %v3078
      %3080 = vmatmul.f32.gmra.mxu0 %v2640
      %v3081 = vpop.f32.mrf.mxu0
      %v3082 = vadd.f32 0.0, %v3081
      %3083 = vmatmul.f32.gmra.mxu0 %v2650
      %v3084 = vpop.f32.mrf.mxu0
      %v3085 = vadd.f32 0.0, %v3084
      %3086 = vmatmul.f32.gmra.mxu0 %v2660
      %v3087 = vpop.f32.mrf.mxu0
      %v3088 = vadd.f32 0.0, %v3087
      %3089 = vmatmul.f32.gmra.mxu0 %v2670
      %v3090 = vpop.f32.mrf.mxu0
      %v3091 = vadd.f32 0.0, %v3090
      %3092 = vmatmul.f32.gmra.mxu0 %v2680
      %v3093 = vpop.f32.mrf.mxu0
      %v3094 = vadd.f32 0.0, %v3093
      %3095 = vmatmul.f32.gmra.mxu0 %v2690
      %v3096 = vpop.f32.mrf.mxu0
      %v3097 = vadd.f32 0.0, %v3096
      %3098 = vmatmul.f32.gmra.mxu0 %v2700
      %v3099 = vpop.f32.mrf.mxu0
      %v3100 = vadd.f32 0.0, %v3099
      %3101 = vmatmul.f32.gmra.mxu0 %v2710
      %v3102 = vpop.f32.mrf.mxu0
      %v3103 = vadd.f32 0.0, %v3102
      %3104 = vmatmul.f32.gmra.mxu0 %v2720
      %v3105 = vpop.f32.mrf.mxu0
      %v3106 = vadd.f32 0.0, %v3105
      %3107 = vmatmul.f32.gmra.mxu0 %v2730
      %v3108 = vpop.f32.mrf.mxu0
      %v3109 = vadd.f32 0.0, %v3108
      %3110 = vmatmul.f32.gmra.mxu0 %v2740
      %v3111 = vpop.f32.mrf.mxu0
      %v3112 = vadd.f32 0.0, %v3111
      %3113 = vmatmul.f32.gmra.mxu0 %v2750
      %v3114 = vpop.f32.mrf.mxu0
      %v3115 = vadd.f32 0.0, %v3114
      %3116 = vmatmul.f32.gmra.mxu0 %v2760
      %v3117 = vpop.f32.mrf.mxu0
      %v3118 = vadd.f32 0.0, %v3117
      %3119 = vmatmul.f32.gmra.mxu0 %v2770
      %v3120 = vpop.f32.mrf.mxu0
      %v3121 = vadd.f32 0.0, %v3120
      %3122 = vmatmul.f32.gmra.mxu0 %v2780
      %v3123 = vpop.f32.mrf.mxu0
      %v3124 = vadd.f32 0.0, %v3123
      %3125 = vmatmul.f32.gmra.mxu0 %v2790
      %v3126 = vpop.f32.mrf.mxu0
      %v3127 = vadd.f32 0.0, %v3126
      %3128 = vmatmul.f32.gmra.mxu0 %v2800
      %v3129 = vpop.f32.mrf.mxu0
      %v3130 = vadd.f32 0.0, %v3129
      %3131 = vmatmul.f32.gmra.mxu0 %v2810
      %v3132 = vpop.f32.mrf.mxu0
      %v3133 = vadd.f32 0.0, %v3132
      %3134 = vmatmul.f32.gmra.mxu0 %v2820
      %v3135 = vpop.f32.mrf.mxu0
      %v3136 = vadd.f32 0.0, %v3135
      %3137 = vmatmul.f32.gmra.mxu0 %v2830
      %v3138 = vpop.f32.mrf.mxu0
      %v3139 = vadd.f32 0.0, %v3138
      %3140 = vmatmul.f32.gmra.mxu0 %v2840
      %v3141 = vpop.f32.mrf.mxu0
      %v3142 = vadd.f32 0.0, %v3141
      %3143 = vmatmul.f32.gmra.mxu0 %v2850
      %v3144 = vpop.f32.mrf.mxu0
      %v3145 = vadd.f32 0.0, %v3144
      %3146 = vmatmul.f32.gmra.mxu0 %v2860
      %v3147 = vpop.f32.mrf.mxu0
      %v3148 = vadd.f32 0.0, %v3147
      %3149 = vmatmul.f32.gmra.mxu0 %v2870
      %v3150 = vpop.f32.mrf.mxu0
      %v3151 = vadd.f32 0.0, %v3150
      %3152 = vdwg.mxu0
      %3153 = vmatpush.msra.mxu0 %v2911
      %3154 = vmatpush.msra.mxu0 %v2910
      %3155 = vmatpush.msra.mxu0 %v2909
      %3156 = vmatpush.msra.mxu0 %v2908
      %3157 = vmatpush.msra.mxu0 %v2907
      %3158 = vmatpush.msra.mxu0 %v2906
      %3159 = vmatpush.msra.mxu0 %v2905
      %3160 = vmatpush.msra.mxu0 %v2904
      %3161 = vmatpush.msra.mxu0 %v2903
      %3162 = vmatpush.msra.mxu0 %v2902
      %3163 = vmatpush.msra.mxu0 %v2901
      %3164 = vmatpush.msra.mxu0 %v2900
      %3165 = vmatpush.msra.mxu0 %v2899
      %3166 = vmatpush.msra.mxu0 %v2898
      %3167 = vmatpush.msra.mxu0 %v2897
      %3168 = vmatpush.msra.mxu0 %v2896
      %3169 = vmatmul.f32.gmra.mxu0 %v2561
      %v3170 = vpop.f32.mrf.mxu0
      %v3171 = vadd.f32 %v3058, %v3170
      %3172 = vmatmul.f32.gmra.mxu0 %v2571
      %v3173 = vpop.f32.mrf.mxu0
      %v3174 = vadd.f32 %v3061, %v3173
      %3175 = vmatmul.f32.gmra.mxu0 %v2581
      %v3176 = vpop.f32.mrf.mxu0
      %v3177 = vadd.f32 %v3064, %v3176
      %3178 = vmatmul.f32.gmra.mxu0 %v2591
      %v3179 = vpop.f32.mrf.mxu0
      %v3180 = vadd.f32 %v3067, %v3179
      %3181 = vmatmul.f32.gmra.mxu0 %v2601
      %v3182 = vpop.f32.mrf.mxu0
      %v3183 = vadd.f32 %v3070, %v3182
      %3184 = vmatmul.f32.gmra.mxu0 %v2611
      %v3185 = vpop.f32.mrf.mxu0
      %v3186 = vadd.f32 %v3073, %v3185
      %3187 = vmatmul.f32.gmra.mxu0 %v2621
      %v3188 = vpop.f32.mrf.mxu0
      %v3189 = vadd.f32 %v3076, %v3188
      %3190 = vmatmul.f32.gmra.mxu0 %v2631
      %v3191 = vpop.f32.mrf.mxu0
      %v3192 = vadd.f32 %v3079, %v3191
      %3193 = vmatmul.f32.gmra.mxu0 %v2641
      %v3194 = vpop.f32.mrf.mxu0
      %v3195 = vadd.f32 %v3082, %v3194
      %3196 = vmatmul.f32.gmra.mxu0 %v2651
      %v3197 = vpop.f32.mrf.mxu0
      %v3198 = vadd.f32 %v3085, %v3197
      %3199 = vmatmul.f32.gmra.mxu0 %v2661
      %v3200 = vpop.f32.mrf.mxu0
      %v3201 = vadd.f32 %v3088, %v3200
      %3202 = vmatmul.f32.gmra.mxu0 %v2671
      %v3203 = vpop.f32.mrf.mxu0
      %v3204 = vadd.f32 %v3091, %v3203
      %3205 = vmatmul.f32.gmra.mxu0 %v2681
      %v3206 = vpop.f32.mrf.mxu0
      %v3207 = vadd.f32 %v3094, %v3206
      %3208 = vmatmul.f32.gmra.mxu0 %v2691
      %v3209 = vpop.f32.mrf.mxu0
      %v3210 = vadd.f32 %v3097, %v3209
      %3211 = vmatmul.f32.gmra.mxu0 %v2701
      %v3212 = vpop.f32.mrf.mxu0
      %v3213 = vadd.f32 %v3100, %v3212
      %3214 = vmatmul.f32.gmra.mxu0 %v2711
      %v3215 = vpop.f32.mrf.mxu0
      %v3216 = vadd.f32 %v3103, %v3215
      %3217 = vmatmul.f32.gmra.mxu0 %v2721
      %v3218 = vpop.f32.mrf.mxu0
      %v3219 = vadd.f32 %v3106, %v3218
      %3220 = vmatmul.f32.gmra.mxu0 %v2731
      %v3221 = vpop.f32.mrf.mxu0
      %v3222 = vadd.f32 %v3109, %v3221
      %3223 = vmatmul.f32.gmra.mxu0 %v2741
      %v3224 = vpop.f32.mrf.mxu0
      %v3225 = vadd.f32 %v3112, %v3224
      %3226 = vmatmul.f32.gmra.mxu0 %v2751
      %v3227 = vpop.f32.mrf.mxu0
      %v3228 = vadd.f32 %v3115, %v3227
      %3229 = vmatmul.f32.gmra.mxu0 %v2761
      %v3230 = vpop.f32.mrf.mxu0
      %v3231 = vadd.f32 %v3118, %v3230
      %3232 = vmatmul.f32.gmra.mxu0 %v2771
      %v3233 = vpop.f32.mrf.mxu0
      %v3234 = vadd.f32 %v3121, %v3233
      %3235 = vmatmul.f32.gmra.mxu0 %v2781
      %v3236 = vpop.f32.mrf.mxu0
      %v3237 = vadd.f32 %v3124, %v3236
      %3238 = vmatmul.f32.gmra.mxu0 %v2791
      %v3239 = vpop.f32.mrf.mxu0
      %v3240 = vadd.f32 %v3127, %v3239
      %3241 = vmatmul.f32.gmra.mxu0 %v2801
      %v3242 = vpop.f32.mrf.mxu0
      %v3243 = vadd.f32 %v3130, %v3242
      %3244 = vmatmul.f32.gmra.mxu0 %v2811
      %v3245 = vpop.f32.mrf.mxu0
      %v3246 = vadd.f32 %v3133, %v3245
      %3247 = vmatmul.f32.gmra.mxu0 %v2821
      %v3248 = vpop.f32.mrf.mxu0
      %v3249 = vadd.f32 %v3136, %v3248
      %3250 = vmatmul.f32.gmra.mxu0 %v2831
      %v3251 = vpop.f32.mrf.mxu0
      %v3252 = vadd.f32 %v3139, %v3251
      %3253 = vmatmul.f32.gmra.mxu0 %v2841
      %v3254 = vpop.f32.mrf.mxu0
      %v3255 = vadd.f32 %v3142, %v3254
      %3256 = vmatmul.f32.gmra.mxu0 %v2851
      %v3257 = vpop.f32.mrf.mxu0
      %v3258 = vadd.f32 %v3145, %v3257
      %3259 = vmatmul.f32.gmra.mxu0 %v2861
      %v3260 = vpop.f32.mrf.mxu0
      %v3261 = vadd.f32 %v3148, %v3260
      %3262 = vmatmul.f32.gmra.mxu0 %v2871
      %v3263 = vpop.f32.mrf.mxu0
      %v3264 = vadd.f32 %v3151, %v3263
      %3265 = vdwg.mxu0
      %3266 = vmatpush.msra.mxu0 %v2927
      %3267 = vmatpush.msra.mxu0 %v2926
      %3268 = vmatpush.msra.mxu0 %v2925
      %3269 = vmatpush.msra.mxu0 %v2924
      %3270 = vmatpush.msra.mxu0 %v2923
      %3271 = vmatpush.msra.mxu0 %v2922
      %3272 = vmatpush.msra.mxu0 %v2921
      %3273 = vmatpush.msra.mxu0 %v2920
      %3274 = vmatpush.msra.mxu0 %v2919
      %3275 = vmatpush.msra.mxu0 %v2918
      %3276 = vmatpush.msra.mxu0 %v2917
      %3277 = vmatpush.msra.mxu0 %v2916
      %3278 = vmatpush.msra.mxu0 %v2915
      %3279 = vmatpush.msra.mxu0 %v2914
      %3280 = vmatpush.msra.mxu0 %v2913
      %3281 = vmatpush.msra.mxu0 %v2912
      %3282 = vmatmul.f32.gmra.mxu0 %v2562
      %v3283 = vpop.f32.mrf.mxu0
      %v3284 = vadd.f32 %v3171, %v3283
      %3285 = vmatmul.f32.gmra.mxu0 %v2572
      %v3286 = vpop.f32.mrf.mxu0
      %v3287 = vadd.f32 %v3174, %v3286
      %3288 = vmatmul.f32.gmra.mxu0 %v2582
      %v3289 = vpop.f32.mrf.mxu0
      %v3290 = vadd.f32 %v3177, %v3289
      %3291 = vmatmul.f32.gmra.mxu0 %v2592
      %v3292 = vpop.f32.mrf.mxu0
      %v3293 = vadd.f32 %v3180, %v3292
      %3294 = vmatmul.f32.gmra.mxu0 %v2602
      %v3295 = vpop.f32.mrf.mxu0
      %v3296 = vadd.f32 %v3183, %v3295
      %3297 = vmatmul.f32.gmra.mxu0 %v2612
      %v3298 = vpop.f32.mrf.mxu0
      %v3299 = vadd.f32 %v3186, %v3298
      %3300 = vmatmul.f32.gmra.mxu0 %v2622
      %v3301 = vpop.f32.mrf.mxu0
      %v3302 = vadd.f32 %v3189, %v3301
      %3303 = vmatmul.f32.gmra.mxu0 %v2632
      %v3304 = vpop.f32.mrf.mxu0
      %v3305 = vadd.f32 %v3192, %v3304
      %3306 = vmatmul.f32.gmra.mxu0 %v2642
      %v3307 = vpop.f32.mrf.mxu0
      %v3308 = vadd.f32 %v3195, %v3307
      %3309 = vmatmul.f32.gmra.mxu0 %v2652
      %v3310 = vpop.f32.mrf.mxu0
      %v3311 = vadd.f32 %v3198, %v3310
      %3312 = vmatmul.f32.gmra.mxu0 %v2662
      %v3313 = vpop.f32.mrf.mxu0
      %v3314 = vadd.f32 %v3201, %v3313
      %3315 = vmatmul.f32.gmra.mxu0 %v2672
      %v3316 = vpop.f32.mrf.mxu0
      %v3317 = vadd.f32 %v3204, %v3316
      %3318 = vmatmul.f32.gmra.mxu0 %v2682
      %v3319 = vpop.f32.mrf.mxu0
      %v3320 = vadd.f32 %v3207, %v3319
      %3321 = vmatmul.f32.gmra.mxu0 %v2692
      %v3322 = vpop.f32.mrf.mxu0
      %v3323 = vadd.f32 %v3210, %v3322
      %3324 = vmatmul.f32.gmra.mxu0 %v2702
      %v3325 = vpop.f32.mrf.mxu0
      %v3326 = vadd.f32 %v3213, %v3325
      %3327 = vmatmul.f32.gmra.mxu0 %v2712
      %v3328 = vpop.f32.mrf.mxu0
      %v3329 = vadd.f32 %v3216, %v3328
      %3330 = vmatmul.f32.gmra.mxu0 %v2722
      %v3331 = vpop.f32.mrf.mxu0
      %v3332 = vadd.f32 %v3219, %v3331
      %3333 = vmatmul.f32.gmra.mxu0 %v2732
      %v3334 = vpop.f32.mrf.mxu0
      %v3335 = vadd.f32 %v3222, %v3334
      %3336 = vmatmul.f32.gmra.mxu0 %v2742
      %v3337 = vpop.f32.mrf.mxu0
      %v3338 = vadd.f32 %v3225, %v3337
      %3339 = vmatmul.f32.gmra.mxu0 %v2752
      %v3340 = vpop.f32.mrf.mxu0
      %v3341 = vadd.f32 %v3228, %v3340
      %3342 = vmatmul.f32.gmra.mxu0 %v2762
      %v3343 = vpop.f32.mrf.mxu0
      %v3344 = vadd.f32 %v3231, %v3343
      %3345 = vmatmul.f32.gmra.mxu0 %v2772
      %v3346 = vpop.f32.mrf.mxu0
      %v3347 = vadd.f32 %v3234, %v3346
      %3348 = vmatmul.f32.gmra.mxu0 %v2782
      %v3349 = vpop.f32.mrf.mxu0
      %v3350 = vadd.f32 %v3237, %v3349
      %3351 = vmatmul.f32.gmra.mxu0 %v2792
      %v3352 = vpop.f32.mrf.mxu0
      %v3353 = vadd.f32 %v3240, %v3352
      %3354 = vmatmul.f32.gmra.mxu0 %v2802
      %v3355 = vpop.f32.mrf.mxu0
      %v3356 = vadd.f32 %v3243, %v3355
      %3357 = vmatmul.f32.gmra.mxu0 %v2812
      %v3358 = vpop.f32.mrf.mxu0
      %v3359 = vadd.f32 %v3246, %v3358
      %3360 = vmatmul.f32.gmra.mxu0 %v2822
      %v3361 = vpop.f32.mrf.mxu0
      %v3362 = vadd.f32 %v3249, %v3361
      %3363 = vmatmul.f32.gmra.mxu0 %v2832
      %v3364 = vpop.f32.mrf.mxu0
      %v3365 = vadd.f32 %v3252, %v3364
      %3366 = vmatmul.f32.gmra.mxu0 %v2842
      %v3367 = vpop.f32.mrf.mxu0
      %v3368 = vadd.f32 %v3255, %v3367
      %3369 = vmatmul.f32.gmra.mxu0 %v2852
      %v3370 = vpop.f32.mrf.mxu0
      %v3371 = vadd.f32 %v3258, %v3370
      %3372 = vmatmul.f32.gmra.mxu0 %v2862
      %v3373 = vpop.f32.mrf.mxu0
      %v3374 = vadd.f32 %v3261, %v3373
      %3375 = vmatmul.f32.gmra.mxu0 %v2872
      %v3376 = vpop.f32.mrf.mxu0
      %v3377 = vadd.f32 %v3264, %v3376
      %3378 = vdwg.mxu0
      %3379 = vmatpush.msra.mxu0 %v2943
      %3380 = vmatpush.msra.mxu0 %v2942
      %3381 = vmatpush.msra.mxu0 %v2941
      %3382 = vmatpush.msra.mxu0 %v2940
      %3383 = vmatpush.msra.mxu0 %v2939
      %3384 = vmatpush.msra.mxu0 %v2938
      %3385 = vmatpush.msra.mxu0 %v2937
      %3386 = vmatpush.msra.mxu0 %v2936
      %3387 = vmatpush.msra.mxu0 %v2935
      %3388 = vmatpush.msra.mxu0 %v2934
      %3389 = vmatpush.msra.mxu0 %v2933
      %3390 = vmatpush.msra.mxu0 %v2932
      %3391 = vmatpush.msra.mxu0 %v2931
      %3392 = vmatpush.msra.mxu0 %v2930
      %3393 = vmatpush.msra.mxu0 %v2929
      %3394 = vmatpush.msra.mxu0 %v2928
      %3395 = vmatmul.f32.gmra.mxu0 %v2563
      %v3396 = vpop.f32.mrf.mxu0
      %v3397 = vadd.f32 %v3284, %v3396
      %3398 = vmatmul.f32.gmra.mxu0 %v2573
      %v3399 = vpop.f32.mrf.mxu0
      %v3400 = vadd.f32 %v3287, %v3399
      %3401 = vmatmul.f32.gmra.mxu0 %v2583
      %v3402 = vpop.f32.mrf.mxu0
      %v3403 = vadd.f32 %v3290, %v3402
      %3404 = vmatmul.f32.gmra.mxu0 %v2593
      %v3405 = vpop.f32.mrf.mxu0
      %v3406 = vadd.f32 %v3293, %v3405
      %3407 = vmatmul.f32.gmra.mxu0 %v2603
      %v3408 = vpop.f32.mrf.mxu0
      %v3409 = vadd.f32 %v3296, %v3408
      %3410 = vmatmul.f32.gmra.mxu0 %v2613
      %v3411 = vpop.f32.mrf.mxu0
      %v3412 = vadd.f32 %v3299, %v3411
      %3413 = vmatmul.f32.gmra.mxu0 %v2623
      %v3414 = vpop.f32.mrf.mxu0
      %v3415 = vadd.f32 %v3302, %v3414
      %3416 = vmatmul.f32.gmra.mxu0 %v2633
      %v3417 = vpop.f32.mrf.mxu0
      %v3418 = vadd.f32 %v3305, %v3417
      %3419 = vmatmul.f32.gmra.mxu0 %v2643
      %v3420 = vpop.f32.mrf.mxu0
      %v3421 = vadd.f32 %v3308, %v3420
      %3422 = vmatmul.f32.gmra.mxu0 %v2653
      %v3423 = vpop.f32.mrf.mxu0
      %v3424 = vadd.f32 %v3311, %v3423
      %3425 = vmatmul.f32.gmra.mxu0 %v2663
      %v3426 = vpop.f32.mrf.mxu0
      %v3427 = vadd.f32 %v3314, %v3426
      %3428 = vmatmul.f32.gmra.mxu0 %v2673
      %v3429 = vpop.f32.mrf.mxu0
      %v3430 = vadd.f32 %v3317, %v3429
      %3431 = vmatmul.f32.gmra.mxu0 %v2683
      %v3432 = vpop.f32.mrf.mxu0
      %v3433 = vadd.f32 %v3320, %v3432
      %3434 = vmatmul.f32.gmra.mxu0 %v2693
      %v3435 = vpop.f32.mrf.mxu0
      %v3436 = vadd.f32 %v3323, %v3435
      %3437 = vmatmul.f32.gmra.mxu0 %v2703
      %v3438 = vpop.f32.mrf.mxu0
      %v3439 = vadd.f32 %v3326, %v3438
      %3440 = vmatmul.f32.gmra.mxu0 %v2713
      %v3441 = vpop.f32.mrf.mxu0
      %v3442 = vadd.f32 %v3329, %v3441
      %3443 = vmatmul.f32.gmra.mxu0 %v2723
      %v3444 = vpop.f32.mrf.mxu0
      %v3445 = vadd.f32 %v3332, %v3444
      %3446 = vmatmul.f32.gmra.mxu0 %v2733
      %v3447 = vpop.f32.mrf.mxu0
      %v3448 = vadd.f32 %v3335, %v3447
      %3449 = vmatmul.f32.gmra.mxu0 %v2743
      %v3450 = vpop.f32.mrf.mxu0
      %v3451 = vadd.f32 %v3338, %v3450
      %3452 = vmatmul.f32.gmra.mxu0 %v2753
      %v3453 = vpop.f32.mrf.mxu0
      %v3454 = vadd.f32 %v3341, %v3453
      %3455 = vmatmul.f32.gmra.mxu0 %v2763
      %v3456 = vpop.f32.mrf.mxu0
      %v3457 = vadd.f32 %v3344, %v3456
      %3458 = vmatmul.f32.gmra.mxu0 %v2773
      %v3459 = vpop.f32.mrf.mxu0
      %v3460 = vadd.f32 %v3347, %v3459
      %3461 = vmatmul.f32.gmra.mxu0 %v2783
      %v3462 = vpop.f32.mrf.mxu0
      %v3463 = vadd.f32 %v3350, %v3462
      %3464 = vmatmul.f32.gmra.mxu0 %v2793
      %v3465 = vpop.f32.mrf.mxu0
      %v3466 = vadd.f32 %v3353, %v3465
      %3467 = vmatmul.f32.gmra.mxu0 %v2803
      %v3468 = vpop.f32.mrf.mxu0
      %v3469 = vadd.f32 %v3356, %v3468
      %3470 = vmatmul.f32.gmra.mxu0 %v2813
      %v3471 = vpop.f32.mrf.mxu0
      %v3472 = vadd.f32 %v3359, %v3471
      %3473 = vmatmul.f32.gmra.mxu0 %v2823
      %v3474 = vpop.f32.mrf.mxu0
      %v3475 = vadd.f32 %v3362, %v3474
      %3476 = vmatmul.f32.gmra.mxu0 %v2833
      %v3477 = vpop.f32.mrf.mxu0
      %v3478 = vadd.f32 %v3365, %v3477
      %3479 = vmatmul.f32.gmra.mxu0 %v2843
      %v3480 = vpop.f32.mrf.mxu0
      %v3481 = vadd.f32 %v3368, %v3480
      %3482 = vmatmul.f32.gmra.mxu0 %v2853
      %v3483 = vpop.f32.mrf.mxu0
      %v3484 = vadd.f32 %v3371, %v3483
      %3485 = vmatmul.f32.gmra.mxu0 %v2863
      %v3486 = vpop.f32.mrf.mxu0
      %v3487 = vadd.f32 %v3374, %v3486
      %3488 = vmatmul.f32.gmra.mxu0 %v2873
      %v3489 = vpop.f32.mrf.mxu0
      %v3490 = vadd.f32 %v3377, %v3489
      %3491 = vdwg.mxu0
      %3492 = vmatpush.msra.mxu0 %v2959
      %3493 = vmatpush.msra.mxu0 %v2958
      %3494 = vmatpush.msra.mxu0 %v2957
      %3495 = vmatpush.msra.mxu0 %v2956
      %3496 = vmatpush.msra.mxu0 %v2955
      %3497 = vmatpush.msra.mxu0 %v2954
      %3498 = vmatpush.msra.mxu0 %v2953
      %3499 = vmatpush.msra.mxu0 %v2952
      %3500 = vmatpush.msra.mxu0 %v2951
      %3501 = vmatpush.msra.mxu0 %v2950
      %3502 = vmatpush.msra.mxu0 %v2949
      %3503 = vmatpush.msra.mxu0 %v2948
      %3504 = vmatpush.msra.mxu0 %v2947
      %3505 = vmatpush.msra.mxu0 %v2946
      %3506 = vmatpush.msra.mxu0 %v2945
      %3507 = vmatpush.msra.mxu0 %v2944
      %3508 = vmatmul.f32.gmra.mxu0 %v2564
      %v3509 = vpop.f32.mrf.mxu0
      %v3510 = vadd.f32 %v3397, %v3509
      %3511 = vmatmul.f32.gmra.mxu0 %v2574
      %v3512 = vpop.f32.mrf.mxu0
      %v3513 = vadd.f32 %v3400, %v3512
      %3514 = vmatmul.f32.gmra.mxu0 %v2584
      %v3515 = vpop.f32.mrf.mxu0
      %v3516 = vadd.f32 %v3403, %v3515
      %3517 = vmatmul.f32.gmra.mxu0 %v2594
      %v3518 = vpop.f32.mrf.mxu0
      %v3519 = vadd.f32 %v3406, %v3518
      %3520 = vmatmul.f32.gmra.mxu0 %v2604
      %v3521 = vpop.f32.mrf.mxu0
      %v3522 = vadd.f32 %v3409, %v3521
      %3523 = vmatmul.f32.gmra.mxu0 %v2614
      %v3524 = vpop.f32.mrf.mxu0
      %v3525 = vadd.f32 %v3412, %v3524
      %3526 = vmatmul.f32.gmra.mxu0 %v2624
      %v3527 = vpop.f32.mrf.mxu0
      %v3528 = vadd.f32 %v3415, %v3527
      %3529 = vmatmul.f32.gmra.mxu0 %v2634
      %v3530 = vpop.f32.mrf.mxu0
      %v3531 = vadd.f32 %v3418, %v3530
      %3532 = vmatmul.f32.gmra.mxu0 %v2644
      %v3533 = vpop.f32.mrf.mxu0
      %v3534 = vadd.f32 %v3421, %v3533
      %3535 = vmatmul.f32.gmra.mxu0 %v2654
      %v3536 = vpop.f32.mrf.mxu0
      %v3537 = vadd.f32 %v3424, %v3536
      %3538 = vmatmul.f32.gmra.mxu0 %v2664
      %v3539 = vpop.f32.mrf.mxu0
      %v3540 = vadd.f32 %v3427, %v3539
      %3541 = vmatmul.f32.gmra.mxu0 %v2674
      %v3542 = vpop.f32.mrf.mxu0
      %v3543 = vadd.f32 %v3430, %v3542
      %3544 = vmatmul.f32.gmra.mxu0 %v2684
      %v3545 = vpop.f32.mrf.mxu0
      %v3546 = vadd.f32 %v3433, %v3545
      %3547 = vmatmul.f32.gmra.mxu0 %v2694
      %v3548 = vpop.f32.mrf.mxu0
      %v3549 = vadd.f32 %v3436, %v3548
      %3550 = vmatmul.f32.gmra.mxu0 %v2704
      %v3551 = vpop.f32.mrf.mxu0
      %v3552 = vadd.f32 %v3439, %v3551
      %3553 = vmatmul.f32.gmra.mxu0 %v2714
      %v3554 = vpop.f32.mrf.mxu0
      %v3555 = vadd.f32 %v3442, %v3554
      %3556 = vmatmul.f32.gmra.mxu0 %v2724
      %v3557 = vpop.f32.mrf.mxu0
      %v3558 = vadd.f32 %v3445, %v3557
      %3559 = vmatmul.f32.gmra.mxu0 %v2734
      %v3560 = vpop.f32.mrf.mxu0
      %v3561 = vadd.f32 %v3448, %v3560
      %3562 = vmatmul.f32.gmra.mxu0 %v2744
      %v3563 = vpop.f32.mrf.mxu0
      %v3564 = vadd.f32 %v3451, %v3563
      %3565 = vmatmul.f32.gmra.mxu0 %v2754
      %v3566 = vpop.f32.mrf.mxu0
      %v3567 = vadd.f32 %v3454, %v3566
      %3568 = vmatmul.f32.gmra.mxu0 %v2764
      %v3569 = vpop.f32.mrf.mxu0
      %v3570 = vadd.f32 %v3457, %v3569
      %3571 = vmatmul.f32.gmra.mxu0 %v2774
      %v3572 = vpop.f32.mrf.mxu0
      %v3573 = vadd.f32 %v3460, %v3572
      %3574 = vmatmul.f32.gmra.mxu0 %v2784
      %v3575 = vpop.f32.mrf.mxu0
      %v3576 = vadd.f32 %v3463, %v3575
      %3577 = vmatmul.f32.gmra.mxu0 %v2794
      %v3578 = vpop.f32.mrf.mxu0
      %v3579 = vadd.f32 %v3466, %v3578
      %3580 = vmatmul.f32.gmra.mxu0 %v2804
      %v3581 = vpop.f32.mrf.mxu0
      %v3582 = vadd.f32 %v3469, %v3581
      %3583 = vmatmul.f32.gmra.mxu0 %v2814
      %v3584 = vpop.f32.mrf.mxu0
      %v3585 = vadd.f32 %v3472, %v3584
      %3586 = vmatmul.f32.gmra.mxu0 %v2824
      %v3587 = vpop.f32.mrf.mxu0
      %v3588 = vadd.f32 %v3475, %v3587
      %3589 = vmatmul.f32.gmra.mxu0 %v2834
      %v3590 = vpop.f32.mrf.mxu0
      %v3591 = vadd.f32 %v3478, %v3590
      %3592 = vmatmul.f32.gmra.mxu0 %v2844
      %v3593 = vpop.f32.mrf.mxu0
      %v3594 = vadd.f32 %v3481, %v3593
      %3595 = vmatmul.f32.gmra.mxu0 %v2854
      %v3596 = vpop.f32.mrf.mxu0
      %v3597 = vadd.f32 %v3484, %v3596
      %3598 = vmatmul.f32.gmra.mxu0 %v2864
      %v3599 = vpop.f32.mrf.mxu0
      %v3600 = vadd.f32 %v3487, %v3599
      %3601 = vmatmul.f32.gmra.mxu0 %v2874
      %v3602 = vpop.f32.mrf.mxu0
      %v3603 = vadd.f32 %v3490, %v3602
      %3604 = vdwg.mxu0
      %3605 = vmatpush.msra.mxu0 %v2975
      %3606 = vmatpush.msra.mxu0 %v2974
      %3607 = vmatpush.msra.mxu0 %v2973
      %3608 = vmatpush.msra.mxu0 %v2972
      %3609 = vmatpush.msra.mxu0 %v2971
      %3610 = vmatpush.msra.mxu0 %v2970
      %3611 = vmatpush.msra.mxu0 %v2969
      %3612 = vmatpush.msra.mxu0 %v2968
      %3613 = vmatpush.msra.mxu0 %v2967
      %3614 = vmatpush.msra.mxu0 %v2966
      %3615 = vmatpush.msra.mxu0 %v2965
      %3616 = vmatpush.msra.mxu0 %v2964
      %3617 = vmatpush.msra.mxu0 %v2963
      %3618 = vmatpush.msra.mxu0 %v2962
      %3619 = vmatpush.msra.mxu0 %v2961
      %3620 = vmatpush.msra.mxu0 %v2960
      %3621 = vmatmul.f32.gmra.mxu0 %v2565
      %v3622 = vpop.f32.mrf.mxu0
      %v3623 = vadd.f32 %v3510, %v3622
      %3624 = vmatmul.f32.gmra.mxu0 %v2575
      %v3625 = vpop.f32.mrf.mxu0
      %v3626 = vadd.f32 %v3513, %v3625
      %3627 = vmatmul.f32.gmra.mxu0 %v2585
      %v3628 = vpop.f32.mrf.mxu0
      %v3629 = vadd.f32 %v3516, %v3628
      %3630 = vmatmul.f32.gmra.mxu0 %v2595
      %v3631 = vpop.f32.mrf.mxu0
      %v3632 = vadd.f32 %v3519, %v3631
      %3633 = vmatmul.f32.gmra.mxu0 %v2605
      %v3634 = vpop.f32.mrf.mxu0
      %v3635 = vadd.f32 %v3522, %v3634
      %3636 = vmatmul.f32.gmra.mxu0 %v2615
      %v3637 = vpop.f32.mrf.mxu0
      %v3638 = vadd.f32 %v3525, %v3637
      %3639 = vmatmul.f32.gmra.mxu0 %v2625
      %v3640 = vpop.f32.mrf.mxu0
      %v3641 = vadd.f32 %v3528, %v3640
      %3642 = vmatmul.f32.gmra.mxu0 %v2635
      %v3643 = vpop.f32.mrf.mxu0
      %v3644 = vadd.f32 %v3531, %v3643
      %3645 = vmatmul.f32.gmra.mxu0 %v2645
      %v3646 = vpop.f32.mrf.mxu0
      %v3647 = vadd.f32 %v3534, %v3646
      %3648 = vmatmul.f32.gmra.mxu0 %v2655
      %v3649 = vpop.f32.mrf.mxu0
      %v3650 = vadd.f32 %v3537, %v3649
      %3651 = vmatmul.f32.gmra.mxu0 %v2665
      %v3652 = vpop.f32.mrf.mxu0
      %v3653 = vadd.f32 %v3540, %v3652
      %3654 = vmatmul.f32.gmra.mxu0 %v2675
      %v3655 = vpop.f32.mrf.mxu0
      %v3656 = vadd.f32 %v3543, %v3655
      %3657 = vmatmul.f32.gmra.mxu0 %v2685
      %v3658 = vpop.f32.mrf.mxu0
      %v3659 = vadd.f32 %v3546, %v3658
      %3660 = vmatmul.f32.gmra.mxu0 %v2695
      %v3661 = vpop.f32.mrf.mxu0
      %v3662 = vadd.f32 %v3549, %v3661
      %3663 = vmatmul.f32.gmra.mxu0 %v2705
      %v3664 = vpop.f32.mrf.mxu0
      %v3665 = vadd.f32 %v3552, %v3664
      %3666 = vmatmul.f32.gmra.mxu0 %v2715
      %v3667 = vpop.f32.mrf.mxu0
      %v3668 = vadd.f32 %v3555, %v3667
      %3669 = vmatmul.f32.gmra.mxu0 %v2725
      %v3670 = vpop.f32.mrf.mxu0
      %v3671 = vadd.f32 %v3558, %v3670
      %3672 = vmatmul.f32.gmra.mxu0 %v2735
      %v3673 = vpop.f32.mrf.mxu0
      %v3674 = vadd.f32 %v3561, %v3673
      %3675 = vmatmul.f32.gmra.mxu0 %v2745
      %v3676 = vpop.f32.mrf.mxu0
      %v3677 = vadd.f32 %v3564, %v3676
      %3678 = vmatmul.f32.gmra.mxu0 %v2755
      %v3679 = vpop.f32.mrf.mxu0
      %v3680 = vadd.f32 %v3567, %v3679
      %3681 = vmatmul.f32.gmra.mxu0 %v2765
      %v3682 = vpop.f32.mrf.mxu0
      %v3683 = vadd.f32 %v3570, %v3682
      %3684 = vmatmul.f32.gmra.mxu0 %v2775
      %v3685 = vpop.f32.mrf.mxu0
      %v3686 = vadd.f32 %v3573, %v3685
      %3687 = vmatmul.f32.gmra.mxu0 %v2785
      %v3688 = vpop.f32.mrf.mxu0
      %v3689 = vadd.f32 %v3576, %v3688
      %3690 = vmatmul.f32.gmra.mxu0 %v2795
      %v3691 = vpop.f32.mrf.mxu0
      %v3692 = vadd.f32 %v3579, %v3691
      %3693 = vmatmul.f32.gmra.mxu0 %v2805
      %v3694 = vpop.f32.mrf.mxu0
      %v3695 = vadd.f32 %v3582, %v3694
      %3696 = vmatmul.f32.gmra.mxu0 %v2815
      %v3697 = vpop.f32.mrf.mxu0
      %v3698 = vadd.f32 %v3585, %v3697
      %3699 = vmatmul.f32.gmra.mxu0 %v2825
      %v3700 = vpop.f32.mrf.mxu0
      %v3701 = vadd.f32 %v3588, %v3700
      %3702 = vmatmul.f32.gmra.mxu0 %v2835
      %v3703 = vpop.f32.mrf.mxu0
      %v3704 = vadd.f32 %v3591, %v3703
      %3705 = vmatmul.f32.gmra.mxu0 %v2845
      %v3706 = vpop.f32.mrf.mxu0
      %v3707 = vadd.f32 %v3594, %v3706
      %3708 = vmatmul.f32.gmra.mxu0 %v2855
      %v3709 = vpop.f32.mrf.mxu0
      %v3710 = vadd.f32 %v3597, %v3709
      %3711 = vmatmul.f32.gmra.mxu0 %v2865
      %v3712 = vpop.f32.mrf.mxu0
      %v3713 = vadd.f32 %v3600, %v3712
      %3714 = vmatmul.f32.gmra.mxu0 %v2875
      %v3715 = vpop.f32.mrf.mxu0
      %v3716 = vadd.f32 %v3603, %v3715
      %3717 = vdwg.mxu0
      %3718 = vmatpush.msra.mxu0 %v2991
      %3719 = vmatpush.msra.mxu0 %v2990
      %3720 = vmatpush.msra.mxu0 %v2989
      %3721 = vmatpush.msra.mxu0 %v2988
      %3722 = vmatpush.msra.mxu0 %v2987
      %3723 = vmatpush.msra.mxu0 %v2986
      %3724 = vmatpush.msra.mxu0 %v2985
      %3725 = vmatpush.msra.mxu0 %v2984
      %3726 = vmatpush.msra.mxu0 %v2983
      %3727 = vmatpush.msra.mxu0 %v2982
      %3728 = vmatpush.msra.mxu0 %v2981
      %3729 = vmatpush.msra.mxu0 %v2980
      %3730 = vmatpush.msra.mxu0 %v2979
      %3731 = vmatpush.msra.mxu0 %v2978
      %3732 = vmatpush.msra.mxu0 %v2977
      %3733 = vmatpush.msra.mxu0 %v2976
      %3734 = vmatmul.f32.gmra.mxu0 %v2566
      %v3735 = vpop.f32.mrf.mxu0
      %v3736 = vadd.f32 %v3623, %v3735
      %3737 = vmatmul.f32.gmra.mxu0 %v2576
      %v3738 = vpop.f32.mrf.mxu0
      %v3739 = vadd.f32 %v3626, %v3738
      %3740 = vmatmul.f32.gmra.mxu0 %v2586
      %v3741 = vpop.f32.mrf.mxu0
      %v3742 = vadd.f32 %v3629, %v3741
      %3743 = vmatmul.f32.gmra.mxu0 %v2596
      %v3744 = vpop.f32.mrf.mxu0
      %v3745 = vadd.f32 %v3632, %v3744
      %3746 = vmatmul.f32.gmra.mxu0 %v2606
      %v3747 = vpop.f32.mrf.mxu0
      %v3748 = vadd.f32 %v3635, %v3747
      %3749 = vmatmul.f32.gmra.mxu0 %v2616
      %v3750 = vpop.f32.mrf.mxu0
      %v3751 = vadd.f32 %v3638, %v3750
      %3752 = vmatmul.f32.gmra.mxu0 %v2626
      %v3753 = vpop.f32.mrf.mxu0
      %v3754 = vadd.f32 %v3641, %v3753
      %3755 = vmatmul.f32.gmra.mxu0 %v2636
      %v3756 = vpop.f32.mrf.mxu0
      %v3757 = vadd.f32 %v3644, %v3756
      %3758 = vmatmul.f32.gmra.mxu0 %v2646
      %v3759 = vpop.f32.mrf.mxu0
      %v3760 = vadd.f32 %v3647, %v3759
      %3761 = vmatmul.f32.gmra.mxu0 %v2656
      %v3762 = vpop.f32.mrf.mxu0
      %v3763 = vadd.f32 %v3650, %v3762
      %3764 = vmatmul.f32.gmra.mxu0 %v2666
      %v3765 = vpop.f32.mrf.mxu0
      %v3766 = vadd.f32 %v3653, %v3765
      %3767 = vmatmul.f32.gmra.mxu0 %v2676
      %v3768 = vpop.f32.mrf.mxu0
      %v3769 = vadd.f32 %v3656, %v3768
      %3770 = vmatmul.f32.gmra.mxu0 %v2686
      %v3771 = vpop.f32.mrf.mxu0
      %v3772 = vadd.f32 %v3659, %v3771
      %3773 = vmatmul.f32.gmra.mxu0 %v2696
      %v3774 = vpop.f32.mrf.mxu0
      %v3775 = vadd.f32 %v3662, %v3774
      %3776 = vmatmul.f32.gmra.mxu0 %v2706
      %v3777 = vpop.f32.mrf.mxu0
      %v3778 = vadd.f32 %v3665, %v3777
      %3779 = vmatmul.f32.gmra.mxu0 %v2716
      %v3780 = vpop.f32.mrf.mxu0
      %v3781 = vadd.f32 %v3668, %v3780
      %3782 = vmatmul.f32.gmra.mxu0 %v2726
      %v3783 = vpop.f32.mrf.mxu0
      %v3784 = vadd.f32 %v3671, %v3783
      %3785 = vmatmul.f32.gmra.mxu0 %v2736
      %v3786 = vpop.f32.mrf.mxu0
      %v3787 = vadd.f32 %v3674, %v3786
      %3788 = vmatmul.f32.gmra.mxu0 %v2746
      %v3789 = vpop.f32.mrf.mxu0
      %v3790 = vadd.f32 %v3677, %v3789
      %3791 = vmatmul.f32.gmra.mxu0 %v2756
      %v3792 = vpop.f32.mrf.mxu0
      %v3793 = vadd.f32 %v3680, %v3792
      %3794 = vmatmul.f32.gmra.mxu0 %v2766
      %v3795 = vpop.f32.mrf.mxu0
      %v3796 = vadd.f32 %v3683, %v3795
      %3797 = vmatmul.f32.gmra.mxu0 %v2776
      %v3798 = vpop.f32.mrf.mxu0
      %v3799 = vadd.f32 %v3686, %v3798
      %3800 = vmatmul.f32.gmra.mxu0 %v2786
      %v3801 = vpop.f32.mrf.mxu0
      %v3802 = vadd.f32 %v3689, %v3801
      %3803 = vmatmul.f32.gmra.mxu0 %v2796
      %v3804 = vpop.f32.mrf.mxu0
      %v3805 = vadd.f32 %v3692, %v3804
      %3806 = vmatmul.f32.gmra.mxu0 %v2806
      %v3807 = vpop.f32.mrf.mxu0
      %v3808 = vadd.f32 %v3695, %v3807
      %3809 = vmatmul.f32.gmra.mxu0 %v2816
      %v3810 = vpop.f32.mrf.mxu0
      %v3811 = vadd.f32 %v3698, %v3810
      %3812 = vmatmul.f32.gmra.mxu0 %v2826
      %v3813 = vpop.f32.mrf.mxu0
      %v3814 = vadd.f32 %v3701, %v3813
      %3815 = vmatmul.f32.gmra.mxu0 %v2836
      %v3816 = vpop.f32.mrf.mxu0
      %v3817 = vadd.f32 %v3704, %v3816
      %3818 = vmatmul.f32.gmra.mxu0 %v2846
      %v3819 = vpop.f32.mrf.mxu0
      %v3820 = vadd.f32 %v3707, %v3819
      %3821 = vmatmul.f32.gmra.mxu0 %v2856
      %v3822 = vpop.f32.mrf.mxu0
      %v3823 = vadd.f32 %v3710, %v3822
      %3824 = vmatmul.f32.gmra.mxu0 %v2866
      %v3825 = vpop.f32.mrf.mxu0
      %v3826 = vadd.f32 %v3713, %v3825
      %3827 = vmatmul.f32.gmra.mxu0 %v2876
      %v3828 = vpop.f32.mrf.mxu0
      %v3829 = vadd.f32 %v3716, %v3828
      %3830 = vdwg.mxu0
      %3831 = vmatpush.msra.mxu0 %v3007
      %3832 = vmatpush.msra.mxu0 %v3006
      %3833 = vmatpush.msra.mxu0 %v3005
      %3834 = vmatpush.msra.mxu0 %v3004
      %3835 = vmatpush.msra.mxu0 %v3003
      %3836 = vmatpush.msra.mxu0 %v3002
      %3837 = vmatpush.msra.mxu0 %v3001
      %3838 = vmatpush.msra.mxu0 %v3000
      %3839 = vmatpush.msra.mxu0 %v2999
      %3840 = vmatpush.msra.mxu0 %v2998
      %3841 = vmatpush.msra.mxu0 %v2997
      %3842 = vmatpush.msra.mxu0 %v2996
      %3843 = vmatpush.msra.mxu0 %v2995
      %3844 = vmatpush.msra.mxu0 %v2994
      %3845 = vmatpush.msra.mxu0 %v2993
      %3846 = vmatpush.msra.mxu0 %v2992
      %3847 = vmatmul.f32.gmra.mxu0 %v2567
      %v3848 = vpop.f32.mrf.mxu0
      %v3849 = vadd.f32 %v3736, %v3848
      %3850 = vmatmul.f32.gmra.mxu0 %v2577
      %v3851 = vpop.f32.mrf.mxu0
      %v3852 = vadd.f32 %v3739, %v3851
      %3853 = vmatmul.f32.gmra.mxu0 %v2587
      %v3854 = vpop.f32.mrf.mxu0
      %v3855 = vadd.f32 %v3742, %v3854
      %3856 = vmatmul.f32.gmra.mxu0 %v2597
      %v3857 = vpop.f32.mrf.mxu0
      %v3858 = vadd.f32 %v3745, %v3857
      %3859 = vmatmul.f32.gmra.mxu0 %v2607
      %v3860 = vpop.f32.mrf.mxu0
      %v3861 = vadd.f32 %v3748, %v3860
      %3862 = vmatmul.f32.gmra.mxu0 %v2617
      %v3863 = vpop.f32.mrf.mxu0
      %v3864 = vadd.f32 %v3751, %v3863
      %3865 = vmatmul.f32.gmra.mxu0 %v2627
      %v3866 = vpop.f32.mrf.mxu0
      %v3867 = vadd.f32 %v3754, %v3866
      %3868 = vmatmul.f32.gmra.mxu0 %v2637
      %v3869 = vpop.f32.mrf.mxu0
      %v3870 = vadd.f32 %v3757, %v3869
      %3871 = vmatmul.f32.gmra.mxu0 %v2647
      %v3872 = vpop.f32.mrf.mxu0
      %v3873 = vadd.f32 %v3760, %v3872
      %3874 = vmatmul.f32.gmra.mxu0 %v2657
      %v3875 = vpop.f32.mrf.mxu0
      %v3876 = vadd.f32 %v3763, %v3875
      %3877 = vmatmul.f32.gmra.mxu0 %v2667
      %v3878 = vpop.f32.mrf.mxu0
      %v3879 = vadd.f32 %v3766, %v3878
      %3880 = vmatmul.f32.gmra.mxu0 %v2677
      %v3881 = vpop.f32.mrf.mxu0
      %v3882 = vadd.f32 %v3769, %v3881
      %3883 = vmatmul.f32.gmra.mxu0 %v2687
      %v3884 = vpop.f32.mrf.mxu0
      %v3885 = vadd.f32 %v3772, %v3884
      %3886 = vmatmul.f32.gmra.mxu0 %v2697
      %v3887 = vpop.f32.mrf.mxu0
      %v3888 = vadd.f32 %v3775, %v3887
      %3889 = vmatmul.f32.gmra.mxu0 %v2707
      %v3890 = vpop.f32.mrf.mxu0
      %v3891 = vadd.f32 %v3778, %v3890
      %3892 = vmatmul.f32.gmra.mxu0 %v2717
      %v3893 = vpop.f32.mrf.mxu0
      %v3894 = vadd.f32 %v3781, %v3893
      %3895 = vmatmul.f32.gmra.mxu0 %v2727
      %v3896 = vpop.f32.mrf.mxu0
      %v3897 = vadd.f32 %v3784, %v3896
      %3898 = vmatmul.f32.gmra.mxu0 %v2737
      %v3899 = vpop.f32.mrf.mxu0
      %v3900 = vadd.f32 %v3787, %v3899
      %3901 = vmatmul.f32.gmra.mxu0 %v2747
      %v3902 = vpop.f32.mrf.mxu0
      %v3903 = vadd.f32 %v3790, %v3902
      %3904 = vmatmul.f32.gmra.mxu0 %v2757
      %v3905 = vpop.f32.mrf.mxu0
      %v3906 = vadd.f32 %v3793, %v3905
      %3907 = vmatmul.f32.gmra.mxu0 %v2767
      %v3908 = vpop.f32.mrf.mxu0
      %v3909 = vadd.f32 %v3796, %v3908
      %3910 = vmatmul.f32.gmra.mxu0 %v2777
      %v3911 = vpop.f32.mrf.mxu0
      %v3912 = vadd.f32 %v3799, %v3911
      %3913 = vmatmul.f32.gmra.mxu0 %v2787
      %v3914 = vpop.f32.mrf.mxu0
      %v3915 = vadd.f32 %v3802, %v3914
      %3916 = vmatmul.f32.gmra.mxu0 %v2797
      %v3917 = vpop.f32.mrf.mxu0
      %v3918 = vadd.f32 %v3805, %v3917
      %3919 = vmatmul.f32.gmra.mxu0 %v2807
      %v3920 = vpop.f32.mrf.mxu0
      %v3921 = vadd.f32 %v3808, %v3920
      %3922 = vmatmul.f32.gmra.mxu0 %v2817
      %v3923 = vpop.f32.mrf.mxu0
      %v3924 = vadd.f32 %v3811, %v3923
      %3925 = vmatmul.f32.gmra.mxu0 %v2827
      %v3926 = vpop.f32.mrf.mxu0
      %v3927 = vadd.f32 %v3814, %v3926
      %3928 = vmatmul.f32.gmra.mxu0 %v2837
      %v3929 = vpop.f32.mrf.mxu0
      %v3930 = vadd.f32 %v3817, %v3929
      %3931 = vmatmul.f32.gmra.mxu0 %v2847
      %v3932 = vpop.f32.mrf.mxu0
      %v3933 = vadd.f32 %v3820, %v3932
      %3934 = vmatmul.f32.gmra.mxu0 %v2857
      %v3935 = vpop.f32.mrf.mxu0
      %v3936 = vadd.f32 %v3823, %v3935
      %3937 = vmatmul.f32.gmra.mxu0 %v2867
      %v3938 = vpop.f32.mrf.mxu0
      %v3939 = vadd.f32 %v3826, %v3938
      %3940 = vmatmul.f32.gmra.mxu0 %v2877
      %v3941 = vpop.f32.mrf.mxu0
      %v3942 = vadd.f32 %v3829, %v3941
      %3943 = vdwg.mxu0
      %3944 = vmatpush.msra.mxu0 %v3023
      %3945 = vmatpush.msra.mxu0 %v3022
      %3946 = vmatpush.msra.mxu0 %v3021
      %3947 = vmatpush.msra.mxu0 %v3020
      %3948 = vmatpush.msra.mxu0 %v3019
      %3949 = vmatpush.msra.mxu0 %v3018
      %3950 = vmatpush.msra.mxu0 %v3017
      %3951 = vmatpush.msra.mxu0 %v3016
      %3952 = vmatpush.msra.mxu0 %v3015
      %3953 = vmatpush.msra.mxu0 %v3014
      %3954 = vmatpush.msra.mxu0 %v3013
      %3955 = vmatpush.msra.mxu0 %v3012
      %3956 = vmatpush.msra.mxu0 %v3011
      %3957 = vmatpush.msra.mxu0 %v3010
      %3958 = vmatpush.msra.mxu0 %v3009
      %3959 = vmatpush.msra.mxu0 %v3008
      %3960 = vmatmul.f32.gmra.mxu0 %v2568
      %v3961 = vpop.f32.mrf.mxu0
      %v3962 = vadd.f32 %v3849, %v3961
      %3963 = vmatmul.f32.gmra.mxu0 %v2578
      %v3964 = vpop.f32.mrf.mxu0
      %v3965 = vadd.f32 %v3852, %v3964
      %3966 = vmatmul.f32.gmra.mxu0 %v2588
      %v3967 = vpop.f32.mrf.mxu0
      %v3968 = vadd.f32 %v3855, %v3967
      %3969 = vmatmul.f32.gmra.mxu0 %v2598
      %v3970 = vpop.f32.mrf.mxu0
      %v3971 = vadd.f32 %v3858, %v3970
      %3972 = vmatmul.f32.gmra.mxu0 %v2608
      %v3973 = vpop.f32.mrf.mxu0
      %v3974 = vadd.f32 %v3861, %v3973
      %3975 = vmatmul.f32.gmra.mxu0 %v2618
      %v3976 = vpop.f32.mrf.mxu0
      %v3977 = vadd.f32 %v3864, %v3976
      %3978 = vmatmul.f32.gmra.mxu0 %v2628
      %v3979 = vpop.f32.mrf.mxu0
      %v3980 = vadd.f32 %v3867, %v3979
      %3981 = vmatmul.f32.gmra.mxu0 %v2638
      %v3982 = vpop.f32.mrf.mxu0
      %v3983 = vadd.f32 %v3870, %v3982
      %3984 = vmatmul.f32.gmra.mxu0 %v2648
      %v3985 = vpop.f32.mrf.mxu0
      %v3986 = vadd.f32 %v3873, %v3985
      %3987 = vmatmul.f32.gmra.mxu0 %v2658
      %v3988 = vpop.f32.mrf.mxu0
      %v3989 = vadd.f32 %v3876, %v3988
      %3990 = vmatmul.f32.gmra.mxu0 %v2668
      %v3991 = vpop.f32.mrf.mxu0
      %v3992 = vadd.f32 %v3879, %v3991
      %3993 = vmatmul.f32.gmra.mxu0 %v2678
      %v3994 = vpop.f32.mrf.mxu0
      %v3995 = vadd.f32 %v3882, %v3994
      %3996 = vmatmul.f32.gmra.mxu0 %v2688
      %v3997 = vpop.f32.mrf.mxu0
      %v3998 = vadd.f32 %v3885, %v3997
      %3999 = vmatmul.f32.gmra.mxu0 %v2698
      %v4000 = vpop.f32.mrf.mxu0
      %v4001 = vadd.f32 %v3888, %v4000
      %4002 = vmatmul.f32.gmra.mxu0 %v2708
      %v4003 = vpop.f32.mrf.mxu0
      %v4004 = vadd.f32 %v3891, %v4003
      %4005 = vmatmul.f32.gmra.mxu0 %v2718
      %v4006 = vpop.f32.mrf.mxu0
      %v4007 = vadd.f32 %v3894, %v4006
      %4008 = vmatmul.f32.gmra.mxu0 %v2728
      %v4009 = vpop.f32.mrf.mxu0
      %v4010 = vadd.f32 %v3897, %v4009
      %4011 = vmatmul.f32.gmra.mxu0 %v2738
      %v4012 = vpop.f32.mrf.mxu0
      %v4013 = vadd.f32 %v3900, %v4012
      %4014 = vmatmul.f32.gmra.mxu0 %v2748
      %v4015 = vpop.f32.mrf.mxu0
      %v4016 = vadd.f32 %v3903, %v4015
      %4017 = vmatmul.f32.gmra.mxu0 %v2758
      %v4018 = vpop.f32.mrf.mxu0
      %v4019 = vadd.f32 %v3906, %v4018
      %4020 = vmatmul.f32.gmra.mxu0 %v2768
      %v4021 = vpop.f32.mrf.mxu0
      %v4022 = vadd.f32 %v3909, %v4021
      %4023 = vmatmul.f32.gmra.mxu0 %v2778
      %v4024 = vpop.f32.mrf.mxu0
      %v4025 = vadd.f32 %v3912, %v4024
      %4026 = vmatmul.f32.gmra.mxu0 %v2788
      %v4027 = vpop.f32.mrf.mxu0
      %v4028 = vadd.f32 %v3915, %v4027
      %4029 = vmatmul.f32.gmra.mxu0 %v2798
      %v4030 = vpop.f32.mrf.mxu0
      %v4031 = vadd.f32 %v3918, %v4030
      %4032 = vmatmul.f32.gmra.mxu0 %v2808
      %v4033 = vpop.f32.mrf.mxu0
      %v4034 = vadd.f32 %v3921, %v4033
      %4035 = vmatmul.f32.gmra.mxu0 %v2818
      %v4036 = vpop.f32.mrf.mxu0
      %v4037 = vadd.f32 %v3924, %v4036
      %4038 = vmatmul.f32.gmra.mxu0 %v2828
      %v4039 = vpop.f32.mrf.mxu0
      %v4040 = vadd.f32 %v3927, %v4039
      %4041 = vmatmul.f32.gmra.mxu0 %v2838
      %v4042 = vpop.f32.mrf.mxu0
      %v4043 = vadd.f32 %v3930, %v4042
      %4044 = vmatmul.f32.gmra.mxu0 %v2848
      %v4045 = vpop.f32.mrf.mxu0
      %v4046 = vadd.f32 %v3933, %v4045
      %4047 = vmatmul.f32.gmra.mxu0 %v2858
      %v4048 = vpop.f32.mrf.mxu0
      %v4049 = vadd.f32 %v3936, %v4048
      %4050 = vmatmul.f32.gmra.mxu0 %v2868
      %v4051 = vpop.f32.mrf.mxu0
      %v4052 = vadd.f32 %v3939, %v4051
      %4053 = vmatmul.f32.gmra.mxu0 %v2878
      %v4054 = vpop.f32.mrf.mxu0
      %v4055 = vadd.f32 %v3942, %v4054
      %4056 = vdwg.mxu0
      %4057 = vmatpush.msra.mxu0 %v3039
      %4058 = vmatpush.msra.mxu0 %v3038
      %4059 = vmatpush.msra.mxu0 %v3037
      %4060 = vmatpush.msra.mxu0 %v3036
      %4061 = vmatpush.msra.mxu0 %v3035
      %4062 = vmatpush.msra.mxu0 %v3034
      %4063 = vmatpush.msra.mxu0 %v3033
      %4064 = vmatpush.msra.mxu0 %v3032
      %4065 = vmatpush.msra.mxu0 %v3031
      %4066 = vmatpush.msra.mxu0 %v3030
      %4067 = vmatpush.msra.mxu0 %v3029
      %4068 = vmatpush.msra.mxu0 %v3028
      %4069 = vmatpush.msra.mxu0 %v3027
      %4070 = vmatpush.msra.mxu0 %v3026
      %4071 = vmatpush.msra.mxu0 %v3025
      %4072 = vmatpush.msra.mxu0 %v3024
      %4073 = vmatmul.f32.gmra.mxu0 %v2569
      %v4074 = vpop.f32.mrf.mxu0
      %v4075 = vadd.f32 %v3962, %v4074
      %4076 = vmatmul.f32.gmra.mxu0 %v2579
      %v4077 = vpop.f32.mrf.mxu0
      %v4078 = vadd.f32 %v3965, %v4077
      %4079 = vmatmul.f32.gmra.mxu0 %v2589
      %v4080 = vpop.f32.mrf.mxu0
      %v4081 = vadd.f32 %v3968, %v4080
      %4082 = vmatmul.f32.gmra.mxu0 %v2599
      %v4083 = vpop.f32.mrf.mxu0
      %v4084 = vadd.f32 %v3971, %v4083
      %4085 = vmatmul.f32.gmra.mxu0 %v2609
      %v4086 = vpop.f32.mrf.mxu0
      %v4087 = vadd.f32 %v3974, %v4086
      %4088 = vmatmul.f32.gmra.mxu0 %v2619
      %v4089 = vpop.f32.mrf.mxu0
      %v4090 = vadd.f32 %v3977, %v4089
      %4091 = vmatmul.f32.gmra.mxu0 %v2629
      %v4092 = vpop.f32.mrf.mxu0
      %v4093 = vadd.f32 %v3980, %v4092
      %4094 = vmatmul.f32.gmra.mxu0 %v2639
      %v4095 = vpop.f32.mrf.mxu0
      %v4096 = vadd.f32 %v3983, %v4095
      %4097 = vmatmul.f32.gmra.mxu0 %v2649
      %v4098 = vpop.f32.mrf.mxu0
      %v4099 = vadd.f32 %v3986, %v4098
      %4100 = vmatmul.f32.gmra.mxu0 %v2659
      %v4101 = vpop.f32.mrf.mxu0
      %v4102 = vadd.f32 %v3989, %v4101
      %4103 = vmatmul.f32.gmra.mxu0 %v2669
      %v4104 = vpop.f32.mrf.mxu0
      %v4105 = vadd.f32 %v3992, %v4104
      %4106 = vmatmul.f32.gmra.mxu0 %v2679
      %v4107 = vpop.f32.mrf.mxu0
      %v4108 = vadd.f32 %v3995, %v4107
      %4109 = vmatmul.f32.gmra.mxu0 %v2689
      %v4110 = vpop.f32.mrf.mxu0
      %v4111 = vadd.f32 %v3998, %v4110
      %4112 = vmatmul.f32.gmra.mxu0 %v2699
      %v4113 = vpop.f32.mrf.mxu0
      %v4114 = vadd.f32 %v4001, %v4113
      %4115 = vmatmul.f32.gmra.mxu0 %v2709
      %v4116 = vpop.f32.mrf.mxu0
      %v4117 = vadd.f32 %v4004, %v4116
      %4118 = vmatmul.f32.gmra.mxu0 %v2719
      %v4119 = vpop.f32.mrf.mxu0
      %v4120 = vadd.f32 %v4007, %v4119
      %4121 = vmatmul.f32.gmra.mxu0 %v2729
      %v4122 = vpop.f32.mrf.mxu0
      %v4123 = vadd.f32 %v4010, %v4122
      %4124 = vmatmul.f32.gmra.mxu0 %v2739
      %v4125 = vpop.f32.mrf.mxu0
      %v4126 = vadd.f32 %v4013, %v4125
      %4127 = vmatmul.f32.gmra.mxu0 %v2749
      %v4128 = vpop.f32.mrf.mxu0
      %v4129 = vadd.f32 %v4016, %v4128
      %4130 = vmatmul.f32.gmra.mxu0 %v2759
      %v4131 = vpop.f32.mrf.mxu0
      %v4132 = vadd.f32 %v4019, %v4131
      %4133 = vmatmul.f32.gmra.mxu0 %v2769
      %v4134 = vpop.f32.mrf.mxu0
      %v4135 = vadd.f32 %v4022, %v4134
      %4136 = vmatmul.f32.gmra.mxu0 %v2779
      %v4137 = vpop.f32.mrf.mxu0
      %v4138 = vadd.f32 %v4025, %v4137
      %4139 = vmatmul.f32.gmra.mxu0 %v2789
      %v4140 = vpop.f32.mrf.mxu0
      %v4141 = vadd.f32 %v4028, %v4140
      %4142 = vmatmul.f32.gmra.mxu0 %v2799
      %v4143 = vpop.f32.mrf.mxu0
      %v4144 = vadd.f32 %v4031, %v4143
      %4145 = vmatmul.f32.gmra.mxu0 %v2809
      %v4146 = vpop.f32.mrf.mxu0
      %v4147 = vadd.f32 %v4034, %v4146
      %4148 = vmatmul.f32.gmra.mxu0 %v2819
      %v4149 = vpop.f32.mrf.mxu0
      %v4150 = vadd.f32 %v4037, %v4149
      %4151 = vmatmul.f32.gmra.mxu0 %v2829
      %v4152 = vpop.f32.mrf.mxu0
      %v4153 = vadd.f32 %v4040, %v4152
      %4154 = vmatmul.f32.gmra.mxu0 %v2839
      %v4155 = vpop.f32.mrf.mxu0
      %v4156 = vadd.f32 %v4043, %v4155
      %4157 = vmatmul.f32.gmra.mxu0 %v2849
      %v4158 = vpop.f32.mrf.mxu0
      %v4159 = vadd.f32 %v4046, %v4158
      %4160 = vmatmul.f32.gmra.mxu0 %v2859
      %v4161 = vpop.f32.mrf.mxu0
      %v4162 = vadd.f32 %v4049, %v4161
      %4163 = vmatmul.f32.gmra.mxu0 %v2869
      %v4164 = vpop.f32.mrf.mxu0
      %v4165 = vadd.f32 %v4052, %v4164
      %4166 = vmatmul.f32.gmra.mxu0 %v2879
      %v4167 = vpop.f32.mrf.mxu0
      %v4168 = vadd.f32 %v4055, %v4167
      %4169 = vdwg.mxu0
      %4170 = vst [vmem:[%s244] sm:$0xff] %v4075
      %4171 = vst [vmem:[%s244 + $0x8] sm:$0xff] %v4078
      %4172 = vst [vmem:[%s244 + $0x10] sm:$0xff] %v4081
      %4173 = vst [vmem:[%s244 + $0x18] sm:$0xff] %v4084
      %4174 = vst [vmem:[%s244 + $0x20] sm:$0xff] %v4087
      %4175 = vst [vmem:[%s244 + $0x28] sm:$0xff] %v4090
      %4176 = vst [vmem:[%s244 + $0x30] sm:$0xff] %v4093
      %4177 = vst [vmem:[%s244 + $0x38] sm:$0xff] %v4096
      %4178 = vst [vmem:[%s244 + $0x40] sm:$0xff] %v4099
      %4179 = vst [vmem:[%s244 + $0x48] sm:$0xff] %v4102
      %4180 = vst [vmem:[%s244 + $0x50] sm:$0xff] %v4105
      %4181 = vst [vmem:[%s244 + $0x58] sm:$0xff] %v4108
      %4182 = vst [vmem:[%s244 + $0x60] sm:$0xff] %v4111
      %4183 = vst [vmem:[%s244 + $0x68] sm:$0xff] %v4114
      %4184 = vst [vmem:[%s244 + $0x70] sm:$0xff] %v4117
      %4185 = vst [vmem:[%s244 + $0x78] sm:$0xff] %v4120
      %4186 = vst [vmem:[%s244 + $0x80] sm:$0xff] %v4123
      %4187 = vst [vmem:[%s244 + $0x88] sm:$0xff] %v4126
      %4188 = vst [vmem:[%s244 + $0x90] sm:$0xff] %v4129
      %4189 = vst [vmem:[%s244 + $0x98] sm:$0xff] %v4132
      %4190 = vst [vmem:[%s244 + $0xa0] sm:$0xff] %v4135
      %4191 = vst [vmem:[%s244 + $0xa8] sm:$0xff] %v4138
      %4192 = vst [vmem:[%s244 + $0xb0] sm:$0xff] %v4141
      %4193 = vst [vmem:[%s244 + $0xb8] sm:$0xff] %v4144
      %4194 = vst [vmem:[%s244 + $0xc0] sm:$0xff] %v4147
      %4195 = vst [vmem:[%s244 + $0xc8] sm:$0xff] %v4150
      %4196 = vst [vmem:[%s244 + $0xd0] sm:$0xff] %v4153
      %4197 = vst [vmem:[%s244 + $0xd8] sm:$0xff] %v4156
      %4198 = vst [vmem:[%s244 + $0xe0] sm:$0xff] %v4159
      %4199 = vst [vmem:[%s244 + $0xe8] sm:$0xff] %v4162
      %4200 = vst [vmem:[%s244 + $0xf0] sm:$0xff] %v4165
      %4201 = vst [vmem:[%s244 + $0xf8] sm:$0xff] %v4168
      %p4202 = scmp.lt.s32.totalorder %s16, 1
      %s4203 = scalar_select %p4202, %s16, 1
      %s4204 = smul.addr %s4203, 32
      %s4205 = smul.addr %s4204, 8
      %s4206 = scalar_lea.vmem %s5, %s4205
      // Predicated region
      $region41: #{residual_forward.5} parent=39 // pred_check
        %p4207 = pneg %p149
      $region42: #{residual_forward.5} parent=39 // pred_check_branch
        %4209 = sbr.rel (%p4207) target = $region44
      $region43: #{residual_forward.5} parent=39 // pred_region
        _
      $region44: #{residual_forward.5} parent=39 // pred_fallthru
        _
    $region40: #{residual_forward.5} parent=5 // pred_fallthru
      _
    %p4210 = scmp.le.s32.totalorder 2, %s11
    // Predicated region
    $region45: #{residual_forward.5} parent=5 // pred_check
      %p4211 = pneg %p4210
    $region46: #{residual_forward.5} parent=5 // pred_check_branch
      %4213 = sbr.rel (%p4211) target = $region48
    $region47: #{residual_forward.5} parent=5 // pred_region
      %s4214 = ssub.s32 %s11, 2
      // Predicated region
      $region49: #{residual_forward.5} parent=47 // pred_check
        %p4215 = pneg %p155
      $region50: #{residual_forward.5} parent=47 // pred_check_branch
        %4217 = sbr.rel (%p4215) target = $region52
      $region51: #{residual_forward.5} parent=47 // pred_region
        %p4218 = scmp.lt.s32.totalorder %s17, 1
        %s4219 = scalar_select %p4218, %s17, 1
        %s4220 = smul.addr %s4219, 32
        %s4221 = smul.addr %s4220, 8
        %s4222 = scalar_lea.vmem %s5, %s4221
      $region52: #{residual_forward.5} parent=47 // pred_fallthru
        _
    $region48: #{residual_forward.5} parent=5 // pred_fallthru
      _
  $region6: #{residual_forward.5} parent=0 // loop_footer
    %s15 = sadd.s32 1, %s11
  $region7: #{residual_forward.5} parent=0 // loop_footer_branch
    %10 = sbr.rel target = $region3
  $region8: #{residual_forward.5} parent=0 // loop_exit
    _

</llo_original>
